<compile_context>
chip_gen: v7x
topology: tpu7x:2x2x1
jax: 0.10.0
libtpu: 0.0.40
codegen_flags: <defaults>
</compile_context>

<pallas_src>
import functools

import jax
import jax.numpy as jnp
from jax.experimental import pallas as pl
from jax.experimental.pallas import tpu as pltpu


def _conv_sigmoid_kernel(x_ref, w_ref, b_ref, o_ref, *,
                         n_batch, cin, h, w, kh, kw, sw, oh, ow, cout):
    # x_ref: (N*Cin*H, W)          VMEM  (row index = (n*Cin + c)*H + h)
    # w_ref: (Cout*Cin*KH*KW,)     SMEM  (row-major flatten of (Cout,Cin,KH,KW))
    # b_ref: (Cout,)               SMEM
    # o_ref: (N, Cout, OH, OW)     VMEM
    x2 = x_ref[...]                                    # (N*Cin*H, W) f32

    # Stride-sw column selection on the MXU:
    #   sel_j[wc, owc] = (wc == sw*owc + j)  ->  ys[j][(n,c,h), ow] = x[n,c,h, sw*ow + j]
    row_w = jax.lax.broadcasted_iota(jnp.int32, (w, ow), 0)
    col_o = jax.lax.broadcasted_iota(jnp.int32, (w, ow), 1)
    ys = []
    for j in range(kw):
        sel = (row_w == sw * col_o + j).astype(x2.dtype)
        ys.append(jnp.dot(x2, sel,
                          preferred_element_type=jnp.float32,
                          precision=jax.lax.Precision.HIGHEST))

    for n in range(n_batch):
        # Bias folded into accumulator init (no extra VPU add, no VMEM operand).
        accs = [jnp.full((oh, ow), b_ref[o], dtype=jnp.float32) for o in range(cout)]
        for c in range(cin):
            base = (n * cin + c) * h
            for i in range(kh):
                for j in range(kw):
                    # stride_h == 1  ->  output rows oh+i are contiguous sublanes.
                    ysl = ys[j][base + i: base + i + oh, :]          # (OH, OW)
                    for o in range(cout):
                        widx = ((o * cin + c) * kh + i) * kw + j
                        accs[o] = accs[o] + w_ref[widx] * ysl
        for o in range(cout):
            z = accs[o]
            sig = 1.0 / (1.0 + jnp.exp(-z))                          # EUP exp + div
            o_ref[n, o] = sig.astype(o_ref.dtype)


def conv2d_sigmoid(x, weight, bias, stride=(1, 3)):
    """x: (N, Cin, H, W) NCHW f32; weight: (Cout, Cin, KH, KW); bias: (Cout,)."""
    N, Cin, H, W = x.shape
    Cout, Cin2, KH, KW = weight.shape
    assert Cin2 == Cin
    sh, sw = stride
    if sh != 1:
        # TODO(synk): generalize the in-kernel row windowing to stride_h > 1
        # (would need a second selection matmul on the sublane axis); the module
        # spec uses stride=(1, 3) so stride_h == 1 is all that is required.
        raise NotImplementedError("conv2d_sigmoid kernel assumes stride_h == 1")
    OH = (H - KH) // sh + 1
    OW = (W - KW) // sw + 1

    x2 = x.reshape(N * Cin * H, W)       # contiguous -> free reshape, no im2col in HBM
    w_flat = weight.reshape(-1)          # (Cout*Cin*KH*KW,), row-major
    kernel = functools.partial(
        _conv_sigmoid_kernel,
        n_batch=N, cin=Cin, h=H, w=W, kh=KH, kw=KW, sw=sw,
        oh=OH, ow=OW, cout=Cout)

    sel_flops = 2 * KW * (N * Cin * H) * W * OW
    acc_flops = 2 * N * Cout * Cin * KH * KW * OH * OW
    bytes_accessed = 4 * (N * Cin * H * W + Cout * Cin * KH * KW + Cout
                          + N * Cout * OH * OW)

    out = pl.pallas_call(
        kernel,
        out_shape=jax.ShapeDtypeStruct((N, Cout, OH, OW), x.dtype),
        grid=(1,),
        in_specs=[
            pl.BlockSpec((N * Cin * H, W), lambda i: (0, 0)),          # x in VMEM
            pl.BlockSpec(memory_space=pltpu.MemorySpace.SMEM),          # weights
            pl.BlockSpec(memory_space=pltpu.MemorySpace.SMEM),          # bias
        ],
        out_specs=pl.BlockSpec((N, Cout, OH, OW), lambda i: (0, 0, 0, 0)),
        compiler_params=pltpu.CompilerParams(
            dimension_semantics=("arbitrary",)),
        cost_estimate=pl.CostEstimate(
            flops=sel_flops + acc_flops,
            transcendentals=N * Cout * OH * OW,
            bytes_accessed=bytes_accessed),
    )(x2, w_flat, bias)
    return out


if __name__ == "__main__":
    key = jax.random.PRNGKey(0)
    kx, kwt, kb = jax.random.split(key, 3)

    # Module-implied shapes.
    N, Cin, H, W = 1, 8, 38, 98
    Cout, KH, KW = 4, 4, 2
    stride = (1, 3)

    x1 = jax.random.normal(kx, (N, Cin, H, W), dtype=jnp.float32)

    # Deterministic PyTorch-style uniform(-1/sqrt(fan_in), 1/sqrt(fan_in)) init.
    fan_in = Cin * KH * KW
    bound = 1.0 / (fan_in ** 0.5)
    weight = jax.random.uniform(kwt, (Cout, Cin, KH, KW),
                                minval=-bound, maxval=bound, dtype=jnp.float32)
    bias = jax.random.uniform(kb, (Cout,),
                              minval=-bound, maxval=bound, dtype=jnp.float32)

    y = conv2d_sigmoid(x1, weight, bias, stride)
    jax.block_until_ready(y)

    # Reference: XLA conv + bias + sigmoid.
    ref = jax.lax.conv_general_dilated(
        x1, weight, window_strides=stride, padding="VALID",
        dimension_numbers=("NCHW", "OIHW", "NCHW"),
        precision=jax.lax.Precision.HIGHEST)
    ref = jax.nn.sigmoid(ref + bias.reshape(1, Cout, 1, 1))

    assert y.shape == (1, 4, 35, 33), y.shape
    err = float(jnp.max(jnp.abs(y - ref)))
    assert err < 1e-3, err
    print("KERNEL_OK")
</pallas_src>

<mosaic_0001>
module attributes {stable_mosaic.version = 11 : i64} {
  func.func @_conv_sigmoid_kernel(%arg0: i32, %arg1: memref<304x98xf32, #tpu.memory_space<vmem>>, %arg2: memref<256xf32, #tpu.memory_space<smem>>, %arg3: memref<4xf32, #tpu.memory_space<smem>>, %arg4: memref<1x4x35x33xf32, #tpu.memory_space<vmem>>) attributes {dimension_semantics = [#tpu.dimension_semantics<arbitrary>], iteration_bounds = array<i64: 1>, scalar_prefetch = 0 : i64, scratch_operands = 0 : i64, tpu.core_type = #tpu.core_type<tc>, window_params = [{pipeline_mode = #tpu.pipeline_mode<synchronous>, transform_indices = @transform_0, window_bounds = array<i64: 304, 98>}, {transform_indices = @transform_1, window_bounds = array<i64: 256>}, {transform_indices = @transform_2, window_bounds = array<i64: 4>}, {pipeline_mode = #tpu.pipeline_mode<synchronous>, transform_indices = @transform_3, window_bounds = array<i64: 1, 4, 35, 33>}]} {
    %c0 = arith.constant 0 : index
    %c0_0 = arith.constant 0 : index
    %0 = vector.load %arg1[%c0, %c0_0] : memref<304x98xf32, #tpu.memory_space<vmem>>, vector<304x98xf32>
    %1 = tpu.iota {dimensions = array<i32: 0>} : vector<98x33xi32>
    %2 = tpu.iota {dimensions = array<i32: 1>} : vector<98x33xi32>
    %c3_i32 = arith.constant 3 : i32
    %3 = vector.broadcast %c3_i32 : i32 to vector<98x33xi32>
    %4 = arith.muli %3, %2 : vector<98x33xi32>
    %c0_i32 = arith.constant 0 : i32
    %5 = vector.broadcast %c0_i32 : i32 to vector<98x33xi32>
    %6 = arith.addi %4, %5 : vector<98x33xi32>
    %7 = arith.cmpi eq, %1, %6 : vector<98x33xi32>
    %8 = arith.extui %7 : vector<98x33xi1> to vector<98x33xi32>
    %9 = arith.sitofp %8 : vector<98x33xi32> to vector<98x33xf32>
    %cst = arith.constant dense<0.000000e+00> : vector<304x33xf32>
    %10 = tpu.matmul %0, %9, %cst {dimension_numbers = #tpu.dot_dimension_numbers<[1], [0], [0], [1], [0, 0, 1, 1], [], []>, precision = #tpu.contract_precision<fp32>} : vector<304x98xf32>, vector<98x33xf32>, vector<304x33xf32> -> vector<304x33xf32>
    %c3_i32_1 = arith.constant 3 : i32
    %11 = vector.broadcast %c3_i32_1 : i32 to vector<98x33xi32>
    %12 = arith.muli %11, %2 : vector<98x33xi32>
    %c1_i32 = arith.constant 1 : i32
    %13 = vector.broadcast %c1_i32 : i32 to vector<98x33xi32>
    %14 = arith.addi %12, %13 : vector<98x33xi32>
    %15 = arith.cmpi eq, %1, %14 : vector<98x33xi32>
    %16 = arith.extui %15 : vector<98x33xi1> to vector<98x33xi32>
    %17 = arith.sitofp %16 : vector<98x33xi32> to vector<98x33xf32>
    %cst_2 = arith.constant dense<0.000000e+00> : vector<304x33xf32>
    %18 = tpu.matmul %0, %17, %cst_2 {dimension_numbers = #tpu.dot_dimension_numbers<[1], [0], [0], [1], [0, 0, 1, 1], [], []>, precision = #tpu.contract_precision<fp32>} : vector<304x98xf32>, vector<98x33xf32>, vector<304x33xf32> -> vector<304x33xf32>
    %c0_3 = arith.constant 0 : index
    %19 = memref.load %arg3[%c0_3] : memref<4xf32, #tpu.memory_space<smem>>
    %20 = vector.broadcast %19 : f32 to vector<35x33xf32>
    %c1 = arith.constant 1 : index
    %21 = memref.load %arg3[%c1] : memref<4xf32, #tpu.memory_space<smem>>
    %22 = vector.broadcast %21 : f32 to vector<35x33xf32>
    %c2 = arith.constant 2 : index
    %23 = memref.load %arg3[%c2] : memref<4xf32, #tpu.memory_space<smem>>
    %24 = vector.broadcast %23 : f32 to vector<35x33xf32>
    %c3 = arith.constant 3 : index
    %25 = memref.load %arg3[%c3] : memref<4xf32, #tpu.memory_space<smem>>
    %26 = vector.broadcast %25 : f32 to vector<35x33xf32>
    %27 = vector.extract_strided_slice %10 {offsets = [0, 0], sizes = [35, 33], strides = [1, 1]} : vector<304x33xf32> to vector<35x33xf32>
    %c0_4 = arith.constant 0 : index
    %28 = memref.load %arg2[%c0_4] : memref<256xf32, #tpu.memory_space<smem>>
    %29 = vector.broadcast %28 : f32 to vector<35x33xf32>
    %30 = arith.mulf %29, %27 : vector<35x33xf32>
    %31 = arith.addf %20, %30 : vector<35x33xf32>
    %c64 = arith.constant 64 : index
    %32 = memref.load %arg2[%c64] : memref<256xf32, #tpu.memory_space<smem>>
    %33 = vector.broadcast %32 : f32 to vector<35x33xf32>
    %34 = arith.mulf %33, %27 : vector<35x33xf32>
    %35 = arith.addf %22, %34 : vector<35x33xf32>
    %c128 = arith.constant 128 : index
    %36 = memref.load %arg2[%c128] : memref<256xf32, #tpu.memory_space<smem>>
    %37 = vector.broadcast %36 : f32 to vector<35x33xf32>
    %38 = arith.mulf %37, %27 : vector<35x33xf32>
    %39 = arith.addf %24, %38 : vector<35x33xf32>
    %c192 = arith.constant 192 : index
    %40 = memref.load %arg2[%c192] : memref<256xf32, #tpu.memory_space<smem>>
    %41 = vector.broadcast %40 : f32 to vector<35x33xf32>
    %42 = arith.mulf %41, %27 : vector<35x33xf32>
    %43 = arith.addf %26, %42 : vector<35x33xf32>
    %44 = vector.extract_strided_slice %18 {offsets = [0, 0], sizes = [35, 33], strides = [1, 1]} : vector<304x33xf32> to vector<35x33xf32>
    %c1_5 = arith.constant 1 : index
    %45 = memref.load %arg2[%c1_5] : memref<256xf32, #tpu.memory_space<smem>>
    %46 = vector.broadcast %45 : f32 to vector<35x33xf32>
    %47 = arith.mulf %46, %44 : vector<35x33xf32>
    %48 = arith.addf %31, %47 : vector<35x33xf32>
    %c65 = arith.constant 65 : index
    %49 = memref.load %arg2[%c65] : memref<256xf32, #tpu.memory_space<smem>>
    %50 = vector.broadcast %49 : f32 to vector<35x33xf32>
    %51 = arith.mulf %50, %44 : vector<35x33xf32>
    %52 = arith.addf %35, %51 : vector<35x33xf32>
    %c129 = arith.constant 129 : index
    %53 = memref.load %arg2[%c129] : memref<256xf32, #tpu.memory_space<smem>>
    %54 = vector.broadcast %53 : f32 to vector<35x33xf32>
    %55 = arith.mulf %54, %44 : vector<35x33xf32>
    %56 = arith.addf %39, %55 : vector<35x33xf32>
    %c193 = arith.constant 193 : index
    %57 = memref.load %arg2[%c193] : memref<256xf32, #tpu.memory_space<smem>>
    %58 = vector.broadcast %57 : f32 to vector<35x33xf32>
    %59 = arith.mulf %58, %44 : vector<35x33xf32>
    %60 = arith.addf %43, %59 : vector<35x33xf32>
    %61 = vector.extract_strided_slice %10 {offsets = [1, 0], sizes = [35, 33], strides = [1, 1]} : vector<304x33xf32> to vector<35x33xf32>
    %c2_6 = arith.constant 2 : index
    %62 = memref.load %arg2[%c2_6] : memref<256xf32, #tpu.memory_space<smem>>
    %63 = vector.broadcast %62 : f32 to vector<35x33xf32>
    %64 = arith.mulf %63, %61 : vector<35x33xf32>
    %65 = arith.addf %48, %64 : vector<35x33xf32>
    %c66 = arith.constant 66 : index
    %66 = memref.load %arg2[%c66] : memref<256xf32, #tpu.memory_space<smem>>
    %67 = vector.broadcast %66 : f32 to vector<35x33xf32>
    %68 = arith.mulf %67, %61 : vector<35x33xf32>
    %69 = arith.addf %52, %68 : vector<35x33xf32>
    %c130 = arith.constant 130 : index
    %70 = memref.load %arg2[%c130] : memref<256xf32, #tpu.memory_space<smem>>
    %71 = vector.broadcast %70 : f32 to vector<35x33xf32>
    %72 = arith.mulf %71, %61 : vector<35x33xf32>
    %73 = arith.addf %56, %72 : vector<35x33xf32>
    %c194 = arith.constant 194 : index
    %74 = memref.load %arg2[%c194] : memref<256xf32, #tpu.memory_space<smem>>
    %75 = vector.broadcast %74 : f32 to vector<35x33xf32>
    %76 = arith.mulf %75, %61 : vector<35x33xf32>
    %77 = arith.addf %60, %76 : vector<35x33xf32>
    %78 = vector.extract_strided_slice %18 {offsets = [1, 0], sizes = [35, 33], strides = [1, 1]} : vector<304x33xf32> to vector<35x33xf32>
    %c3_7 = arith.constant 3 : index
    %79 = memref.load %arg2[%c3_7] : memref<256xf32, #tpu.memory_space<smem>>
    %80 = vector.broadcast %79 : f32 to vector<35x33xf32>
    %81 = arith.mulf %80, %78 : vector<35x33xf32>
    %82 = arith.addf %65, %81 : vector<35x33xf32>
    %c67 = arith.constant 67 : index
    %83 = memref.load %arg2[%c67] : memref<256xf32, #tpu.memory_space<smem>>
    %84 = vector.broadcast %83 : f32 to vector<35x33xf32>
    %85 = arith.mulf %84, %78 : vector<35x33xf32>
    %86 = arith.addf %69, %85 : vector<35x33xf32>
    %c131 = arith.constant 131 : index
    %87 = memref.load %arg2[%c131] : memref<256xf32, #tpu.memory_space<smem>>
    %88 = vector.broadcast %87 : f32 to vector<35x33xf32>
    %89 = arith.mulf %88, %78 : vector<35x33xf32>
    %90 = arith.addf %73, %89 : vector<35x33xf32>
    %c195 = arith.constant 195 : index
    %91 = memref.load %arg2[%c195] : memref<256xf32, #tpu.memory_space<smem>>
    %92 = vector.broadcast %91 : f32 to vector<35x33xf32>
    %93 = arith.mulf %92, %78 : vector<35x33xf32>
    %94 = arith.addf %77, %93 : vector<35x33xf32>
    %95 = vector.extract_strided_slice %10 {offsets = [2, 0], sizes = [35, 33], strides = [1, 1]} : vector<304x33xf32> to vector<35x33xf32>
    %c4 = arith.constant 4 : index
    %96 = memref.load %arg2[%c4] : memref<256xf32, #tpu.memory_space<smem>>
    %97 = vector.broadcast %96 : f32 to vector<35x33xf32>
    %98 = arith.mulf %97, %95 : vector<35x33xf32>
    %99 = arith.addf %82, %98 : vector<35x33xf32>
    %c68 = arith.constant 68 : index
    %100 = memref.load %arg2[%c68] : memref<256xf32, #tpu.memory_space<smem>>
    %101 = vector.broadcast %100 : f32 to vector<35x33xf32>
    %102 = arith.mulf %101, %95 : vector<35x33xf32>
    %103 = arith.addf %86, %102 : vector<35x33xf32>
    %c132 = arith.constant 132 : index
    %104 = memref.load %arg2[%c132] : memref<256xf32, #tpu.memory_space<smem>>
    %105 = vector.broadcast %104 : f32 to vector<35x33xf32>
    %106 = arith.mulf %105, %95 : vector<35x33xf32>
    %107 = arith.addf %90, %106 : vector<35x33xf32>
    %c196 = arith.constant 196 : index
    %108 = memref.load %arg2[%c196] : memref<256xf32, #tpu.memory_space<smem>>
    %109 = vector.broadcast %108 : f32 to vector<35x33xf32>
    %110 = arith.mulf %109, %95 : vector<35x33xf32>
    %111 = arith.addf %94, %110 : vector<35x33xf32>
    %112 = vector.extract_strided_slice %18 {offsets = [2, 0], sizes = [35, 33], strides = [1, 1]} : vector<304x33xf32> to vector<35x33xf32>
    %c5 = arith.constant 5 : index
    %113 = memref.load %arg2[%c5] : memref<256xf32, #tpu.memory_space<smem>>
    %114 = vector.broadcast %113 : f32 to vector<35x33xf32>
    %115 = arith.mulf %114, %112 : vector<35x33xf32>
    %116 = arith.addf %99, %115 : vector<35x33xf32>
    %c69 = arith.constant 69 : index
    %117 = memref.load %arg2[%c69] : memref<256xf32, #tpu.memory_space<smem>>
    %118 = vector.broadcast %117 : f32 to vector<35x33xf32>
    %119 = arith.mulf %118, %112 : vector<35x33xf32>
    %120 = arith.addf %103, %119 : vector<35x33xf32>
    %c133 = arith.constant 133 : index
    %121 = memref.load %arg2[%c133] : memref<256xf32, #tpu.memory_space<smem>>
    %122 = vector.broadcast %121 : f32 to vector<35x33xf32>
    %123 = arith.mulf %122, %112 : vector<35x33xf32>
    %124 = arith.addf %107, %123 : vector<35x33xf32>
    %c197 = arith.constant 197 : index
    %125 = memref.load %arg2[%c197] : memref<256xf32, #tpu.memory_space<smem>>
    %126 = vector.broadcast %125 : f32 to vector<35x33xf32>
    %127 = arith.mulf %126, %112 : vector<35x33xf32>
    %128 = arith.addf %111, %127 : vector<35x33xf32>
    %129 = vector.extract_strided_slice %10 {offsets = [3, 0], sizes = [35, 33], strides = [1, 1]} : vector<304x33xf32> to vector<35x33xf32>
    %c6 = arith.constant 6 : index
    %130 = memref.load %arg2[%c6] : memref<256xf32, #tpu.memory_space<smem>>
    %131 = vector.broadcast %130 : f32 to vector<35x33xf32>
    %132 = arith.mulf %131, %129 : vector<35x33xf32>
    %133 = arith.addf %116, %132 : vector<35x33xf32>
    %c70 = arith.constant 70 : index
    %134 = memref.load %arg2[%c70] : memref<256xf32, #tpu.memory_space<smem>>
    %135 = vector.broadcast %134 : f32 to vector<35x33xf32>
    %136 = arith.mulf %135, %129 : vector<35x33xf32>
    %137 = arith.addf %120, %136 : vector<35x33xf32>
    %c134 = arith.constant 134 : index
    %138 = memref.load %arg2[%c134] : memref<256xf32, #tpu.memory_space<smem>>
    %139 = vector.broadcast %138 : f32 to vector<35x33xf32>
    %140 = arith.mulf %139, %129 : vector<35x33xf32>
    %141 = arith.addf %124, %140 : vector<35x33xf32>
    %c198 = arith.constant 198 : index
    %142 = memref.load %arg2[%c198] : memref<256xf32, #tpu.memory_space<smem>>
    %143 = vector.broadcast %142 : f32 to vector<35x33xf32>
    %144 = arith.mulf %143, %129 : vector<35x33xf32>
    %145 = arith.addf %128, %144 : vector<35x33xf32>
    %146 = vector.extract_strided_slice %18 {offsets = [3, 0], sizes = [35, 33], strides = [1, 1]} : vector<304x33xf32> to vector<35x33xf32>
    %c7 = arith.constant 7 : index
    %147 = memref.load %arg2[%c7] : memref<256xf32, #tpu.memory_space<smem>>
    %148 = vector.broadcast %147 : f32 to vector<35x33xf32>
    %149 = arith.mulf %148, %146 : vector<35x33xf32>
    %150 = arith.addf %133, %149 : vector<35x33xf32>
    %c71 = arith.constant 71 : index
    %151 = memref.load %arg2[%c71] : memref<256xf32, #tpu.memory_space<smem>>
    %152 = vector.broadcast %151 : f32 to vector<35x33xf32>
    %153 = arith.mulf %152, %146 : vector<35x33xf32>
    %154 = arith.addf %137, %153 : vector<35x33xf32>
    %c135 = arith.constant 135 : index
    %155 = memref.load %arg2[%c135] : memref<256xf32, #tpu.memory_space<smem>>
    %156 = vector.broadcast %155 : f32 to vector<35x33xf32>
    %157 = arith.mulf %156, %146 : vector<35x33xf32>
    %158 = arith.addf %141, %157 : vector<35x33xf32>
    %c199 = arith.constant 199 : index
    %159 = memref.load %arg2[%c199] : memref<256xf32, #tpu.memory_space<smem>>
    %160 = vector.broadcast %159 : f32 to vector<35x33xf32>
    %161 = arith.mulf %160, %146 : vector<35x33xf32>
    %162 = arith.addf %145, %161 : vector<35x33xf32>
    %163 = vector.extract_strided_slice %10 {offsets = [38, 0], sizes = [35, 33], strides = [1, 1]} : vector<304x33xf32> to vector<35x33xf32>
    %c8 = arith.constant 8 : index
    %164 = memref.load %arg2[%c8] : memref<256xf32, #tpu.memory_space<smem>>
    %165 = vector.broadcast %164 : f32 to vector<35x33xf32>
    %166 = arith.mulf %165, %163 : vector<35x33xf32>
    %167 = arith.addf %150, %166 : vector<35x33xf32>
    %c72 = arith.constant 72 : index
    %168 = memref.load %arg2[%c72] : memref<256xf32, #tpu.memory_space<smem>>
    %169 = vector.broadcast %168 : f32 to vector<35x33xf32>
    %170 = arith.mulf %169, %163 : vector<35x33xf32>
    %171 = arith.addf %154, %170 : vector<35x33xf32>
    %c136 = arith.constant 136 : index
    %172 = memref.load %arg2[%c136] : memref<256xf32, #tpu.memory_space<smem>>
    %173 = vector.broadcast %172 : f32 to vector<35x33xf32>
    %174 = arith.mulf %173, %163 : vector<35x33xf32>
    %175 = arith.addf %158, %174 : vector<35x33xf32>
    %c200 = arith.constant 200 : index
    %176 = memref.load %arg2[%c200] : memref<256xf32, #tpu.memory_space<smem>>
    %177 = vector.broadcast %176 : f32 to vector<35x33xf32>
    %178 = arith.mulf %177, %163 : vector<35x33xf32>
    %179 = arith.addf %162, %178 : vector<35x33xf32>
    %180 = vector.extract_strided_slice %18 {offsets = [38, 0], sizes = [35, 33], strides = [1, 1]} : vector<304x33xf32> to vector<35x33xf32>
    %c9 = arith.constant 9 : index
    %181 = memref.load %arg2[%c9] : memref<256xf32, #tpu.memory_space<smem>>
    %182 = vector.broadcast %181 : f32 to vector<35x33xf32>
    %183 = arith.mulf %182, %180 : vector<35x33xf32>
    %184 = arith.addf %167, %183 : vector<35x33xf32>
    %c73 = arith.constant 73 : index
    %185 = memref.load %arg2[%c73] : memref<256xf32, #tpu.memory_space<smem>>
    %186 = vector.broadcast %185 : f32 to vector<35x33xf32>
    %187 = arith.mulf %186, %180 : vector<35x33xf32>
    %188 = arith.addf %171, %187 : vector<35x33xf32>
    %c137 = arith.constant 137 : index
    %189 = memref.load %arg2[%c137] : memref<256xf32, #tpu.memory_space<smem>>
    %190 = vector.broadcast %189 : f32 to vector<35x33xf32>
    %191 = arith.mulf %190, %180 : vector<35x33xf32>
    %192 = arith.addf %175, %191 : vector<35x33xf32>
    %c201 = arith.constant 201 : index
    %193 = memref.load %arg2[%c201] : memref<256xf32, #tpu.memory_space<smem>>
    %194 = vector.broadcast %193 : f32 to vector<35x33xf32>
    %195 = arith.mulf %194, %180 : vector<35x33xf32>
    %196 = arith.addf %179, %195 : vector<35x33xf32>
    %197 = vector.extract_strided_slice %10 {offsets = [39, 0], sizes = [35, 33], strides = [1, 1]} : vector<304x33xf32> to vector<35x33xf32>
    %c10 = arith.constant 10 : index
    %198 = memref.load %arg2[%c10] : memref<256xf32, #tpu.memory_space<smem>>
    %199 = vector.broadcast %198 : f32 to vector<35x33xf32>
    %200 = arith.mulf %199, %197 : vector<35x33xf32>
    %201 = arith.addf %184, %200 : vector<35x33xf32>
    %c74 = arith.constant 74 : index
    %202 = memref.load %arg2[%c74] : memref<256xf32, #tpu.memory_space<smem>>
    %203 = vector.broadcast %202 : f32 to vector<35x33xf32>
    %204 = arith.mulf %203, %197 : vector<35x33xf32>
    %205 = arith.addf %188, %204 : vector<35x33xf32>
    %c138 = arith.constant 138 : index
    %206 = memref.load %arg2[%c138] : memref<256xf32, #tpu.memory_space<smem>>
    %207 = vector.broadcast %206 : f32 to vector<35x33xf32>
    %208 = arith.mulf %207, %197 : vector<35x33xf32>
    %209 = arith.addf %192, %208 : vector<35x33xf32>
    %c202 = arith.constant 202 : index
    %210 = memref.load %arg2[%c202] : memref<256xf32, #tpu.memory_space<smem>>
    %211 = vector.broadcast %210 : f32 to vector<35x33xf32>
    %212 = arith.mulf %211, %197 : vector<35x33xf32>
    %213 = arith.addf %196, %212 : vector<35x33xf32>
    %214 = vector.extract_strided_slice %18 {offsets = [39, 0], sizes = [35, 33], strides = [1, 1]} : vector<304x33xf32> to vector<35x33xf32>
    %c11 = arith.constant 11 : index
    %215 = memref.load %arg2[%c11] : memref<256xf32, #tpu.memory_space<smem>>
    %216 = vector.broadcast %215 : f32 to vector<35x33xf32>
    %217 = arith.mulf %216, %214 : vector<35x33xf32>
    %218 = arith.addf %201, %217 : vector<35x33xf32>
    %c75 = arith.constant 75 : index
    %219 = memref.load %arg2[%c75] : memref<256xf32, #tpu.memory_space<smem>>
    %220 = vector.broadcast %219 : f32 to vector<35x33xf32>
    %221 = arith.mulf %220, %214 : vector<35x33xf32>
    %222 = arith.addf %205, %221 : vector<35x33xf32>
    %c139 = arith.constant 139 : index
    %223 = memref.load %arg2[%c139] : memref<256xf32, #tpu.memory_space<smem>>
    %224 = vector.broadcast %223 : f32 to vector<35x33xf32>
    %225 = arith.mulf %224, %214 : vector<35x33xf32>
    %226 = arith.addf %209, %225 : vector<35x33xf32>
    %c203 = arith.constant 203 : index
    %227 = memref.load %arg2[%c203] : memref<256xf32, #tpu.memory_space<smem>>
    %228 = vector.broadcast %227 : f32 to vector<35x33xf32>
    %229 = arith.mulf %228, %214 : vector<35x33xf32>
    %230 = arith.addf %213, %229 : vector<35x33xf32>
    %231 = vector.extract_strided_slice %10 {offsets = [40, 0], sizes = [35, 33], strides = [1, 1]} : vector<304x33xf32> to vector<35x33xf32>
    %c12 = arith.constant 12 : index
    %232 = memref.load %arg2[%c12] : memref<256xf32, #tpu.memory_space<smem>>
    %233 = vector.broadcast %232 : f32 to vector<35x33xf32>
    %234 = arith.mulf %233, %231 : vector<35x33xf32>
    %235 = arith.addf %218, %234 : vector<35x33xf32>
    %c76 = arith.constant 76 : index
    %236 = memref.load %arg2[%c76] : memref<256xf32, #tpu.memory_space<smem>>
    %237 = vector.broadcast %236 : f32 to vector<35x33xf32>
    %238 = arith.mulf %237, %231 : vector<35x33xf32>
    %239 = arith.addf %222, %238 : vector<35x33xf32>
    %c140 = arith.constant 140 : index
    %240 = memref.load %arg2[%c140] : memref<256xf32, #tpu.memory_space<smem>>
    %241 = vector.broadcast %240 : f32 to vector<35x33xf32>
    %242 = arith.mulf %241, %231 : vector<35x33xf32>
    %243 = arith.addf %226, %242 : vector<35x33xf32>
    %c204 = arith.constant 204 : index
    %244 = memref.load %arg2[%c204] : memref<256xf32, #tpu.memory_space<smem>>
    %245 = vector.broadcast %244 : f32 to vector<35x33xf32>
    %246 = arith.mulf %245, %231 : vector<35x33xf32>
    %247 = arith.addf %230, %246 : vector<35x33xf32>
    %248 = vector.extract_strided_slice %18 {offsets = [40, 0], sizes = [35, 33], strides = [1, 1]} : vector<304x33xf32> to vector<35x33xf32>
    %c13 = arith.constant 13 : index
    %249 = memref.load %arg2[%c13] : memref<256xf32, #tpu.memory_space<smem>>
    %250 = vector.broadcast %249 : f32 to vector<35x33xf32>
    %251 = arith.mulf %250, %248 : vector<35x33xf32>
    %252 = arith.addf %235, %251 : vector<35x33xf32>
    %c77 = arith.constant 77 : index
    %253 = memref.load %arg2[%c77] : memref<256xf32, #tpu.memory_space<smem>>
    %254 = vector.broadcast %253 : f32 to vector<35x33xf32>
    %255 = arith.mulf %254, %248 : vector<35x33xf32>
    %256 = arith.addf %239, %255 : vector<35x33xf32>
    %c141 = arith.constant 141 : index
    %257 = memref.load %arg2[%c141] : memref<256xf32, #tpu.memory_space<smem>>
    %258 = vector.broadcast %257 : f32 to vector<35x33xf32>
    %259 = arith.mulf %258, %248 : vector<35x33xf32>
    %260 = arith.addf %243, %259 : vector<35x33xf32>
    %c205 = arith.constant 205 : index
    %261 = memref.load %arg2[%c205] : memref<256xf32, #tpu.memory_space<smem>>
    %262 = vector.broadcast %261 : f32 to vector<35x33xf32>
    %263 = arith.mulf %262, %248 : vector<35x33xf32>
    %264 = arith.addf %247, %263 : vector<35x33xf32>
    %265 = vector.extract_strided_slice %10 {offsets = [41, 0], sizes = [35, 33], strides = [1, 1]} : vector<304x33xf32> to vector<35x33xf32>
    %c14 = arith.constant 14 : index
    %266 = memref.load %arg2[%c14] : memref<256xf32, #tpu.memory_space<smem>>
    %267 = vector.broadcast %266 : f32 to vector<35x33xf32>
    %268 = arith.mulf %267, %265 : vector<35x33xf32>
    %269 = arith.addf %252, %268 : vector<35x33xf32>
    %c78 = arith.constant 78 : index
    %270 = memref.load %arg2[%c78] : memref<256xf32, #tpu.memory_space<smem>>
    %271 = vector.broadcast %270 : f32 to vector<35x33xf32>
    %272 = arith.mulf %271, %265 : vector<35x33xf32>
    %273 = arith.addf %256, %272 : vector<35x33xf32>
    %c142 = arith.constant 142 : index
    %274 = memref.load %arg2[%c142] : memref<256xf32, #tpu.memory_space<smem>>
    %275 = vector.broadcast %274 : f32 to vector<35x33xf32>
    %276 = arith.mulf %275, %265 : vector<35x33xf32>
    %277 = arith.addf %260, %276 : vector<35x33xf32>
    %c206 = arith.constant 206 : index
    %278 = memref.load %arg2[%c206] : memref<256xf32, #tpu.memory_space<smem>>
    %279 = vector.broadcast %278 : f32 to vector<35x33xf32>
    %280 = arith.mulf %279, %265 : vector<35x33xf32>
    %281 = arith.addf %264, %280 : vector<35x33xf32>
    %282 = vector.extract_strided_slice %18 {offsets = [41, 0], sizes = [35, 33], strides = [1, 1]} : vector<304x33xf32> to vector<35x33xf32>
    %c15 = arith.constant 15 : index
    %283 = memref.load %arg2[%c15] : memref<256xf32, #tpu.memory_space<smem>>
    %284 = vector.broadcast %283 : f32 to vector<35x33xf32>
    %285 = arith.mulf %284, %282 : vector<35x33xf32>
    %286 = arith.addf %269, %285 : vector<35x33xf32>
    %c79 = arith.constant 79 : index
    %287 = memref.load %arg2[%c79] : memref<256xf32, #tpu.memory_space<smem>>
    %288 = vector.broadcast %287 : f32 to vector<35x33xf32>
    %289 = arith.mulf %288, %282 : vector<35x33xf32>
    %290 = arith.addf %273, %289 : vector<35x33xf32>
    %c143 = arith.constant 143 : index
    %291 = memref.load %arg2[%c143] : memref<256xf32, #tpu.memory_space<smem>>
    %292 = vector.broadcast %291 : f32 to vector<35x33xf32>
    %293 = arith.mulf %292, %282 : vector<35x33xf32>
    %294 = arith.addf %277, %293 : vector<35x33xf32>
    %c207 = arith.constant 207 : index
    %295 = memref.load %arg2[%c207] : memref<256xf32, #tpu.memory_space<smem>>
    %296 = vector.broadcast %295 : f32 to vector<35x33xf32>
    %297 = arith.mulf %296, %282 : vector<35x33xf32>
    %298 = arith.addf %281, %297 : vector<35x33xf32>
    %299 = vector.extract_strided_slice %10 {offsets = [76, 0], sizes = [35, 33], strides = [1, 1]} : vector<304x33xf32> to vector<35x33xf32>
    %c16 = arith.constant 16 : index
    %300 = memref.load %arg2[%c16] : memref<256xf32, #tpu.memory_space<smem>>
    %301 = vector.broadcast %300 : f32 to vector<35x33xf32>
    %302 = arith.mulf %301, %299 : vector<35x33xf32>
    %303 = arith.addf %286, %302 : vector<35x33xf32>
    %c80 = arith.constant 80 : index
    %304 = memref.load %arg2[%c80] : memref<256xf32, #tpu.memory_space<smem>>
    %305 = vector.broadcast %304 : f32 to vector<35x33xf32>
    %306 = arith.mulf %305, %299 : vector<35x33xf32>
    %307 = arith.addf %290, %306 : vector<35x33xf32>
    %c144 = arith.constant 144 : index
    %308 = memref.load %arg2[%c144] : memref<256xf32, #tpu.memory_space<smem>>
    %309 = vector.broadcast %308 : f32 to vector<35x33xf32>
    %310 = arith.mulf %309, %299 : vector<35x33xf32>
    %311 = arith.addf %294, %310 : vector<35x33xf32>
    %c208 = arith.constant 208 : index
    %312 = memref.load %arg2[%c208] : memref<256xf32, #tpu.memory_space<smem>>
    %313 = vector.broadcast %312 : f32 to vector<35x33xf32>
    %314 = arith.mulf %313, %299 : vector<35x33xf32>
    %315 = arith.addf %298, %314 : vector<35x33xf32>
    %316 = vector.extract_strided_slice %18 {offsets = [76, 0], sizes = [35, 33], strides = [1, 1]} : vector<304x33xf32> to vector<35x33xf32>
    %c17 = arith.constant 17 : index
    %317 = memref.load %arg2[%c17] : memref<256xf32, #tpu.memory_space<smem>>
    %318 = vector.broadcast %317 : f32 to vector<35x33xf32>
    %319 = arith.mulf %318, %316 : vector<35x33xf32>
    %320 = arith.addf %303, %319 : vector<35x33xf32>
    %c81 = arith.constant 81 : index
    %321 = memref.load %arg2[%c81] : memref<256xf32, #tpu.memory_space<smem>>
    %322 = vector.broadcast %321 : f32 to vector<35x33xf32>
    %323 = arith.mulf %322, %316 : vector<35x33xf32>
    %324 = arith.addf %307, %323 : vector<35x33xf32>
    %c145 = arith.constant 145 : index
    %325 = memref.load %arg2[%c145] : memref<256xf32, #tpu.memory_space<smem>>
    %326 = vector.broadcast %325 : f32 to vector<35x33xf32>
    %327 = arith.mulf %326, %316 : vector<35x33xf32>
    %328 = arith.addf %311, %327 : vector<35x33xf32>
    %c209 = arith.constant 209 : index
    %329 = memref.load %arg2[%c209] : memref<256xf32, #tpu.memory_space<smem>>
    %330 = vector.broadcast %329 : f32 to vector<35x33xf32>
    %331 = arith.mulf %330, %316 : vector<35x33xf32>
    %332 = arith.addf %315, %331 : vector<35x33xf32>
    %333 = vector.extract_strided_slice %10 {offsets = [77, 0], sizes = [35, 33], strides = [1, 1]} : vector<304x33xf32> to vector<35x33xf32>
    %c18 = arith.constant 18 : index
    %334 = memref.load %arg2[%c18] : memref<256xf32, #tpu.memory_space<smem>>
    %335 = vector.broadcast %334 : f32 to vector<35x33xf32>
    %336 = arith.mulf %335, %333 : vector<35x33xf32>
    %337 = arith.addf %320, %336 : vector<35x33xf32>
    %c82 = arith.constant 82 : index
    %338 = memref.load %arg2[%c82] : memref<256xf32, #tpu.memory_space<smem>>
    %339 = vector.broadcast %338 : f32 to vector<35x33xf32>
    %340 = arith.mulf %339, %333 : vector<35x33xf32>
    %341 = arith.addf %324, %340 : vector<35x33xf32>
    %c146 = arith.constant 146 : index
    %342 = memref.load %arg2[%c146] : memref<256xf32, #tpu.memory_space<smem>>
    %343 = vector.broadcast %342 : f32 to vector<35x33xf32>
    %344 = arith.mulf %343, %333 : vector<35x33xf32>
    %345 = arith.addf %328, %344 : vector<35x33xf32>
    %c210 = arith.constant 210 : index
    %346 = memref.load %arg2[%c210] : memref<256xf32, #tpu.memory_space<smem>>
    %347 = vector.broadcast %346 : f32 to vector<35x33xf32>
    %348 = arith.mulf %347, %333 : vector<35x33xf32>
    %349 = arith.addf %332, %348 : vector<35x33xf32>
    %350 = vector.extract_strided_slice %18 {offsets = [77, 0], sizes = [35, 33], strides = [1, 1]} : vector<304x33xf32> to vector<35x33xf32>
    %c19 = arith.constant 19 : index
    %351 = memref.load %arg2[%c19] : memref<256xf32, #tpu.memory_space<smem>>
    %352 = vector.broadcast %351 : f32 to vector<35x33xf32>
    %353 = arith.mulf %352, %350 : vector<35x33xf32>
    %354 = arith.addf %337, %353 : vector<35x33xf32>
    %c83 = arith.constant 83 : index
    %355 = memref.load %arg2[%c83] : memref<256xf32, #tpu.memory_space<smem>>
    %356 = vector.broadcast %355 : f32 to vector<35x33xf32>
    %357 = arith.mulf %356, %350 : vector<35x33xf32>
    %358 = arith.addf %341, %357 : vector<35x33xf32>
    %c147 = arith.constant 147 : index
    %359 = memref.load %arg2[%c147] : memref<256xf32, #tpu.memory_space<smem>>
    %360 = vector.broadcast %359 : f32 to vector<35x33xf32>
    %361 = arith.mulf %360, %350 : vector<35x33xf32>
    %362 = arith.addf %345, %361 : vector<35x33xf32>
    %c211 = arith.constant 211 : index
    %363 = memref.load %arg2[%c211] : memref<256xf32, #tpu.memory_space<smem>>
    %364 = vector.broadcast %363 : f32 to vector<35x33xf32>
    %365 = arith.mulf %364, %350 : vector<35x33xf32>
    %366 = arith.addf %349, %365 : vector<35x33xf32>
    %367 = vector.extract_strided_slice %10 {offsets = [78, 0], sizes = [35, 33], strides = [1, 1]} : vector<304x33xf32> to vector<35x33xf32>
    %c20 = arith.constant 20 : index
    %368 = memref.load %arg2[%c20] : memref<256xf32, #tpu.memory_space<smem>>
    %369 = vector.broadcast %368 : f32 to vector<35x33xf32>
    %370 = arith.mulf %369, %367 : vector<35x33xf32>
    %371 = arith.addf %354, %370 : vector<35x33xf32>
    %c84 = arith.constant 84 : index
    %372 = memref.load %arg2[%c84] : memref<256xf32, #tpu.memory_space<smem>>
    %373 = vector.broadcast %372 : f32 to vector<35x33xf32>
    %374 = arith.mulf %373, %367 : vector<35x33xf32>
    %375 = arith.addf %358, %374 : vector<35x33xf32>
    %c148 = arith.constant 148 : index
    %376 = memref.load %arg2[%c148] : memref<256xf32, #tpu.memory_space<smem>>
    %377 = vector.broadcast %376 : f32 to vector<35x33xf32>
    %378 = arith.mulf %377, %367 : vector<35x33xf32>
    %379 = arith.addf %362, %378 : vector<35x33xf32>
    %c212 = arith.constant 212 : index
    %380 = memref.load %arg2[%c212] : memref<256xf32, #tpu.memory_space<smem>>
    %381 = vector.broadcast %380 : f32 to vector<35x33xf32>
    %382 = arith.mulf %381, %367 : vector<35x33xf32>
    %383 = arith.addf %366, %382 : vector<35x33xf32>
    %384 = vector.extract_strided_slice %18 {offsets = [78, 0], sizes = [35, 33], strides = [1, 1]} : vector<304x33xf32> to vector<35x33xf32>
    %c21 = arith.constant 21 : index
    %385 = memref.load %arg2[%c21] : memref<256xf32, #tpu.memory_space<smem>>
    %386 = vector.broadcast %385 : f32 to vector<35x33xf32>
    %387 = arith.mulf %386, %384 : vector<35x33xf32>
    %388 = arith.addf %371, %387 : vector<35x33xf32>
    %c85 = arith.constant 85 : index
    %389 = memref.load %arg2[%c85] : memref<256xf32, #tpu.memory_space<smem>>
    %390 = vector.broadcast %389 : f32 to vector<35x33xf32>
    %391 = arith.mulf %390, %384 : vector<35x33xf32>
    %392 = arith.addf %375, %391 : vector<35x33xf32>
    %c149 = arith.constant 149 : index
    %393 = memref.load %arg2[%c149] : memref<256xf32, #tpu.memory_space<smem>>
    %394 = vector.broadcast %393 : f32 to vector<35x33xf32>
    %395 = arith.mulf %394, %384 : vector<35x33xf32>
    %396 = arith.addf %379, %395 : vector<35x33xf32>
    %c213 = arith.constant 213 : index
    %397 = memref.load %arg2[%c213] : memref<256xf32, #tpu.memory_space<smem>>
    %398 = vector.broadcast %397 : f32 to vector<35x33xf32>
    %399 = arith.mulf %398, %384 : vector<35x33xf32>
    %400 = arith.addf %383, %399 : vector<35x33xf32>
    %401 = vector.extract_strided_slice %10 {offsets = [79, 0], sizes = [35, 33], strides = [1, 1]} : vector<304x33xf32> to vector<35x33xf32>
    %c22 = arith.constant 22 : index
    %402 = memref.load %arg2[%c22] : memref<256xf32, #tpu.memory_space<smem>>
    %403 = vector.broadcast %402 : f32 to vector<35x33xf32>
    %404 = arith.mulf %403, %401 : vector<35x33xf32>
    %405 = arith.addf %388, %404 : vector<35x33xf32>
    %c86 = arith.constant 86 : index
    %406 = memref.load %arg2[%c86] : memref<256xf32, #tpu.memory_space<smem>>
    %407 = vector.broadcast %406 : f32 to vector<35x33xf32>
    %408 = arith.mulf %407, %401 : vector<35x33xf32>
    %409 = arith.addf %392, %408 : vector<35x33xf32>
    %c150 = arith.constant 150 : index
    %410 = memref.load %arg2[%c150] : memref<256xf32, #tpu.memory_space<smem>>
    %411 = vector.broadcast %410 : f32 to vector<35x33xf32>
    %412 = arith.mulf %411, %401 : vector<35x33xf32>
    %413 = arith.addf %396, %412 : vector<35x33xf32>
    %c214 = arith.constant 214 : index
    %414 = memref.load %arg2[%c214] : memref<256xf32, #tpu.memory_space<smem>>
    %415 = vector.broadcast %414 : f32 to vector<35x33xf32>
    %416 = arith.mulf %415, %401 : vector<35x33xf32>
    %417 = arith.addf %400, %416 : vector<35x33xf32>
    %418 = vector.extract_strided_slice %18 {offsets = [79, 0], sizes = [35, 33], strides = [1, 1]} : vector<304x33xf32> to vector<35x33xf32>
    %c23 = arith.constant 23 : index
    %419 = memref.load %arg2[%c23] : memref<256xf32, #tpu.memory_space<smem>>
    %420 = vector.broadcast %419 : f32 to vector<35x33xf32>
    %421 = arith.mulf %420, %418 : vector<35x33xf32>
    %422 = arith.addf %405, %421 : vector<35x33xf32>
    %c87 = arith.constant 87 : index
    %423 = memref.load %arg2[%c87] : memref<256xf32, #tpu.memory_space<smem>>
    %424 = vector.broadcast %423 : f32 to vector<35x33xf32>
    %425 = arith.mulf %424, %418 : vector<35x33xf32>
    %426 = arith.addf %409, %425 : vector<35x33xf32>
    %c151 = arith.constant 151 : index
    %427 = memref.load %arg2[%c151] : memref<256xf32, #tpu.memory_space<smem>>
    %428 = vector.broadcast %427 : f32 to vector<35x33xf32>
    %429 = arith.mulf %428, %418 : vector<35x33xf32>
    %430 = arith.addf %413, %429 : vector<35x33xf32>
    %c215 = arith.constant 215 : index
    %431 = memref.load %arg2[%c215] : memref<256xf32, #tpu.memory_space<smem>>
    %432 = vector.broadcast %431 : f32 to vector<35x33xf32>
    %433 = arith.mulf %432, %418 : vector<35x33xf32>
    %434 = arith.addf %417, %433 : vector<35x33xf32>
    %435 = vector.extract_strided_slice %10 {offsets = [114, 0], sizes = [35, 33], strides = [1, 1]} : vector<304x33xf32> to vector<35x33xf32>
    %c24 = arith.constant 24 : index
    %436 = memref.load %arg2[%c24] : memref<256xf32, #tpu.memory_space<smem>>
    %437 = vector.broadcast %436 : f32 to vector<35x33xf32>
    %438 = arith.mulf %437, %435 : vector<35x33xf32>
    %439 = arith.addf %422, %438 : vector<35x33xf32>
    %c88 = arith.constant 88 : index
    %440 = memref.load %arg2[%c88] : memref<256xf32, #tpu.memory_space<smem>>
    %441 = vector.broadcast %440 : f32 to vector<35x33xf32>
    %442 = arith.mulf %441, %435 : vector<35x33xf32>
    %443 = arith.addf %426, %442 : vector<35x33xf32>
    %c152 = arith.constant 152 : index
    %444 = memref.load %arg2[%c152] : memref<256xf32, #tpu.memory_space<smem>>
    %445 = vector.broadcast %444 : f32 to vector<35x33xf32>
    %446 = arith.mulf %445, %435 : vector<35x33xf32>
    %447 = arith.addf %430, %446 : vector<35x33xf32>
    %c216 = arith.constant 216 : index
    %448 = memref.load %arg2[%c216] : memref<256xf32, #tpu.memory_space<smem>>
    %449 = vector.broadcast %448 : f32 to vector<35x33xf32>
    %450 = arith.mulf %449, %435 : vector<35x33xf32>
    %451 = arith.addf %434, %450 : vector<35x33xf32>
    %452 = vector.extract_strided_slice %18 {offsets = [114, 0], sizes = [35, 33], strides = [1, 1]} : vector<304x33xf32> to vector<35x33xf32>
    %c25 = arith.constant 25 : index
    %453 = memref.load %arg2[%c25] : memref<256xf32, #tpu.memory_space<smem>>
    %454 = vector.broadcast %453 : f32 to vector<35x33xf32>
    %455 = arith.mulf %454, %452 : vector<35x33xf32>
    %456 = arith.addf %439, %455 : vector<35x33xf32>
    %c89 = arith.constant 89 : index
    %457 = memref.load %arg2[%c89] : memref<256xf32, #tpu.memory_space<smem>>
    %458 = vector.broadcast %457 : f32 to vector<35x33xf32>
    %459 = arith.mulf %458, %452 : vector<35x33xf32>
    %460 = arith.addf %443, %459 : vector<35x33xf32>
    %c153 = arith.constant 153 : index
    %461 = memref.load %arg2[%c153] : memref<256xf32, #tpu.memory_space<smem>>
    %462 = vector.broadcast %461 : f32 to vector<35x33xf32>
    %463 = arith.mulf %462, %452 : vector<35x33xf32>
    %464 = arith.addf %447, %463 : vector<35x33xf32>
    %c217 = arith.constant 217 : index
    %465 = memref.load %arg2[%c217] : memref<256xf32, #tpu.memory_space<smem>>
    %466 = vector.broadcast %465 : f32 to vector<35x33xf32>
    %467 = arith.mulf %466, %452 : vector<35x33xf32>
    %468 = arith.addf %451, %467 : vector<35x33xf32>
    %469 = vector.extract_strided_slice %10 {offsets = [115, 0], sizes = [35, 33], strides = [1, 1]} : vector<304x33xf32> to vector<35x33xf32>
    %c26 = arith.constant 26 : index
    %470 = memref.load %arg2[%c26] : memref<256xf32, #tpu.memory_space<smem>>
    %471 = vector.broadcast %470 : f32 to vector<35x33xf32>
    %472 = arith.mulf %471, %469 : vector<35x33xf32>
    %473 = arith.addf %456, %472 : vector<35x33xf32>
    %c90 = arith.constant 90 : index
    %474 = memref.load %arg2[%c90] : memref<256xf32, #tpu.memory_space<smem>>
    %475 = vector.broadcast %474 : f32 to vector<35x33xf32>
    %476 = arith.mulf %475, %469 : vector<35x33xf32>
    %477 = arith.addf %460, %476 : vector<35x33xf32>
    %c154 = arith.constant 154 : index
    %478 = memref.load %arg2[%c154] : memref<256xf32, #tpu.memory_space<smem>>
    %479 = vector.broadcast %478 : f32 to vector<35x33xf32>
    %480 = arith.mulf %479, %469 : vector<35x33xf32>
    %481 = arith.addf %464, %480 : vector<35x33xf32>
    %c218 = arith.constant 218 : index
    %482 = memref.load %arg2[%c218] : memref<256xf32, #tpu.memory_space<smem>>
    %483 = vector.broadcast %482 : f32 to vector<35x33xf32>
    %484 = arith.mulf %483, %469 : vector<35x33xf32>
    %485 = arith.addf %468, %484 : vector<35x33xf32>
    %486 = vector.extract_strided_slice %18 {offsets = [115, 0], sizes = [35, 33], strides = [1, 1]} : vector<304x33xf32> to vector<35x33xf32>
    %c27 = arith.constant 27 : index
    %487 = memref.load %arg2[%c27] : memref<256xf32, #tpu.memory_space<smem>>
    %488 = vector.broadcast %487 : f32 to vector<35x33xf32>
    %489 = arith.mulf %488, %486 : vector<35x33xf32>
    %490 = arith.addf %473, %489 : vector<35x33xf32>
    %c91 = arith.constant 91 : index
    %491 = memref.load %arg2[%c91] : memref<256xf32, #tpu.memory_space<smem>>
    %492 = vector.broadcast %491 : f32 to vector<35x33xf32>
    %493 = arith.mulf %492, %486 : vector<35x33xf32>
    %494 = arith.addf %477, %493 : vector<35x33xf32>
    %c155 = arith.constant 155 : index
    %495 = memref.load %arg2[%c155] : memref<256xf32, #tpu.memory_space<smem>>
    %496 = vector.broadcast %495 : f32 to vector<35x33xf32>
    %497 = arith.mulf %496, %486 : vector<35x33xf32>
    %498 = arith.addf %481, %497 : vector<35x33xf32>
    %c219 = arith.constant 219 : index
    %499 = memref.load %arg2[%c219] : memref<256xf32, #tpu.memory_space<smem>>
    %500 = vector.broadcast %499 : f32 to vector<35x33xf32>
    %501 = arith.mulf %500, %486 : vector<35x33xf32>
    %502 = arith.addf %485, %501 : vector<35x33xf32>
    %503 = vector.extract_strided_slice %10 {offsets = [116, 0], sizes = [35, 33], strides = [1, 1]} : vector<304x33xf32> to vector<35x33xf32>
    %c28 = arith.constant 28 : index
    %504 = memref.load %arg2[%c28] : memref<256xf32, #tpu.memory_space<smem>>
    %505 = vector.broadcast %504 : f32 to vector<35x33xf32>
    %506 = arith.mulf %505, %503 : vector<35x33xf32>
    %507 = arith.addf %490, %506 : vector<35x33xf32>
    %c92 = arith.constant 92 : index
    %508 = memref.load %arg2[%c92] : memref<256xf32, #tpu.memory_space<smem>>
    %509 = vector.broadcast %508 : f32 to vector<35x33xf32>
    %510 = arith.mulf %509, %503 : vector<35x33xf32>
    %511 = arith.addf %494, %510 : vector<35x33xf32>
    %c156 = arith.constant 156 : index
    %512 = memref.load %arg2[%c156] : memref<256xf32, #tpu.memory_space<smem>>
    %513 = vector.broadcast %512 : f32 to vector<35x33xf32>
    %514 = arith.mulf %513, %503 : vector<35x33xf32>
    %515 = arith.addf %498, %514 : vector<35x33xf32>
    %c220 = arith.constant 220 : index
    %516 = memref.load %arg2[%c220] : memref<256xf32, #tpu.memory_space<smem>>
    %517 = vector.broadcast %516 : f32 to vector<35x33xf32>
    %518 = arith.mulf %517, %503 : vector<35x33xf32>
    %519 = arith.addf %502, %518 : vector<35x33xf32>
    %520 = vector.extract_strided_slice %18 {offsets = [116, 0], sizes = [35, 33], strides = [1, 1]} : vector<304x33xf32> to vector<35x33xf32>
    %c29 = arith.constant 29 : index
    %521 = memref.load %arg2[%c29] : memref<256xf32, #tpu.memory_space<smem>>
    %522 = vector.broadcast %521 : f32 to vector<35x33xf32>
    %523 = arith.mulf %522, %520 : vector<35x33xf32>
    %524 = arith.addf %507, %523 : vector<35x33xf32>
    %c93 = arith.constant 93 : index
    %525 = memref.load %arg2[%c93] : memref<256xf32, #tpu.memory_space<smem>>
    %526 = vector.broadcast %525 : f32 to vector<35x33xf32>
    %527 = arith.mulf %526, %520 : vector<35x33xf32>
    %528 = arith.addf %511, %527 : vector<35x33xf32>
    %c157 = arith.constant 157 : index
    %529 = memref.load %arg2[%c157] : memref<256xf32, #tpu.memory_space<smem>>
    %530 = vector.broadcast %529 : f32 to vector<35x33xf32>
    %531 = arith.mulf %530, %520 : vector<35x33xf32>
    %532 = arith.addf %515, %531 : vector<35x33xf32>
    %c221 = arith.constant 221 : index
    %533 = memref.load %arg2[%c221] : memref<256xf32, #tpu.memory_space<smem>>
    %534 = vector.broadcast %533 : f32 to vector<35x33xf32>
    %535 = arith.mulf %534, %520 : vector<35x33xf32>
    %536 = arith.addf %519, %535 : vector<35x33xf32>
    %537 = vector.extract_strided_slice %10 {offsets = [117, 0], sizes = [35, 33], strides = [1, 1]} : vector<304x33xf32> to vector<35x33xf32>
    %c30 = arith.constant 30 : index
    %538 = memref.load %arg2[%c30] : memref<256xf32, #tpu.memory_space<smem>>
    %539 = vector.broadcast %538 : f32 to vector<35x33xf32>
    %540 = arith.mulf %539, %537 : vector<35x33xf32>
    %541 = arith.addf %524, %540 : vector<35x33xf32>
    %c94 = arith.constant 94 : index
    %542 = memref.load %arg2[%c94] : memref<256xf32, #tpu.memory_space<smem>>
    %543 = vector.broadcast %542 : f32 to vector<35x33xf32>
    %544 = arith.mulf %543, %537 : vector<35x33xf32>
    %545 = arith.addf %528, %544 : vector<35x33xf32>
    %c158 = arith.constant 158 : index
    %546 = memref.load %arg2[%c158] : memref<256xf32, #tpu.memory_space<smem>>
    %547 = vector.broadcast %546 : f32 to vector<35x33xf32>
    %548 = arith.mulf %547, %537 : vector<35x33xf32>
    %549 = arith.addf %532, %548 : vector<35x33xf32>
    %c222 = arith.constant 222 : index
    %550 = memref.load %arg2[%c222] : memref<256xf32, #tpu.memory_space<smem>>
    %551 = vector.broadcast %550 : f32 to vector<35x33xf32>
    %552 = arith.mulf %551, %537 : vector<35x33xf32>
    %553 = arith.addf %536, %552 : vector<35x33xf32>
    %554 = vector.extract_strided_slice %18 {offsets = [117, 0], sizes = [35, 33], strides = [1, 1]} : vector<304x33xf32> to vector<35x33xf32>
    %c31 = arith.constant 31 : index
    %555 = memref.load %arg2[%c31] : memref<256xf32, #tpu.memory_space<smem>>
    %556 = vector.broadcast %555 : f32 to vector<35x33xf32>
    %557 = arith.mulf %556, %554 : vector<35x33xf32>
    %558 = arith.addf %541, %557 : vector<35x33xf32>
    %c95 = arith.constant 95 : index
    %559 = memref.load %arg2[%c95] : memref<256xf32, #tpu.memory_space<smem>>
    %560 = vector.broadcast %559 : f32 to vector<35x33xf32>
    %561 = arith.mulf %560, %554 : vector<35x33xf32>
    %562 = arith.addf %545, %561 : vector<35x33xf32>
    %c159 = arith.constant 159 : index
    %563 = memref.load %arg2[%c159] : memref<256xf32, #tpu.memory_space<smem>>
    %564 = vector.broadcast %563 : f32 to vector<35x33xf32>
    %565 = arith.mulf %564, %554 : vector<35x33xf32>
    %566 = arith.addf %549, %565 : vector<35x33xf32>
    %c223 = arith.constant 223 : index
    %567 = memref.load %arg2[%c223] : memref<256xf32, #tpu.memory_space<smem>>
    %568 = vector.broadcast %567 : f32 to vector<35x33xf32>
    %569 = arith.mulf %568, %554 : vector<35x33xf32>
    %570 = arith.addf %553, %569 : vector<35x33xf32>
    %571 = vector.extract_strided_slice %10 {offsets = [152, 0], sizes = [35, 33], strides = [1, 1]} : vector<304x33xf32> to vector<35x33xf32>
    %c32 = arith.constant 32 : index
    %572 = memref.load %arg2[%c32] : memref<256xf32, #tpu.memory_space<smem>>
    %573 = vector.broadcast %572 : f32 to vector<35x33xf32>
    %574 = arith.mulf %573, %571 : vector<35x33xf32>
    %575 = arith.addf %558, %574 : vector<35x33xf32>
    %c96 = arith.constant 96 : index
    %576 = memref.load %arg2[%c96] : memref<256xf32, #tpu.memory_space<smem>>
    %577 = vector.broadcast %576 : f32 to vector<35x33xf32>
    %578 = arith.mulf %577, %571 : vector<35x33xf32>
    %579 = arith.addf %562, %578 : vector<35x33xf32>
    %c160 = arith.constant 160 : index
    %580 = memref.load %arg2[%c160] : memref<256xf32, #tpu.memory_space<smem>>
    %581 = vector.broadcast %580 : f32 to vector<35x33xf32>
    %582 = arith.mulf %581, %571 : vector<35x33xf32>
    %583 = arith.addf %566, %582 : vector<35x33xf32>
    %c224 = arith.constant 224 : index
    %584 = memref.load %arg2[%c224] : memref<256xf32, #tpu.memory_space<smem>>
    %585 = vector.broadcast %584 : f32 to vector<35x33xf32>
    %586 = arith.mulf %585, %571 : vector<35x33xf32>
    %587 = arith.addf %570, %586 : vector<35x33xf32>
    %588 = vector.extract_strided_slice %18 {offsets = [152, 0], sizes = [35, 33], strides = [1, 1]} : vector<304x33xf32> to vector<35x33xf32>
    %c33 = arith.constant 33 : index
    %589 = memref.load %arg2[%c33] : memref<256xf32, #tpu.memory_space<smem>>
    %590 = vector.broadcast %589 : f32 to vector<35x33xf32>
    %591 = arith.mulf %590, %588 : vector<35x33xf32>
    %592 = arith.addf %575, %591 : vector<35x33xf32>
    %c97 = arith.constant 97 : index
    %593 = memref.load %arg2[%c97] : memref<256xf32, #tpu.memory_space<smem>>
    %594 = vector.broadcast %593 : f32 to vector<35x33xf32>
    %595 = arith.mulf %594, %588 : vector<35x33xf32>
    %596 = arith.addf %579, %595 : vector<35x33xf32>
    %c161 = arith.constant 161 : index
    %597 = memref.load %arg2[%c161] : memref<256xf32, #tpu.memory_space<smem>>
    %598 = vector.broadcast %597 : f32 to vector<35x33xf32>
    %599 = arith.mulf %598, %588 : vector<35x33xf32>
    %600 = arith.addf %583, %599 : vector<35x33xf32>
    %c225 = arith.constant 225 : index
    %601 = memref.load %arg2[%c225] : memref<256xf32, #tpu.memory_space<smem>>
    %602 = vector.broadcast %601 : f32 to vector<35x33xf32>
    %603 = arith.mulf %602, %588 : vector<35x33xf32>
    %604 = arith.addf %587, %603 : vector<35x33xf32>
    %605 = vector.extract_strided_slice %10 {offsets = [153, 0], sizes = [35, 33], strides = [1, 1]} : vector<304x33xf32> to vector<35x33xf32>
    %c34 = arith.constant 34 : index
    %606 = memref.load %arg2[%c34] : memref<256xf32, #tpu.memory_space<smem>>
    %607 = vector.broadcast %606 : f32 to vector<35x33xf32>
    %608 = arith.mulf %607, %605 : vector<35x33xf32>
    %609 = arith.addf %592, %608 : vector<35x33xf32>
    %c98 = arith.constant 98 : index
    %610 = memref.load %arg2[%c98] : memref<256xf32, #tpu.memory_space<smem>>
    %611 = vector.broadcast %610 : f32 to vector<35x33xf32>
    %612 = arith.mulf %611, %605 : vector<35x33xf32>
    %613 = arith.addf %596, %612 : vector<35x33xf32>
    %c162 = arith.constant 162 : index
    %614 = memref.load %arg2[%c162] : memref<256xf32, #tpu.memory_space<smem>>
    %615 = vector.broadcast %614 : f32 to vector<35x33xf32>
    %616 = arith.mulf %615, %605 : vector<35x33xf32>
    %617 = arith.addf %600, %616 : vector<35x33xf32>
    %c226 = arith.constant 226 : index
    %618 = memref.load %arg2[%c226] : memref<256xf32, #tpu.memory_space<smem>>
    %619 = vector.broadcast %618 : f32 to vector<35x33xf32>
    %620 = arith.mulf %619, %605 : vector<35x33xf32>
    %621 = arith.addf %604, %620 : vector<35x33xf32>
    %622 = vector.extract_strided_slice %18 {offsets = [153, 0], sizes = [35, 33], strides = [1, 1]} : vector<304x33xf32> to vector<35x33xf32>
    %c35 = arith.constant 35 : index
    %623 = memref.load %arg2[%c35] : memref<256xf32, #tpu.memory_space<smem>>
    %624 = vector.broadcast %623 : f32 to vector<35x33xf32>
    %625 = arith.mulf %624, %622 : vector<35x33xf32>
    %626 = arith.addf %609, %625 : vector<35x33xf32>
    %c99 = arith.constant 99 : index
    %627 = memref.load %arg2[%c99] : memref<256xf32, #tpu.memory_space<smem>>
    %628 = vector.broadcast %627 : f32 to vector<35x33xf32>
    %629 = arith.mulf %628, %622 : vector<35x33xf32>
    %630 = arith.addf %613, %629 : vector<35x33xf32>
    %c163 = arith.constant 163 : index
    %631 = memref.load %arg2[%c163] : memref<256xf32, #tpu.memory_space<smem>>
    %632 = vector.broadcast %631 : f32 to vector<35x33xf32>
    %633 = arith.mulf %632, %622 : vector<35x33xf32>
    %634 = arith.addf %617, %633 : vector<35x33xf32>
    %c227 = arith.constant 227 : index
    %635 = memref.load %arg2[%c227] : memref<256xf32, #tpu.memory_space<smem>>
    %636 = vector.broadcast %635 : f32 to vector<35x33xf32>
    %637 = arith.mulf %636, %622 : vector<35x33xf32>
    %638 = arith.addf %621, %637 : vector<35x33xf32>
    %639 = vector.extract_strided_slice %10 {offsets = [154, 0], sizes = [35, 33], strides = [1, 1]} : vector<304x33xf32> to vector<35x33xf32>
    %c36 = arith.constant 36 : index
    %640 = memref.load %arg2[%c36] : memref<256xf32, #tpu.memory_space<smem>>
    %641 = vector.broadcast %640 : f32 to vector<35x33xf32>
    %642 = arith.mulf %641, %639 : vector<35x33xf32>
    %643 = arith.addf %626, %642 : vector<35x33xf32>
    %c100 = arith.constant 100 : index
    %644 = memref.load %arg2[%c100] : memref<256xf32, #tpu.memory_space<smem>>
    %645 = vector.broadcast %644 : f32 to vector<35x33xf32>
    %646 = arith.mulf %645, %639 : vector<35x33xf32>
    %647 = arith.addf %630, %646 : vector<35x33xf32>
    %c164 = arith.constant 164 : index
    %648 = memref.load %arg2[%c164] : memref<256xf32, #tpu.memory_space<smem>>
    %649 = vector.broadcast %648 : f32 to vector<35x33xf32>
    %650 = arith.mulf %649, %639 : vector<35x33xf32>
    %651 = arith.addf %634, %650 : vector<35x33xf32>
    %c228 = arith.constant 228 : index
    %652 = memref.load %arg2[%c228] : memref<256xf32, #tpu.memory_space<smem>>
    %653 = vector.broadcast %652 : f32 to vector<35x33xf32>
    %654 = arith.mulf %653, %639 : vector<35x33xf32>
    %655 = arith.addf %638, %654 : vector<35x33xf32>
    %656 = vector.extract_strided_slice %18 {offsets = [154, 0], sizes = [35, 33], strides = [1, 1]} : vector<304x33xf32> to vector<35x33xf32>
    %c37 = arith.constant 37 : index
    %657 = memref.load %arg2[%c37] : memref<256xf32, #tpu.memory_space<smem>>
    %658 = vector.broadcast %657 : f32 to vector<35x33xf32>
    %659 = arith.mulf %658, %656 : vector<35x33xf32>
    %660 = arith.addf %643, %659 : vector<35x33xf32>
    %c101 = arith.constant 101 : index
    %661 = memref.load %arg2[%c101] : memref<256xf32, #tpu.memory_space<smem>>
    %662 = vector.broadcast %661 : f32 to vector<35x33xf32>
    %663 = arith.mulf %662, %656 : vector<35x33xf32>
    %664 = arith.addf %647, %663 : vector<35x33xf32>
    %c165 = arith.constant 165 : index
    %665 = memref.load %arg2[%c165] : memref<256xf32, #tpu.memory_space<smem>>
    %666 = vector.broadcast %665 : f32 to vector<35x33xf32>
    %667 = arith.mulf %666, %656 : vector<35x33xf32>
    %668 = arith.addf %651, %667 : vector<35x33xf32>
    %c229 = arith.constant 229 : index
    %669 = memref.load %arg2[%c229] : memref<256xf32, #tpu.memory_space<smem>>
    %670 = vector.broadcast %669 : f32 to vector<35x33xf32>
    %671 = arith.mulf %670, %656 : vector<35x33xf32>
    %672 = arith.addf %655, %671 : vector<35x33xf32>
    %673 = vector.extract_strided_slice %10 {offsets = [155, 0], sizes = [35, 33], strides = [1, 1]} : vector<304x33xf32> to vector<35x33xf32>
    %c38 = arith.constant 38 : index
    %674 = memref.load %arg2[%c38] : memref<256xf32, #tpu.memory_space<smem>>
    %675 = vector.broadcast %674 : f32 to vector<35x33xf32>
    %676 = arith.mulf %675, %673 : vector<35x33xf32>
    %677 = arith.addf %660, %676 : vector<35x33xf32>
    %c102 = arith.constant 102 : index
    %678 = memref.load %arg2[%c102] : memref<256xf32, #tpu.memory_space<smem>>
    %679 = vector.broadcast %678 : f32 to vector<35x33xf32>
    %680 = arith.mulf %679, %673 : vector<35x33xf32>
    %681 = arith.addf %664, %680 : vector<35x33xf32>
    %c166 = arith.constant 166 : index
    %682 = memref.load %arg2[%c166] : memref<256xf32, #tpu.memory_space<smem>>
    %683 = vector.broadcast %682 : f32 to vector<35x33xf32>
    %684 = arith.mulf %683, %673 : vector<35x33xf32>
    %685 = arith.addf %668, %684 : vector<35x33xf32>
    %c230 = arith.constant 230 : index
    %686 = memref.load %arg2[%c230] : memref<256xf32, #tpu.memory_space<smem>>
    %687 = vector.broadcast %686 : f32 to vector<35x33xf32>
    %688 = arith.mulf %687, %673 : vector<35x33xf32>
    %689 = arith.addf %672, %688 : vector<35x33xf32>
    %690 = vector.extract_strided_slice %18 {offsets = [155, 0], sizes = [35, 33], strides = [1, 1]} : vector<304x33xf32> to vector<35x33xf32>
    %c39 = arith.constant 39 : index
    %691 = memref.load %arg2[%c39] : memref<256xf32, #tpu.memory_space<smem>>
    %692 = vector.broadcast %691 : f32 to vector<35x33xf32>
    %693 = arith.mulf %692, %690 : vector<35x33xf32>
    %694 = arith.addf %677, %693 : vector<35x33xf32>
    %c103 = arith.constant 103 : index
    %695 = memref.load %arg2[%c103] : memref<256xf32, #tpu.memory_space<smem>>
    %696 = vector.broadcast %695 : f32 to vector<35x33xf32>
    %697 = arith.mulf %696, %690 : vector<35x33xf32>
    %698 = arith.addf %681, %697 : vector<35x33xf32>
    %c167 = arith.constant 167 : index
    %699 = memref.load %arg2[%c167] : memref<256xf32, #tpu.memory_space<smem>>
    %700 = vector.broadcast %699 : f32 to vector<35x33xf32>
    %701 = arith.mulf %700, %690 : vector<35x33xf32>
    %702 = arith.addf %685, %701 : vector<35x33xf32>
    %c231 = arith.constant 231 : index
    %703 = memref.load %arg2[%c231] : memref<256xf32, #tpu.memory_space<smem>>
    %704 = vector.broadcast %703 : f32 to vector<35x33xf32>
    %705 = arith.mulf %704, %690 : vector<35x33xf32>
    %706 = arith.addf %689, %705 : vector<35x33xf32>
    %707 = vector.extract_strided_slice %10 {offsets = [190, 0], sizes = [35, 33], strides = [1, 1]} : vector<304x33xf32> to vector<35x33xf32>
    %c40 = arith.constant 40 : index
    %708 = memref.load %arg2[%c40] : memref<256xf32, #tpu.memory_space<smem>>
    %709 = vector.broadcast %708 : f32 to vector<35x33xf32>
    %710 = arith.mulf %709, %707 : vector<35x33xf32>
    %711 = arith.addf %694, %710 : vector<35x33xf32>
    %c104 = arith.constant 104 : index
    %712 = memref.load %arg2[%c104] : memref<256xf32, #tpu.memory_space<smem>>
    %713 = vector.broadcast %712 : f32 to vector<35x33xf32>
    %714 = arith.mulf %713, %707 : vector<35x33xf32>
    %715 = arith.addf %698, %714 : vector<35x33xf32>
    %c168 = arith.constant 168 : index
    %716 = memref.load %arg2[%c168] : memref<256xf32, #tpu.memory_space<smem>>
    %717 = vector.broadcast %716 : f32 to vector<35x33xf32>
    %718 = arith.mulf %717, %707 : vector<35x33xf32>
    %719 = arith.addf %702, %718 : vector<35x33xf32>
    %c232 = arith.constant 232 : index
    %720 = memref.load %arg2[%c232] : memref<256xf32, #tpu.memory_space<smem>>
    %721 = vector.broadcast %720 : f32 to vector<35x33xf32>
    %722 = arith.mulf %721, %707 : vector<35x33xf32>
    %723 = arith.addf %706, %722 : vector<35x33xf32>
    %724 = vector.extract_strided_slice %18 {offsets = [190, 0], sizes = [35, 33], strides = [1, 1]} : vector<304x33xf32> to vector<35x33xf32>
    %c41 = arith.constant 41 : index
    %725 = memref.load %arg2[%c41] : memref<256xf32, #tpu.memory_space<smem>>
    %726 = vector.broadcast %725 : f32 to vector<35x33xf32>
    %727 = arith.mulf %726, %724 : vector<35x33xf32>
    %728 = arith.addf %711, %727 : vector<35x33xf32>
    %c105 = arith.constant 105 : index
    %729 = memref.load %arg2[%c105] : memref<256xf32, #tpu.memory_space<smem>>
    %730 = vector.broadcast %729 : f32 to vector<35x33xf32>
    %731 = arith.mulf %730, %724 : vector<35x33xf32>
    %732 = arith.addf %715, %731 : vector<35x33xf32>
    %c169 = arith.constant 169 : index
    %733 = memref.load %arg2[%c169] : memref<256xf32, #tpu.memory_space<smem>>
    %734 = vector.broadcast %733 : f32 to vector<35x33xf32>
    %735 = arith.mulf %734, %724 : vector<35x33xf32>
    %736 = arith.addf %719, %735 : vector<35x33xf32>
    %c233 = arith.constant 233 : index
    %737 = memref.load %arg2[%c233] : memref<256xf32, #tpu.memory_space<smem>>
    %738 = vector.broadcast %737 : f32 to vector<35x33xf32>
    %739 = arith.mulf %738, %724 : vector<35x33xf32>
    %740 = arith.addf %723, %739 : vector<35x33xf32>
    %741 = vector.extract_strided_slice %10 {offsets = [191, 0], sizes = [35, 33], strides = [1, 1]} : vector<304x33xf32> to vector<35x33xf32>
    %c42 = arith.constant 42 : index
    %742 = memref.load %arg2[%c42] : memref<256xf32, #tpu.memory_space<smem>>
    %743 = vector.broadcast %742 : f32 to vector<35x33xf32>
    %744 = arith.mulf %743, %741 : vector<35x33xf32>
    %745 = arith.addf %728, %744 : vector<35x33xf32>
    %c106 = arith.constant 106 : index
    %746 = memref.load %arg2[%c106] : memref<256xf32, #tpu.memory_space<smem>>
    %747 = vector.broadcast %746 : f32 to vector<35x33xf32>
    %748 = arith.mulf %747, %741 : vector<35x33xf32>
    %749 = arith.addf %732, %748 : vector<35x33xf32>
    %c170 = arith.constant 170 : index
    %750 = memref.load %arg2[%c170] : memref<256xf32, #tpu.memory_space<smem>>
    %751 = vector.broadcast %750 : f32 to vector<35x33xf32>
    %752 = arith.mulf %751, %741 : vector<35x33xf32>
    %753 = arith.addf %736, %752 : vector<35x33xf32>
    %c234 = arith.constant 234 : index
    %754 = memref.load %arg2[%c234] : memref<256xf32, #tpu.memory_space<smem>>
    %755 = vector.broadcast %754 : f32 to vector<35x33xf32>
    %756 = arith.mulf %755, %741 : vector<35x33xf32>
    %757 = arith.addf %740, %756 : vector<35x33xf32>
    %758 = vector.extract_strided_slice %18 {offsets = [191, 0], sizes = [35, 33], strides = [1, 1]} : vector<304x33xf32> to vector<35x33xf32>
    %c43 = arith.constant 43 : index
    %759 = memref.load %arg2[%c43] : memref<256xf32, #tpu.memory_space<smem>>
    %760 = vector.broadcast %759 : f32 to vector<35x33xf32>
    %761 = arith.mulf %760, %758 : vector<35x33xf32>
    %762 = arith.addf %745, %761 : vector<35x33xf32>
    %c107 = arith.constant 107 : index
    %763 = memref.load %arg2[%c107] : memref<256xf32, #tpu.memory_space<smem>>
    %764 = vector.broadcast %763 : f32 to vector<35x33xf32>
    %765 = arith.mulf %764, %758 : vector<35x33xf32>
    %766 = arith.addf %749, %765 : vector<35x33xf32>
    %c171 = arith.constant 171 : index
    %767 = memref.load %arg2[%c171] : memref<256xf32, #tpu.memory_space<smem>>
    %768 = vector.broadcast %767 : f32 to vector<35x33xf32>
    %769 = arith.mulf %768, %758 : vector<35x33xf32>
    %770 = arith.addf %753, %769 : vector<35x33xf32>
    %c235 = arith.constant 235 : index
    %771 = memref.load %arg2[%c235] : memref<256xf32, #tpu.memory_space<smem>>
    %772 = vector.broadcast %771 : f32 to vector<35x33xf32>
    %773 = arith.mulf %772, %758 : vector<35x33xf32>
    %774 = arith.addf %757, %773 : vector<35x33xf32>
    %775 = vector.extract_strided_slice %10 {offsets = [192, 0], sizes = [35, 33], strides = [1, 1]} : vector<304x33xf32> to vector<35x33xf32>
    %c44 = arith.constant 44 : index
    %776 = memref.load %arg2[%c44] : memref<256xf32, #tpu.memory_space<smem>>
    %777 = vector.broadcast %776 : f32 to vector<35x33xf32>
    %778 = arith.mulf %777, %775 : vector<35x33xf32>
    %779 = arith.addf %762, %778 : vector<35x33xf32>
    %c108 = arith.constant 108 : index
    %780 = memref.load %arg2[%c108] : memref<256xf32, #tpu.memory_space<smem>>
    %781 = vector.broadcast %780 : f32 to vector<35x33xf32>
    %782 = arith.mulf %781, %775 : vector<35x33xf32>
    %783 = arith.addf %766, %782 : vector<35x33xf32>
    %c172 = arith.constant 172 : index
    %784 = memref.load %arg2[%c172] : memref<256xf32, #tpu.memory_space<smem>>
    %785 = vector.broadcast %784 : f32 to vector<35x33xf32>
    %786 = arith.mulf %785, %775 : vector<35x33xf32>
    %787 = arith.addf %770, %786 : vector<35x33xf32>
    %c236 = arith.constant 236 : index
    %788 = memref.load %arg2[%c236] : memref<256xf32, #tpu.memory_space<smem>>
    %789 = vector.broadcast %788 : f32 to vector<35x33xf32>
    %790 = arith.mulf %789, %775 : vector<35x33xf32>
    %791 = arith.addf %774, %790 : vector<35x33xf32>
    %792 = vector.extract_strided_slice %18 {offsets = [192, 0], sizes = [35, 33], strides = [1, 1]} : vector<304x33xf32> to vector<35x33xf32>
    %c45 = arith.constant 45 : index
    %793 = memref.load %arg2[%c45] : memref<256xf32, #tpu.memory_space<smem>>
    %794 = vector.broadcast %793 : f32 to vector<35x33xf32>
    %795 = arith.mulf %794, %792 : vector<35x33xf32>
    %796 = arith.addf %779, %795 : vector<35x33xf32>
    %c109 = arith.constant 109 : index
    %797 = memref.load %arg2[%c109] : memref<256xf32, #tpu.memory_space<smem>>
    %798 = vector.broadcast %797 : f32 to vector<35x33xf32>
    %799 = arith.mulf %798, %792 : vector<35x33xf32>
    %800 = arith.addf %783, %799 : vector<35x33xf32>
    %c173 = arith.constant 173 : index
    %801 = memref.load %arg2[%c173] : memref<256xf32, #tpu.memory_space<smem>>
    %802 = vector.broadcast %801 : f32 to vector<35x33xf32>
    %803 = arith.mulf %802, %792 : vector<35x33xf32>
    %804 = arith.addf %787, %803 : vector<35x33xf32>
    %c237 = arith.constant 237 : index
    %805 = memref.load %arg2[%c237] : memref<256xf32, #tpu.memory_space<smem>>
    %806 = vector.broadcast %805 : f32 to vector<35x33xf32>
    %807 = arith.mulf %806, %792 : vector<35x33xf32>
    %808 = arith.addf %791, %807 : vector<35x33xf32>
    %809 = vector.extract_strided_slice %10 {offsets = [193, 0], sizes = [35, 33], strides = [1, 1]} : vector<304x33xf32> to vector<35x33xf32>
    %c46 = arith.constant 46 : index
    %810 = memref.load %arg2[%c46] : memref<256xf32, #tpu.memory_space<smem>>
    %811 = vector.broadcast %810 : f32 to vector<35x33xf32>
    %812 = arith.mulf %811, %809 : vector<35x33xf32>
    %813 = arith.addf %796, %812 : vector<35x33xf32>
    %c110 = arith.constant 110 : index
    %814 = memref.load %arg2[%c110] : memref<256xf32, #tpu.memory_space<smem>>
    %815 = vector.broadcast %814 : f32 to vector<35x33xf32>
    %816 = arith.mulf %815, %809 : vector<35x33xf32>
    %817 = arith.addf %800, %816 : vector<35x33xf32>
    %c174 = arith.constant 174 : index
    %818 = memref.load %arg2[%c174] : memref<256xf32, #tpu.memory_space<smem>>
    %819 = vector.broadcast %818 : f32 to vector<35x33xf32>
    %820 = arith.mulf %819, %809 : vector<35x33xf32>
    %821 = arith.addf %804, %820 : vector<35x33xf32>
    %c238 = arith.constant 238 : index
    %822 = memref.load %arg2[%c238] : memref<256xf32, #tpu.memory_space<smem>>
    %823 = vector.broadcast %822 : f32 to vector<35x33xf32>
    %824 = arith.mulf %823, %809 : vector<35x33xf32>
    %825 = arith.addf %808, %824 : vector<35x33xf32>
    %826 = vector.extract_strided_slice %18 {offsets = [193, 0], sizes = [35, 33], strides = [1, 1]} : vector<304x33xf32> to vector<35x33xf32>
    %c47 = arith.constant 47 : index
    %827 = memref.load %arg2[%c47] : memref<256xf32, #tpu.memory_space<smem>>
    %828 = vector.broadcast %827 : f32 to vector<35x33xf32>
    %829 = arith.mulf %828, %826 : vector<35x33xf32>
    %830 = arith.addf %813, %829 : vector<35x33xf32>
    %c111 = arith.constant 111 : index
    %831 = memref.load %arg2[%c111] : memref<256xf32, #tpu.memory_space<smem>>
    %832 = vector.broadcast %831 : f32 to vector<35x33xf32>
    %833 = arith.mulf %832, %826 : vector<35x33xf32>
    %834 = arith.addf %817, %833 : vector<35x33xf32>
    %c175 = arith.constant 175 : index
    %835 = memref.load %arg2[%c175] : memref<256xf32, #tpu.memory_space<smem>>
    %836 = vector.broadcast %835 : f32 to vector<35x33xf32>
    %837 = arith.mulf %836, %826 : vector<35x33xf32>
    %838 = arith.addf %821, %837 : vector<35x33xf32>
    %c239 = arith.constant 239 : index
    %839 = memref.load %arg2[%c239] : memref<256xf32, #tpu.memory_space<smem>>
    %840 = vector.broadcast %839 : f32 to vector<35x33xf32>
    %841 = arith.mulf %840, %826 : vector<35x33xf32>
    %842 = arith.addf %825, %841 : vector<35x33xf32>
    %843 = vector.extract_strided_slice %10 {offsets = [228, 0], sizes = [35, 33], strides = [1, 1]} : vector<304x33xf32> to vector<35x33xf32>
    %c48 = arith.constant 48 : index
    %844 = memref.load %arg2[%c48] : memref<256xf32, #tpu.memory_space<smem>>
    %845 = vector.broadcast %844 : f32 to vector<35x33xf32>
    %846 = arith.mulf %845, %843 : vector<35x33xf32>
    %847 = arith.addf %830, %846 : vector<35x33xf32>
    %c112 = arith.constant 112 : index
    %848 = memref.load %arg2[%c112] : memref<256xf32, #tpu.memory_space<smem>>
    %849 = vector.broadcast %848 : f32 to vector<35x33xf32>
    %850 = arith.mulf %849, %843 : vector<35x33xf32>
    %851 = arith.addf %834, %850 : vector<35x33xf32>
    %c176 = arith.constant 176 : index
    %852 = memref.load %arg2[%c176] : memref<256xf32, #tpu.memory_space<smem>>
    %853 = vector.broadcast %852 : f32 to vector<35x33xf32>
    %854 = arith.mulf %853, %843 : vector<35x33xf32>
    %855 = arith.addf %838, %854 : vector<35x33xf32>
    %c240 = arith.constant 240 : index
    %856 = memref.load %arg2[%c240] : memref<256xf32, #tpu.memory_space<smem>>
    %857 = vector.broadcast %856 : f32 to vector<35x33xf32>
    %858 = arith.mulf %857, %843 : vector<35x33xf32>
    %859 = arith.addf %842, %858 : vector<35x33xf32>
    %860 = vector.extract_strided_slice %18 {offsets = [228, 0], sizes = [35, 33], strides = [1, 1]} : vector<304x33xf32> to vector<35x33xf32>
    %c49 = arith.constant 49 : index
    %861 = memref.load %arg2[%c49] : memref<256xf32, #tpu.memory_space<smem>>
    %862 = vector.broadcast %861 : f32 to vector<35x33xf32>
    %863 = arith.mulf %862, %860 : vector<35x33xf32>
    %864 = arith.addf %847, %863 : vector<35x33xf32>
    %c113 = arith.constant 113 : index
    %865 = memref.load %arg2[%c113] : memref<256xf32, #tpu.memory_space<smem>>
    %866 = vector.broadcast %865 : f32 to vector<35x33xf32>
    %867 = arith.mulf %866, %860 : vector<35x33xf32>
    %868 = arith.addf %851, %867 : vector<35x33xf32>
    %c177 = arith.constant 177 : index
    %869 = memref.load %arg2[%c177] : memref<256xf32, #tpu.memory_space<smem>>
    %870 = vector.broadcast %869 : f32 to vector<35x33xf32>
    %871 = arith.mulf %870, %860 : vector<35x33xf32>
    %872 = arith.addf %855, %871 : vector<35x33xf32>
    %c241 = arith.constant 241 : index
    %873 = memref.load %arg2[%c241] : memref<256xf32, #tpu.memory_space<smem>>
    %874 = vector.broadcast %873 : f32 to vector<35x33xf32>
    %875 = arith.mulf %874, %860 : vector<35x33xf32>
    %876 = arith.addf %859, %875 : vector<35x33xf32>
    %877 = vector.extract_strided_slice %10 {offsets = [229, 0], sizes = [35, 33], strides = [1, 1]} : vector<304x33xf32> to vector<35x33xf32>
    %c50 = arith.constant 50 : index
    %878 = memref.load %arg2[%c50] : memref<256xf32, #tpu.memory_space<smem>>
    %879 = vector.broadcast %878 : f32 to vector<35x33xf32>
    %880 = arith.mulf %879, %877 : vector<35x33xf32>
    %881 = arith.addf %864, %880 : vector<35x33xf32>
    %c114 = arith.constant 114 : index
    %882 = memref.load %arg2[%c114] : memref<256xf32, #tpu.memory_space<smem>>
    %883 = vector.broadcast %882 : f32 to vector<35x33xf32>
    %884 = arith.mulf %883, %877 : vector<35x33xf32>
    %885 = arith.addf %868, %884 : vector<35x33xf32>
    %c178 = arith.constant 178 : index
    %886 = memref.load %arg2[%c178] : memref<256xf32, #tpu.memory_space<smem>>
    %887 = vector.broadcast %886 : f32 to vector<35x33xf32>
    %888 = arith.mulf %887, %877 : vector<35x33xf32>
    %889 = arith.addf %872, %888 : vector<35x33xf32>
    %c242 = arith.constant 242 : index
    %890 = memref.load %arg2[%c242] : memref<256xf32, #tpu.memory_space<smem>>
    %891 = vector.broadcast %890 : f32 to vector<35x33xf32>
    %892 = arith.mulf %891, %877 : vector<35x33xf32>
    %893 = arith.addf %876, %892 : vector<35x33xf32>
    %894 = vector.extract_strided_slice %18 {offsets = [229, 0], sizes = [35, 33], strides = [1, 1]} : vector<304x33xf32> to vector<35x33xf32>
    %c51 = arith.constant 51 : index
    %895 = memref.load %arg2[%c51] : memref<256xf32, #tpu.memory_space<smem>>
    %896 = vector.broadcast %895 : f32 to vector<35x33xf32>
    %897 = arith.mulf %896, %894 : vector<35x33xf32>
    %898 = arith.addf %881, %897 : vector<35x33xf32>
    %c115 = arith.constant 115 : index
    %899 = memref.load %arg2[%c115] : memref<256xf32, #tpu.memory_space<smem>>
    %900 = vector.broadcast %899 : f32 to vector<35x33xf32>
    %901 = arith.mulf %900, %894 : vector<35x33xf32>
    %902 = arith.addf %885, %901 : vector<35x33xf32>
    %c179 = arith.constant 179 : index
    %903 = memref.load %arg2[%c179] : memref<256xf32, #tpu.memory_space<smem>>
    %904 = vector.broadcast %903 : f32 to vector<35x33xf32>
    %905 = arith.mulf %904, %894 : vector<35x33xf32>
    %906 = arith.addf %889, %905 : vector<35x33xf32>
    %c243 = arith.constant 243 : index
    %907 = memref.load %arg2[%c243] : memref<256xf32, #tpu.memory_space<smem>>
    %908 = vector.broadcast %907 : f32 to vector<35x33xf32>
    %909 = arith.mulf %908, %894 : vector<35x33xf32>
    %910 = arith.addf %893, %909 : vector<35x33xf32>
    %911 = vector.extract_strided_slice %10 {offsets = [230, 0], sizes = [35, 33], strides = [1, 1]} : vector<304x33xf32> to vector<35x33xf32>
    %c52 = arith.constant 52 : index
    %912 = memref.load %arg2[%c52] : memref<256xf32, #tpu.memory_space<smem>>
    %913 = vector.broadcast %912 : f32 to vector<35x33xf32>
    %914 = arith.mulf %913, %911 : vector<35x33xf32>
    %915 = arith.addf %898, %914 : vector<35x33xf32>
    %c116 = arith.constant 116 : index
    %916 = memref.load %arg2[%c116] : memref<256xf32, #tpu.memory_space<smem>>
    %917 = vector.broadcast %916 : f32 to vector<35x33xf32>
    %918 = arith.mulf %917, %911 : vector<35x33xf32>
    %919 = arith.addf %902, %918 : vector<35x33xf32>
    %c180 = arith.constant 180 : index
    %920 = memref.load %arg2[%c180] : memref<256xf32, #tpu.memory_space<smem>>
    %921 = vector.broadcast %920 : f32 to vector<35x33xf32>
    %922 = arith.mulf %921, %911 : vector<35x33xf32>
    %923 = arith.addf %906, %922 : vector<35x33xf32>
    %c244 = arith.constant 244 : index
    %924 = memref.load %arg2[%c244] : memref<256xf32, #tpu.memory_space<smem>>
    %925 = vector.broadcast %924 : f32 to vector<35x33xf32>
    %926 = arith.mulf %925, %911 : vector<35x33xf32>
    %927 = arith.addf %910, %926 : vector<35x33xf32>
    %928 = vector.extract_strided_slice %18 {offsets = [230, 0], sizes = [35, 33], strides = [1, 1]} : vector<304x33xf32> to vector<35x33xf32>
    %c53 = arith.constant 53 : index
    %929 = memref.load %arg2[%c53] : memref<256xf32, #tpu.memory_space<smem>>
    %930 = vector.broadcast %929 : f32 to vector<35x33xf32>
    %931 = arith.mulf %930, %928 : vector<35x33xf32>
    %932 = arith.addf %915, %931 : vector<35x33xf32>
    %c117 = arith.constant 117 : index
    %933 = memref.load %arg2[%c117] : memref<256xf32, #tpu.memory_space<smem>>
    %934 = vector.broadcast %933 : f32 to vector<35x33xf32>
    %935 = arith.mulf %934, %928 : vector<35x33xf32>
    %936 = arith.addf %919, %935 : vector<35x33xf32>
    %c181 = arith.constant 181 : index
    %937 = memref.load %arg2[%c181] : memref<256xf32, #tpu.memory_space<smem>>
    %938 = vector.broadcast %937 : f32 to vector<35x33xf32>
    %939 = arith.mulf %938, %928 : vector<35x33xf32>
    %940 = arith.addf %923, %939 : vector<35x33xf32>
    %c245 = arith.constant 245 : index
    %941 = memref.load %arg2[%c245] : memref<256xf32, #tpu.memory_space<smem>>
    %942 = vector.broadcast %941 : f32 to vector<35x33xf32>
    %943 = arith.mulf %942, %928 : vector<35x33xf32>
    %944 = arith.addf %927, %943 : vector<35x33xf32>
    %945 = vector.extract_strided_slice %10 {offsets = [231, 0], sizes = [35, 33], strides = [1, 1]} : vector<304x33xf32> to vector<35x33xf32>
    %c54 = arith.constant 54 : index
    %946 = memref.load %arg2[%c54] : memref<256xf32, #tpu.memory_space<smem>>
    %947 = vector.broadcast %946 : f32 to vector<35x33xf32>
    %948 = arith.mulf %947, %945 : vector<35x33xf32>
    %949 = arith.addf %932, %948 : vector<35x33xf32>
    %c118 = arith.constant 118 : index
    %950 = memref.load %arg2[%c118] : memref<256xf32, #tpu.memory_space<smem>>
    %951 = vector.broadcast %950 : f32 to vector<35x33xf32>
    %952 = arith.mulf %951, %945 : vector<35x33xf32>
    %953 = arith.addf %936, %952 : vector<35x33xf32>
    %c182 = arith.constant 182 : index
    %954 = memref.load %arg2[%c182] : memref<256xf32, #tpu.memory_space<smem>>
    %955 = vector.broadcast %954 : f32 to vector<35x33xf32>
    %956 = arith.mulf %955, %945 : vector<35x33xf32>
    %957 = arith.addf %940, %956 : vector<35x33xf32>
    %c246 = arith.constant 246 : index
    %958 = memref.load %arg2[%c246] : memref<256xf32, #tpu.memory_space<smem>>
    %959 = vector.broadcast %958 : f32 to vector<35x33xf32>
    %960 = arith.mulf %959, %945 : vector<35x33xf32>
    %961 = arith.addf %944, %960 : vector<35x33xf32>
    %962 = vector.extract_strided_slice %18 {offsets = [231, 0], sizes = [35, 33], strides = [1, 1]} : vector<304x33xf32> to vector<35x33xf32>
    %c55 = arith.constant 55 : index
    %963 = memref.load %arg2[%c55] : memref<256xf32, #tpu.memory_space<smem>>
    %964 = vector.broadcast %963 : f32 to vector<35x33xf32>
    %965 = arith.mulf %964, %962 : vector<35x33xf32>
    %966 = arith.addf %949, %965 : vector<35x33xf32>
    %c119 = arith.constant 119 : index
    %967 = memref.load %arg2[%c119] : memref<256xf32, #tpu.memory_space<smem>>
    %968 = vector.broadcast %967 : f32 to vector<35x33xf32>
    %969 = arith.mulf %968, %962 : vector<35x33xf32>
    %970 = arith.addf %953, %969 : vector<35x33xf32>
    %c183 = arith.constant 183 : index
    %971 = memref.load %arg2[%c183] : memref<256xf32, #tpu.memory_space<smem>>
    %972 = vector.broadcast %971 : f32 to vector<35x33xf32>
    %973 = arith.mulf %972, %962 : vector<35x33xf32>
    %974 = arith.addf %957, %973 : vector<35x33xf32>
    %c247 = arith.constant 247 : index
    %975 = memref.load %arg2[%c247] : memref<256xf32, #tpu.memory_space<smem>>
    %976 = vector.broadcast %975 : f32 to vector<35x33xf32>
    %977 = arith.mulf %976, %962 : vector<35x33xf32>
    %978 = arith.addf %961, %977 : vector<35x33xf32>
    %979 = vector.extract_strided_slice %10 {offsets = [266, 0], sizes = [35, 33], strides = [1, 1]} : vector<304x33xf32> to vector<35x33xf32>
    %c56 = arith.constant 56 : index
    %980 = memref.load %arg2[%c56] : memref<256xf32, #tpu.memory_space<smem>>
    %981 = vector.broadcast %980 : f32 to vector<35x33xf32>
    %982 = arith.mulf %981, %979 : vector<35x33xf32>
    %983 = arith.addf %966, %982 : vector<35x33xf32>
    %c120 = arith.constant 120 : index
    %984 = memref.load %arg2[%c120] : memref<256xf32, #tpu.memory_space<smem>>
    %985 = vector.broadcast %984 : f32 to vector<35x33xf32>
    %986 = arith.mulf %985, %979 : vector<35x33xf32>
    %987 = arith.addf %970, %986 : vector<35x33xf32>
    %c184 = arith.constant 184 : index
    %988 = memref.load %arg2[%c184] : memref<256xf32, #tpu.memory_space<smem>>
    %989 = vector.broadcast %988 : f32 to vector<35x33xf32>
    %990 = arith.mulf %989, %979 : vector<35x33xf32>
    %991 = arith.addf %974, %990 : vector<35x33xf32>
    %c248 = arith.constant 248 : index
    %992 = memref.load %arg2[%c248] : memref<256xf32, #tpu.memory_space<smem>>
    %993 = vector.broadcast %992 : f32 to vector<35x33xf32>
    %994 = arith.mulf %993, %979 : vector<35x33xf32>
    %995 = arith.addf %978, %994 : vector<35x33xf32>
    %996 = vector.extract_strided_slice %18 {offsets = [266, 0], sizes = [35, 33], strides = [1, 1]} : vector<304x33xf32> to vector<35x33xf32>
    %c57 = arith.constant 57 : index
    %997 = memref.load %arg2[%c57] : memref<256xf32, #tpu.memory_space<smem>>
    %998 = vector.broadcast %997 : f32 to vector<35x33xf32>
    %999 = arith.mulf %998, %996 : vector<35x33xf32>
    %1000 = arith.addf %983, %999 : vector<35x33xf32>
    %c121 = arith.constant 121 : index
    %1001 = memref.load %arg2[%c121] : memref<256xf32, #tpu.memory_space<smem>>
    %1002 = vector.broadcast %1001 : f32 to vector<35x33xf32>
    %1003 = arith.mulf %1002, %996 : vector<35x33xf32>
    %1004 = arith.addf %987, %1003 : vector<35x33xf32>
    %c185 = arith.constant 185 : index
    %1005 = memref.load %arg2[%c185] : memref<256xf32, #tpu.memory_space<smem>>
    %1006 = vector.broadcast %1005 : f32 to vector<35x33xf32>
    %1007 = arith.mulf %1006, %996 : vector<35x33xf32>
    %1008 = arith.addf %991, %1007 : vector<35x33xf32>
    %c249 = arith.constant 249 : index
    %1009 = memref.load %arg2[%c249] : memref<256xf32, #tpu.memory_space<smem>>
    %1010 = vector.broadcast %1009 : f32 to vector<35x33xf32>
    %1011 = arith.mulf %1010, %996 : vector<35x33xf32>
    %1012 = arith.addf %995, %1011 : vector<35x33xf32>
    %1013 = vector.extract_strided_slice %10 {offsets = [267, 0], sizes = [35, 33], strides = [1, 1]} : vector<304x33xf32> to vector<35x33xf32>
    %c58 = arith.constant 58 : index
    %1014 = memref.load %arg2[%c58] : memref<256xf32, #tpu.memory_space<smem>>
    %1015 = vector.broadcast %1014 : f32 to vector<35x33xf32>
    %1016 = arith.mulf %1015, %1013 : vector<35x33xf32>
    %1017 = arith.addf %1000, %1016 : vector<35x33xf32>
    %c122 = arith.constant 122 : index
    %1018 = memref.load %arg2[%c122] : memref<256xf32, #tpu.memory_space<smem>>
    %1019 = vector.broadcast %1018 : f32 to vector<35x33xf32>
    %1020 = arith.mulf %1019, %1013 : vector<35x33xf32>
    %1021 = arith.addf %1004, %1020 : vector<35x33xf32>
    %c186 = arith.constant 186 : index
    %1022 = memref.load %arg2[%c186] : memref<256xf32, #tpu.memory_space<smem>>
    %1023 = vector.broadcast %1022 : f32 to vector<35x33xf32>
    %1024 = arith.mulf %1023, %1013 : vector<35x33xf32>
    %1025 = arith.addf %1008, %1024 : vector<35x33xf32>
    %c250 = arith.constant 250 : index
    %1026 = memref.load %arg2[%c250] : memref<256xf32, #tpu.memory_space<smem>>
    %1027 = vector.broadcast %1026 : f32 to vector<35x33xf32>
    %1028 = arith.mulf %1027, %1013 : vector<35x33xf32>
    %1029 = arith.addf %1012, %1028 : vector<35x33xf32>
    %1030 = vector.extract_strided_slice %18 {offsets = [267, 0], sizes = [35, 33], strides = [1, 1]} : vector<304x33xf32> to vector<35x33xf32>
    %c59 = arith.constant 59 : index
    %1031 = memref.load %arg2[%c59] : memref<256xf32, #tpu.memory_space<smem>>
    %1032 = vector.broadcast %1031 : f32 to vector<35x33xf32>
    %1033 = arith.mulf %1032, %1030 : vector<35x33xf32>
    %1034 = arith.addf %1017, %1033 : vector<35x33xf32>
    %c123 = arith.constant 123 : index
    %1035 = memref.load %arg2[%c123] : memref<256xf32, #tpu.memory_space<smem>>
    %1036 = vector.broadcast %1035 : f32 to vector<35x33xf32>
    %1037 = arith.mulf %1036, %1030 : vector<35x33xf32>
    %1038 = arith.addf %1021, %1037 : vector<35x33xf32>
    %c187 = arith.constant 187 : index
    %1039 = memref.load %arg2[%c187] : memref<256xf32, #tpu.memory_space<smem>>
    %1040 = vector.broadcast %1039 : f32 to vector<35x33xf32>
    %1041 = arith.mulf %1040, %1030 : vector<35x33xf32>
    %1042 = arith.addf %1025, %1041 : vector<35x33xf32>
    %c251 = arith.constant 251 : index
    %1043 = memref.load %arg2[%c251] : memref<256xf32, #tpu.memory_space<smem>>
    %1044 = vector.broadcast %1043 : f32 to vector<35x33xf32>
    %1045 = arith.mulf %1044, %1030 : vector<35x33xf32>
    %1046 = arith.addf %1029, %1045 : vector<35x33xf32>
    %1047 = vector.extract_strided_slice %10 {offsets = [268, 0], sizes = [35, 33], strides = [1, 1]} : vector<304x33xf32> to vector<35x33xf32>
    %c60 = arith.constant 60 : index
    %1048 = memref.load %arg2[%c60] : memref<256xf32, #tpu.memory_space<smem>>
    %1049 = vector.broadcast %1048 : f32 to vector<35x33xf32>
    %1050 = arith.mulf %1049, %1047 : vector<35x33xf32>
    %1051 = arith.addf %1034, %1050 : vector<35x33xf32>
    %c124 = arith.constant 124 : index
    %1052 = memref.load %arg2[%c124] : memref<256xf32, #tpu.memory_space<smem>>
    %1053 = vector.broadcast %1052 : f32 to vector<35x33xf32>
    %1054 = arith.mulf %1053, %1047 : vector<35x33xf32>
    %1055 = arith.addf %1038, %1054 : vector<35x33xf32>
    %c188 = arith.constant 188 : index
    %1056 = memref.load %arg2[%c188] : memref<256xf32, #tpu.memory_space<smem>>
    %1057 = vector.broadcast %1056 : f32 to vector<35x33xf32>
    %1058 = arith.mulf %1057, %1047 : vector<35x33xf32>
    %1059 = arith.addf %1042, %1058 : vector<35x33xf32>
    %c252 = arith.constant 252 : index
    %1060 = memref.load %arg2[%c252] : memref<256xf32, #tpu.memory_space<smem>>
    %1061 = vector.broadcast %1060 : f32 to vector<35x33xf32>
    %1062 = arith.mulf %1061, %1047 : vector<35x33xf32>
    %1063 = arith.addf %1046, %1062 : vector<35x33xf32>
    %1064 = vector.extract_strided_slice %18 {offsets = [268, 0], sizes = [35, 33], strides = [1, 1]} : vector<304x33xf32> to vector<35x33xf32>
    %c61 = arith.constant 61 : index
    %1065 = memref.load %arg2[%c61] : memref<256xf32, #tpu.memory_space<smem>>
    %1066 = vector.broadcast %1065 : f32 to vector<35x33xf32>
    %1067 = arith.mulf %1066, %1064 : vector<35x33xf32>
    %1068 = arith.addf %1051, %1067 : vector<35x33xf32>
    %c125 = arith.constant 125 : index
    %1069 = memref.load %arg2[%c125] : memref<256xf32, #tpu.memory_space<smem>>
    %1070 = vector.broadcast %1069 : f32 to vector<35x33xf32>
    %1071 = arith.mulf %1070, %1064 : vector<35x33xf32>
    %1072 = arith.addf %1055, %1071 : vector<35x33xf32>
    %c189 = arith.constant 189 : index
    %1073 = memref.load %arg2[%c189] : memref<256xf32, #tpu.memory_space<smem>>
    %1074 = vector.broadcast %1073 : f32 to vector<35x33xf32>
    %1075 = arith.mulf %1074, %1064 : vector<35x33xf32>
    %1076 = arith.addf %1059, %1075 : vector<35x33xf32>
    %c253 = arith.constant 253 : index
    %1077 = memref.load %arg2[%c253] : memref<256xf32, #tpu.memory_space<smem>>
    %1078 = vector.broadcast %1077 : f32 to vector<35x33xf32>
    %1079 = arith.mulf %1078, %1064 : vector<35x33xf32>
    %1080 = arith.addf %1063, %1079 : vector<35x33xf32>
    %1081 = vector.extract_strided_slice %10 {offsets = [269, 0], sizes = [35, 33], strides = [1, 1]} : vector<304x33xf32> to vector<35x33xf32>
    %c62 = arith.constant 62 : index
    %1082 = memref.load %arg2[%c62] : memref<256xf32, #tpu.memory_space<smem>>
    %1083 = vector.broadcast %1082 : f32 to vector<35x33xf32>
    %1084 = arith.mulf %1083, %1081 : vector<35x33xf32>
    %1085 = arith.addf %1068, %1084 : vector<35x33xf32>
    %c126 = arith.constant 126 : index
    %1086 = memref.load %arg2[%c126] : memref<256xf32, #tpu.memory_space<smem>>
    %1087 = vector.broadcast %1086 : f32 to vector<35x33xf32>
    %1088 = arith.mulf %1087, %1081 : vector<35x33xf32>
    %1089 = arith.addf %1072, %1088 : vector<35x33xf32>
    %c190 = arith.constant 190 : index
    %1090 = memref.load %arg2[%c190] : memref<256xf32, #tpu.memory_space<smem>>
    %1091 = vector.broadcast %1090 : f32 to vector<35x33xf32>
    %1092 = arith.mulf %1091, %1081 : vector<35x33xf32>
    %1093 = arith.addf %1076, %1092 : vector<35x33xf32>
    %c254 = arith.constant 254 : index
    %1094 = memref.load %arg2[%c254] : memref<256xf32, #tpu.memory_space<smem>>
    %1095 = vector.broadcast %1094 : f32 to vector<35x33xf32>
    %1096 = arith.mulf %1095, %1081 : vector<35x33xf32>
    %1097 = arith.addf %1080, %1096 : vector<35x33xf32>
    %1098 = vector.extract_strided_slice %18 {offsets = [269, 0], sizes = [35, 33], strides = [1, 1]} : vector<304x33xf32> to vector<35x33xf32>
    %c63 = arith.constant 63 : index
    %1099 = memref.load %arg2[%c63] : memref<256xf32, #tpu.memory_space<smem>>
    %1100 = vector.broadcast %1099 : f32 to vector<35x33xf32>
    %1101 = arith.mulf %1100, %1098 : vector<35x33xf32>
    %1102 = arith.addf %1085, %1101 : vector<35x33xf32>
    %c127 = arith.constant 127 : index
    %1103 = memref.load %arg2[%c127] : memref<256xf32, #tpu.memory_space<smem>>
    %1104 = vector.broadcast %1103 : f32 to vector<35x33xf32>
    %1105 = arith.mulf %1104, %1098 : vector<35x33xf32>
    %1106 = arith.addf %1089, %1105 : vector<35x33xf32>
    %c191 = arith.constant 191 : index
    %1107 = memref.load %arg2[%c191] : memref<256xf32, #tpu.memory_space<smem>>
    %1108 = vector.broadcast %1107 : f32 to vector<35x33xf32>
    %1109 = arith.mulf %1108, %1098 : vector<35x33xf32>
    %1110 = arith.addf %1093, %1109 : vector<35x33xf32>
    %c255 = arith.constant 255 : index
    %1111 = memref.load %arg2[%c255] : memref<256xf32, #tpu.memory_space<smem>>
    %1112 = vector.broadcast %1111 : f32 to vector<35x33xf32>
    %1113 = arith.mulf %1112, %1098 : vector<35x33xf32>
    %1114 = arith.addf %1097, %1113 : vector<35x33xf32>
    %cst_8 = arith.constant 0.000000e+00 : f32
    %1115 = vector.broadcast %cst_8 : f32 to vector<35x33xf32>
    %1116 = arith.subf %1115, %1102 : vector<35x33xf32>
    %1117 = math.exp %1116 : vector<35x33xf32>
    %cst_9 = arith.constant 1.000000e+00 : f32
    %1118 = vector.broadcast %cst_9 : f32 to vector<35x33xf32>
    %1119 = arith.addf %1118, %1117 : vector<35x33xf32>
    %cst_10 = arith.constant 1.000000e+00 : f32
    %1120 = vector.broadcast %cst_10 : f32 to vector<35x33xf32>
    %1121 = arith.divf %1120, %1119 : vector<35x33xf32>
    %c0_11 = arith.constant 0 : index
    %c0_12 = arith.constant 0 : index
    %c0_13 = arith.constant 0 : index
    %c0_14 = arith.constant 0 : index
    %1122 = vector.load %arg4[%c0_11, %c0_12, %c0_13, %c0_14] : memref<1x4x35x33xf32, #tpu.memory_space<vmem>>, vector<1x1x35x33xf32>
    %1123 = vector.shape_cast %1122 : vector<1x1x35x33xf32> to vector<35x33xf32>
    %1124 = vector.shape_cast %1121 : vector<35x33xf32> to vector<1x1x35x33xf32>
    tpu.vector_store %arg4[%c0_11, %c0_12, %c0_13, %c0_14], %1124 {strides = array<i32>} : memref<1x4x35x33xf32, #tpu.memory_space<vmem>>, vector<1x1x35x33xf32>,
    %cst_15 = arith.constant 0.000000e+00 : f32
    %1125 = vector.broadcast %cst_15 : f32 to vector<35x33xf32>
    %1126 = arith.subf %1125, %1106 : vector<35x33xf32>
    %1127 = math.exp %1126 : vector<35x33xf32>
    %cst_16 = arith.constant 1.000000e+00 : f32
    %1128 = vector.broadcast %cst_16 : f32 to vector<35x33xf32>
    %1129 = arith.addf %1128, %1127 : vector<35x33xf32>
    %cst_17 = arith.constant 1.000000e+00 : f32
    %1130 = vector.broadcast %cst_17 : f32 to vector<35x33xf32>
    %1131 = arith.divf %1130, %1129 : vector<35x33xf32>
    %c0_18 = arith.constant 0 : index
    %c1_19 = arith.constant 1 : index
    %c0_20 = arith.constant 0 : index
    %c0_21 = arith.constant 0 : index
    %1132 = vector.load %arg4[%c0_18, %c1_19, %c0_20, %c0_21] : memref<1x4x35x33xf32, #tpu.memory_space<vmem>>, vector<1x1x35x33xf32>
    %1133 = vector.shape_cast %1132 : vector<1x1x35x33xf32> to vector<35x33xf32>
    %1134 = vector.shape_cast %1131 : vector<35x33xf32> to vector<1x1x35x33xf32>
    tpu.vector_store %arg4[%c0_18, %c1_19, %c0_20, %c0_21], %1134 {strides = array<i32>} : memref<1x4x35x33xf32, #tpu.memory_space<vmem>>, vector<1x1x35x33xf32>,
    %cst_22 = arith.constant 0.000000e+00 : f32
    %1135 = vector.broadcast %cst_22 : f32 to vector<35x33xf32>
    %1136 = arith.subf %1135, %1110 : vector<35x33xf32>
    %1137 = math.exp %1136 : vector<35x33xf32>
    %cst_23 = arith.constant 1.000000e+00 : f32
    %1138 = vector.broadcast %cst_23 : f32 to vector<35x33xf32>
    %1139 = arith.addf %1138, %1137 : vector<35x33xf32>
    %cst_24 = arith.constant 1.000000e+00 : f32
    %1140 = vector.broadcast %cst_24 : f32 to vector<35x33xf32>
    %1141 = arith.divf %1140, %1139 : vector<35x33xf32>
    %c0_25 = arith.constant 0 : index
    %c2_26 = arith.constant 2 : index
    %c0_27 = arith.constant 0 : index
    %c0_28 = arith.constant 0 : index
    %1142 = vector.load %arg4[%c0_25, %c2_26, %c0_27, %c0_28] : memref<1x4x35x33xf32, #tpu.memory_space<vmem>>, vector<1x1x35x33xf32>
    %1143 = vector.shape_cast %1142 : vector<1x1x35x33xf32> to vector<35x33xf32>
    %1144 = vector.shape_cast %1141 : vector<35x33xf32> to vector<1x1x35x33xf32>
    tpu.vector_store %arg4[%c0_25, %c2_26, %c0_27, %c0_28], %1144 {strides = array<i32>} : memref<1x4x35x33xf32, #tpu.memory_space<vmem>>, vector<1x1x35x33xf32>,
    %cst_29 = arith.constant 0.000000e+00 : f32
    %1145 = vector.broadcast %cst_29 : f32 to vector<35x33xf32>
    %1146 = arith.subf %1145, %1114 : vector<35x33xf32>
    %1147 = math.exp %1146 : vector<35x33xf32>
    %cst_30 = arith.constant 1.000000e+00 : f32
    %1148 = vector.broadcast %cst_30 : f32 to vector<35x33xf32>
    %1149 = arith.addf %1148, %1147 : vector<35x33xf32>
    %cst_31 = arith.constant 1.000000e+00 : f32
    %1150 = vector.broadcast %cst_31 : f32 to vector<35x33xf32>
    %1151 = arith.divf %1150, %1149 : vector<35x33xf32>
    %c0_32 = arith.constant 0 : index
    %c3_33 = arith.constant 3 : index
    %c0_34 = arith.constant 0 : index
    %c0_35 = arith.constant 0 : index
    %1152 = vector.load %arg4[%c0_32, %c3_33, %c0_34, %c0_35] : memref<1x4x35x33xf32, #tpu.memory_space<vmem>>, vector<1x1x35x33xf32>
    %1153 = vector.shape_cast %1152 : vector<1x1x35x33xf32> to vector<35x33xf32>
    %1154 = vector.shape_cast %1151 : vector<35x33xf32> to vector<1x1x35x33xf32>
    tpu.vector_store %arg4[%c0_32, %c3_33, %c0_34, %c0_35], %1154 {strides = array<i32>} : memref<1x4x35x33xf32, #tpu.memory_space<vmem>>, vector<1x1x35x33xf32>,
    return
  }
  func.func @transform_0(%arg0: i32) -> (i32, i32) {
    %c0_i32 = arith.constant 0 : i32
    %c0_i32_0 = arith.constant 0 : i32
    %c0_i32_1 = arith.constant 0 : i32
    return %c0_i32, %c0_i32_0 : i32, i32
  }
  func.func @transform_1(%arg0: i32) -> i32 {
    %c0_i32 = arith.constant 0 : i32
    %c0_i32_0 = arith.constant 0 : i32
    return %c0_i32 : i32
  }
  func.func @transform_2(%arg0: i32) -> i32 {
    %c0_i32 = arith.constant 0 : i32
    %c0_i32_0 = arith.constant 0 : i32
    return %c0_i32 : i32
  }
  func.func @transform_3(%arg0: i32) -> (i32, i32, i32, i32) {
    %c0_i32 = arith.constant 0 : i32
    %c0_i32_0 = arith.constant 0 : i32
    %c0_i32_1 = arith.constant 0 : i32
    %c0_i32_2 = arith.constant 0 : i32
    %c0_i32_3 = arith.constant 0 : i32
    return %c0_i32, %c0_i32_0, %c0_i32_1, %c0_i32_2 : i32, i32, i32, i32
  }
}

</mosaic_0001>

<llo_original>
// kernel: tpu_custom_call.1
$region0: #{tpu_custom_call.1}
  #allocation0 [shape = 'u32[]', space=smem, size = 0x4, offset = 0x4, fixed_abs, tag = 'smem constant byte address 0x4 - core index']
  #allocation1 [shape = 'u32[144,128]{1,0:T(1,128)}', space=vmem, size = 0x12000, scoped, tag = 'internal scratch']
  %s0 = inlined_call_operand.hbm [shape: f32[304,98], index: 0, kind: input, shape index: {}]
  %s1 = inlined_call_operand.vmem [shape: f32[256], index: 1, kind: input, shape index: {}]
  %s2 = inlined_call_operand.vmem [shape: f32[4], index: 2, kind: input, shape index: {}]
  %s3 = inlined_call_operand.vmem [shape: f32[1,4,35,33], index: 3, kind: output, shape index: {}]
  %s4 = sld [smem:[#allocation0]]
  $region34: #{tpu_custom_call.1} parent=0
    _
  %s6 = ssub.s32 1, %s4
  %s7 = scalar_select 0, %s6, %s4
  $region1: #{tpu_custom_call.1} parent=0
    #allocation2 [shape = 'u8[155648]{0}', space=vmem, size = 0x26000, scoped, tag = 'input window, operand 0, single buffered']
    #allocation3 [shape = 's32[1]{0}', space=sflag, size = 0x4, scoped, tag = 'scoped memory for tpu_custom_call.1']
    #allocation4 [shape = 's32[1]{0}', space=sflag, size = 0x4, scoped, tag = 'scoped memory for tpu_custom_call.1']
    #allocation5 [shape = 'u8[1024]{0}', space=smem, size = 0x400, scoped, tag = 'input window, operand 1, single buffered']
    #allocation6 [shape = 'u8[512]{0}', space=smem, size = 0x200, scoped, tag = 'input window, operand 2, single buffered']
    #allocation7 [shape = 's32[1]{0}', space=sflag, size = 0x4, scoped, tag = 'scoped memory for tpu_custom_call.1']
    %8 = vsyncpa [#allocation3], 0
    %9 = vsyncpa [#allocation4], 0
    %10 = vsyncpa [#allocation7], 0
    // Predicated region
    $region2: #{tpu_custom_call.1} parent=1 // pred_check
      _
    $region3: #{tpu_custom_call.1} parent=1 // pred_check_branch
      %12 = sbr.rel (0) target = $region5
    $region4: #{tpu_custom_call.1} parent=1 // pred_region
      %s14 = ssub.s32 4864, 4864
      %15 = vsyncadd [#allocation3], %s14
      %s16 = sshll.u32 [#allocation2], 4
      %s17 = int_to_ptr.vmem [resolvable:$true] %s16
      %22 = dma.hbm_to_vmem [thread:$0]  %s0, 4864, %s17, [#allocation3], 128, 128, 8
    $region5: #{tpu_custom_call.1} parent=1 // pred_fallthru
      _
    // Predicated region
    $region6: #{tpu_custom_call.1} parent=1 // pred_check
      _
    $region7: #{tpu_custom_call.1} parent=1 // pred_check_branch
      %24 = sbr.rel (0) target = $region9
    $region8: #{tpu_custom_call.1} parent=1 // pred_region
      %s26 = ssub.s32 32, 32
      %27 = vsyncadd [#allocation4], %s26
      %s29 = sshll.u32 %s1, 4
      %s30 = int_to_ptr.vmem [resolvable:$true] %s29
      %32 = dma.vmem_to_smem %s30, 32, [#allocation5], [#allocation4]
    $region9: #{tpu_custom_call.1} parent=1 // pred_fallthru
      _
    // Predicated region
    $region10: #{tpu_custom_call.1} parent=1 // pred_check
      _
    $region11: #{tpu_custom_call.1} parent=1 // pred_check_branch
      %34 = sbr.rel (0) target = $region13
    $region12: #{tpu_custom_call.1} parent=1 // pred_region
      %s36 = ssub.s32 16, 16
      %37 = vsyncadd [#allocation7], %s36
      %s39 = sshll.u32 %s2, 4
      %s40 = int_to_ptr.vmem [resolvable:$true] %s39
      %42 = dma.vmem_to_smem %s40, 16, [#allocation6], [#allocation7]
    $region13: #{tpu_custom_call.1} parent=1 // pred_fallthru
      _
    // Predicated region
    $region14: #{tpu_custom_call.1} parent=1 // pred_check
      _
    $region15: #{tpu_custom_call.1} parent=1 // pred_check_branch
      %44 = sbr.rel (0) target = $region17
    $region16: #{tpu_custom_call.1} parent=1 // pred_region
      %45 = dma.done [#allocation3], 4864
    $region17: #{tpu_custom_call.1} parent=1 // pred_fallthru
      _
    // Predicated region
    $region18: #{tpu_custom_call.1} parent=1 // pred_check
      _
    $region19: #{tpu_custom_call.1} parent=1 // pred_check_branch
      %47 = sbr.rel (0) target = $region21
    $region20: #{tpu_custom_call.1} parent=1 // pred_region
      %48 = dma.done [#allocation4], 32
    $region21: #{tpu_custom_call.1} parent=1 // pred_fallthru
      _
    // Predicated region
    $region22: #{tpu_custom_call.1} parent=1 // pred_check
      _
    $region23: #{tpu_custom_call.1} parent=1 // pred_check_branch
      %50 = sbr.rel (0) target = $region25
    $region24: #{tpu_custom_call.1} parent=1 // pred_region
      %51 = dma.done [#allocation7], 16
    $region25: #{tpu_custom_call.1} parent=1 // pred_fallthru
      _
    %52 = sfence
    %v53 = vld [vmem:[#allocation2] sm:$0xff]
    %v54 = vld [vmem:[#allocation2 + $0x8] sm:$0xff]
    %v55 = vld [vmem:[#allocation2 + $0x10] sm:$0xff]
    %v56 = vld [vmem:[#allocation2 + $0x18] sm:$0xff]
    %v57 = vld [vmem:[#allocation2 + $0x20] sm:$0xff]
    %v58 = vld [vmem:[#allocation2 + $0x28] sm:$0xff]
    %v59 = vld [vmem:[#allocation2 + $0x30] sm:$0xff]
    %v60 = vld [vmem:[#allocation2 + $0x38] sm:$0xff]
    %v61 = vld [vmem:[#allocation2 + $0x40] sm:$0xff]
    %v62 = vld [vmem:[#allocation2 + $0x48] sm:$0xff]
    %v63 = vld [vmem:[#allocation2 + $0x50] sm:$0xff]
    %v64 = vld [vmem:[#allocation2 + $0x58] sm:$0xff]
    %v65 = vld [vmem:[#allocation2 + $0x60] sm:$0xff]
    %v66 = vld [vmem:[#allocation2 + $0x68] sm:$0xff]
    %v67 = vld [vmem:[#allocation2 + $0x70] sm:$0xff]
    %v68 = vld [vmem:[#allocation2 + $0x78] sm:$0xff]
    %v69 = vld [vmem:[#allocation2 + $0x80] sm:$0xff]
    %v70 = vld [vmem:[#allocation2 + $0x88] sm:$0xff]
    %v71 = vld [vmem:[#allocation2 + $0x90] sm:$0xff]
    %v72 = vld [vmem:[#allocation2 + $0x98] sm:$0xff]
    %v73 = vld [vmem:[#allocation2 + $0xa0] sm:$0xff]
    %v74 = vld [vmem:[#allocation2 + $0xa8] sm:$0xff]
    %v75 = vld [vmem:[#allocation2 + $0xb0] sm:$0xff]
    %v76 = vld [vmem:[#allocation2 + $0xb8] sm:$0xff]
    %v77 = vld [vmem:[#allocation2 + $0xc0] sm:$0xff]
    %v78 = vld [vmem:[#allocation2 + $0xc8] sm:$0xff]
    %v79 = vld [vmem:[#allocation2 + $0xd0] sm:$0xff]
    %v80 = vld [vmem:[#allocation2 + $0xd8] sm:$0xff]
    %v81 = vld [vmem:[#allocation2 + $0xe0] sm:$0xff]
    %v82 = vld [vmem:[#allocation2 + $0xe8] sm:$0xff]
    %v83 = vld [vmem:[#allocation2 + $0xf0] sm:$0xff]
    %v84 = vld [vmem:[#allocation2 + $0xf8] sm:$0xff]
    %v85 = vld [vmem:[#allocation2 + $0x100] sm:$0xff]
    %v86 = vld [vmem:[#allocation2 + $0x108] sm:$0xff]
    %v87 = vld [vmem:[#allocation2 + $0x110] sm:$0xff]
    %v88 = vld [vmem:[#allocation2 + $0x118] sm:$0xff]
    %v89 = vld [vmem:[#allocation2 + $0x120] sm:$0xff]
    %v90 = vld [vmem:[#allocation2 + $0x128] sm:$0xff]
    %v91 = vlaneseq
    %v92 = vshrl.u32 %v91, 7
    %v93 = vadd.s32 %v92, 8
    %v94 = vadd.s32 %v92, 16
    %v95 = vadd.s32 %v92, 24
    %v96 = vadd.s32 %v92, 32
    %v97 = vadd.s32 %v92, 40
    %v98 = vadd.s32 %v92, 48
    %v99 = vadd.s32 %v92, 56
    %v100 = vadd.s32 %v92, 64
    %v101 = vadd.s32 %v92, 72
    %v102 = vadd.s32 %v92, 80
    %v103 = vadd.s32 %v92, 88
    %v104 = vadd.s32 %v92, 96
    %v105 = vlaneseq
    %v106 = vand.u32 %v105, 127
    %v107 = vmul.u32 %v106, 3
    %vm108 = vcmp.eq.s32.totalorder %v92, %v107
    %vm109 = vcmp.eq.s32.totalorder %v93, %v107
    %vm110 = vcmp.eq.s32.totalorder %v94, %v107
    %vm111 = vcmp.eq.s32.totalorder %v95, %v107
    %vm112 = vcmp.eq.s32.totalorder %v96, %v107
    %vm113 = vcmp.eq.s32.totalorder %v97, %v107
    %vm114 = vcmp.eq.s32.totalorder %v98, %v107
    %vm115 = vcmp.eq.s32.totalorder %v99, %v107
    %vm116 = vcmp.eq.s32.totalorder %v100, %v107
    %vm117 = vcmp.eq.s32.totalorder %v101, %v107
    %vm118 = vcmp.eq.s32.totalorder %v102, %v107
    %vm119 = vcmp.eq.s32.totalorder %v103, %v107
    %vm120 = vcmp.eq.s32.totalorder %v104, %v107
    %v121 = vsel %vm108, 1, 0
    %v122 = vsel %vm109, 1, 0
    %v123 = vsel %vm110, 1, 0
    %v124 = vsel %vm111, 1, 0
    %v125 = vsel %vm112, 1, 0
    %v126 = vsel %vm113, 1, 0
    %v127 = vsel %vm114, 1, 0
    %v128 = vsel %vm115, 1, 0
    %v129 = vsel %vm116, 1, 0
    %v130 = vsel %vm117, 1, 0
    %v131 = vsel %vm118, 1, 0
    %v132 = vsel %vm119, 1, 0
    %v133 = vsel %vm120, 1, 0
    %v134 = vcvt.s32.f32 %v121
    %v135 = vcvt.s32.f32 %v122
    %v136 = vcvt.s32.f32 %v123
    %v137 = vcvt.s32.f32 %v124
    %v138 = vcvt.s32.f32 %v125
    %v139 = vcvt.s32.f32 %v126
    %v140 = vcvt.s32.f32 %v127
    %v141 = vcvt.s32.f32 %v128
    %v142 = vcvt.s32.f32 %v129
    %v143 = vcvt.s32.f32 %v130
    %v144 = vcvt.s32.f32 %v131
    %v145 = vcvt.s32.f32 %v132
    %v146 = vcvt.s32.f32 %v133
    %vm147 = vcmask 801792
    %v149 = vsel %vm147, %v53, 0
    %v152 = vsel %vm147, %v54, 0
    %v155 = vsel %vm147, %v55, 0
    %v158 = vsel %vm147, %v56, 0
    %v161 = vsel %vm147, %v57, 0
    %v164 = vsel %vm147, %v58, 0
    %v167 = vsel %vm147, %v59, 0
    %v170 = vsel %vm147, %v60, 0
    %v173 = vsel %vm147, %v61, 0
    %v176 = vsel %vm147, %v62, 0
    %v179 = vsel %vm147, %v63, 0
    %v182 = vsel %vm147, %v64, 0
    %v185 = vsel %vm147, %v65, 0
    %v188 = vsel %vm147, %v66, 0
    %v191 = vsel %vm147, %v67, 0
    %v194 = vsel %vm147, %v68, 0
    %v197 = vsel %vm147, %v69, 0
    %v200 = vsel %vm147, %v70, 0
    %v203 = vsel %vm147, %v71, 0
    %v206 = vsel %vm147, %v72, 0
    %v209 = vsel %vm147, %v73, 0
    %v212 = vsel %vm147, %v74, 0
    %v215 = vsel %vm147, %v75, 0
    %v218 = vsel %vm147, %v76, 0
    %v221 = vsel %vm147, %v77, 0
    %v224 = vsel %vm147, %v78, 0
    %v227 = vsel %vm147, %v79, 0
    %v230 = vsel %vm147, %v80, 0
    %v233 = vsel %vm147, %v81, 0
    %v236 = vsel %vm147, %v82, 0
    %v239 = vsel %vm147, %v83, 0
    %v242 = vsel %vm147, %v84, 0
    %v245 = vsel %vm147, %v85, 0
    %v248 = vsel %vm147, %v86, 0
    %v251 = vsel %vm147, %v87, 0
    %v254 = vsel %vm147, %v88, 0
    %v257 = vsel %vm147, %v89, 0
    %v260 = vsel %vm147, %v90, 0
    %vm262 = vcmask 1041408
    %v264 = vsel %vm262, %v146, 0
    %266 = vmatprep.subr.mxu0 0.0
    %v267 = vand.u32 %v134, 4294901760
    %268 = vmatpush1.msra.mxu0 %v267
    %269 = vmatprep.subr.mxu0 0.0
    %v270 = vand.u32 %v135, 4294901760
    %271 = vmatpush1.msra.mxu0 %v270
    %272 = vmatprep.subr.mxu0 0.0
    %v273 = vand.u32 %v136, 4294901760
    %274 = vmatpush1.msra.mxu0 %v273
    %275 = vmatprep.subr.mxu0 0.0
    %v276 = vand.u32 %v137, 4294901760
    %277 = vmatpush1.msra.mxu0 %v276
    %278 = vmatprep.subr.mxu0 0.0
    %v279 = vand.u32 %v138, 4294901760
    %280 = vmatpush1.msra.mxu0 %v279
    %281 = vmatprep.subr.mxu0 0.0
    %v282 = vand.u32 %v139, 4294901760
    %283 = vmatpush1.msra.mxu0 %v282
    %284 = vmatprep.subr.mxu0 0.0
    %v285 = vand.u32 %v140, 4294901760
    %286 = vmatpush1.msra.mxu0 %v285
    %287 = vmatprep.subr.mxu0 0.0
    %v288 = vand.u32 %v141, 4294901760
    %289 = vmatpush1.msra.mxu0 %v288
    %290 = vmatprep.subr.mxu0 0.0
    %v291 = vand.u32 %v142, 4294901760
    %292 = vmatpush1.msra.mxu0 %v291
    %293 = vmatprep.subr.mxu0 0.0
    %v294 = vand.u32 %v143, 4294901760
    %295 = vmatpush1.msra.mxu0 %v294
    %296 = vmatprep.subr.mxu0 0.0
    %v297 = vand.u32 %v144, 4294901760
    %298 = vmatpush1.msra.mxu0 %v297
    %299 = vmatprep.subr.mxu0 0.0
    %v300 = vand.u32 %v145, 4294901760
    %301 = vmatpush1.msra.mxu0 %v300
    %302 = vmatprep.subr.mxu0 0.0
    %v303 = vand.u32 %v264, 4294901760
    %304 = vmatpush1.msra.mxu0 %v303
    %305 = vmatprep.subr.mxu0 0.0
    %306 = vmatpush1.msra.mxu0 0.0
    %307 = vmatprep.subr.mxu0 0.0
    %308 = vmatpush1.msra.mxu0 0.0
    %309 = vmatprep.subr.mxu0 0.0
    %310 = vmatpush1.msra.mxu0 0.0
    %311 = vmatprep.subr.mxu0 0.0
    %312 = vmatpush1.msra.mxu0 0.0
    %313 = vmatprep.subr.mxu0 0.0
    %314 = vmatpush1.msra.mxu0 0.0
    %315 = vmatprep.subr.mxu0 0.0
    %316 = vmatpush1.msra.mxu0 0.0
    %317 = vmatprep.subr.mxu0 0.0
    %318 = vmatpush1.msra.mxu0 0.0
    %319 = vmatprep.subr.mxu0 0.0
    %320 = vmatpush1.msra.mxu0 0.0
    %321 = vmatprep.subr.mxu0 0.0
    %322 = vmatpush1.msra.mxu0 0.0
    %323 = vmatprep.subr.mxu0 0.0
    %324 = vmatpush1.msra.mxu0 0.0
    %325 = vmatprep.subr.mxu0 0.0
    %326 = vmatpush1.msra.mxu0 0.0
    %327 = vmatprep.subr.mxu0 0.0
    %328 = vmatpush1.msra.mxu0 0.0
    %329 = vmatprep.subr.mxu0 0.0
    %330 = vmatpush1.msra.mxu0 0.0
    %331 = vmatprep.subr.mxu0 0.0
    %332 = vmatpush1.msra.mxu0 0.0
    %333 = vmatprep.subr.mxu0 0.0
    %334 = vmatpush1.msra.mxu0 0.0
    %335 = vmatprep.subr.mxu0 0.0
    %336 = vmatpush1.msra.mxu0 0.0
    %337 = vmatprep.subr.mxu0 0.0
    %338 = vmatpush1.msra.mxu0 0.0
    %339 = vmatprep.subr.mxu0 0.0
    %340 = vmatpush1.msra.mxu0 0.0
    %341 = vmatprep.subr.mxu0 0.0
    %342 = vmatpush1.msra.mxu0 0.0
    %343 = vmatprep.mubr.f32.mxu0 0.0
    %v344 = vand.u32 %v149, 4294901760
    %v345 = vsub.f32 %v149, %v344
    %v346 = vand.u32 %v345, 4294901760
    %v347 = vsub.f32 %v345, %v346
    %v348 = vand.u32 %v347, 4294901760
    %349 = vmatmul.mubr.f32.gmra.mrb[0].mxu0 %v348
    %v350 = vpop.f32.mrb[0].mxu0
    %v351 = vadd.f32 0.0, %v350
    %v352 = vpop.f32.mrb[0].mxu0
    %353 = vmatprep.mubr.f32.mxu0 0.0
    %v354 = vand.u32 %v152, 4294901760
    %v355 = vsub.f32 %v152, %v354
    %v356 = vand.u32 %v355, 4294901760
    %v357 = vsub.f32 %v355, %v356
    %v358 = vand.u32 %v357, 4294901760
    %359 = vmatmul.mubr.f32.gmra.mrb[0].mxu0 %v358
    %v360 = vpop.f32.mrb[0].mxu0
    %v361 = vadd.f32 0.0, %v360
    %v362 = vpop.f32.mrb[0].mxu0
    %363 = vmatprep.mubr.f32.mxu0 0.0
    %v364 = vand.u32 %v155, 4294901760
    %v365 = vsub.f32 %v155, %v364
    %v366 = vand.u32 %v365, 4294901760
    %v367 = vsub.f32 %v365, %v366
    %v368 = vand.u32 %v367, 4294901760
    %369 = vmatmul.mubr.f32.gmra.mrb[0].mxu0 %v368
    %v370 = vpop.f32.mrb[0].mxu0
    %v371 = vadd.f32 0.0, %v370
    %v372 = vpop.f32.mrb[0].mxu0
    %373 = vmatprep.mubr.f32.mxu0 0.0
    %v374 = vand.u32 %v158, 4294901760
    %v375 = vsub.f32 %v158, %v374
    %v376 = vand.u32 %v375, 4294901760
    %v377 = vsub.f32 %v375, %v376
    %v378 = vand.u32 %v377, 4294901760
    %379 = vmatmul.mubr.f32.gmra.mrb[0].mxu0 %v378
    %v380 = vpop.f32.mrb[0].mxu0
    %v381 = vadd.f32 0.0, %v380
    %v382 = vpop.f32.mrb[0].mxu0
    %383 = vmatprep.mubr.f32.mxu0 0.0
    %v384 = vand.u32 %v161, 4294901760
    %v385 = vsub.f32 %v161, %v384
    %v386 = vand.u32 %v385, 4294901760
    %v387 = vsub.f32 %v385, %v386
    %v388 = vand.u32 %v387, 4294901760
    %389 = vmatmul.mubr.f32.gmra.mrb[0].mxu0 %v388
    %v390 = vpop.f32.mrb[0].mxu0
    %v391 = vadd.f32 0.0, %v390
    %v392 = vpop.f32.mrb[0].mxu0
    %393 = vmatprep.mubr.f32.mxu0 0.0
    %v394 = vand.u32 %v164, 4294901760
    %v395 = vsub.f32 %v164, %v394
    %v396 = vand.u32 %v395, 4294901760
    %v397 = vsub.f32 %v395, %v396
    %v398 = vand.u32 %v397, 4294901760
    %399 = vmatmul.mubr.f32.gmra.mrb[0].mxu0 %v398
    %v400 = vpop.f32.mrb[0].mxu0
    %v401 = vadd.f32 0.0, %v400
    %v402 = vpop.f32.mrb[0].mxu0
    %403 = vmatprep.mubr.f32.mxu0 0.0
    %v404 = vand.u32 %v167, 4294901760
    %v405 = vsub.f32 %v167, %v404
    %v406 = vand.u32 %v405, 4294901760
    %v407 = vsub.f32 %v405, %v406
    %v408 = vand.u32 %v407, 4294901760
    %409 = vmatmul.mubr.f32.gmra.mrb[0].mxu0 %v408
    %v410 = vpop.f32.mrb[0].mxu0
    %v411 = vadd.f32 0.0, %v410
    %v412 = vpop.f32.mrb[0].mxu0
    %413 = vmatprep.mubr.f32.mxu0 0.0
    %v414 = vand.u32 %v170, 4294901760
    %v415 = vsub.f32 %v170, %v414
    %v416 = vand.u32 %v415, 4294901760
    %v417 = vsub.f32 %v415, %v416
    %v418 = vand.u32 %v417, 4294901760
    %419 = vmatmul.mubr.f32.gmra.mrb[0].mxu0 %v418
    %v420 = vpop.f32.mrb[0].mxu0
    %v421 = vadd.f32 0.0, %v420
    %v422 = vpop.f32.mrb[0].mxu0
    %423 = vmatprep.mubr.f32.mxu0 0.0
    %v424 = vand.u32 %v173, 4294901760
    %v425 = vsub.f32 %v173, %v424
    %v426 = vand.u32 %v425, 4294901760
    %v427 = vsub.f32 %v425, %v426
    %v428 = vand.u32 %v427, 4294901760
    %429 = vmatmul.mubr.f32.gmra.mrb[0].mxu0 %v428
    %v430 = vpop.f32.mrb[0].mxu0
    %v431 = vadd.f32 0.0, %v430
    %v432 = vpop.f32.mrb[0].mxu0
    %433 = vmatprep.mubr.f32.mxu0 0.0
    %v434 = vand.u32 %v176, 4294901760
    %v435 = vsub.f32 %v176, %v434
    %v436 = vand.u32 %v435, 4294901760
    %v437 = vsub.f32 %v435, %v436
    %v438 = vand.u32 %v437, 4294901760
    %439 = vmatmul.mubr.f32.gmra.mrb[0].mxu0 %v438
    %v440 = vpop.f32.mrb[0].mxu0
    %v441 = vadd.f32 0.0, %v440
    %v442 = vpop.f32.mrb[0].mxu0
    %443 = vmatprep.mubr.f32.mxu0 0.0
    %v444 = vand.u32 %v179, 4294901760
    %v445 = vsub.f32 %v179, %v444
    %v446 = vand.u32 %v445, 4294901760
    %v447 = vsub.f32 %v445, %v446
    %v448 = vand.u32 %v447, 4294901760
    %449 = vmatmul.mubr.f32.gmra.mrb[0].mxu0 %v448
    %v450 = vpop.f32.mrb[0].mxu0
    %v451 = vadd.f32 0.0, %v450
    %v452 = vpop.f32.mrb[0].mxu0
    %453 = vmatprep.mubr.f32.mxu0 0.0
    %v454 = vand.u32 %v182, 4294901760
    %v455 = vsub.f32 %v182, %v454
    %v456 = vand.u32 %v455, 4294901760
    %v457 = vsub.f32 %v455, %v456
    %v458 = vand.u32 %v457, 4294901760
    %459 = vmatmul.mubr.f32.gmra.mrb[0].mxu0 %v458
    %v460 = vpop.f32.mrb[0].mxu0
    %v461 = vadd.f32 0.0, %v460
    %v462 = vpop.f32.mrb[0].mxu0
    %463 = vmatprep.mubr.f32.mxu0 0.0
    %v464 = vand.u32 %v185, 4294901760
    %v465 = vsub.f32 %v185, %v464
    %v466 = vand.u32 %v465, 4294901760
    %v467 = vsub.f32 %v465, %v466
    %v468 = vand.u32 %v467, 4294901760
    %469 = vmatmul.mubr.f32.gmra.mrb[0].mxu0 %v468
    %v470 = vpop.f32.mrb[0].mxu0
    %v471 = vadd.f32 0.0, %v470
    %v472 = vpop.f32.mrb[0].mxu0
    %473 = vmatprep.mubr.f32.mxu0 0.0
    %v474 = vand.u32 %v188, 4294901760
    %v475 = vsub.f32 %v188, %v474
    %v476 = vand.u32 %v475, 4294901760
    %v477 = vsub.f32 %v475, %v476
    %v478 = vand.u32 %v477, 4294901760
    %479 = vmatmul.mubr.f32.gmra.mrb[0].mxu0 %v478
    %v480 = vpop.f32.mrb[0].mxu0
    %v481 = vadd.f32 0.0, %v480
    %v482 = vpop.f32.mrb[0].mxu0
    %483 = vmatprep.mubr.f32.mxu0 0.0
    %v484 = vand.u32 %v191, 4294901760
    %v485 = vsub.f32 %v191, %v484
    %v486 = vand.u32 %v485, 4294901760
    %v487 = vsub.f32 %v485, %v486
    %v488 = vand.u32 %v487, 4294901760
    %489 = vmatmul.mubr.f32.gmra.mrb[0].mxu0 %v488
    %v490 = vpop.f32.mrb[0].mxu0
    %v491 = vadd.f32 0.0, %v490
    %v492 = vpop.f32.mrb[0].mxu0
    %493 = vmatprep.mubr.f32.mxu0 0.0
    %v494 = vand.u32 %v194, 4294901760
    %v495 = vsub.f32 %v194, %v494
    %v496 = vand.u32 %v495, 4294901760
    %v497 = vsub.f32 %v495, %v496
    %v498 = vand.u32 %v497, 4294901760
    %499 = vmatmul.mubr.f32.gmra.mrb[0].mxu0 %v498
    %v500 = vpop.f32.mrb[0].mxu0
    %v501 = vadd.f32 0.0, %v500
    %v502 = vpop.f32.mrb[0].mxu0
    %503 = vmatprep.mubr.f32.mxu0 0.0
    %v504 = vand.u32 %v197, 4294901760
    %v505 = vsub.f32 %v197, %v504
    %v506 = vand.u32 %v505, 4294901760
    %v507 = vsub.f32 %v505, %v506
    %v508 = vand.u32 %v507, 4294901760
    %509 = vmatmul.mubr.f32.gmra.mrb[0].mxu0 %v508
    %v510 = vpop.f32.mrb[0].mxu0
    %v511 = vadd.f32 0.0, %v510
    %v512 = vpop.f32.mrb[0].mxu0
    %513 = vmatprep.mubr.f32.mxu0 0.0
    %v514 = vand.u32 %v200, 4294901760
    %v515 = vsub.f32 %v200, %v514
    %v516 = vand.u32 %v515, 4294901760
    %v517 = vsub.f32 %v515, %v516
    %v518 = vand.u32 %v517, 4294901760
    %519 = vmatmul.mubr.f32.gmra.mrb[0].mxu0 %v518
    %v520 = vpop.f32.mrb[0].mxu0
    %v521 = vadd.f32 0.0, %v520
    %v522 = vpop.f32.mrb[0].mxu0
    %523 = vmatprep.mubr.f32.mxu0 0.0
    %v524 = vand.u32 %v203, 4294901760
    %v525 = vsub.f32 %v203, %v524
    %v526 = vand.u32 %v525, 4294901760
    %v527 = vsub.f32 %v525, %v526
    %v528 = vand.u32 %v527, 4294901760
    %529 = vmatmul.mubr.f32.gmra.mrb[0].mxu0 %v528
    %v530 = vpop.f32.mrb[0].mxu0
    %v531 = vadd.f32 0.0, %v530
    %v532 = vpop.f32.mrb[0].mxu0
    %533 = vmatprep.mubr.f32.mxu0 0.0
    %v534 = vand.u32 %v206, 4294901760
    %v535 = vsub.f32 %v206, %v534
    %v536 = vand.u32 %v535, 4294901760
    %v537 = vsub.f32 %v535, %v536
    %v538 = vand.u32 %v537, 4294901760
    %539 = vmatmul.mubr.f32.gmra.mrb[0].mxu0 %v538
    %v540 = vpop.f32.mrb[0].mxu0
    %v541 = vadd.f32 0.0, %v540
    %v542 = vpop.f32.mrb[0].mxu0
    %543 = vmatprep.mubr.f32.mxu0 0.0
    %v544 = vand.u32 %v209, 4294901760
    %v545 = vsub.f32 %v209, %v544
    %v546 = vand.u32 %v545, 4294901760
    %v547 = vsub.f32 %v545, %v546
    %v548 = vand.u32 %v547, 4294901760
    %549 = vmatmul.mubr.f32.gmra.mrb[0].mxu0 %v548
    %v550 = vpop.f32.mrb[0].mxu0
    %v551 = vadd.f32 0.0, %v550
    %v552 = vpop.f32.mrb[0].mxu0
    %553 = vmatprep.mubr.f32.mxu0 0.0
    %v554 = vand.u32 %v212, 4294901760
    %v555 = vsub.f32 %v212, %v554
    %v556 = vand.u32 %v555, 4294901760
    %v557 = vsub.f32 %v555, %v556
    %v558 = vand.u32 %v557, 4294901760
    %559 = vmatmul.mubr.f32.gmra.mrb[0].mxu0 %v558
    %v560 = vpop.f32.mrb[0].mxu0
    %v561 = vadd.f32 0.0, %v560
    %v562 = vpop.f32.mrb[0].mxu0
    %563 = vmatprep.mubr.f32.mxu0 0.0
    %v564 = vand.u32 %v215, 4294901760
    %v565 = vsub.f32 %v215, %v564
    %v566 = vand.u32 %v565, 4294901760
    %v567 = vsub.f32 %v565, %v566
    %v568 = vand.u32 %v567, 4294901760
    %569 = vmatmul.mubr.f32.gmra.mrb[0].mxu0 %v568
    %v570 = vpop.f32.mrb[0].mxu0
    %v571 = vadd.f32 0.0, %v570
    %v572 = vpop.f32.mrb[0].mxu0
    %573 = vmatprep.mubr.f32.mxu0 0.0
    %v574 = vand.u32 %v218, 4294901760
    %v575 = vsub.f32 %v218, %v574
    %v576 = vand.u32 %v575, 4294901760
    %v577 = vsub.f32 %v575, %v576
    %v578 = vand.u32 %v577, 4294901760
    %579 = vmatmul.mubr.f32.gmra.mrb[0].mxu0 %v578
    %v580 = vpop.f32.mrb[0].mxu0
    %v581 = vadd.f32 0.0, %v580
    %v582 = vpop.f32.mrb[0].mxu0
    %583 = vmatprep.mubr.f32.mxu0 0.0
    %v584 = vand.u32 %v221, 4294901760
    %v585 = vsub.f32 %v221, %v584
    %v586 = vand.u32 %v585, 4294901760
    %v587 = vsub.f32 %v585, %v586
    %v588 = vand.u32 %v587, 4294901760
    %589 = vmatmul.mubr.f32.gmra.mrb[0].mxu0 %v588
    %v590 = vpop.f32.mrb[0].mxu0
    %v591 = vadd.f32 0.0, %v590
    %v592 = vpop.f32.mrb[0].mxu0
    %593 = vmatprep.mubr.f32.mxu0 0.0
    %v594 = vand.u32 %v224, 4294901760
    %v595 = vsub.f32 %v224, %v594
    %v596 = vand.u32 %v595, 4294901760
    %v597 = vsub.f32 %v595, %v596
    %v598 = vand.u32 %v597, 4294901760
    %599 = vmatmul.mubr.f32.gmra.mrb[0].mxu0 %v598
    %v600 = vpop.f32.mrb[0].mxu0
    %v601 = vadd.f32 0.0, %v600
    %v602 = vpop.f32.mrb[0].mxu0
    %603 = vmatprep.mubr.f32.mxu0 0.0
    %v604 = vand.u32 %v227, 4294901760
    %v605 = vsub.f32 %v227, %v604
    %v606 = vand.u32 %v605, 4294901760
    %v607 = vsub.f32 %v605, %v606
    %v608 = vand.u32 %v607, 4294901760
    %609 = vmatmul.mubr.f32.gmra.mrb[0].mxu0 %v608
    %v610 = vpop.f32.mrb[0].mxu0
    %v611 = vadd.f32 0.0, %v610
    %v612 = vpop.f32.mrb[0].mxu0
    %613 = vmatprep.mubr.f32.mxu0 0.0
    %v614 = vand.u32 %v230, 4294901760
    %v615 = vsub.f32 %v230, %v614
    %v616 = vand.u32 %v615, 4294901760
    %v617 = vsub.f32 %v615, %v616
    %v618 = vand.u32 %v617, 4294901760
    %619 = vmatmul.mubr.f32.gmra.mrb[0].mxu0 %v618
    %v620 = vpop.f32.mrb[0].mxu0
    %v621 = vadd.f32 0.0, %v620
    %v622 = vpop.f32.mrb[0].mxu0
    %623 = vmatprep.mubr.f32.mxu0 0.0
    %v624 = vand.u32 %v233, 4294901760
    %v625 = vsub.f32 %v233, %v624
    %v626 = vand.u32 %v625, 4294901760
    %v627 = vsub.f32 %v625, %v626
    %v628 = vand.u32 %v627, 4294901760
    %629 = vmatmul.mubr.f32.gmra.mrb[0].mxu0 %v628
    %v630 = vpop.f32.mrb[0].mxu0
    %v631 = vadd.f32 0.0, %v630
    %v632 = vpop.f32.mrb[0].mxu0
    %633 = vmatprep.mubr.f32.mxu0 0.0
    %v634 = vand.u32 %v236, 4294901760
    %v635 = vsub.f32 %v236, %v634
    %v636 = vand.u32 %v635, 4294901760
    %v637 = vsub.f32 %v635, %v636
    %v638 = vand.u32 %v637, 4294901760
    %639 = vmatmul.mubr.f32.gmra.mrb[0].mxu0 %v638
    %v640 = vpop.f32.mrb[0].mxu0
    %v641 = vadd.f32 0.0, %v640
    %v642 = vpop.f32.mrb[0].mxu0
    %643 = vmatprep.mubr.f32.mxu0 0.0
    %v644 = vand.u32 %v239, 4294901760
    %v645 = vsub.f32 %v239, %v644
    %v646 = vand.u32 %v645, 4294901760
    %v647 = vsub.f32 %v645, %v646
    %v648 = vand.u32 %v647, 4294901760
    %649 = vmatmul.mubr.f32.gmra.mrb[0].mxu0 %v648
    %v650 = vpop.f32.mrb[0].mxu0
    %v651 = vadd.f32 0.0, %v650
    %v652 = vpop.f32.mrb[0].mxu0
    %653 = vmatprep.mubr.f32.mxu0 0.0
    %v654 = vand.u32 %v242, 4294901760
    %v655 = vsub.f32 %v242, %v654
    %v656 = vand.u32 %v655, 4294901760
    %v657 = vsub.f32 %v655, %v656
    %v658 = vand.u32 %v657, 4294901760
    %659 = vmatmul.mubr.f32.gmra.mrb[0].mxu0 %v658
    %v660 = vpop.f32.mrb[0].mxu0
    %v661 = vadd.f32 0.0, %v660
    %v662 = vpop.f32.mrb[0].mxu0
    %663 = vmatprep.mubr.f32.mxu0 0.0
    %v664 = vand.u32 %v245, 4294901760
    %v665 = vsub.f32 %v245, %v664
    %v666 = vand.u32 %v665, 4294901760
    %v667 = vsub.f32 %v665, %v666
    %v668 = vand.u32 %v667, 4294901760
    %669 = vmatmul.mubr.f32.gmra.mrb[0].mxu0 %v668
    %v670 = vpop.f32.mrb[0].mxu0
    %v671 = vadd.f32 0.0, %v670
    %v672 = vpop.f32.mrb[0].mxu0
    %673 = vmatprep.mubr.f32.mxu0 0.0
    %v674 = vand.u32 %v248, 4294901760
    %v675 = vsub.f32 %v248, %v674
    %v676 = vand.u32 %v675, 4294901760
    %v677 = vsub.f32 %v675, %v676
    %v678 = vand.u32 %v677, 4294901760
    %679 = vmatmul.mubr.f32.gmra.mrb[0].mxu0 %v678
    %v680 = vpop.f32.mrb[0].mxu0
    %v681 = vadd.f32 0.0, %v680
    %v682 = vpop.f32.mrb[0].mxu0
    %683 = vmatprep.mubr.f32.mxu0 0.0
    %v684 = vand.u32 %v251, 4294901760
    %v685 = vsub.f32 %v251, %v684
    %v686 = vand.u32 %v685, 4294901760
    %v687 = vsub.f32 %v685, %v686
    %v688 = vand.u32 %v687, 4294901760
    %689 = vmatmul.mubr.f32.gmra.mrb[0].mxu0 %v688
    %v690 = vpop.f32.mrb[0].mxu0
    %v691 = vadd.f32 0.0, %v690
    %v692 = vpop.f32.mrb[0].mxu0
    %693 = vmatprep.mubr.f32.mxu0 0.0
    %v694 = vand.u32 %v254, 4294901760
    %v695 = vsub.f32 %v254, %v694
    %v696 = vand.u32 %v695, 4294901760
    %v697 = vsub.f32 %v695, %v696
    %v698 = vand.u32 %v697, 4294901760
    %699 = vmatmul.mubr.f32.gmra.mrb[0].mxu0 %v698
    %v700 = vpop.f32.mrb[0].mxu0
    %v701 = vadd.f32 0.0, %v700
    %v702 = vpop.f32.mrb[0].mxu0
    %703 = vmatprep.mubr.f32.mxu0 0.0
    %v704 = vand.u32 %v257, 4294901760
    %v705 = vsub.f32 %v257, %v704
    %v706 = vand.u32 %v705, 4294901760
    %v707 = vsub.f32 %v705, %v706
    %v708 = vand.u32 %v707, 4294901760
    %709 = vmatmul.mubr.f32.gmra.mrb[0].mxu0 %v708
    %v710 = vpop.f32.mrb[0].mxu0
    %v711 = vadd.f32 0.0, %v710
    %v712 = vpop.f32.mrb[0].mxu0
    %713 = vmatprep.mubr.f32.mxu0 0.0
    %v714 = vand.u32 %v260, 4294901760
    %v715 = vsub.f32 %v260, %v714
    %v716 = vand.u32 %v715, 4294901760
    %v717 = vsub.f32 %v715, %v716
    %v718 = vand.u32 %v717, 4294901760
    %719 = vmatmul.mubr.f32.gmra.mrb[0].mxu0 %v718
    %v720 = vpop.f32.mrb[0].mxu0
    %v721 = vadd.f32 0.0, %v720
    %v722 = vpop.f32.mrb[0].mxu0
    %723 = vdwg.mxu0
    %724 = vmatprep.subr.mxu0 0.0
    %v725 = vand.u32 %v134, 4294901760
    %v726 = vsub.f32 %v134, %v725
    %v727 = vand.u32 %v726, 4294901760
    %v728 = vsub.f32 %v726, %v727
    %v729 = vand.u32 %v728, 4294901760
    %730 = vmatpush1.msra.mxu0 %v729
    %731 = vmatprep.subr.mxu0 0.0
    %v732 = vand.u32 %v135, 4294901760
    %v733 = vsub.f32 %v135, %v732
    %v734 = vand.u32 %v733, 4294901760
    %v735 = vsub.f32 %v733, %v734
    %v736 = vand.u32 %v735, 4294901760
    %737 = vmatpush1.msra.mxu0 %v736
    %738 = vmatprep.subr.mxu0 0.0
    %v739 = vand.u32 %v136, 4294901760
    %v740 = vsub.f32 %v136, %v739
    %v741 = vand.u32 %v740, 4294901760
    %v742 = vsub.f32 %v740, %v741
    %v743 = vand.u32 %v742, 4294901760
    %744 = vmatpush1.msra.mxu0 %v743
    %745 = vmatprep.subr.mxu0 0.0
    %v746 = vand.u32 %v137, 4294901760
    %v747 = vsub.f32 %v137, %v746
    %v748 = vand.u32 %v747, 4294901760
    %v749 = vsub.f32 %v747, %v748
    %v750 = vand.u32 %v749, 4294901760
    %751 = vmatpush1.msra.mxu0 %v750
    %752 = vmatprep.subr.mxu0 0.0
    %v753 = vand.u32 %v138, 4294901760
    %v754 = vsub.f32 %v138, %v753
    %v755 = vand.u32 %v754, 4294901760
    %v756 = vsub.f32 %v754, %v755
    %v757 = vand.u32 %v756, 4294901760
    %758 = vmatpush1.msra.mxu0 %v757
    %759 = vmatprep.subr.mxu0 0.0
    %v760 = vand.u32 %v139, 4294901760
    %v761 = vsub.f32 %v139, %v760
    %v762 = vand.u32 %v761, 4294901760
    %v763 = vsub.f32 %v761, %v762
    %v764 = vand.u32 %v763, 4294901760
    %765 = vmatpush1.msra.mxu0 %v764
    %766 = vmatprep.subr.mxu0 0.0
    %v767 = vand.u32 %v140, 4294901760
    %v768 = vsub.f32 %v140, %v767
    %v769 = vand.u32 %v768, 4294901760
    %v770 = vsub.f32 %v768, %v769
    %v771 = vand.u32 %v770, 4294901760
    %772 = vmatpush1.msra.mxu0 %v771
    %773 = vmatprep.subr.mxu0 0.0
    %v774 = vand.u32 %v141, 4294901760
    %v775 = vsub.f32 %v141, %v774
    %v776 = vand.u32 %v775, 4294901760
    %v777 = vsub.f32 %v775, %v776
    %v778 = vand.u32 %v777, 4294901760
    %779 = vmatpush1.msra.mxu0 %v778
    %780 = vmatprep.subr.mxu0 0.0
    %v781 = vand.u32 %v142, 4294901760
    %v782 = vsub.f32 %v142, %v781
    %v783 = vand.u32 %v782, 4294901760
    %v784 = vsub.f32 %v782, %v783
    %v785 = vand.u32 %v784, 4294901760
    %786 = vmatpush1.msra.mxu0 %v785
    %787 = vmatprep.subr.mxu0 0.0
    %v788 = vand.u32 %v143, 4294901760
    %v789 = vsub.f32 %v143, %v788
    %v790 = vand.u32 %v789, 4294901760
    %v791 = vsub.f32 %v789, %v790
    %v792 = vand.u32 %v791, 4294901760
    %793 = vmatpush1.msra.mxu0 %v792
    %794 = vmatprep.subr.mxu0 0.0
    %v795 = vand.u32 %v144, 4294901760
    %v796 = vsub.f32 %v144, %v795
    %v797 = vand.u32 %v796, 4294901760
    %v798 = vsub.f32 %v796, %v797
    %v799 = vand.u32 %v798, 4294901760
    %800 = vmatpush1.msra.mxu0 %v799
    %801 = vmatprep.subr.mxu0 0.0
    %v802 = vand.u32 %v145, 4294901760
    %v803 = vsub.f32 %v145, %v802
    %v804 = vand.u32 %v803, 4294901760
    %v805 = vsub.f32 %v803, %v804
    %v806 = vand.u32 %v805, 4294901760
    %807 = vmatpush1.msra.mxu0 %v806
    %808 = vmatprep.subr.mxu0 0.0
    %v809 = vand.u32 %v264, 4294901760
    %v810 = vsub.f32 %v264, %v809
    %v811 = vand.u32 %v810, 4294901760
    %v812 = vsub.f32 %v810, %v811
    %v813 = vand.u32 %v812, 4294901760
    %814 = vmatpush1.msra.mxu0 %v813
    %815 = vmatprep.subr.mxu0 0.0
    %816 = vmatpush1.msra.mxu0 0.0
    %817 = vmatprep.subr.mxu0 0.0
    %818 = vmatpush1.msra.mxu0 0.0
    %819 = vmatprep.subr.mxu0 0.0
    %820 = vmatpush1.msra.mxu0 0.0
    %821 = vmatprep.subr.mxu0 0.0
    %822 = vmatpush1.msra.mxu0 0.0
    %823 = vmatprep.subr.mxu0 0.0
    %824 = vmatpush1.msra.mxu0 0.0
    %825 = vmatprep.subr.mxu0 0.0
    %826 = vmatpush1.msra.mxu0 0.0
    %827 = vmatprep.subr.mxu0 0.0
    %828 = vmatpush1.msra.mxu0 0.0
    %829 = vmatprep.subr.mxu0 0.0
    %830 = vmatpush1.msra.mxu0 0.0
    %831 = vmatprep.subr.mxu0 0.0
    %832 = vmatpush1.msra.mxu0 0.0
    %833 = vmatprep.subr.mxu0 0.0
    %834 = vmatpush1.msra.mxu0 0.0
    %835 = vmatprep.subr.mxu0 0.0
    %836 = vmatpush1.msra.mxu0 0.0
    %837 = vmatprep.subr.mxu0 0.0
    %838 = vmatpush1.msra.mxu0 0.0
    %839 = vmatprep.subr.mxu0 0.0
    %840 = vmatpush1.msra.mxu0 0.0
    %841 = vmatprep.subr.mxu0 0.0
    %842 = vmatpush1.msra.mxu0 0.0
    %843 = vmatprep.subr.mxu0 0.0
    %844 = vmatpush1.msra.mxu0 0.0
    %845 = vmatprep.subr.mxu0 0.0
    %846 = vmatpush1.msra.mxu0 0.0
    %847 = vmatprep.subr.mxu0 0.0
    %848 = vmatpush1.msra.mxu0 0.0
    %849 = vmatprep.subr.mxu0 0.0
    %850 = vmatpush1.msra.mxu0 0.0
    %851 = vmatprep.subr.mxu0 0.0
    %852 = vmatpush1.msra.mxu0 0.0
    %853 = vmatprep.mubr.f32.mxu0 0.0
    %v854 = vand.u32 %v149, 4294901760
    %855 = vmatmul.mubr.f32.gmra.mrb[0].mxu0 %v854
    %v856 = vpop.f32.mrb[0].mxu0
    %v857 = vadd.f32 %v351, %v856
    %v858 = vpop.f32.mrb[0].mxu0
    %859 = vmatprep.mubr.f32.mxu0 0.0
    %v860 = vand.u32 %v152, 4294901760
    %861 = vmatmul.mubr.f32.gmra.mrb[0].mxu0 %v860
    %v862 = vpop.f32.mrb[0].mxu0
    %v863 = vadd.f32 %v361, %v862
    %v864 = vpop.f32.mrb[0].mxu0
    %865 = vmatprep.mubr.f32.mxu0 0.0
    %v866 = vand.u32 %v155, 4294901760
    %867 = vmatmul.mubr.f32.gmra.mrb[0].mxu0 %v866
    %v868 = vpop.f32.mrb[0].mxu0
    %v869 = vadd.f32 %v371, %v868
    %v870 = vpop.f32.mrb[0].mxu0
    %871 = vmatprep.mubr.f32.mxu0 0.0
    %v872 = vand.u32 %v158, 4294901760
    %873 = vmatmul.mubr.f32.gmra.mrb[0].mxu0 %v872
    %v874 = vpop.f32.mrb[0].mxu0
    %v875 = vadd.f32 %v381, %v874
    %v876 = vpop.f32.mrb[0].mxu0
    %877 = vmatprep.mubr.f32.mxu0 0.0
    %v878 = vand.u32 %v161, 4294901760
    %879 = vmatmul.mubr.f32.gmra.mrb[0].mxu0 %v878
    %v880 = vpop.f32.mrb[0].mxu0
    %v881 = vadd.f32 %v391, %v880
    %v882 = vpop.f32.mrb[0].mxu0
    %883 = vmatprep.mubr.f32.mxu0 0.0
    %v884 = vand.u32 %v164, 4294901760
    %885 = vmatmul.mubr.f32.gmra.mrb[0].mxu0 %v884
    %v886 = vpop.f32.mrb[0].mxu0
    %v887 = vadd.f32 %v401, %v886
    %v888 = vpop.f32.mrb[0].mxu0
    %889 = vmatprep.mubr.f32.mxu0 0.0
    %v890 = vand.u32 %v167, 4294901760
    %891 = vmatmul.mubr.f32.gmra.mrb[0].mxu0 %v890
    %v892 = vpop.f32.mrb[0].mxu0
    %v893 = vadd.f32 %v411, %v892
    %v894 = vpop.f32.mrb[0].mxu0
    %895 = vmatprep.mubr.f32.mxu0 0.0
    %v896 = vand.u32 %v170, 4294901760
    %897 = vmatmul.mubr.f32.gmra.mrb[0].mxu0 %v896
    %v898 = vpop.f32.mrb[0].mxu0
    %v899 = vadd.f32 %v421, %v898
    %v900 = vpop.f32.mrb[0].mxu0
    %901 = vmatprep.mubr.f32.mxu0 0.0
    %v902 = vand.u32 %v173, 4294901760
    %903 = vmatmul.mubr.f32.gmra.mrb[0].mxu0 %v902
    %v904 = vpop.f32.mrb[0].mxu0
    %v905 = vadd.f32 %v431, %v904
    %v906 = vpop.f32.mrb[0].mxu0
    %907 = vmatprep.mubr.f32.mxu0 0.0
    %v908 = vand.u32 %v176, 4294901760
    %909 = vmatmul.mubr.f32.gmra.mrb[0].mxu0 %v908
    %v910 = vpop.f32.mrb[0].mxu0
    %v911 = vadd.f32 %v441, %v910
    %v912 = vpop.f32.mrb[0].mxu0
    %913 = vmatprep.mubr.f32.mxu0 0.0
    %v914 = vand.u32 %v179, 4294901760
    %915 = vmatmul.mubr.f32.gmra.mrb[0].mxu0 %v914
    %v916 = vpop.f32.mrb[0].mxu0
    %v917 = vadd.f32 %v451, %v916
    %v918 = vpop.f32.mrb[0].mxu0
    %919 = vmatprep.mubr.f32.mxu0 0.0
    %v920 = vand.u32 %v182, 4294901760
    %921 = vmatmul.mubr.f32.gmra.mrb[0].mxu0 %v920
    %v922 = vpop.f32.mrb[0].mxu0
    %v923 = vadd.f32 %v461, %v922
    %v924 = vpop.f32.mrb[0].mxu0
    %925 = vmatprep.mubr.f32.mxu0 0.0
    %v926 = vand.u32 %v185, 4294901760
    %927 = vmatmul.mubr.f32.gmra.mrb[0].mxu0 %v926
    %v928 = vpop.f32.mrb[0].mxu0
    %v929 = vadd.f32 %v471, %v928
    %v930 = vpop.f32.mrb[0].mxu0
    %931 = vmatprep.mubr.f32.mxu0 0.0
    %v932 = vand.u32 %v188, 4294901760
    %933 = vmatmul.mubr.f32.gmra.mrb[0].mxu0 %v932
    %v934 = vpop.f32.mrb[0].mxu0
    %v935 = vadd.f32 %v481, %v934
    %v936 = vpop.f32.mrb[0].mxu0
    %937 = vmatprep.mubr.f32.mxu0 0.0
    %v938 = vand.u32 %v191, 4294901760
    %939 = vmatmul.mubr.f32.gmra.mrb[0].mxu0 %v938
    %v940 = vpop.f32.mrb[0].mxu0
    %v941 = vadd.f32 %v491, %v940
    %v942 = vpop.f32.mrb[0].mxu0
    %943 = vmatprep.mubr.f32.mxu0 0.0
    %v944 = vand.u32 %v194, 4294901760
    %945 = vmatmul.mubr.f32.gmra.mrb[0].mxu0 %v944
    %v946 = vpop.f32.mrb[0].mxu0
    %v947 = vadd.f32 %v501, %v946
    %v948 = vpop.f32.mrb[0].mxu0
    %949 = vmatprep.mubr.f32.mxu0 0.0
    %v950 = vand.u32 %v197, 4294901760
    %951 = vmatmul.mubr.f32.gmra.mrb[0].mxu0 %v950
    %v952 = vpop.f32.mrb[0].mxu0
    %v953 = vadd.f32 %v511, %v952
    %v954 = vpop.f32.mrb[0].mxu0
    %955 = vmatprep.mubr.f32.mxu0 0.0
    %v956 = vand.u32 %v200, 4294901760
    %957 = vmatmul.mubr.f32.gmra.mrb[0].mxu0 %v956
    %v958 = vpop.f32.mrb[0].mxu0
    %v959 = vadd.f32 %v521, %v958
    %v960 = vpop.f32.mrb[0].mxu0
    %961 = vmatprep.mubr.f32.mxu0 0.0
    %v962 = vand.u32 %v203, 4294901760
    %963 = vmatmul.mubr.f32.gmra.mrb[0].mxu0 %v962
    %v964 = vpop.f32.mrb[0].mxu0
    %v965 = vadd.f32 %v531, %v964
    %v966 = vpop.f32.mrb[0].mxu0
    %967 = vmatprep.mubr.f32.mxu0 0.0
    %v968 = vand.u32 %v206, 4294901760
    %969 = vmatmul.mubr.f32.gmra.mrb[0].mxu0 %v968
    %v970 = vpop.f32.mrb[0].mxu0
    %v971 = vadd.f32 %v541, %v970
    %v972 = vpop.f32.mrb[0].mxu0
    %973 = vmatprep.mubr.f32.mxu0 0.0
    %v974 = vand.u32 %v209, 4294901760
    %975 = vmatmul.mubr.f32.gmra.mrb[0].mxu0 %v974
    %v976 = vpop.f32.mrb[0].mxu0
    %v977 = vadd.f32 %v551, %v976
    %v978 = vpop.f32.mrb[0].mxu0
    %979 = vmatprep.mubr.f32.mxu0 0.0
    %v980 = vand.u32 %v212, 4294901760
    %981 = vmatmul.mubr.f32.gmra.mrb[0].mxu0 %v980
    %v982 = vpop.f32.mrb[0].mxu0
    %v983 = vadd.f32 %v561, %v982
    %v984 = vpop.f32.mrb[0].mxu0
    %985 = vmatprep.mubr.f32.mxu0 0.0
    %v986 = vand.u32 %v215, 4294901760
    %987 = vmatmul.mubr.f32.gmra.mrb[0].mxu0 %v986
    %v988 = vpop.f32.mrb[0].mxu0
    %v989 = vadd.f32 %v571, %v988
    %v990 = vpop.f32.mrb[0].mxu0
    %991 = vmatprep.mubr.f32.mxu0 0.0
    %v992 = vand.u32 %v218, 4294901760
    %993 = vmatmul.mubr.f32.gmra.mrb[0].mxu0 %v992
    %v994 = vpop.f32.mrb[0].mxu0
    %v995 = vadd.f32 %v581, %v994
    %v996 = vpop.f32.mrb[0].mxu0
    %997 = vmatprep.mubr.f32.mxu0 0.0
    %v998 = vand.u32 %v221, 4294901760
    %999 = vmatmul.mubr.f32.gmra.mrb[0].mxu0 %v998
    %v1000 = vpop.f32.mrb[0].mxu0
    %v1001 = vadd.f32 %v591, %v1000
    %v1002 = vpop.f32.mrb[0].mxu0
    %1003 = vmatprep.mubr.f32.mxu0 0.0
    %v1004 = vand.u32 %v224, 4294901760
    %1005 = vmatmul.mubr.f32.gmra.mrb[0].mxu0 %v1004
    %v1006 = vpop.f32.mrb[0].mxu0
    %v1007 = vadd.f32 %v601, %v1006
    %v1008 = vpop.f32.mrb[0].mxu0
    %1009 = vmatprep.mubr.f32.mxu0 0.0
    %v1010 = vand.u32 %v227, 4294901760
    %1011 = vmatmul.mubr.f32.gmra.mrb[0].mxu0 %v1010
    %v1012 = vpop.f32.mrb[0].mxu0
    %v1013 = vadd.f32 %v611, %v1012
    %v1014 = vpop.f32.mrb[0].mxu0
    %1015 = vmatprep.mubr.f32.mxu0 0.0
    %v1016 = vand.u32 %v230, 4294901760
    %1017 = vmatmul.mubr.f32.gmra.mrb[0].mxu0 %v1016
    %v1018 = vpop.f32.mrb[0].mxu0
    %v1019 = vadd.f32 %v621, %v1018
    %v1020 = vpop.f32.mrb[0].mxu0
    %1021 = vmatprep.mubr.f32.mxu0 0.0
    %v1022 = vand.u32 %v233, 4294901760
    %1023 = vmatmul.mubr.f32.gmra.mrb[0].mxu0 %v1022
    %v1024 = vpop.f32.mrb[0].mxu0
    %v1025 = vadd.f32 %v631, %v1024
    %v1026 = vpop.f32.mrb[0].mxu0
    %1027 = vmatprep.mubr.f32.mxu0 0.0
    %v1028 = vand.u32 %v236, 4294901760
    %1029 = vmatmul.mubr.f32.gmra.mrb[0].mxu0 %v1028
    %v1030 = vpop.f32.mrb[0].mxu0
    %v1031 = vadd.f32 %v641, %v1030
    %v1032 = vpop.f32.mrb[0].mxu0
    %1033 = vmatprep.mubr.f32.mxu0 0.0
    %v1034 = vand.u32 %v239, 4294901760
    %1035 = vmatmul.mubr.f32.gmra.mrb[0].mxu0 %v1034
    %v1036 = vpop.f32.mrb[0].mxu0
    %v1037 = vadd.f32 %v651, %v1036
    %v1038 = vpop.f32.mrb[0].mxu0
    %1039 = vmatprep.mubr.f32.mxu0 0.0
    %v1040 = vand.u32 %v242, 4294901760
    %1041 = vmatmul.mubr.f32.gmra.mrb[0].mxu0 %v1040
    %v1042 = vpop.f32.mrb[0].mxu0
    %v1043 = vadd.f32 %v661, %v1042
    %v1044 = vpop.f32.mrb[0].mxu0
    %1045 = vmatprep.mubr.f32.mxu0 0.0
    %v1046 = vand.u32 %v245, 4294901760
    %1047 = vmatmul.mubr.f32.gmra.mrb[0].mxu0 %v1046
    %v1048 = vpop.f32.mrb[0].mxu0
    %v1049 = vadd.f32 %v671, %v1048
    %v1050 = vpop.f32.mrb[0].mxu0
    %1051 = vmatprep.mubr.f32.mxu0 0.0
    %v1052 = vand.u32 %v248, 4294901760
    %1053 = vmatmul.mubr.f32.gmra.mrb[0].mxu0 %v1052
    %v1054 = vpop.f32.mrb[0].mxu0
    %v1055 = vadd.f32 %v681, %v1054
    %v1056 = vpop.f32.mrb[0].mxu0
    %1057 = vmatprep.mubr.f32.mxu0 0.0
    %v1058 = vand.u32 %v251, 4294901760
    %1059 = vmatmul.mubr.f32.gmra.mrb[0].mxu0 %v1058
    %v1060 = vpop.f32.mrb[0].mxu0
    %v1061 = vadd.f32 %v691, %v1060
    %v1062 = vpop.f32.mrb[0].mxu0
    %1063 = vmatprep.mubr.f32.mxu0 0.0
    %v1064 = vand.u32 %v254, 4294901760
    %1065 = vmatmul.mubr.f32.gmra.mrb[0].mxu0 %v1064
    %v1066 = vpop.f32.mrb[0].mxu0
    %v1067 = vadd.f32 %v701, %v1066
    %v1068 = vpop.f32.mrb[0].mxu0
    %1069 = vmatprep.mubr.f32.mxu0 0.0
    %v1070 = vand.u32 %v257, 4294901760
    %1071 = vmatmul.mubr.f32.gmra.mrb[0].mxu0 %v1070
    %v1072 = vpop.f32.mrb[0].mxu0
    %v1073 = vadd.f32 %v711, %v1072
    %v1074 = vpop.f32.mrb[0].mxu0
    %1075 = vmatprep.mubr.f32.mxu0 0.0
    %v1076 = vand.u32 %v260, 4294901760
    %1077 = vmatmul.mubr.f32.gmra.mrb[0].mxu0 %v1076
    %v1078 = vpop.f32.mrb[0].mxu0
    %v1079 = vadd.f32 %v721, %v1078
    %v1080 = vpop.f32.mrb[0].mxu0
    %1081 = vdwg.mxu0
    %1082 = vmatprep.subr.mxu0 0.0
    %v1083 = vand.u32 %v134, 4294901760
    %v1084 = vsub.f32 %v134, %v1083
    %1085 = vmatpush1.msra.mxu0 %v1084
    %1086 = vmatprep.subr.mxu0 0.0
    %v1087 = vand.u32 %v135, 4294901760
    %v1088 = vsub.f32 %v135, %v1087
    %1089 = vmatpush1.msra.mxu0 %v1088
    %1090 = vmatprep.subr.mxu0 0.0
    %v1091 = vand.u32 %v136, 4294901760
    %v1092 = vsub.f32 %v136, %v1091
    %1093 = vmatpush1.msra.mxu0 %v1092
    %1094 = vmatprep.subr.mxu0 0.0
    %v1095 = vand.u32 %v137, 4294901760
    %v1096 = vsub.f32 %v137, %v1095
    %1097 = vmatpush1.msra.mxu0 %v1096
    %1098 = vmatprep.subr.mxu0 0.0
    %v1099 = vand.u32 %v138, 4294901760
    %v1100 = vsub.f32 %v138, %v1099
    %1101 = vmatpush1.msra.mxu0 %v1100
    %1102 = vmatprep.subr.mxu0 0.0
    %v1103 = vand.u32 %v139, 4294901760
    %v1104 = vsub.f32 %v139, %v1103
    %1105 = vmatpush1.msra.mxu0 %v1104
    %1106 = vmatprep.subr.mxu0 0.0
    %v1107 = vand.u32 %v140, 4294901760
    %v1108 = vsub.f32 %v140, %v1107
    %1109 = vmatpush1.msra.mxu0 %v1108
    %1110 = vmatprep.subr.mxu0 0.0
    %v1111 = vand.u32 %v141, 4294901760
    %v1112 = vsub.f32 %v141, %v1111
    %1113 = vmatpush1.msra.mxu0 %v1112
    %1114 = vmatprep.subr.mxu0 0.0
    %v1115 = vand.u32 %v142, 4294901760
    %v1116 = vsub.f32 %v142, %v1115
    %1117 = vmatpush1.msra.mxu0 %v1116
    %1118 = vmatprep.subr.mxu0 0.0
    %v1119 = vand.u32 %v143, 4294901760
    %v1120 = vsub.f32 %v143, %v1119
    %1121 = vmatpush1.msra.mxu0 %v1120
    %1122 = vmatprep.subr.mxu0 0.0
    %v1123 = vand.u32 %v144, 4294901760
    %v1124 = vsub.f32 %v144, %v1123
    %1125 = vmatpush1.msra.mxu0 %v1124
    %1126 = vmatprep.subr.mxu0 0.0
    %v1127 = vand.u32 %v145, 4294901760
    %v1128 = vsub.f32 %v145, %v1127
    %1129 = vmatpush1.msra.mxu0 %v1128
    %1130 = vmatprep.subr.mxu0 0.0
    %v1131 = vand.u32 %v264, 4294901760
    %v1132 = vsub.f32 %v264, %v1131
    %1133 = vmatpush1.msra.mxu0 %v1132
    %1134 = vmatprep.subr.mxu0 0.0
    %1135 = vmatpush1.msra.mxu0 0.0
    %1136 = vmatprep.subr.mxu0 0.0
    %1137 = vmatpush1.msra.mxu0 0.0
    %1138 = vmatprep.subr.mxu0 0.0
    %1139 = vmatpush1.msra.mxu0 0.0
    %1140 = vmatprep.subr.mxu0 0.0
    %1141 = vmatpush1.msra.mxu0 0.0
    %1142 = vmatprep.subr.mxu0 0.0
    %1143 = vmatpush1.msra.mxu0 0.0
    %1144 = vmatprep.subr.mxu0 0.0
    %1145 = vmatpush1.msra.mxu0 0.0
    %1146 = vmatprep.subr.mxu0 0.0
    %1147 = vmatpush1.msra.mxu0 0.0
    %1148 = vmatprep.subr.mxu0 0.0
    %1149 = vmatpush1.msra.mxu0 0.0
    %1150 = vmatprep.subr.mxu0 0.0
    %1151 = vmatpush1.msra.mxu0 0.0
    %1152 = vmatprep.subr.mxu0 0.0
    %1153 = vmatpush1.msra.mxu0 0.0
    %1154 = vmatprep.subr.mxu0 0.0
    %1155 = vmatpush1.msra.mxu0 0.0
    %1156 = vmatprep.subr.mxu0 0.0
    %1157 = vmatpush1.msra.mxu0 0.0
    %1158 = vmatprep.subr.mxu0 0.0
    %1159 = vmatpush1.msra.mxu0 0.0
    %1160 = vmatprep.subr.mxu0 0.0
    %1161 = vmatpush1.msra.mxu0 0.0
    %1162 = vmatprep.subr.mxu0 0.0
    %1163 = vmatpush1.msra.mxu0 0.0
    %1164 = vmatprep.subr.mxu0 0.0
    %1165 = vmatpush1.msra.mxu0 0.0
    %1166 = vmatprep.subr.mxu0 0.0
    %1167 = vmatpush1.msra.mxu0 0.0
    %1168 = vmatprep.subr.mxu0 0.0
    %1169 = vmatpush1.msra.mxu0 0.0
    %1170 = vmatprep.subr.mxu0 0.0
    %1171 = vmatpush1.msra.mxu0 0.0
    %1172 = vmatprep.mubr.f32.mxu0 0.0
    %v1173 = vand.u32 %v149, 4294901760
    %v1174 = vsub.f32 %v149, %v1173
    %1175 = vmatmul.mubr.f32.gmra.mrb[0].mxu0 %v1174
    %v1176 = vpop.f32.mrb[0].mxu0
    %v1177 = vadd.f32 %v857, %v1176
    %v1178 = vpop.f32.mrb[0].mxu0
    %1179 = vmatprep.mubr.f32.mxu0 0.0
    %v1180 = vand.u32 %v152, 4294901760
    %v1181 = vsub.f32 %v152, %v1180
    %1182 = vmatmul.mubr.f32.gmra.mrb[0].mxu0 %v1181
    %v1183 = vpop.f32.mrb[0].mxu0
    %v1184 = vadd.f32 %v863, %v1183
    %v1185 = vpop.f32.mrb[0].mxu0
    %1186 = vmatprep.mubr.f32.mxu0 0.0
    %v1187 = vand.u32 %v155, 4294901760
    %v1188 = vsub.f32 %v155, %v1187
    %1189 = vmatmul.mubr.f32.gmra.mrb[0].mxu0 %v1188
    %v1190 = vpop.f32.mrb[0].mxu0
    %v1191 = vadd.f32 %v869, %v1190
    %v1192 = vpop.f32.mrb[0].mxu0
    %1193 = vmatprep.mubr.f32.mxu0 0.0
    %v1194 = vand.u32 %v158, 4294901760
    %v1195 = vsub.f32 %v158, %v1194
    %1196 = vmatmul.mubr.f32.gmra.mrb[0].mxu0 %v1195
    %v1197 = vpop.f32.mrb[0].mxu0
    %v1198 = vadd.f32 %v875, %v1197
    %v1199 = vpop.f32.mrb[0].mxu0
    %1200 = vmatprep.mubr.f32.mxu0 0.0
    %v1201 = vand.u32 %v161, 4294901760
    %v1202 = vsub.f32 %v161, %v1201
    %1203 = vmatmul.mubr.f32.gmra.mrb[0].mxu0 %v1202
    %v1204 = vpop.f32.mrb[0].mxu0
    %v1205 = vadd.f32 %v881, %v1204
    %v1206 = vpop.f32.mrb[0].mxu0
    %1207 = vmatprep.mubr.f32.mxu0 0.0
    %v1208 = vand.u32 %v164, 4294901760
    %v1209 = vsub.f32 %v164, %v1208
    %1210 = vmatmul.mubr.f32.gmra.mrb[0].mxu0 %v1209
    %v1211 = vpop.f32.mrb[0].mxu0
    %v1212 = vadd.f32 %v887, %v1211
    %v1213 = vpop.f32.mrb[0].mxu0
    %1214 = vmatprep.mubr.f32.mxu0 0.0
    %v1215 = vand.u32 %v167, 4294901760
    %v1216 = vsub.f32 %v167, %v1215
    %1217 = vmatmul.mubr.f32.gmra.mrb[0].mxu0 %v1216
    %v1218 = vpop.f32.mrb[0].mxu0
    %v1219 = vadd.f32 %v893, %v1218
    %v1220 = vpop.f32.mrb[0].mxu0
    %1221 = vmatprep.mubr.f32.mxu0 0.0
    %v1222 = vand.u32 %v170, 4294901760
    %v1223 = vsub.f32 %v170, %v1222
    %1224 = vmatmul.mubr.f32.gmra.mrb[0].mxu0 %v1223
    %v1225 = vpop.f32.mrb[0].mxu0
    %v1226 = vadd.f32 %v899, %v1225
    %v1227 = vpop.f32.mrb[0].mxu0
    %1228 = vmatprep.mubr.f32.mxu0 0.0
    %v1229 = vand.u32 %v173, 4294901760
    %v1230 = vsub.f32 %v173, %v1229
    %1231 = vmatmul.mubr.f32.gmra.mrb[0].mxu0 %v1230
    %v1232 = vpop.f32.mrb[0].mxu0
    %v1233 = vadd.f32 %v905, %v1232
    %v1234 = vpop.f32.mrb[0].mxu0
    %1235 = vmatprep.mubr.f32.mxu0 0.0
    %v1236 = vand.u32 %v176, 4294901760
    %v1237 = vsub.f32 %v176, %v1236
    %1238 = vmatmul.mubr.f32.gmra.mrb[0].mxu0 %v1237
    %v1239 = vpop.f32.mrb[0].mxu0
    %v1240 = vadd.f32 %v911, %v1239
    %v1241 = vpop.f32.mrb[0].mxu0
    %1242 = vmatprep.mubr.f32.mxu0 0.0
    %v1243 = vand.u32 %v179, 4294901760
    %v1244 = vsub.f32 %v179, %v1243
    %1245 = vmatmul.mubr.f32.gmra.mrb[0].mxu0 %v1244
    %v1246 = vpop.f32.mrb[0].mxu0
    %v1247 = vadd.f32 %v917, %v1246
    %v1248 = vpop.f32.mrb[0].mxu0
    %1249 = vmatprep.mubr.f32.mxu0 0.0
    %v1250 = vand.u32 %v182, 4294901760
    %v1251 = vsub.f32 %v182, %v1250
    %1252 = vmatmul.mubr.f32.gmra.mrb[0].mxu0 %v1251
    %v1253 = vpop.f32.mrb[0].mxu0
    %v1254 = vadd.f32 %v923, %v1253
    %v1255 = vpop.f32.mrb[0].mxu0
    %1256 = vmatprep.mubr.f32.mxu0 0.0
    %v1257 = vand.u32 %v185, 4294901760
    %v1258 = vsub.f32 %v185, %v1257
    %1259 = vmatmul.mubr.f32.gmra.mrb[0].mxu0 %v1258
    %v1260 = vpop.f32.mrb[0].mxu0
    %v1261 = vadd.f32 %v929, %v1260
    %v1262 = vpop.f32.mrb[0].mxu0
    %1263 = vmatprep.mubr.f32.mxu0 0.0
    %v1264 = vand.u32 %v188, 4294901760
    %v1265 = vsub.f32 %v188, %v1264
    %1266 = vmatmul.mubr.f32.gmra.mrb[0].mxu0 %v1265
    %v1267 = vpop.f32.mrb[0].mxu0
    %v1268 = vadd.f32 %v935, %v1267
    %v1269 = vpop.f32.mrb[0].mxu0
    %1270 = vmatprep.mubr.f32.mxu0 0.0
    %v1271 = vand.u32 %v191, 4294901760
    %v1272 = vsub.f32 %v191, %v1271
    %1273 = vmatmul.mubr.f32.gmra.mrb[0].mxu0 %v1272
    %v1274 = vpop.f32.mrb[0].mxu0
    %v1275 = vadd.f32 %v941, %v1274
    %v1276 = vpop.f32.mrb[0].mxu0
    %1277 = vmatprep.mubr.f32.mxu0 0.0
    %v1278 = vand.u32 %v194, 4294901760
    %v1279 = vsub.f32 %v194, %v1278
    %1280 = vmatmul.mubr.f32.gmra.mrb[0].mxu0 %v1279
    %v1281 = vpop.f32.mrb[0].mxu0
    %v1282 = vadd.f32 %v947, %v1281
    %v1283 = vpop.f32.mrb[0].mxu0
    %1284 = vmatprep.mubr.f32.mxu0 0.0
    %v1285 = vand.u32 %v197, 4294901760
    %v1286 = vsub.f32 %v197, %v1285
    %1287 = vmatmul.mubr.f32.gmra.mrb[0].mxu0 %v1286
    %v1288 = vpop.f32.mrb[0].mxu0
    %v1289 = vadd.f32 %v953, %v1288
    %v1290 = vpop.f32.mrb[0].mxu0
    %1291 = vmatprep.mubr.f32.mxu0 0.0
    %v1292 = vand.u32 %v200, 4294901760
    %v1293 = vsub.f32 %v200, %v1292
    %1294 = vmatmul.mubr.f32.gmra.mrb[0].mxu0 %v1293
    %v1295 = vpop.f32.mrb[0].mxu0
    %v1296 = vadd.f32 %v959, %v1295
    %v1297 = vpop.f32.mrb[0].mxu0
    %1298 = vmatprep.mubr.f32.mxu0 0.0
    %v1299 = vand.u32 %v203, 4294901760
    %v1300 = vsub.f32 %v203, %v1299
    %1301 = vmatmul.mubr.f32.gmra.mrb[0].mxu0 %v1300
    %v1302 = vpop.f32.mrb[0].mxu0
    %v1303 = vadd.f32 %v965, %v1302
    %v1304 = vpop.f32.mrb[0].mxu0
    %1305 = vmatprep.mubr.f32.mxu0 0.0
    %v1306 = vand.u32 %v206, 4294901760
    %v1307 = vsub.f32 %v206, %v1306
    %1308 = vmatmul.mubr.f32.gmra.mrb[0].mxu0 %v1307
    %v1309 = vpop.f32.mrb[0].mxu0
    %v1310 = vadd.f32 %v971, %v1309
    %v1311 = vpop.f32.mrb[0].mxu0
    %1312 = vmatprep.mubr.f32.mxu0 0.0
    %v1313 = vand.u32 %v209, 4294901760
    %v1314 = vsub.f32 %v209, %v1313
    %1315 = vmatmul.mubr.f32.gmra.mrb[0].mxu0 %v1314
    %v1316 = vpop.f32.mrb[0].mxu0
    %v1317 = vadd.f32 %v977, %v1316
    %v1318 = vpop.f32.mrb[0].mxu0
    %1319 = vmatprep.mubr.f32.mxu0 0.0
    %v1320 = vand.u32 %v212, 4294901760
    %v1321 = vsub.f32 %v212, %v1320
    %1322 = vmatmul.mubr.f32.gmra.mrb[0].mxu0 %v1321
    %v1323 = vpop.f32.mrb[0].mxu0
    %v1324 = vadd.f32 %v983, %v1323
    %v1325 = vpop.f32.mrb[0].mxu0
    %1326 = vmatprep.mubr.f32.mxu0 0.0
    %v1327 = vand.u32 %v215, 4294901760
    %v1328 = vsub.f32 %v215, %v1327
    %1329 = vmatmul.mubr.f32.gmra.mrb[0].mxu0 %v1328
    %v1330 = vpop.f32.mrb[0].mxu0
    %v1331 = vadd.f32 %v989, %v1330
    %v1332 = vpop.f32.mrb[0].mxu0
    %1333 = vmatprep.mubr.f32.mxu0 0.0
    %v1334 = vand.u32 %v218, 4294901760
    %v1335 = vsub.f32 %v218, %v1334
    %1336 = vmatmul.mubr.f32.gmra.mrb[0].mxu0 %v1335
    %v1337 = vpop.f32.mrb[0].mxu0
    %v1338 = vadd.f32 %v995, %v1337
    %v1339 = vpop.f32.mrb[0].mxu0
    %1340 = vmatprep.mubr.f32.mxu0 0.0
    %v1341 = vand.u32 %v221, 4294901760
    %v1342 = vsub.f32 %v221, %v1341
    %1343 = vmatmul.mubr.f32.gmra.mrb[0].mxu0 %v1342
    %v1344 = vpop.f32.mrb[0].mxu0
    %v1345 = vadd.f32 %v1001, %v1344
    %v1346 = vpop.f32.mrb[0].mxu0
    %1347 = vmatprep.mubr.f32.mxu0 0.0
    %v1348 = vand.u32 %v224, 4294901760
    %v1349 = vsub.f32 %v224, %v1348
    %1350 = vmatmul.mubr.f32.gmra.mrb[0].mxu0 %v1349
    %v1351 = vpop.f32.mrb[0].mxu0
    %v1352 = vadd.f32 %v1007, %v1351
    %v1353 = vpop.f32.mrb[0].mxu0
    %1354 = vmatprep.mubr.f32.mxu0 0.0
    %v1355 = vand.u32 %v227, 4294901760
    %v1356 = vsub.f32 %v227, %v1355
    %1357 = vmatmul.mubr.f32.gmra.mrb[0].mxu0 %v1356
    %v1358 = vpop.f32.mrb[0].mxu0
    %v1359 = vadd.f32 %v1013, %v1358
    %v1360 = vpop.f32.mrb[0].mxu0
    %1361 = vmatprep.mubr.f32.mxu0 0.0
    %v1362 = vand.u32 %v230, 4294901760
    %v1363 = vsub.f32 %v230, %v1362
    %1364 = vmatmul.mubr.f32.gmra.mrb[0].mxu0 %v1363
    %v1365 = vpop.f32.mrb[0].mxu0
    %v1366 = vadd.f32 %v1019, %v1365
    %v1367 = vpop.f32.mrb[0].mxu0
    %1368 = vmatprep.mubr.f32.mxu0 0.0
    %v1369 = vand.u32 %v233, 4294901760
    %v1370 = vsub.f32 %v233, %v1369
    %1371 = vmatmul.mubr.f32.gmra.mrb[0].mxu0 %v1370
    %v1372 = vpop.f32.mrb[0].mxu0
    %v1373 = vadd.f32 %v1025, %v1372
    %v1374 = vpop.f32.mrb[0].mxu0
    %1375 = vmatprep.mubr.f32.mxu0 0.0
    %v1376 = vand.u32 %v236, 4294901760
    %v1377 = vsub.f32 %v236, %v1376
    %1378 = vmatmul.mubr.f32.gmra.mrb[0].mxu0 %v1377
    %v1379 = vpop.f32.mrb[0].mxu0
    %v1380 = vadd.f32 %v1031, %v1379
    %v1381 = vpop.f32.mrb[0].mxu0
    %1382 = vmatprep.mubr.f32.mxu0 0.0
    %v1383 = vand.u32 %v239, 4294901760
    %v1384 = vsub.f32 %v239, %v1383
    %1385 = vmatmul.mubr.f32.gmra.mrb[0].mxu0 %v1384
    %v1386 = vpop.f32.mrb[0].mxu0
    %v1387 = vadd.f32 %v1037, %v1386
    %v1388 = vpop.f32.mrb[0].mxu0
    %1389 = vmatprep.mubr.f32.mxu0 0.0
    %v1390 = vand.u32 %v242, 4294901760
    %v1391 = vsub.f32 %v242, %v1390
    %1392 = vmatmul.mubr.f32.gmra.mrb[0].mxu0 %v1391
    %v1393 = vpop.f32.mrb[0].mxu0
    %v1394 = vadd.f32 %v1043, %v1393
    %v1395 = vpop.f32.mrb[0].mxu0
    %1396 = vmatprep.mubr.f32.mxu0 0.0
    %v1397 = vand.u32 %v245, 4294901760
    %v1398 = vsub.f32 %v245, %v1397
    %1399 = vmatmul.mubr.f32.gmra.mrb[0].mxu0 %v1398
    %v1400 = vpop.f32.mrb[0].mxu0
    %v1401 = vadd.f32 %v1049, %v1400
    %v1402 = vpop.f32.mrb[0].mxu0
    %1403 = vmatprep.mubr.f32.mxu0 0.0
    %v1404 = vand.u32 %v248, 4294901760
    %v1405 = vsub.f32 %v248, %v1404
    %1406 = vmatmul.mubr.f32.gmra.mrb[0].mxu0 %v1405
    %v1407 = vpop.f32.mrb[0].mxu0
    %v1408 = vadd.f32 %v1055, %v1407
    %v1409 = vpop.f32.mrb[0].mxu0
    %1410 = vmatprep.mubr.f32.mxu0 0.0
    %v1411 = vand.u32 %v251, 4294901760
    %v1412 = vsub.f32 %v251, %v1411
    %1413 = vmatmul.mubr.f32.gmra.mrb[0].mxu0 %v1412
    %v1414 = vpop.f32.mrb[0].mxu0
    %v1415 = vadd.f32 %v1061, %v1414
    %v1416 = vpop.f32.mrb[0].mxu0
    %1417 = vmatprep.mubr.f32.mxu0 0.0
    %v1418 = vand.u32 %v254, 4294901760
    %v1419 = vsub.f32 %v254, %v1418
    %1420 = vmatmul.mubr.f32.gmra.mrb[0].mxu0 %v1419
    %v1421 = vpop.f32.mrb[0].mxu0
    %v1422 = vadd.f32 %v1067, %v1421
    %v1423 = vpop.f32.mrb[0].mxu0
    %1424 = vmatprep.mubr.f32.mxu0 0.0
    %v1425 = vand.u32 %v257, 4294901760
    %v1426 = vsub.f32 %v257, %v1425
    %1427 = vmatmul.mubr.f32.gmra.mrb[0].mxu0 %v1426
    %v1428 = vpop.f32.mrb[0].mxu0
    %v1429 = vadd.f32 %v1073, %v1428
    %v1430 = vpop.f32.mrb[0].mxu0
    %1431 = vmatprep.mubr.f32.mxu0 0.0
    %v1432 = vand.u32 %v260, 4294901760
    %v1433 = vsub.f32 %v260, %v1432
    %1434 = vmatmul.mubr.f32.gmra.mrb[0].mxu0 %v1433
    %v1435 = vpop.f32.mrb[0].mxu0
    %v1436 = vadd.f32 %v1079, %v1435
    %v1437 = vpop.f32.mrb[0].mxu0
    %1438 = vdwg.mxu0
    %1439 = vmatprep.subr.mxu0 0.0
    %v1440 = vand.u32 %v134, 4294901760
    %1441 = vmatpush1.msra.mxu0 %v1440
    %1442 = vmatprep.subr.mxu0 0.0
    %v1443 = vand.u32 %v135, 4294901760
    %1444 = vmatpush1.msra.mxu0 %v1443
    %1445 = vmatprep.subr.mxu0 0.0
    %v1446 = vand.u32 %v136, 4294901760
    %1447 = vmatpush1.msra.mxu0 %v1446
    %1448 = vmatprep.subr.mxu0 0.0
    %v1449 = vand.u32 %v137, 4294901760
    %1450 = vmatpush1.msra.mxu0 %v1449
    %1451 = vmatprep.subr.mxu0 0.0
    %v1452 = vand.u32 %v138, 4294901760
    %1453 = vmatpush1.msra.mxu0 %v1452
    %1454 = vmatprep.subr.mxu0 0.0
    %v1455 = vand.u32 %v139, 4294901760
    %1456 = vmatpush1.msra.mxu0 %v1455
    %1457 = vmatprep.subr.mxu0 0.0
    %v1458 = vand.u32 %v140, 4294901760
    %1459 = vmatpush1.msra.mxu0 %v1458
    %1460 = vmatprep.subr.mxu0 0.0
    %v1461 = vand.u32 %v141, 4294901760
    %1462 = vmatpush1.msra.mxu0 %v1461
    %1463 = vmatprep.subr.mxu0 0.0
    %v1464 = vand.u32 %v142, 4294901760
    %1465 = vmatpush1.msra.mxu0 %v1464
    %1466 = vmatprep.subr.mxu0 0.0
    %v1467 = vand.u32 %v143, 4294901760
    %1468 = vmatpush1.msra.mxu0 %v1467
    %1469 = vmatprep.subr.mxu0 0.0
    %v1470 = vand.u32 %v144, 4294901760
    %1471 = vmatpush1.msra.mxu0 %v1470
    %1472 = vmatprep.subr.mxu0 0.0
    %v1473 = vand.u32 %v145, 4294901760
    %1474 = vmatpush1.msra.mxu0 %v1473
    %1475 = vmatprep.subr.mxu0 0.0
    %v1476 = vand.u32 %v264, 4294901760
    %1477 = vmatpush1.msra.mxu0 %v1476
    %1478 = vmatprep.subr.mxu0 0.0
    %1479 = vmatpush1.msra.mxu0 0.0
    %1480 = vmatprep.subr.mxu0 0.0
    %1481 = vmatpush1.msra.mxu0 0.0
    %1482 = vmatprep.subr.mxu0 0.0
    %1483 = vmatpush1.msra.mxu0 0.0
    %1484 = vmatprep.subr.mxu0 0.0
    %1485 = vmatpush1.msra.mxu0 0.0
    %1486 = vmatprep.subr.mxu0 0.0
    %1487 = vmatpush1.msra.mxu0 0.0
    %1488 = vmatprep.subr.mxu0 0.0
    %1489 = vmatpush1.msra.mxu0 0.0
    %1490 = vmatprep.subr.mxu0 0.0
    %1491 = vmatpush1.msra.mxu0 0.0
    %1492 = vmatprep.subr.mxu0 0.0
    %1493 = vmatpush1.msra.mxu0 0.0
    %1494 = vmatprep.subr.mxu0 0.0
    %1495 = vmatpush1.msra.mxu0 0.0
    %1496 = vmatprep.subr.mxu0 0.0
    %1497 = vmatpush1.msra.mxu0 0.0
    %1498 = vmatprep.subr.mxu0 0.0
    %1499 = vmatpush1.msra.mxu0 0.0
    %1500 = vmatprep.subr.mxu0 0.0
    %1501 = vmatpush1.msra.mxu0 0.0
    %1502 = vmatprep.subr.mxu0 0.0
    %1503 = vmatpush1.msra.mxu0 0.0
    %1504 = vmatprep.subr.mxu0 0.0
    %1505 = vmatpush1.msra.mxu0 0.0
    %1506 = vmatprep.subr.mxu0 0.0
    %1507 = vmatpush1.msra.mxu0 0.0
    %1508 = vmatprep.subr.mxu0 0.0
    %1509 = vmatpush1.msra.mxu0 0.0
    %1510 = vmatprep.subr.mxu0 0.0
    %1511 = vmatpush1.msra.mxu0 0.0
    %1512 = vmatprep.subr.mxu0 0.0
    %1513 = vmatpush1.msra.mxu0 0.0
    %1514 = vmatprep.subr.mxu0 0.0
    %1515 = vmatpush1.msra.mxu0 0.0
    %1516 = vmatprep.mubr.f32.mxu0 0.0
    %v1517 = vand.u32 %v149, 4294901760
    %v1518 = vsub.f32 %v149, %v1517
    %v1519 = vand.u32 %v1518, 4294901760
    %1520 = vmatmul.mubr.f32.gmra.mrb[0].mxu0 %v1519
    %v1521 = vpop.f32.mrb[0].mxu0
    %v1522 = vadd.f32 %v1177, %v1521
    %v1523 = vpop.f32.mrb[0].mxu0
    %1524 = vmatprep.mubr.f32.mxu0 0.0
    %v1525 = vand.u32 %v152, 4294901760
    %v1526 = vsub.f32 %v152, %v1525
    %v1527 = vand.u32 %v1526, 4294901760
    %1528 = vmatmul.mubr.f32.gmra.mrb[0].mxu0 %v1527
    %v1529 = vpop.f32.mrb[0].mxu0
    %v1530 = vadd.f32 %v1184, %v1529
    %v1531 = vpop.f32.mrb[0].mxu0
    %1532 = vmatprep.mubr.f32.mxu0 0.0
    %v1533 = vand.u32 %v155, 4294901760
    %v1534 = vsub.f32 %v155, %v1533
    %v1535 = vand.u32 %v1534, 4294901760
    %1536 = vmatmul.mubr.f32.gmra.mrb[0].mxu0 %v1535
    %v1537 = vpop.f32.mrb[0].mxu0
    %v1538 = vadd.f32 %v1191, %v1537
    %v1539 = vpop.f32.mrb[0].mxu0
    %1540 = vmatprep.mubr.f32.mxu0 0.0
    %v1541 = vand.u32 %v158, 4294901760
    %v1542 = vsub.f32 %v158, %v1541
    %v1543 = vand.u32 %v1542, 4294901760
    %1544 = vmatmul.mubr.f32.gmra.mrb[0].mxu0 %v1543
    %v1545 = vpop.f32.mrb[0].mxu0
    %v1546 = vadd.f32 %v1198, %v1545
    %v1547 = vpop.f32.mrb[0].mxu0
    %1548 = vmatprep.mubr.f32.mxu0 0.0
    %v1549 = vand.u32 %v161, 4294901760
    %v1550 = vsub.f32 %v161, %v1549
    %v1551 = vand.u32 %v1550, 4294901760
    %1552 = vmatmul.mubr.f32.gmra.mrb[0].mxu0 %v1551
    %v1553 = vpop.f32.mrb[0].mxu0
    %v1554 = vadd.f32 %v1205, %v1553
    %v1555 = vpop.f32.mrb[0].mxu0
    %1556 = vmatprep.mubr.f32.mxu0 0.0
    %v1557 = vand.u32 %v164, 4294901760
    %v1558 = vsub.f32 %v164, %v1557
    %v1559 = vand.u32 %v1558, 4294901760
    %1560 = vmatmul.mubr.f32.gmra.mrb[0].mxu0 %v1559
    %v1561 = vpop.f32.mrb[0].mxu0
    %v1562 = vadd.f32 %v1212, %v1561
    %v1563 = vpop.f32.mrb[0].mxu0
    %1564 = vmatprep.mubr.f32.mxu0 0.0
    %v1565 = vand.u32 %v167, 4294901760
    %v1566 = vsub.f32 %v167, %v1565
    %v1567 = vand.u32 %v1566, 4294901760
    %1568 = vmatmul.mubr.f32.gmra.mrb[0].mxu0 %v1567
    %v1569 = vpop.f32.mrb[0].mxu0
    %v1570 = vadd.f32 %v1219, %v1569
    %v1571 = vpop.f32.mrb[0].mxu0
    %1572 = vmatprep.mubr.f32.mxu0 0.0
    %v1573 = vand.u32 %v170, 4294901760
    %v1574 = vsub.f32 %v170, %v1573
    %v1575 = vand.u32 %v1574, 4294901760
    %1576 = vmatmul.mubr.f32.gmra.mrb[0].mxu0 %v1575
    %v1577 = vpop.f32.mrb[0].mxu0
    %v1578 = vadd.f32 %v1226, %v1577
    %v1579 = vpop.f32.mrb[0].mxu0
    %1580 = vmatprep.mubr.f32.mxu0 0.0
    %v1581 = vand.u32 %v173, 4294901760
    %v1582 = vsub.f32 %v173, %v1581
    %v1583 = vand.u32 %v1582, 4294901760
    %1584 = vmatmul.mubr.f32.gmra.mrb[0].mxu0 %v1583
    %v1585 = vpop.f32.mrb[0].mxu0
    %v1586 = vadd.f32 %v1233, %v1585
    %v1587 = vpop.f32.mrb[0].mxu0
    %1588 = vmatprep.mubr.f32.mxu0 0.0
    %v1589 = vand.u32 %v176, 4294901760
    %v1590 = vsub.f32 %v176, %v1589
    %v1591 = vand.u32 %v1590, 4294901760
    %1592 = vmatmul.mubr.f32.gmra.mrb[0].mxu0 %v1591
    %v1593 = vpop.f32.mrb[0].mxu0
    %v1594 = vadd.f32 %v1240, %v1593
    %v1595 = vpop.f32.mrb[0].mxu0
    %1596 = vmatprep.mubr.f32.mxu0 0.0
    %v1597 = vand.u32 %v179, 4294901760
    %v1598 = vsub.f32 %v179, %v1597
    %v1599 = vand.u32 %v1598, 4294901760
    %1600 = vmatmul.mubr.f32.gmra.mrb[0].mxu0 %v1599
    %v1601 = vpop.f32.mrb[0].mxu0
    %v1602 = vadd.f32 %v1247, %v1601
    %v1603 = vpop.f32.mrb[0].mxu0
    %1604 = vmatprep.mubr.f32.mxu0 0.0
    %v1605 = vand.u32 %v182, 4294901760
    %v1606 = vsub.f32 %v182, %v1605
    %v1607 = vand.u32 %v1606, 4294901760
    %1608 = vmatmul.mubr.f32.gmra.mrb[0].mxu0 %v1607
    %v1609 = vpop.f32.mrb[0].mxu0
    %v1610 = vadd.f32 %v1254, %v1609
    %v1611 = vpop.f32.mrb[0].mxu0
    %1612 = vmatprep.mubr.f32.mxu0 0.0
    %v1613 = vand.u32 %v185, 4294901760
    %v1614 = vsub.f32 %v185, %v1613
    %v1615 = vand.u32 %v1614, 4294901760
    %1616 = vmatmul.mubr.f32.gmra.mrb[0].mxu0 %v1615
    %v1617 = vpop.f32.mrb[0].mxu0
    %v1618 = vadd.f32 %v1261, %v1617
    %v1619 = vpop.f32.mrb[0].mxu0
    %1620 = vmatprep.mubr.f32.mxu0 0.0
    %v1621 = vand.u32 %v188, 4294901760
    %v1622 = vsub.f32 %v188, %v1621
    %v1623 = vand.u32 %v1622, 4294901760
    %1624 = vmatmul.mubr.f32.gmra.mrb[0].mxu0 %v1623
    %v1625 = vpop.f32.mrb[0].mxu0
    %v1626 = vadd.f32 %v1268, %v1625
    %v1627 = vpop.f32.mrb[0].mxu0
    %1628 = vmatprep.mubr.f32.mxu0 0.0
    %v1629 = vand.u32 %v191, 4294901760
    %v1630 = vsub.f32 %v191, %v1629
    %v1631 = vand.u32 %v1630, 4294901760
    %1632 = vmatmul.mubr.f32.gmra.mrb[0].mxu0 %v1631
    %v1633 = vpop.f32.mrb[0].mxu0
    %v1634 = vadd.f32 %v1275, %v1633
    %v1635 = vpop.f32.mrb[0].mxu0
    %1636 = vmatprep.mubr.f32.mxu0 0.0
    %v1637 = vand.u32 %v194, 4294901760
    %v1638 = vsub.f32 %v194, %v1637
    %v1639 = vand.u32 %v1638, 4294901760
    %1640 = vmatmul.mubr.f32.gmra.mrb[0].mxu0 %v1639
    %v1641 = vpop.f32.mrb[0].mxu0
    %v1642 = vadd.f32 %v1282, %v1641
    %v1643 = vpop.f32.mrb[0].mxu0
    %1644 = vmatprep.mubr.f32.mxu0 0.0
    %v1645 = vand.u32 %v197, 4294901760
    %v1646 = vsub.f32 %v197, %v1645
    %v1647 = vand.u32 %v1646, 4294901760
    %1648 = vmatmul.mubr.f32.gmra.mrb[0].mxu0 %v1647
    %v1649 = vpop.f32.mrb[0].mxu0
    %v1650 = vadd.f32 %v1289, %v1649
    %v1651 = vpop.f32.mrb[0].mxu0
    %1652 = vmatprep.mubr.f32.mxu0 0.0
    %v1653 = vand.u32 %v200, 4294901760
    %v1654 = vsub.f32 %v200, %v1653
    %v1655 = vand.u32 %v1654, 4294901760
    %1656 = vmatmul.mubr.f32.gmra.mrb[0].mxu0 %v1655
    %v1657 = vpop.f32.mrb[0].mxu0
    %v1658 = vadd.f32 %v1296, %v1657
    %v1659 = vpop.f32.mrb[0].mxu0
    %1660 = vmatprep.mubr.f32.mxu0 0.0
    %v1661 = vand.u32 %v203, 4294901760
    %v1662 = vsub.f32 %v203, %v1661
    %v1663 = vand.u32 %v1662, 4294901760
    %1664 = vmatmul.mubr.f32.gmra.mrb[0].mxu0 %v1663
    %v1665 = vpop.f32.mrb[0].mxu0
    %v1666 = vadd.f32 %v1303, %v1665
    %v1667 = vpop.f32.mrb[0].mxu0
    %1668 = vmatprep.mubr.f32.mxu0 0.0
    %v1669 = vand.u32 %v206, 4294901760
    %v1670 = vsub.f32 %v206, %v1669
    %v1671 = vand.u32 %v1670, 4294901760
    %1672 = vmatmul.mubr.f32.gmra.mrb[0].mxu0 %v1671
    %v1673 = vpop.f32.mrb[0].mxu0
    %v1674 = vadd.f32 %v1310, %v1673
    %v1675 = vpop.f32.mrb[0].mxu0
    %1676 = vmatprep.mubr.f32.mxu0 0.0
    %v1677 = vand.u32 %v209, 4294901760
    %v1678 = vsub.f32 %v209, %v1677
    %v1679 = vand.u32 %v1678, 4294901760
    %1680 = vmatmul.mubr.f32.gmra.mrb[0].mxu0 %v1679
    %v1681 = vpop.f32.mrb[0].mxu0
    %v1682 = vadd.f32 %v1317, %v1681
    %v1683 = vpop.f32.mrb[0].mxu0
    %1684 = vmatprep.mubr.f32.mxu0 0.0
    %v1685 = vand.u32 %v212, 4294901760
    %v1686 = vsub.f32 %v212, %v1685
    %v1687 = vand.u32 %v1686, 4294901760
    %1688 = vmatmul.mubr.f32.gmra.mrb[0].mxu0 %v1687
    %v1689 = vpop.f32.mrb[0].mxu0
    %v1690 = vadd.f32 %v1324, %v1689
    %v1691 = vpop.f32.mrb[0].mxu0
    %1692 = vmatprep.mubr.f32.mxu0 0.0
    %v1693 = vand.u32 %v215, 4294901760
    %v1694 = vsub.f32 %v215, %v1693
    %v1695 = vand.u32 %v1694, 4294901760
    %1696 = vmatmul.mubr.f32.gmra.mrb[0].mxu0 %v1695
    %v1697 = vpop.f32.mrb[0].mxu0
    %v1698 = vadd.f32 %v1331, %v1697
    %v1699 = vpop.f32.mrb[0].mxu0
    %1700 = vmatprep.mubr.f32.mxu0 0.0
    %v1701 = vand.u32 %v218, 4294901760
    %v1702 = vsub.f32 %v218, %v1701
    %v1703 = vand.u32 %v1702, 4294901760
    %1704 = vmatmul.mubr.f32.gmra.mrb[0].mxu0 %v1703
    %v1705 = vpop.f32.mrb[0].mxu0
    %v1706 = vadd.f32 %v1338, %v1705
    %v1707 = vpop.f32.mrb[0].mxu0
    %1708 = vmatprep.mubr.f32.mxu0 0.0
    %v1709 = vand.u32 %v221, 4294901760
    %v1710 = vsub.f32 %v221, %v1709
    %v1711 = vand.u32 %v1710, 4294901760
    %1712 = vmatmul.mubr.f32.gmra.mrb[0].mxu0 %v1711
    %v1713 = vpop.f32.mrb[0].mxu0
    %v1714 = vadd.f32 %v1345, %v1713
    %v1715 = vpop.f32.mrb[0].mxu0
    %1716 = vmatprep.mubr.f32.mxu0 0.0
    %v1717 = vand.u32 %v224, 4294901760
    %v1718 = vsub.f32 %v224, %v1717
    %v1719 = vand.u32 %v1718, 4294901760
    %1720 = vmatmul.mubr.f32.gmra.mrb[0].mxu0 %v1719
    %v1721 = vpop.f32.mrb[0].mxu0
    %v1722 = vadd.f32 %v1352, %v1721
    %v1723 = vpop.f32.mrb[0].mxu0
    %1724 = vmatprep.mubr.f32.mxu0 0.0
    %v1725 = vand.u32 %v227, 4294901760
    %v1726 = vsub.f32 %v227, %v1725
    %v1727 = vand.u32 %v1726, 4294901760
    %1728 = vmatmul.mubr.f32.gmra.mrb[0].mxu0 %v1727
    %v1729 = vpop.f32.mrb[0].mxu0
    %v1730 = vadd.f32 %v1359, %v1729
    %v1731 = vpop.f32.mrb[0].mxu0
    %1732 = vmatprep.mubr.f32.mxu0 0.0
    %v1733 = vand.u32 %v230, 4294901760
    %v1734 = vsub.f32 %v230, %v1733
    %v1735 = vand.u32 %v1734, 4294901760
    %1736 = vmatmul.mubr.f32.gmra.mrb[0].mxu0 %v1735
    %v1737 = vpop.f32.mrb[0].mxu0
    %v1738 = vadd.f32 %v1366, %v1737
    %v1739 = vpop.f32.mrb[0].mxu0
    %1740 = vmatprep.mubr.f32.mxu0 0.0
    %v1741 = vand.u32 %v233, 4294901760
    %v1742 = vsub.f32 %v233, %v1741
    %v1743 = vand.u32 %v1742, 4294901760
    %1744 = vmatmul.mubr.f32.gmra.mrb[0].mxu0 %v1743
    %v1745 = vpop.f32.mrb[0].mxu0
    %v1746 = vadd.f32 %v1373, %v1745
    %v1747 = vpop.f32.mrb[0].mxu0
    %1748 = vmatprep.mubr.f32.mxu0 0.0
    %v1749 = vand.u32 %v236, 4294901760
    %v1750 = vsub.f32 %v236, %v1749
    %v1751 = vand.u32 %v1750, 4294901760
    %1752 = vmatmul.mubr.f32.gmra.mrb[0].mxu0 %v1751
    %v1753 = vpop.f32.mrb[0].mxu0
    %v1754 = vadd.f32 %v1380, %v1753
    %v1755 = vpop.f32.mrb[0].mxu0
    %1756 = vmatprep.mubr.f32.mxu0 0.0
    %v1757 = vand.u32 %v239, 4294901760
    %v1758 = vsub.f32 %v239, %v1757
    %v1759 = vand.u32 %v1758, 4294901760
    %1760 = vmatmul.mubr.f32.gmra.mrb[0].mxu0 %v1759
    %v1761 = vpop.f32.mrb[0].mxu0
    %v1762 = vadd.f32 %v1387, %v1761
    %v1763 = vpop.f32.mrb[0].mxu0
    %1764 = vmatprep.mubr.f32.mxu0 0.0
    %v1765 = vand.u32 %v242, 4294901760
    %v1766 = vsub.f32 %v242, %v1765
    %v1767 = vand.u32 %v1766, 4294901760
    %1768 = vmatmul.mubr.f32.gmra.mrb[0].mxu0 %v1767
    %v1769 = vpop.f32.mrb[0].mxu0
    %v1770 = vadd.f32 %v1394, %v1769
    %v1771 = vpop.f32.mrb[0].mxu0
    %1772 = vmatprep.mubr.f32.mxu0 0.0
    %v1773 = vand.u32 %v245, 4294901760
    %v1774 = vsub.f32 %v245, %v1773
    %v1775 = vand.u32 %v1774, 4294901760
    %1776 = vmatmul.mubr.f32.gmra.mrb[0].mxu0 %v1775
    %v1777 = vpop.f32.mrb[0].mxu0
    %v1778 = vadd.f32 %v1401, %v1777
    %v1779 = vpop.f32.mrb[0].mxu0
    %1780 = vmatprep.mubr.f32.mxu0 0.0
    %v1781 = vand.u32 %v248, 4294901760
    %v1782 = vsub.f32 %v248, %v1781
    %v1783 = vand.u32 %v1782, 4294901760
    %1784 = vmatmul.mubr.f32.gmra.mrb[0].mxu0 %v1783
    %v1785 = vpop.f32.mrb[0].mxu0
    %v1786 = vadd.f32 %v1408, %v1785
    %v1787 = vpop.f32.mrb[0].mxu0
    %1788 = vmatprep.mubr.f32.mxu0 0.0
    %v1789 = vand.u32 %v251, 4294901760
    %v1790 = vsub.f32 %v251, %v1789
    %v1791 = vand.u32 %v1790, 4294901760
    %1792 = vmatmul.mubr.f32.gmra.mrb[0].mxu0 %v1791
    %v1793 = vpop.f32.mrb[0].mxu0
    %v1794 = vadd.f32 %v1415, %v1793
    %v1795 = vpop.f32.mrb[0].mxu0
    %1796 = vmatprep.mubr.f32.mxu0 0.0
    %v1797 = vand.u32 %v254, 4294901760
    %v1798 = vsub.f32 %v254, %v1797
    %v1799 = vand.u32 %v1798, 4294901760
    %1800 = vmatmul.mubr.f32.gmra.mrb[0].mxu0 %v1799
    %v1801 = vpop.f32.mrb[0].mxu0
    %v1802 = vadd.f32 %v1422, %v1801
    %v1803 = vpop.f32.mrb[0].mxu0
    %1804 = vmatprep.mubr.f32.mxu0 0.0
    %v1805 = vand.u32 %v257, 4294901760
    %v1806 = vsub.f32 %v257, %v1805
    %v1807 = vand.u32 %v1806, 4294901760
    %1808 = vmatmul.mubr.f32.gmra.mrb[0].mxu0 %v1807
    %v1809 = vpop.f32.mrb[0].mxu0
    %v1810 = vadd.f32 %v1429, %v1809
    %v1811 = vpop.f32.mrb[0].mxu0
    %1812 = vmatprep.mubr.f32.mxu0 0.0
    %v1813 = vand.u32 %v260, 4294901760
    %v1814 = vsub.f32 %v260, %v1813
    %v1815 = vand.u32 %v1814, 4294901760
    %1816 = vmatmul.mubr.f32.gmra.mrb[0].mxu0 %v1815
    %v1817 = vpop.f32.mrb[0].mxu0
    %v1818 = vadd.f32 %v1436, %v1817
    %v1819 = vpop.f32.mrb[0].mxu0
    %1820 = vdwg.mxu0
    %1821 = vmatprep.subr.mxu0 0.0
    %v1822 = vand.u32 %v134, 4294901760
    %v1823 = vsub.f32 %v134, %v1822
    %v1824 = vand.u32 %v1823, 4294901760
    %1825 = vmatpush1.msra.mxu0 %v1824
    %1826 = vmatprep.subr.mxu0 0.0
    %v1827 = vand.u32 %v135, 4294901760
    %v1828 = vsub.f32 %v135, %v1827
    %v1829 = vand.u32 %v1828, 4294901760
    %1830 = vmatpush1.msra.mxu0 %v1829
    %1831 = vmatprep.subr.mxu0 0.0
    %v1832 = vand.u32 %v136, 4294901760
    %v1833 = vsub.f32 %v136, %v1832
    %v1834 = vand.u32 %v1833, 4294901760
    %1835 = vmatpush1.msra.mxu0 %v1834
    %1836 = vmatprep.subr.mxu0 0.0
    %v1837 = vand.u32 %v137, 4294901760
    %v1838 = vsub.f32 %v137, %v1837
    %v1839 = vand.u32 %v1838, 4294901760
    %1840 = vmatpush1.msra.mxu0 %v1839
    %1841 = vmatprep.subr.mxu0 0.0
    %v1842 = vand.u32 %v138, 4294901760
    %v1843 = vsub.f32 %v138, %v1842
    %v1844 = vand.u32 %v1843, 4294901760
    %1845 = vmatpush1.msra.mxu0 %v1844
    %1846 = vmatprep.subr.mxu0 0.0
    %v1847 = vand.u32 %v139, 4294901760
    %v1848 = vsub.f32 %v139, %v1847
    %v1849 = vand.u32 %v1848, 4294901760
    %1850 = vmatpush1.msra.mxu0 %v1849
    %1851 = vmatprep.subr.mxu0 0.0
    %v1852 = vand.u32 %v140, 4294901760
    %v1853 = vsub.f32 %v140, %v1852
    %v1854 = vand.u32 %v1853, 4294901760
    %1855 = vmatpush1.msra.mxu0 %v1854
    %1856 = vmatprep.subr.mxu0 0.0
    %v1857 = vand.u32 %v141, 4294901760
    %v1858 = vsub.f32 %v141, %v1857
    %v1859 = vand.u32 %v1858, 4294901760
    %1860 = vmatpush1.msra.mxu0 %v1859
    %1861 = vmatprep.subr.mxu0 0.0
    %v1862 = vand.u32 %v142, 4294901760
    %v1863 = vsub.f32 %v142, %v1862
    %v1864 = vand.u32 %v1863, 4294901760
    %1865 = vmatpush1.msra.mxu0 %v1864
    %1866 = vmatprep.subr.mxu0 0.0
    %v1867 = vand.u32 %v143, 4294901760
    %v1868 = vsub.f32 %v143, %v1867
    %v1869 = vand.u32 %v1868, 4294901760
    %1870 = vmatpush1.msra.mxu0 %v1869
    %1871 = vmatprep.subr.mxu0 0.0
    %v1872 = vand.u32 %v144, 4294901760
    %v1873 = vsub.f32 %v144, %v1872
    %v1874 = vand.u32 %v1873, 4294901760
    %1875 = vmatpush1.msra.mxu0 %v1874
    %1876 = vmatprep.subr.mxu0 0.0
    %v1877 = vand.u32 %v145, 4294901760
    %v1878 = vsub.f32 %v145, %v1877
    %v1879 = vand.u32 %v1878, 4294901760
    %1880 = vmatpush1.msra.mxu0 %v1879
    %1881 = vmatprep.subr.mxu0 0.0
    %v1882 = vand.u32 %v264, 4294901760
    %v1883 = vsub.f32 %v264, %v1882
    %v1884 = vand.u32 %v1883, 4294901760
    %1885 = vmatpush1.msra.mxu0 %v1884
    %1886 = vmatprep.subr.mxu0 0.0
    %1887 = vmatpush1.msra.mxu0 0.0
    %1888 = vmatprep.subr.mxu0 0.0
    %1889 = vmatpush1.msra.mxu0 0.0
    %1890 = vmatprep.subr.mxu0 0.0
    %1891 = vmatpush1.msra.mxu0 0.0
    %1892 = vmatprep.subr.mxu0 0.0
    %1893 = vmatpush1.msra.mxu0 0.0
    %1894 = vmatprep.subr.mxu0 0.0
    %1895 = vmatpush1.msra.mxu0 0.0
    %1896 = vmatprep.subr.mxu0 0.0
    %1897 = vmatpush1.msra.mxu0 0.0
    %1898 = vmatprep.subr.mxu0 0.0
    %1899 = vmatpush1.msra.mxu0 0.0
    %1900 = vmatprep.subr.mxu0 0.0
    %1901 = vmatpush1.msra.mxu0 0.0
    %1902 = vmatprep.subr.mxu0 0.0
    %1903 = vmatpush1.msra.mxu0 0.0
    %1904 = vmatprep.subr.mxu0 0.0
    %1905 = vmatpush1.msra.mxu0 0.0
    %1906 = vmatprep.subr.mxu0 0.0
    %1907 = vmatpush1.msra.mxu0 0.0
    %1908 = vmatprep.subr.mxu0 0.0
    %1909 = vmatpush1.msra.mxu0 0.0
    %1910 = vmatprep.subr.mxu0 0.0
    %1911 = vmatpush1.msra.mxu0 0.0
    %1912 = vmatprep.subr.mxu0 0.0
    %1913 = vmatpush1.msra.mxu0 0.0
    %1914 = vmatprep.subr.mxu0 0.0
    %1915 = vmatpush1.msra.mxu0 0.0
    %1916 = vmatprep.subr.mxu0 0.0
    %1917 = vmatpush1.msra.mxu0 0.0
    %1918 = vmatprep.subr.mxu0 0.0
    %1919 = vmatpush1.msra.mxu0 0.0
    %1920 = vmatprep.subr.mxu0 0.0
    %1921 = vmatpush1.msra.mxu0 0.0
    %1922 = vmatprep.subr.mxu0 0.0
    %1923 = vmatpush1.msra.mxu0 0.0
    %1924 = vmatprep.mubr.f32.mxu0 0.0
    %v1925 = vand.u32 %v149, 4294901760
    %1926 = vmatmul.mubr.f32.gmra.mrb[0].mxu0 %v1925
    %v1927 = vpop.f32.mrb[0].mxu0
    %v1928 = vadd.f32 %v1522, %v1927
    %v1929 = vpop.f32.mrb[0].mxu0
    %1930 = vmatprep.mubr.f32.mxu0 0.0
    %v1931 = vand.u32 %v152, 4294901760
    %1932 = vmatmul.mubr.f32.gmra.mrb[0].mxu0 %v1931
    %v1933 = vpop.f32.mrb[0].mxu0
    %v1934 = vadd.f32 %v1530, %v1933
    %v1935 = vpop.f32.mrb[0].mxu0
    %1936 = vmatprep.mubr.f32.mxu0 0.0
    %v1937 = vand.u32 %v155, 4294901760
    %1938 = vmatmul.mubr.f32.gmra.mrb[0].mxu0 %v1937
    %v1939 = vpop.f32.mrb[0].mxu0
    %v1940 = vadd.f32 %v1538, %v1939
    %v1941 = vpop.f32.mrb[0].mxu0
    %1942 = vmatprep.mubr.f32.mxu0 0.0
    %v1943 = vand.u32 %v158, 4294901760
    %1944 = vmatmul.mubr.f32.gmra.mrb[0].mxu0 %v1943
    %v1945 = vpop.f32.mrb[0].mxu0
    %v1946 = vadd.f32 %v1546, %v1945
    %v1947 = vpop.f32.mrb[0].mxu0
    %1948 = vmatprep.mubr.f32.mxu0 0.0
    %v1949 = vand.u32 %v161, 4294901760
    %1950 = vmatmul.mubr.f32.gmra.mrb[0].mxu0 %v1949
    %v1951 = vpop.f32.mrb[0].mxu0
    %v1952 = vadd.f32 %v1554, %v1951
    %v1953 = vpop.f32.mrb[0].mxu0
    %1954 = vmatprep.mubr.f32.mxu0 0.0
    %v1955 = vand.u32 %v164, 4294901760
    %1956 = vmatmul.mubr.f32.gmra.mrb[0].mxu0 %v1955
    %v1957 = vpop.f32.mrb[0].mxu0
    %v1958 = vadd.f32 %v1562, %v1957
    %v1959 = vpop.f32.mrb[0].mxu0
    %1960 = vmatprep.mubr.f32.mxu0 0.0
    %v1961 = vand.u32 %v167, 4294901760
    %1962 = vmatmul.mubr.f32.gmra.mrb[0].mxu0 %v1961
    %v1963 = vpop.f32.mrb[0].mxu0
    %v1964 = vadd.f32 %v1570, %v1963
    %v1965 = vpop.f32.mrb[0].mxu0
    %1966 = vmatprep.mubr.f32.mxu0 0.0
    %v1967 = vand.u32 %v170, 4294901760
    %1968 = vmatmul.mubr.f32.gmra.mrb[0].mxu0 %v1967
    %v1969 = vpop.f32.mrb[0].mxu0
    %v1970 = vadd.f32 %v1578, %v1969
    %v1971 = vpop.f32.mrb[0].mxu0
    %1972 = vmatprep.mubr.f32.mxu0 0.0
    %v1973 = vand.u32 %v173, 4294901760
    %1974 = vmatmul.mubr.f32.gmra.mrb[0].mxu0 %v1973
    %v1975 = vpop.f32.mrb[0].mxu0
    %v1976 = vadd.f32 %v1586, %v1975
    %v1977 = vpop.f32.mrb[0].mxu0
    %1978 = vmatprep.mubr.f32.mxu0 0.0
    %v1979 = vand.u32 %v176, 4294901760
    %1980 = vmatmul.mubr.f32.gmra.mrb[0].mxu0 %v1979
    %v1981 = vpop.f32.mrb[0].mxu0
    %v1982 = vadd.f32 %v1594, %v1981
    %v1983 = vpop.f32.mrb[0].mxu0
    %1984 = vmatprep.mubr.f32.mxu0 0.0
    %v1985 = vand.u32 %v179, 4294901760
    %1986 = vmatmul.mubr.f32.gmra.mrb[0].mxu0 %v1985
    %v1987 = vpop.f32.mrb[0].mxu0
    %v1988 = vadd.f32 %v1602, %v1987
    %v1989 = vpop.f32.mrb[0].mxu0
    %1990 = vmatprep.mubr.f32.mxu0 0.0
    %v1991 = vand.u32 %v182, 4294901760
    %1992 = vmatmul.mubr.f32.gmra.mrb[0].mxu0 %v1991
    %v1993 = vpop.f32.mrb[0].mxu0
    %v1994 = vadd.f32 %v1610, %v1993
    %v1995 = vpop.f32.mrb[0].mxu0
    %1996 = vmatprep.mubr.f32.mxu0 0.0
    %v1997 = vand.u32 %v185, 4294901760
    %1998 = vmatmul.mubr.f32.gmra.mrb[0].mxu0 %v1997
    %v1999 = vpop.f32.mrb[0].mxu0
    %v2000 = vadd.f32 %v1618, %v1999
    %v2001 = vpop.f32.mrb[0].mxu0
    %2002 = vmatprep.mubr.f32.mxu0 0.0
    %v2003 = vand.u32 %v188, 4294901760
    %2004 = vmatmul.mubr.f32.gmra.mrb[0].mxu0 %v2003
    %v2005 = vpop.f32.mrb[0].mxu0
    %v2006 = vadd.f32 %v1626, %v2005
    %v2007 = vpop.f32.mrb[0].mxu0
    %2008 = vmatprep.mubr.f32.mxu0 0.0
    %v2009 = vand.u32 %v191, 4294901760
    %2010 = vmatmul.mubr.f32.gmra.mrb[0].mxu0 %v2009
    %v2011 = vpop.f32.mrb[0].mxu0
    %v2012 = vadd.f32 %v1634, %v2011
    %v2013 = vpop.f32.mrb[0].mxu0
    %2014 = vmatprep.mubr.f32.mxu0 0.0
    %v2015 = vand.u32 %v194, 4294901760
    %2016 = vmatmul.mubr.f32.gmra.mrb[0].mxu0 %v2015
    %v2017 = vpop.f32.mrb[0].mxu0
    %v2018 = vadd.f32 %v1642, %v2017
    %v2019 = vpop.f32.mrb[0].mxu0
    %2020 = vmatprep.mubr.f32.mxu0 0.0
    %v2021 = vand.u32 %v197, 4294901760
    %2022 = vmatmul.mubr.f32.gmra.mrb[0].mxu0 %v2021
    %v2023 = vpop.f32.mrb[0].mxu0
    %v2024 = vadd.f32 %v1650, %v2023
    %v2025 = vpop.f32.mrb[0].mxu0
    %2026 = vmatprep.mubr.f32.mxu0 0.0
    %v2027 = vand.u32 %v200, 4294901760
    %2028 = vmatmul.mubr.f32.gmra.mrb[0].mxu0 %v2027
    %v2029 = vpop.f32.mrb[0].mxu0
    %v2030 = vadd.f32 %v1658, %v2029
    %v2031 = vpop.f32.mrb[0].mxu0
    %2032 = vmatprep.mubr.f32.mxu0 0.0
    %v2033 = vand.u32 %v203, 4294901760
    %2034 = vmatmul.mubr.f32.gmra.mrb[0].mxu0 %v2033
    %v2035 = vpop.f32.mrb[0].mxu0
    %v2036 = vadd.f32 %v1666, %v2035
    %v2037 = vpop.f32.mrb[0].mxu0
    %2038 = vmatprep.mubr.f32.mxu0 0.0
    %v2039 = vand.u32 %v206, 4294901760
    %2040 = vmatmul.mubr.f32.gmra.mrb[0].mxu0 %v2039
    %v2041 = vpop.f32.mrb[0].mxu0
    %v2042 = vadd.f32 %v1674, %v2041
    %v2043 = vpop.f32.mrb[0].mxu0
    %2044 = vmatprep.mubr.f32.mxu0 0.0
    %v2045 = vand.u32 %v209, 4294901760
    %2046 = vmatmul.mubr.f32.gmra.mrb[0].mxu0 %v2045
    %v2047 = vpop.f32.mrb[0].mxu0
    %v2048 = vadd.f32 %v1682, %v2047
    %v2049 = vpop.f32.mrb[0].mxu0
    %2050 = vmatprep.mubr.f32.mxu0 0.0
    %v2051 = vand.u32 %v212, 4294901760
    %2052 = vmatmul.mubr.f32.gmra.mrb[0].mxu0 %v2051
    %v2053 = vpop.f32.mrb[0].mxu0
    %v2054 = vadd.f32 %v1690, %v2053
    %v2055 = vpop.f32.mrb[0].mxu0
    %2056 = vmatprep.mubr.f32.mxu0 0.0
    %v2057 = vand.u32 %v215, 4294901760
    %2058 = vmatmul.mubr.f32.gmra.mrb[0].mxu0 %v2057
    %v2059 = vpop.f32.mrb[0].mxu0
    %v2060 = vadd.f32 %v1698, %v2059
    %v2061 = vpop.f32.mrb[0].mxu0
    %2062 = vmatprep.mubr.f32.mxu0 0.0
    %v2063 = vand.u32 %v218, 4294901760
    %2064 = vmatmul.mubr.f32.gmra.mrb[0].mxu0 %v2063
    %v2065 = vpop.f32.mrb[0].mxu0
    %v2066 = vadd.f32 %v1706, %v2065
    %v2067 = vpop.f32.mrb[0].mxu0
    %2068 = vmatprep.mubr.f32.mxu0 0.0
    %v2069 = vand.u32 %v221, 4294901760
    %2070 = vmatmul.mubr.f32.gmra.mrb[0].mxu0 %v2069
    %v2071 = vpop.f32.mrb[0].mxu0
    %v2072 = vadd.f32 %v1714, %v2071
    %v2073 = vpop.f32.mrb[0].mxu0
    %2074 = vmatprep.mubr.f32.mxu0 0.0
    %v2075 = vand.u32 %v224, 4294901760
    %2076 = vmatmul.mubr.f32.gmra.mrb[0].mxu0 %v2075
    %v2077 = vpop.f32.mrb[0].mxu0
    %v2078 = vadd.f32 %v1722, %v2077
    %v2079 = vpop.f32.mrb[0].mxu0
    %2080 = vmatprep.mubr.f32.mxu0 0.0
    %v2081 = vand.u32 %v227, 4294901760
    %2082 = vmatmul.mubr.f32.gmra.mrb[0].mxu0 %v2081
    %v2083 = vpop.f32.mrb[0].mxu0
    %v2084 = vadd.f32 %v1730, %v2083
    %v2085 = vpop.f32.mrb[0].mxu0
    %2086 = vmatprep.mubr.f32.mxu0 0.0
    %v2087 = vand.u32 %v230, 4294901760
    %2088 = vmatmul.mubr.f32.gmra.mrb[0].mxu0 %v2087
    %v2089 = vpop.f32.mrb[0].mxu0
    %v2090 = vadd.f32 %v1738, %v2089
    %v2091 = vpop.f32.mrb[0].mxu0
    %2092 = vmatprep.mubr.f32.mxu0 0.0
    %v2093 = vand.u32 %v233, 4294901760
    %2094 = vmatmul.mubr.f32.gmra.mrb[0].mxu0 %v2093
    %v2095 = vpop.f32.mrb[0].mxu0
    %v2096 = vadd.f32 %v1746, %v2095
    %v2097 = vpop.f32.mrb[0].mxu0
    %2098 = vmatprep.mubr.f32.mxu0 0.0
    %v2099 = vand.u32 %v236, 4294901760
    %2100 = vmatmul.mubr.f32.gmra.mrb[0].mxu0 %v2099
    %v2101 = vpop.f32.mrb[0].mxu0
    %v2102 = vadd.f32 %v1754, %v2101
    %v2103 = vpop.f32.mrb[0].mxu0
    %2104 = vmatprep.mubr.f32.mxu0 0.0
    %v2105 = vand.u32 %v239, 4294901760
    %2106 = vmatmul.mubr.f32.gmra.mrb[0].mxu0 %v2105
    %v2107 = vpop.f32.mrb[0].mxu0
    %v2108 = vadd.f32 %v1762, %v2107
    %v2109 = vpop.f32.mrb[0].mxu0
    %2110 = vmatprep.mubr.f32.mxu0 0.0
    %v2111 = vand.u32 %v242, 4294901760
    %2112 = vmatmul.mubr.f32.gmra.mrb[0].mxu0 %v2111
    %v2113 = vpop.f32.mrb[0].mxu0
    %v2114 = vadd.f32 %v1770, %v2113
    %v2115 = vpop.f32.mrb[0].mxu0
    %2116 = vmatprep.mubr.f32.mxu0 0.0
    %v2117 = vand.u32 %v245, 4294901760
    %2118 = vmatmul.mubr.f32.gmra.mrb[0].mxu0 %v2117
    %v2119 = vpop.f32.mrb[0].mxu0
    %v2120 = vadd.f32 %v1778, %v2119
    %v2121 = vpop.f32.mrb[0].mxu0
    %2122 = vmatprep.mubr.f32.mxu0 0.0
    %v2123 = vand.u32 %v248, 4294901760
    %2124 = vmatmul.mubr.f32.gmra.mrb[0].mxu0 %v2123
    %v2125 = vpop.f32.mrb[0].mxu0
    %v2126 = vadd.f32 %v1786, %v2125
    %v2127 = vpop.f32.mrb[0].mxu0
    %2128 = vmatprep.mubr.f32.mxu0 0.0
    %v2129 = vand.u32 %v251, 4294901760
    %2130 = vmatmul.mubr.f32.gmra.mrb[0].mxu0 %v2129
    %v2131 = vpop.f32.mrb[0].mxu0
    %v2132 = vadd.f32 %v1794, %v2131
    %v2133 = vpop.f32.mrb[0].mxu0
    %2134 = vmatprep.mubr.f32.mxu0 0.0
    %v2135 = vand.u32 %v254, 4294901760
    %2136 = vmatmul.mubr.f32.gmra.mrb[0].mxu0 %v2135
    %v2137 = vpop.f32.mrb[0].mxu0
    %v2138 = vadd.f32 %v1802, %v2137
    %v2139 = vpop.f32.mrb[0].mxu0
    %2140 = vmatprep.mubr.f32.mxu0 0.0
    %v2141 = vand.u32 %v257, 4294901760
    %2142 = vmatmul.mubr.f32.gmra.mrb[0].mxu0 %v2141
    %v2143 = vpop.f32.mrb[0].mxu0
    %v2144 = vadd.f32 %v1810, %v2143
    %v2145 = vpop.f32.mrb[0].mxu0
    %2146 = vmatprep.mubr.f32.mxu0 0.0
    %v2147 = vand.u32 %v260, 4294901760
    %2148 = vmatmul.mubr.f32.gmra.mrb[0].mxu0 %v2147
    %v2149 = vpop.f32.mrb[0].mxu0
    %v2150 = vadd.f32 %v1818, %v2149
    %v2151 = vpop.f32.mrb[0].mxu0
    %2152 = vdwg.mxu0
    %2153 = vmatprep.subr.mxu0 0.0
    %v2154 = vand.u32 %v134, 4294901760
    %2155 = vmatpush1.msra.mxu0 %v2154
    %2156 = vmatprep.subr.mxu0 0.0
    %v2157 = vand.u32 %v135, 4294901760
    %2158 = vmatpush1.msra.mxu0 %v2157
    %2159 = vmatprep.subr.mxu0 0.0
    %v2160 = vand.u32 %v136, 4294901760
    %2161 = vmatpush1.msra.mxu0 %v2160
    %2162 = vmatprep.subr.mxu0 0.0
    %v2163 = vand.u32 %v137, 4294901760
    %2164 = vmatpush1.msra.mxu0 %v2163
    %2165 = vmatprep.subr.mxu0 0.0
    %v2166 = vand.u32 %v138, 4294901760
    %2167 = vmatpush1.msra.mxu0 %v2166
    %2168 = vmatprep.subr.mxu0 0.0
    %v2169 = vand.u32 %v139, 4294901760
    %2170 = vmatpush1.msra.mxu0 %v2169
    %2171 = vmatprep.subr.mxu0 0.0
    %v2172 = vand.u32 %v140, 4294901760
    %2173 = vmatpush1.msra.mxu0 %v2172
    %2174 = vmatprep.subr.mxu0 0.0
    %v2175 = vand.u32 %v141, 4294901760
    %2176 = vmatpush1.msra.mxu0 %v2175
    %2177 = vmatprep.subr.mxu0 0.0
    %v2178 = vand.u32 %v142, 4294901760
    %2179 = vmatpush1.msra.mxu0 %v2178
    %2180 = vmatprep.subr.mxu0 0.0
    %v2181 = vand.u32 %v143, 4294901760
    %2182 = vmatpush1.msra.mxu0 %v2181
    %2183 = vmatprep.subr.mxu0 0.0
    %v2184 = vand.u32 %v144, 4294901760
    %2185 = vmatpush1.msra.mxu0 %v2184
    %2186 = vmatprep.subr.mxu0 0.0
    %v2187 = vand.u32 %v145, 4294901760
    %2188 = vmatpush1.msra.mxu0 %v2187
    %2189 = vmatprep.subr.mxu0 0.0
    %v2190 = vand.u32 %v264, 4294901760
    %2191 = vmatpush1.msra.mxu0 %v2190
    %2192 = vmatprep.subr.mxu0 0.0
    %2193 = vmatpush1.msra.mxu0 0.0
    %2194 = vmatprep.subr.mxu0 0.0
    %2195 = vmatpush1.msra.mxu0 0.0
    %2196 = vmatprep.subr.mxu0 0.0
    %2197 = vmatpush1.msra.mxu0 0.0
    %2198 = vmatprep.subr.mxu0 0.0
    %2199 = vmatpush1.msra.mxu0 0.0
    %2200 = vmatprep.subr.mxu0 0.0
    %2201 = vmatpush1.msra.mxu0 0.0
    %2202 = vmatprep.subr.mxu0 0.0
    %2203 = vmatpush1.msra.mxu0 0.0
    %2204 = vmatprep.subr.mxu0 0.0
    %2205 = vmatpush1.msra.mxu0 0.0
    %2206 = vmatprep.subr.mxu0 0.0
    %2207 = vmatpush1.msra.mxu0 0.0
    %2208 = vmatprep.subr.mxu0 0.0
    %2209 = vmatpush1.msra.mxu0 0.0
    %2210 = vmatprep.subr.mxu0 0.0
    %2211 = vmatpush1.msra.mxu0 0.0
    %2212 = vmatprep.subr.mxu0 0.0
    %2213 = vmatpush1.msra.mxu0 0.0
    %2214 = vmatprep.subr.mxu0 0.0
    %2215 = vmatpush1.msra.mxu0 0.0
    %2216 = vmatprep.subr.mxu0 0.0
    %2217 = vmatpush1.msra.mxu0 0.0
    %2218 = vmatprep.subr.mxu0 0.0
    %2219 = vmatpush1.msra.mxu0 0.0
    %2220 = vmatprep.subr.mxu0 0.0
    %2221 = vmatpush1.msra.mxu0 0.0
    %2222 = vmatprep.subr.mxu0 0.0
    %2223 = vmatpush1.msra.mxu0 0.0
    %2224 = vmatprep.subr.mxu0 0.0
    %2225 = vmatpush1.msra.mxu0 0.0
    %2226 = vmatprep.subr.mxu0 0.0
    %2227 = vmatpush1.msra.mxu0 0.0
    %2228 = vmatprep.subr.mxu0 0.0
    %2229 = vmatpush1.msra.mxu0 0.0
    %2230 = vmatprep.mubr.f32.mxu0 0.0
    %v2231 = vand.u32 %v149, 4294901760
    %2232 = vmatmul.mubr.f32.gmra.mrb[0].mxu0 %v2231
    %v2233 = vpop.f32.mrb[0].mxu0
    %v2234 = vadd.f32 %v1928, %v2233
    %v2235 = vpop.f32.mrb[0].mxu0
    %2236 = vmatprep.mubr.f32.mxu0 0.0
    %v2237 = vand.u32 %v152, 4294901760
    %2238 = vmatmul.mubr.f32.gmra.mrb[0].mxu0 %v2237
    %v2239 = vpop.f32.mrb[0].mxu0
    %v2240 = vadd.f32 %v1934, %v2239
    %v2241 = vpop.f32.mrb[0].mxu0
    %2242 = vmatprep.mubr.f32.mxu0 0.0
    %v2243 = vand.u32 %v155, 4294901760
    %2244 = vmatmul.mubr.f32.gmra.mrb[0].mxu0 %v2243
    %v2245 = vpop.f32.mrb[0].mxu0
    %v2246 = vadd.f32 %v1940, %v2245
    %v2247 = vpop.f32.mrb[0].mxu0
    %2248 = vmatprep.mubr.f32.mxu0 0.0
    %v2249 = vand.u32 %v158, 4294901760
    %2250 = vmatmul.mubr.f32.gmra.mrb[0].mxu0 %v2249
    %v2251 = vpop.f32.mrb[0].mxu0
    %v2252 = vadd.f32 %v1946, %v2251
    %v2253 = vpop.f32.mrb[0].mxu0
    %2254 = vmatprep.mubr.f32.mxu0 0.0
    %v2255 = vand.u32 %v161, 4294901760
    %2256 = vmatmul.mubr.f32.gmra.mrb[0].mxu0 %v2255
    %v2257 = vpop.f32.mrb[0].mxu0
    %v2258 = vadd.f32 %v1952, %v2257
    %v2259 = vpop.f32.mrb[0].mxu0
    %2260 = vmatprep.mubr.f32.mxu0 0.0
    %v2261 = vand.u32 %v164, 4294901760
    %2262 = vmatmul.mubr.f32.gmra.mrb[0].mxu0 %v2261
    %v2263 = vpop.f32.mrb[0].mxu0
    %v2264 = vadd.f32 %v1958, %v2263
    %v2265 = vpop.f32.mrb[0].mxu0
    %2266 = vmatprep.mubr.f32.mxu0 0.0
    %v2267 = vand.u32 %v167, 4294901760
    %2268 = vmatmul.mubr.f32.gmra.mrb[0].mxu0 %v2267
    %v2269 = vpop.f32.mrb[0].mxu0
    %v2270 = vadd.f32 %v1964, %v2269
    %v2271 = vpop.f32.mrb[0].mxu0
    %2272 = vmatprep.mubr.f32.mxu0 0.0
    %v2273 = vand.u32 %v170, 4294901760
    %2274 = vmatmul.mubr.f32.gmra.mrb[0].mxu0 %v2273
    %v2275 = vpop.f32.mrb[0].mxu0
    %v2276 = vadd.f32 %v1970, %v2275
    %v2277 = vpop.f32.mrb[0].mxu0
    %2278 = vmatprep.mubr.f32.mxu0 0.0
    %v2279 = vand.u32 %v173, 4294901760
    %2280 = vmatmul.mubr.f32.gmra.mrb[0].mxu0 %v2279
    %v2281 = vpop.f32.mrb[0].mxu0
    %v2282 = vadd.f32 %v1976, %v2281
    %v2283 = vpop.f32.mrb[0].mxu0
    %2284 = vmatprep.mubr.f32.mxu0 0.0
    %v2285 = vand.u32 %v176, 4294901760
    %2286 = vmatmul.mubr.f32.gmra.mrb[0].mxu0 %v2285
    %v2287 = vpop.f32.mrb[0].mxu0
    %v2288 = vadd.f32 %v1982, %v2287
    %v2289 = vpop.f32.mrb[0].mxu0
    %2290 = vmatprep.mubr.f32.mxu0 0.0
    %v2291 = vand.u32 %v179, 4294901760
    %2292 = vmatmul.mubr.f32.gmra.mrb[0].mxu0 %v2291
    %v2293 = vpop.f32.mrb[0].mxu0
    %v2294 = vadd.f32 %v1988, %v2293
    %v2295 = vpop.f32.mrb[0].mxu0
    %2296 = vmatprep.mubr.f32.mxu0 0.0
    %v2297 = vand.u32 %v182, 4294901760
    %2298 = vmatmul.mubr.f32.gmra.mrb[0].mxu0 %v2297
    %v2299 = vpop.f32.mrb[0].mxu0
    %v2300 = vadd.f32 %v1994, %v2299
    %v2301 = vpop.f32.mrb[0].mxu0
    %2302 = vmatprep.mubr.f32.mxu0 0.0
    %v2303 = vand.u32 %v185, 4294901760
    %2304 = vmatmul.mubr.f32.gmra.mrb[0].mxu0 %v2303
    %v2305 = vpop.f32.mrb[0].mxu0
    %v2306 = vadd.f32 %v2000, %v2305
    %v2307 = vpop.f32.mrb[0].mxu0
    %2308 = vmatprep.mubr.f32.mxu0 0.0
    %v2309 = vand.u32 %v188, 4294901760
    %2310 = vmatmul.mubr.f32.gmra.mrb[0].mxu0 %v2309
    %v2311 = vpop.f32.mrb[0].mxu0
    %v2312 = vadd.f32 %v2006, %v2311
    %v2313 = vpop.f32.mrb[0].mxu0
    %2314 = vmatprep.mubr.f32.mxu0 0.0
    %v2315 = vand.u32 %v191, 4294901760
    %2316 = vmatmul.mubr.f32.gmra.mrb[0].mxu0 %v2315
    %v2317 = vpop.f32.mrb[0].mxu0
    %v2318 = vadd.f32 %v2012, %v2317
    %v2319 = vpop.f32.mrb[0].mxu0
    %2320 = vmatprep.mubr.f32.mxu0 0.0
    %v2321 = vand.u32 %v194, 4294901760
    %2322 = vmatmul.mubr.f32.gmra.mrb[0].mxu0 %v2321
    %v2323 = vpop.f32.mrb[0].mxu0
    %v2324 = vadd.f32 %v2018, %v2323
    %v2325 = vpop.f32.mrb[0].mxu0
    %2326 = vmatprep.mubr.f32.mxu0 0.0
    %v2327 = vand.u32 %v197, 4294901760
    %2328 = vmatmul.mubr.f32.gmra.mrb[0].mxu0 %v2327
    %v2329 = vpop.f32.mrb[0].mxu0
    %v2330 = vadd.f32 %v2024, %v2329
    %v2331 = vpop.f32.mrb[0].mxu0
    %2332 = vmatprep.mubr.f32.mxu0 0.0
    %v2333 = vand.u32 %v200, 4294901760
    %2334 = vmatmul.mubr.f32.gmra.mrb[0].mxu0 %v2333
    %v2335 = vpop.f32.mrb[0].mxu0
    %v2336 = vadd.f32 %v2030, %v2335
    %v2337 = vpop.f32.mrb[0].mxu0
    %2338 = vmatprep.mubr.f32.mxu0 0.0
    %v2339 = vand.u32 %v203, 4294901760
    %2340 = vmatmul.mubr.f32.gmra.mrb[0].mxu0 %v2339
    %v2341 = vpop.f32.mrb[0].mxu0
    %v2342 = vadd.f32 %v2036, %v2341
    %v2343 = vpop.f32.mrb[0].mxu0
    %2344 = vmatprep.mubr.f32.mxu0 0.0
    %v2345 = vand.u32 %v206, 4294901760
    %2346 = vmatmul.mubr.f32.gmra.mrb[0].mxu0 %v2345
    %v2347 = vpop.f32.mrb[0].mxu0
    %v2348 = vadd.f32 %v2042, %v2347
    %v2349 = vpop.f32.mrb[0].mxu0
    %2350 = vmatprep.mubr.f32.mxu0 0.0
    %v2351 = vand.u32 %v209, 4294901760
    %2352 = vmatmul.mubr.f32.gmra.mrb[0].mxu0 %v2351
    %v2353 = vpop.f32.mrb[0].mxu0
    %v2354 = vadd.f32 %v2048, %v2353
    %v2355 = vpop.f32.mrb[0].mxu0
    %2356 = vmatprep.mubr.f32.mxu0 0.0
    %v2357 = vand.u32 %v212, 4294901760
    %2358 = vmatmul.mubr.f32.gmra.mrb[0].mxu0 %v2357
    %v2359 = vpop.f32.mrb[0].mxu0
    %v2360 = vadd.f32 %v2054, %v2359
    %v2361 = vpop.f32.mrb[0].mxu0
    %2362 = vmatprep.mubr.f32.mxu0 0.0
    %v2363 = vand.u32 %v215, 4294901760
    %2364 = vmatmul.mubr.f32.gmra.mrb[0].mxu0 %v2363
    %v2365 = vpop.f32.mrb[0].mxu0
    %v2366 = vadd.f32 %v2060, %v2365
    %v2367 = vpop.f32.mrb[0].mxu0
    %2368 = vmatprep.mubr.f32.mxu0 0.0
    %v2369 = vand.u32 %v218, 4294901760
    %2370 = vmatmul.mubr.f32.gmra.mrb[0].mxu0 %v2369
    %v2371 = vpop.f32.mrb[0].mxu0
    %v2372 = vadd.f32 %v2066, %v2371
    %v2373 = vpop.f32.mrb[0].mxu0
    %2374 = vmatprep.mubr.f32.mxu0 0.0
    %v2375 = vand.u32 %v221, 4294901760
    %2376 = vmatmul.mubr.f32.gmra.mrb[0].mxu0 %v2375
    %v2377 = vpop.f32.mrb[0].mxu0
    %v2378 = vadd.f32 %v2072, %v2377
    %v2379 = vpop.f32.mrb[0].mxu0
    %2380 = vmatprep.mubr.f32.mxu0 0.0
    %v2381 = vand.u32 %v224, 4294901760
    %2382 = vmatmul.mubr.f32.gmra.mrb[0].mxu0 %v2381
    %v2383 = vpop.f32.mrb[0].mxu0
    %v2384 = vadd.f32 %v2078, %v2383
    %v2385 = vpop.f32.mrb[0].mxu0
    %2386 = vmatprep.mubr.f32.mxu0 0.0
    %v2387 = vand.u32 %v227, 4294901760
    %2388 = vmatmul.mubr.f32.gmra.mrb[0].mxu0 %v2387
    %v2389 = vpop.f32.mrb[0].mxu0
    %v2390 = vadd.f32 %v2084, %v2389
    %v2391 = vpop.f32.mrb[0].mxu0
    %2392 = vmatprep.mubr.f32.mxu0 0.0
    %v2393 = vand.u32 %v230, 4294901760
    %2394 = vmatmul.mubr.f32.gmra.mrb[0].mxu0 %v2393
    %v2395 = vpop.f32.mrb[0].mxu0
    %v2396 = vadd.f32 %v2090, %v2395
    %v2397 = vpop.f32.mrb[0].mxu0
    %2398 = vmatprep.mubr.f32.mxu0 0.0
    %v2399 = vand.u32 %v233, 4294901760
    %2400 = vmatmul.mubr.f32.gmra.mrb[0].mxu0 %v2399
    %v2401 = vpop.f32.mrb[0].mxu0
    %v2402 = vadd.f32 %v2096, %v2401
    %v2403 = vpop.f32.mrb[0].mxu0
    %2404 = vmatprep.mubr.f32.mxu0 0.0
    %v2405 = vand.u32 %v236, 4294901760
    %2406 = vmatmul.mubr.f32.gmra.mrb[0].mxu0 %v2405
    %v2407 = vpop.f32.mrb[0].mxu0
    %v2408 = vadd.f32 %v2102, %v2407
    %v2409 = vpop.f32.mrb[0].mxu0
    %2410 = vmatprep.mubr.f32.mxu0 0.0
    %v2411 = vand.u32 %v239, 4294901760
    %2412 = vmatmul.mubr.f32.gmra.mrb[0].mxu0 %v2411
    %v2413 = vpop.f32.mrb[0].mxu0
    %v2414 = vadd.f32 %v2108, %v2413
    %v2415 = vpop.f32.mrb[0].mxu0
    %2416 = vmatprep.mubr.f32.mxu0 0.0
    %v2417 = vand.u32 %v242, 4294901760
    %2418 = vmatmul.mubr.f32.gmra.mrb[0].mxu0 %v2417
    %v2419 = vpop.f32.mrb[0].mxu0
    %v2420 = vadd.f32 %v2114, %v2419
    %v2421 = vpop.f32.mrb[0].mxu0
    %2422 = vmatprep.mubr.f32.mxu0 0.0
    %v2423 = vand.u32 %v245, 4294901760
    %2424 = vmatmul.mubr.f32.gmra.mrb[0].mxu0 %v2423
    %v2425 = vpop.f32.mrb[0].mxu0
    %v2426 = vadd.f32 %v2120, %v2425
    %v2427 = vpop.f32.mrb[0].mxu0
    %2428 = vmatprep.mubr.f32.mxu0 0.0
    %v2429 = vand.u32 %v248, 4294901760
    %2430 = vmatmul.mubr.f32.gmra.mrb[0].mxu0 %v2429
    %v2431 = vpop.f32.mrb[0].mxu0
    %v2432 = vadd.f32 %v2126, %v2431
    %v2433 = vpop.f32.mrb[0].mxu0
    %2434 = vmatprep.mubr.f32.mxu0 0.0
    %v2435 = vand.u32 %v251, 4294901760
    %2436 = vmatmul.mubr.f32.gmra.mrb[0].mxu0 %v2435
    %v2437 = vpop.f32.mrb[0].mxu0
    %v2438 = vadd.f32 %v2132, %v2437
    %v2439 = vpop.f32.mrb[0].mxu0
    %2440 = vmatprep.mubr.f32.mxu0 0.0
    %v2441 = vand.u32 %v254, 4294901760
    %2442 = vmatmul.mubr.f32.gmra.mrb[0].mxu0 %v2441
    %v2443 = vpop.f32.mrb[0].mxu0
    %v2444 = vadd.f32 %v2138, %v2443
    %v2445 = vpop.f32.mrb[0].mxu0
    %2446 = vmatprep.mubr.f32.mxu0 0.0
    %v2447 = vand.u32 %v257, 4294901760
    %2448 = vmatmul.mubr.f32.gmra.mrb[0].mxu0 %v2447
    %v2449 = vpop.f32.mrb[0].mxu0
    %v2450 = vadd.f32 %v2144, %v2449
    %v2451 = vpop.f32.mrb[0].mxu0
    %2452 = vmatprep.mubr.f32.mxu0 0.0
    %v2453 = vand.u32 %v260, 4294901760
    %2454 = vmatmul.mubr.f32.gmra.mrb[0].mxu0 %v2453
    %v2455 = vpop.f32.mrb[0].mxu0
    %v2456 = vadd.f32 %v2150, %v2455
    %v2457 = vpop.f32.mrb[0].mxu0
    %2458 = vdwg.mxu0
    %v2459 = vadd.s32 %v107, 1
    %vm2460 = vcmp.eq.s32.totalorder %v92, %v2459
    %vm2461 = vcmp.eq.s32.totalorder %v93, %v2459
    %vm2462 = vcmp.eq.s32.totalorder %v94, %v2459
    %vm2463 = vcmp.eq.s32.totalorder %v95, %v2459
    %vm2464 = vcmp.eq.s32.totalorder %v96, %v2459
    %vm2465 = vcmp.eq.s32.totalorder %v97, %v2459
    %vm2466 = vcmp.eq.s32.totalorder %v98, %v2459
    %vm2467 = vcmp.eq.s32.totalorder %v99, %v2459
    %vm2468 = vcmp.eq.s32.totalorder %v100, %v2459
    %vm2469 = vcmp.eq.s32.totalorder %v101, %v2459
    %vm2470 = vcmp.eq.s32.totalorder %v102, %v2459
    %vm2471 = vcmp.eq.s32.totalorder %v103, %v2459
    %vm2472 = vcmp.eq.s32.totalorder %v104, %v2459
    %v2473 = vsel %vm2460, 1, 0
    %v2474 = vsel %vm2461, 1, 0
    %v2475 = vsel %vm2462, 1, 0
    %v2476 = vsel %vm2463, 1, 0
    %v2477 = vsel %vm2464, 1, 0
    %v2478 = vsel %vm2465, 1, 0
    %v2479 = vsel %vm2466, 1, 0
    %v2480 = vsel %vm2467, 1, 0
    %v2481 = vsel %vm2468, 1, 0
    %v2482 = vsel %vm2469, 1, 0
    %v2483 = vsel %vm2470, 1, 0
    %v2484 = vsel %vm2471, 1, 0
    %v2485 = vsel %vm2472, 1, 0
    %v2486 = vcvt.s32.f32 %v2473
    %v2487 = vcvt.s32.f32 %v2474
    %v2488 = vcvt.s32.f32 %v2475
    %v2489 = vcvt.s32.f32 %v2476
    %v2490 = vcvt.s32.f32 %v2477
    %v2491 = vcvt.s32.f32 %v2478
    %v2492 = vcvt.s32.f32 %v2479
    %v2493 = vcvt.s32.f32 %v2480
    %v2494 = vcvt.s32.f32 %v2481
    %v2495 = vcvt.s32.f32 %v2482
    %v2496 = vcvt.s32.f32 %v2483
    %v2497 = vcvt.s32.f32 %v2484
    %v2498 = vcvt.s32.f32 %v2485
    %v2500 = vsel %vm262, %v2498, 0
    %2502 = vmatprep.subr.mxu0 0.0
    %v2503 = vand.u32 %v2486, 4294901760
    %2504 = vmatpush1.msra.mxu0 %v2503
    %2505 = vmatprep.subr.mxu0 0.0
    %v2506 = vand.u32 %v2487, 4294901760
    %2507 = vmatpush1.msra.mxu0 %v2506
    %2508 = vmatprep.subr.mxu0 0.0
    %v2509 = vand.u32 %v2488, 4294901760
    %2510 = vmatpush1.msra.mxu0 %v2509
    %2511 = vmatprep.subr.mxu0 0.0
    %v2512 = vand.u32 %v2489, 4294901760
    %2513 = vmatpush1.msra.mxu0 %v2512
    %2514 = vmatprep.subr.mxu0 0.0
    %v2515 = vand.u32 %v2490, 4294901760
    %2516 = vmatpush1.msra.mxu0 %v2515
    %2517 = vmatprep.subr.mxu0 0.0
    %v2518 = vand.u32 %v2491, 4294901760
    %2519 = vmatpush1.msra.mxu0 %v2518
    %2520 = vmatprep.subr.mxu0 0.0
    %v2521 = vand.u32 %v2492, 4294901760
    %2522 = vmatpush1.msra.mxu0 %v2521
    %2523 = vmatprep.subr.mxu0 0.0
    %v2524 = vand.u32 %v2493, 4294901760
    %2525 = vmatpush1.msra.mxu0 %v2524
    %2526 = vmatprep.subr.mxu0 0.0
    %v2527 = vand.u32 %v2494, 4294901760
    %2528 = vmatpush1.msra.mxu0 %v2527
    %2529 = vmatprep.subr.mxu0 0.0
    %v2530 = vand.u32 %v2495, 4294901760
    %2531 = vmatpush1.msra.mxu0 %v2530
    %2532 = vmatprep.subr.mxu0 0.0
    %v2533 = vand.u32 %v2496, 4294901760
    %2534 = vmatpush1.msra.mxu0 %v2533
    %2535 = vmatprep.subr.mxu0 0.0
    %v2536 = vand.u32 %v2497, 4294901760
    %2537 = vmatpush1.msra.mxu0 %v2536
    %2538 = vmatprep.subr.mxu0 0.0
    %v2539 = vand.u32 %v2500, 4294901760
    %2540 = vmatpush1.msra.mxu0 %v2539
    %2541 = vmatprep.subr.mxu0 0.0
    %2542 = vmatpush1.msra.mxu0 0.0
    %2543 = vmatprep.subr.mxu0 0.0
    %2544 = vmatpush1.msra.mxu0 0.0
    %2545 = vmatprep.subr.mxu0 0.0
    %2546 = vmatpush1.msra.mxu0 0.0
    %2547 = vmatprep.subr.mxu0 0.0
    %2548 = vmatpush1.msra.mxu0 0.0
    %2549 = vmatprep.subr.mxu0 0.0
    %2550 = vmatpush1.msra.mxu0 0.0
    %2551 = vmatprep.subr.mxu0 0.0
    %2552 = vmatpush1.msra.mxu0 0.0
    %2553 = vmatprep.subr.mxu0 0.0
    %2554 = vmatpush1.msra.mxu0 0.0
    %2555 = vmatprep.subr.mxu0 0.0
    %2556 = vmatpush1.msra.mxu0 0.0
    %2557 = vmatprep.subr.mxu0 0.0
    %2558 = vmatpush1.msra.mxu0 0.0
    %2559 = vmatprep.subr.mxu0 0.0
    %2560 = vmatpush1.msra.mxu0 0.0
    %2561 = vmatprep.subr.mxu0 0.0
    %2562 = vmatpush1.msra.mxu0 0.0
    %2563 = vmatprep.subr.mxu0 0.0
    %2564 = vmatpush1.msra.mxu0 0.0
    %2565 = vmatprep.subr.mxu0 0.0
    %2566 = vmatpush1.msra.mxu0 0.0
    %2567 = vmatprep.subr.mxu0 0.0
    %2568 = vmatpush1.msra.mxu0 0.0
    %2569 = vmatprep.subr.mxu0 0.0
    %2570 = vmatpush1.msra.mxu0 0.0
    %2571 = vmatprep.subr.mxu0 0.0
    %2572 = vmatpush1.msra.mxu0 0.0
    %2573 = vmatprep.subr.mxu0 0.0
    %2574 = vmatpush1.msra.mxu0 0.0
    %2575 = vmatprep.subr.mxu0 0.0
    %2576 = vmatpush1.msra.mxu0 0.0
    %2577 = vmatprep.subr.mxu0 0.0
    %2578 = vmatpush1.msra.mxu0 0.0
    %2579 = vmatprep.mubr.f32.mxu0 0.0
    %v2580 = vand.u32 %v149, 4294901760
    %v2581 = vsub.f32 %v149, %v2580
    %v2582 = vand.u32 %v2581, 4294901760
    %v2583 = vsub.f32 %v2581, %v2582
    %v2584 = vand.u32 %v2583, 4294901760
    %2585 = vmatmul.mubr.f32.gmra.mrb[0].mxu0 %v2584
    %v2586 = vpop.f32.mrb[0].mxu0
    %v2587 = vadd.f32 0.0, %v2586
    %v2588 = vpop.f32.mrb[0].mxu0
    %2589 = vmatprep.mubr.f32.mxu0 0.0
    %v2590 = vand.u32 %v152, 4294901760
    %v2591 = vsub.f32 %v152, %v2590
    %v2592 = vand.u32 %v2591, 4294901760
    %v2593 = vsub.f32 %v2591, %v2592
    %v2594 = vand.u32 %v2593, 4294901760
    %2595 = vmatmul.mubr.f32.gmra.mrb[0].mxu0 %v2594
    %v2596 = vpop.f32.mrb[0].mxu0
    %v2597 = vadd.f32 0.0, %v2596
    %v2598 = vpop.f32.mrb[0].mxu0
    %2599 = vmatprep.mubr.f32.mxu0 0.0
    %v2600 = vand.u32 %v155, 4294901760
    %v2601 = vsub.f32 %v155, %v2600
    %v2602 = vand.u32 %v2601, 4294901760
    %v2603 = vsub.f32 %v2601, %v2602
    %v2604 = vand.u32 %v2603, 4294901760
    %2605 = vmatmul.mubr.f32.gmra.mrb[0].mxu0 %v2604
    %v2606 = vpop.f32.mrb[0].mxu0
    %v2607 = vadd.f32 0.0, %v2606
    %v2608 = vpop.f32.mrb[0].mxu0
    %2609 = vmatprep.mubr.f32.mxu0 0.0
    %v2610 = vand.u32 %v158, 4294901760
    %v2611 = vsub.f32 %v158, %v2610
    %v2612 = vand.u32 %v2611, 4294901760
    %v2613 = vsub.f32 %v2611, %v2612
    %v2614 = vand.u32 %v2613, 4294901760
    %2615 = vmatmul.mubr.f32.gmra.mrb[0].mxu0 %v2614
    %v2616 = vpop.f32.mrb[0].mxu0
    %v2617 = vadd.f32 0.0, %v2616
    %v2618 = vpop.f32.mrb[0].mxu0
    %2619 = vmatprep.mubr.f32.mxu0 0.0
    %v2620 = vand.u32 %v161, 4294901760
    %v2621 = vsub.f32 %v161, %v2620
    %v2622 = vand.u32 %v2621, 4294901760
    %v2623 = vsub.f32 %v2621, %v2622
    %v2624 = vand.u32 %v2623, 4294901760
    %2625 = vmatmul.mubr.f32.gmra.mrb[0].mxu0 %v2624
    %v2626 = vpop.f32.mrb[0].mxu0
    %v2627 = vadd.f32 0.0, %v2626
    %v2628 = vpop.f32.mrb[0].mxu0
    %2629 = vmatprep.mubr.f32.mxu0 0.0
    %v2630 = vand.u32 %v164, 4294901760
    %v2631 = vsub.f32 %v164, %v2630
    %v2632 = vand.u32 %v2631, 4294901760
    %v2633 = vsub.f32 %v2631, %v2632
    %v2634 = vand.u32 %v2633, 4294901760
    %2635 = vmatmul.mubr.f32.gmra.mrb[0].mxu0 %v2634
    %v2636 = vpop.f32.mrb[0].mxu0
    %v2637 = vadd.f32 0.0, %v2636
    %v2638 = vpop.f32.mrb[0].mxu0
    %2639 = vmatprep.mubr.f32.mxu0 0.0
    %v2640 = vand.u32 %v167, 4294901760
    %v2641 = vsub.f32 %v167, %v2640
    %v2642 = vand.u32 %v2641, 4294901760
    %v2643 = vsub.f32 %v2641, %v2642
    %v2644 = vand.u32 %v2643, 4294901760
    %2645 = vmatmul.mubr.f32.gmra.mrb[0].mxu0 %v2644
    %v2646 = vpop.f32.mrb[0].mxu0
    %v2647 = vadd.f32 0.0, %v2646
    %v2648 = vpop.f32.mrb[0].mxu0
    %2649 = vmatprep.mubr.f32.mxu0 0.0
    %v2650 = vand.u32 %v170, 4294901760
    %v2651 = vsub.f32 %v170, %v2650
    %v2652 = vand.u32 %v2651, 4294901760
    %v2653 = vsub.f32 %v2651, %v2652
    %v2654 = vand.u32 %v2653, 4294901760
    %2655 = vmatmul.mubr.f32.gmra.mrb[0].mxu0 %v2654
    %v2656 = vpop.f32.mrb[0].mxu0
    %v2657 = vadd.f32 0.0, %v2656
    %v2658 = vpop.f32.mrb[0].mxu0
    %2659 = vmatprep.mubr.f32.mxu0 0.0
    %v2660 = vand.u32 %v173, 4294901760
    %v2661 = vsub.f32 %v173, %v2660
    %v2662 = vand.u32 %v2661, 4294901760
    %v2663 = vsub.f32 %v2661, %v2662
    %v2664 = vand.u32 %v2663, 4294901760
    %2665 = vmatmul.mubr.f32.gmra.mrb[0].mxu0 %v2664
    %v2666 = vpop.f32.mrb[0].mxu0
    %v2667 = vadd.f32 0.0, %v2666
    %v2668 = vpop.f32.mrb[0].mxu0
    %2669 = vmatprep.mubr.f32.mxu0 0.0
    %v2670 = vand.u32 %v176, 4294901760
    %v2671 = vsub.f32 %v176, %v2670
    %v2672 = vand.u32 %v2671, 4294901760
    %v2673 = vsub.f32 %v2671, %v2672
    %v2674 = vand.u32 %v2673, 4294901760
    %2675 = vmatmul.mubr.f32.gmra.mrb[0].mxu0 %v2674
    %v2676 = vpop.f32.mrb[0].mxu0
    %v2677 = vadd.f32 0.0, %v2676
    %v2678 = vpop.f32.mrb[0].mxu0
    %2679 = vmatprep.mubr.f32.mxu0 0.0
    %v2680 = vand.u32 %v179, 4294901760
    %v2681 = vsub.f32 %v179, %v2680
    %v2682 = vand.u32 %v2681, 4294901760
    %v2683 = vsub.f32 %v2681, %v2682
    %v2684 = vand.u32 %v2683, 4294901760
    %2685 = vmatmul.mubr.f32.gmra.mrb[0].mxu0 %v2684
    %v2686 = vpop.f32.mrb[0].mxu0
    %v2687 = vadd.f32 0.0, %v2686
    %v2688 = vpop.f32.mrb[0].mxu0
    %2689 = vmatprep.mubr.f32.mxu0 0.0
    %v2690 = vand.u32 %v182, 4294901760
    %v2691 = vsub.f32 %v182, %v2690
    %v2692 = vand.u32 %v2691, 4294901760
    %v2693 = vsub.f32 %v2691, %v2692
    %v2694 = vand.u32 %v2693, 4294901760
    %2695 = vmatmul.mubr.f32.gmra.mrb[0].mxu0 %v2694
    %v2696 = vpop.f32.mrb[0].mxu0
    %v2697 = vadd.f32 0.0, %v2696
    %v2698 = vpop.f32.mrb[0].mxu0
    %2699 = vmatprep.mubr.f32.mxu0 0.0
    %v2700 = vand.u32 %v185, 4294901760
    %v2701 = vsub.f32 %v185, %v2700
    %v2702 = vand.u32 %v2701, 4294901760
    %v2703 = vsub.f32 %v2701, %v2702
    %v2704 = vand.u32 %v2703, 4294901760
    %2705 = vmatmul.mubr.f32.gmra.mrb[0].mxu0 %v2704
    %v2706 = vpop.f32.mrb[0].mxu0
    %v2707 = vadd.f32 0.0, %v2706
    %v2708 = vpop.f32.mrb[0].mxu0
    %2709 = vmatprep.mubr.f32.mxu0 0.0
    %v2710 = vand.u32 %v188, 4294901760
    %v2711 = vsub.f32 %v188, %v2710
    %v2712 = vand.u32 %v2711, 4294901760
    %v2713 = vsub.f32 %v2711, %v2712
    %v2714 = vand.u32 %v2713, 4294901760
    %2715 = vmatmul.mubr.f32.gmra.mrb[0].mxu0 %v2714
    %v2716 = vpop.f32.mrb[0].mxu0
    %v2717 = vadd.f32 0.0, %v2716
    %v2718 = vpop.f32.mrb[0].mxu0
    %2719 = vmatprep.mubr.f32.mxu0 0.0
    %v2720 = vand.u32 %v191, 4294901760
    %v2721 = vsub.f32 %v191, %v2720
    %v2722 = vand.u32 %v2721, 4294901760
    %v2723 = vsub.f32 %v2721, %v2722
    %v2724 = vand.u32 %v2723, 4294901760
    %2725 = vmatmul.mubr.f32.gmra.mrb[0].mxu0 %v2724
    %v2726 = vpop.f32.mrb[0].mxu0
    %v2727 = vadd.f32 0.0, %v2726
    %v2728 = vpop.f32.mrb[0].mxu0
    %2729 = vmatprep.mubr.f32.mxu0 0.0
    %v2730 = vand.u32 %v194, 4294901760
    %v2731 = vsub.f32 %v194, %v2730
    %v2732 = vand.u32 %v2731, 4294901760
    %v2733 = vsub.f32 %v2731, %v2732
    %v2734 = vand.u32 %v2733, 4294901760
    %2735 = vmatmul.mubr.f32.gmra.mrb[0].mxu0 %v2734
    %v2736 = vpop.f32.mrb[0].mxu0
    %v2737 = vadd.f32 0.0, %v2736
    %v2738 = vpop.f32.mrb[0].mxu0
    %2739 = vmatprep.mubr.f32.mxu0 0.0
    %v2740 = vand.u32 %v197, 4294901760
    %v2741 = vsub.f32 %v197, %v2740
    %v2742 = vand.u32 %v2741, 4294901760
    %v2743 = vsub.f32 %v2741, %v2742
    %v2744 = vand.u32 %v2743, 4294901760
    %2745 = vmatmul.mubr.f32.gmra.mrb[0].mxu0 %v2744
    %v2746 = vpop.f32.mrb[0].mxu0
    %v2747 = vadd.f32 0.0, %v2746
    %v2748 = vpop.f32.mrb[0].mxu0
    %2749 = vmatprep.mubr.f32.mxu0 0.0
    %v2750 = vand.u32 %v200, 4294901760
    %v2751 = vsub.f32 %v200, %v2750
    %v2752 = vand.u32 %v2751, 4294901760
    %v2753 = vsub.f32 %v2751, %v2752
    %v2754 = vand.u32 %v2753, 4294901760
    %2755 = vmatmul.mubr.f32.gmra.mrb[0].mxu0 %v2754
    %v2756 = vpop.f32.mrb[0].mxu0
    %v2757 = vadd.f32 0.0, %v2756
    %v2758 = vpop.f32.mrb[0].mxu0
    %2759 = vmatprep.mubr.f32.mxu0 0.0
    %v2760 = vand.u32 %v203, 4294901760
    %v2761 = vsub.f32 %v203, %v2760
    %v2762 = vand.u32 %v2761, 4294901760
    %v2763 = vsub.f32 %v2761, %v2762
    %v2764 = vand.u32 %v2763, 4294901760
    %2765 = vmatmul.mubr.f32.gmra.mrb[0].mxu0 %v2764
    %v2766 = vpop.f32.mrb[0].mxu0
    %v2767 = vadd.f32 0.0, %v2766
    %v2768 = vpop.f32.mrb[0].mxu0
    %2769 = vmatprep.mubr.f32.mxu0 0.0
    %v2770 = vand.u32 %v206, 4294901760
    %v2771 = vsub.f32 %v206, %v2770
    %v2772 = vand.u32 %v2771, 4294901760
    %v2773 = vsub.f32 %v2771, %v2772
    %v2774 = vand.u32 %v2773, 4294901760
    %2775 = vmatmul.mubr.f32.gmra.mrb[0].mxu0 %v2774
    %v2776 = vpop.f32.mrb[0].mxu0
    %v2777 = vadd.f32 0.0, %v2776
    %v2778 = vpop.f32.mrb[0].mxu0
    %2779 = vmatprep.mubr.f32.mxu0 0.0
    %v2780 = vand.u32 %v209, 4294901760
    %v2781 = vsub.f32 %v209, %v2780
    %v2782 = vand.u32 %v2781, 4294901760
    %v2783 = vsub.f32 %v2781, %v2782
    %v2784 = vand.u32 %v2783, 4294901760
    %2785 = vmatmul.mubr.f32.gmra.mrb[0].mxu0 %v2784
    %v2786 = vpop.f32.mrb[0].mxu0
    %v2787 = vadd.f32 0.0, %v2786
    %v2788 = vpop.f32.mrb[0].mxu0
    %2789 = vmatprep.mubr.f32.mxu0 0.0
    %v2790 = vand.u32 %v212, 4294901760
    %v2791 = vsub.f32 %v212, %v2790
    %v2792 = vand.u32 %v2791, 4294901760
    %v2793 = vsub.f32 %v2791, %v2792
    %v2794 = vand.u32 %v2793, 4294901760
    %2795 = vmatmul.mubr.f32.gmra.mrb[0].mxu0 %v2794
    %v2796 = vpop.f32.mrb[0].mxu0
    %v2797 = vadd.f32 0.0, %v2796
    %v2798 = vpop.f32.mrb[0].mxu0
    %2799 = vmatprep.mubr.f32.mxu0 0.0
    %v2800 = vand.u32 %v215, 4294901760
    %v2801 = vsub.f32 %v215, %v2800
    %v2802 = vand.u32 %v2801, 4294901760
    %v2803 = vsub.f32 %v2801, %v2802
    %v2804 = vand.u32 %v2803, 4294901760
    %2805 = vmatmul.mubr.f32.gmra.mrb[0].mxu0 %v2804
    %v2806 = vpop.f32.mrb[0].mxu0
    %v2807 = vadd.f32 0.0, %v2806
    %v2808 = vpop.f32.mrb[0].mxu0
    %2809 = vmatprep.mubr.f32.mxu0 0.0
    %v2810 = vand.u32 %v218, 4294901760
    %v2811 = vsub.f32 %v218, %v2810
    %v2812 = vand.u32 %v2811, 4294901760
    %v2813 = vsub.f32 %v2811, %v2812
    %v2814 = vand.u32 %v2813, 4294901760
    %2815 = vmatmul.mubr.f32.gmra.mrb[0].mxu0 %v2814
    %v2816 = vpop.f32.mrb[0].mxu0
    %v2817 = vadd.f32 0.0, %v2816
    %v2818 = vpop.f32.mrb[0].mxu0
    %2819 = vmatprep.mubr.f32.mxu0 0.0
    %v2820 = vand.u32 %v221, 4294901760
    %v2821 = vsub.f32 %v221, %v2820
    %v2822 = vand.u32 %v2821, 4294901760
    %v2823 = vsub.f32 %v2821, %v2822
    %v2824 = vand.u32 %v2823, 4294901760
    %2825 = vmatmul.mubr.f32.gmra.mrb[0].mxu0 %v2824
    %v2826 = vpop.f32.mrb[0].mxu0
    %v2827 = vadd.f32 0.0, %v2826
    %v2828 = vpop.f32.mrb[0].mxu0
    %2829 = vmatprep.mubr.f32.mxu0 0.0
    %v2830 = vand.u32 %v224, 4294901760
    %v2831 = vsub.f32 %v224, %v2830
    %v2832 = vand.u32 %v2831, 4294901760
    %v2833 = vsub.f32 %v2831, %v2832
    %v2834 = vand.u32 %v2833, 4294901760
    %2835 = vmatmul.mubr.f32.gmra.mrb[0].mxu0 %v2834
    %v2836 = vpop.f32.mrb[0].mxu0
    %v2837 = vadd.f32 0.0, %v2836
    %v2838 = vpop.f32.mrb[0].mxu0
    %2839 = vmatprep.mubr.f32.mxu0 0.0
    %v2840 = vand.u32 %v227, 4294901760
    %v2841 = vsub.f32 %v227, %v2840
    %v2842 = vand.u32 %v2841, 4294901760
    %v2843 = vsub.f32 %v2841, %v2842
    %v2844 = vand.u32 %v2843, 4294901760
    %2845 = vmatmul.mubr.f32.gmra.mrb[0].mxu0 %v2844
    %v2846 = vpop.f32.mrb[0].mxu0
    %v2847 = vadd.f32 0.0, %v2846
    %v2848 = vpop.f32.mrb[0].mxu0
    %2849 = vmatprep.mubr.f32.mxu0 0.0
    %v2850 = vand.u32 %v230, 4294901760
    %v2851 = vsub.f32 %v230, %v2850
    %v2852 = vand.u32 %v2851, 4294901760
    %v2853 = vsub.f32 %v2851, %v2852
    %v2854 = vand.u32 %v2853, 4294901760
    %2855 = vmatmul.mubr.f32.gmra.mrb[0].mxu0 %v2854
    %v2856 = vpop.f32.mrb[0].mxu0
    %v2857 = vadd.f32 0.0, %v2856
    %v2858 = vpop.f32.mrb[0].mxu0
    %2859 = vmatprep.mubr.f32.mxu0 0.0
    %v2860 = vand.u32 %v233, 4294901760
    %v2861 = vsub.f32 %v233, %v2860
    %v2862 = vand.u32 %v2861, 4294901760
    %v2863 = vsub.f32 %v2861, %v2862
    %v2864 = vand.u32 %v2863, 4294901760
    %2865 = vmatmul.mubr.f32.gmra.mrb[0].mxu0 %v2864
    %v2866 = vpop.f32.mrb[0].mxu0
    %v2867 = vadd.f32 0.0, %v2866
    %v2868 = vpop.f32.mrb[0].mxu0
    %2869 = vmatprep.mubr.f32.mxu0 0.0
    %v2870 = vand.u32 %v236, 4294901760
    %v2871 = vsub.f32 %v236, %v2870
    %v2872 = vand.u32 %v2871, 4294901760
    %v2873 = vsub.f32 %v2871, %v2872
    %v2874 = vand.u32 %v2873, 4294901760
    %2875 = vmatmul.mubr.f32.gmra.mrb[0].mxu0 %v2874
    %v2876 = vpop.f32.mrb[0].mxu0
    %v2877 = vadd.f32 0.0, %v2876
    %v2878 = vpop.f32.mrb[0].mxu0
    %2879 = vmatprep.mubr.f32.mxu0 0.0
    %v2880 = vand.u32 %v239, 4294901760
    %v2881 = vsub.f32 %v239, %v2880
    %v2882 = vand.u32 %v2881, 4294901760
    %v2883 = vsub.f32 %v2881, %v2882
    %v2884 = vand.u32 %v2883, 4294901760
    %2885 = vmatmul.mubr.f32.gmra.mrb[0].mxu0 %v2884
    %v2886 = vpop.f32.mrb[0].mxu0
    %v2887 = vadd.f32 0.0, %v2886
    %v2888 = vpop.f32.mrb[0].mxu0
    %2889 = vmatprep.mubr.f32.mxu0 0.0
    %v2890 = vand.u32 %v242, 4294901760
    %v2891 = vsub.f32 %v242, %v2890
    %v2892 = vand.u32 %v2891, 4294901760
    %v2893 = vsub.f32 %v2891, %v2892
    %v2894 = vand.u32 %v2893, 4294901760
    %2895 = vmatmul.mubr.f32.gmra.mrb[0].mxu0 %v2894
    %v2896 = vpop.f32.mrb[0].mxu0
    %v2897 = vadd.f32 0.0, %v2896
    %v2898 = vpop.f32.mrb[0].mxu0
    %2899 = vmatprep.mubr.f32.mxu0 0.0
    %v2900 = vand.u32 %v245, 4294901760
    %v2901 = vsub.f32 %v245, %v2900
    %v2902 = vand.u32 %v2901, 4294901760
    %v2903 = vsub.f32 %v2901, %v2902
    %v2904 = vand.u32 %v2903, 4294901760
    %2905 = vmatmul.mubr.f32.gmra.mrb[0].mxu0 %v2904
    %v2906 = vpop.f32.mrb[0].mxu0
    %v2907 = vadd.f32 0.0, %v2906
    %v2908 = vpop.f32.mrb[0].mxu0
    %2909 = vmatprep.mubr.f32.mxu0 0.0
    %v2910 = vand.u32 %v248, 4294901760
    %v2911 = vsub.f32 %v248, %v2910
    %v2912 = vand.u32 %v2911, 4294901760
    %v2913 = vsub.f32 %v2911, %v2912
    %v2914 = vand.u32 %v2913, 4294901760
    %2915 = vmatmul.mubr.f32.gmra.mrb[0].mxu0 %v2914
    %v2916 = vpop.f32.mrb[0].mxu0
    %v2917 = vadd.f32 0.0, %v2916
    %v2918 = vpop.f32.mrb[0].mxu0
    %2919 = vmatprep.mubr.f32.mxu0 0.0
    %v2920 = vand.u32 %v251, 4294901760
    %v2921 = vsub.f32 %v251, %v2920
    %v2922 = vand.u32 %v2921, 4294901760
    %v2923 = vsub.f32 %v2921, %v2922
    %v2924 = vand.u32 %v2923, 4294901760
    %2925 = vmatmul.mubr.f32.gmra.mrb[0].mxu0 %v2924
    %v2926 = vpop.f32.mrb[0].mxu0
    %v2927 = vadd.f32 0.0, %v2926
    %v2928 = vpop.f32.mrb[0].mxu0
    %2929 = vmatprep.mubr.f32.mxu0 0.0
    %v2930 = vand.u32 %v254, 4294901760
    %v2931 = vsub.f32 %v254, %v2930
    %v2932 = vand.u32 %v2931, 4294901760
    %v2933 = vsub.f32 %v2931, %v2932
    %v2934 = vand.u32 %v2933, 4294901760
    %2935 = vmatmul.mubr.f32.gmra.mrb[0].mxu0 %v2934
    %v2936 = vpop.f32.mrb[0].mxu0
    %v2937 = vadd.f32 0.0, %v2936
    %v2938 = vpop.f32.mrb[0].mxu0
    %2939 = vmatprep.mubr.f32.mxu0 0.0
    %v2940 = vand.u32 %v257, 4294901760
    %v2941 = vsub.f32 %v257, %v2940
    %v2942 = vand.u32 %v2941, 4294901760
    %v2943 = vsub.f32 %v2941, %v2942
    %v2944 = vand.u32 %v2943, 4294901760
    %2945 = vmatmul.mubr.f32.gmra.mrb[0].mxu0 %v2944
    %v2946 = vpop.f32.mrb[0].mxu0
    %v2947 = vadd.f32 0.0, %v2946
    %v2948 = vpop.f32.mrb[0].mxu0
    %2949 = vmatprep.mubr.f32.mxu0 0.0
    %v2950 = vand.u32 %v260, 4294901760
    %v2951 = vsub.f32 %v260, %v2950
    %v2952 = vand.u32 %v2951, 4294901760
    %v2953 = vsub.f32 %v2951, %v2952
    %v2954 = vand.u32 %v2953, 4294901760
    %2955 = vmatmul.mubr.f32.gmra.mrb[0].mxu0 %v2954
    %v2956 = vpop.f32.mrb[0].mxu0
    %v2957 = vadd.f32 0.0, %v2956
    %v2958 = vpop.f32.mrb[0].mxu0
    %2959 = vdwg.mxu0
    %2960 = vmatprep.subr.mxu0 0.0
    %v2961 = vand.u32 %v2486, 4294901760
    %v2962 = vsub.f32 %v2486, %v2961
    %v2963 = vand.u32 %v2962, 4294901760
    %v2964 = vsub.f32 %v2962, %v2963
    %v2965 = vand.u32 %v2964, 4294901760
    %2966 = vmatpush1.msra.mxu0 %v2965
    %2967 = vmatprep.subr.mxu0 0.0
    %v2968 = vand.u32 %v2487, 4294901760
    %v2969 = vsub.f32 %v2487, %v2968
    %v2970 = vand.u32 %v2969, 4294901760
    %v2971 = vsub.f32 %v2969, %v2970
    %v2972 = vand.u32 %v2971, 4294901760
    %2973 = vmatpush1.msra.mxu0 %v2972
    %2974 = vmatprep.subr.mxu0 0.0
    %v2975 = vand.u32 %v2488, 4294901760
    %v2976 = vsub.f32 %v2488, %v2975
    %v2977 = vand.u32 %v2976, 4294901760
    %v2978 = vsub.f32 %v2976, %v2977
    %v2979 = vand.u32 %v2978, 4294901760
    %2980 = vmatpush1.msra.mxu0 %v2979
    %2981 = vmatprep.subr.mxu0 0.0
    %v2982 = vand.u32 %v2489, 4294901760
    %v2983 = vsub.f32 %v2489, %v2982
    %v2984 = vand.u32 %v2983, 4294901760
    %v2985 = vsub.f32 %v2983, %v2984
    %v2986 = vand.u32 %v2985, 4294901760
    %2987 = vmatpush1.msra.mxu0 %v2986
    %2988 = vmatprep.subr.mxu0 0.0
    %v2989 = vand.u32 %v2490, 4294901760
    %v2990 = vsub.f32 %v2490, %v2989
    %v2991 = vand.u32 %v2990, 4294901760
    %v2992 = vsub.f32 %v2990, %v2991
    %v2993 = vand.u32 %v2992, 4294901760
    %2994 = vmatpush1.msra.mxu0 %v2993
    %2995 = vmatprep.subr.mxu0 0.0
    %v2996 = vand.u32 %v2491, 4294901760
    %v2997 = vsub.f32 %v2491, %v2996
    %v2998 = vand.u32 %v2997, 4294901760
    %v2999 = vsub.f32 %v2997, %v2998
    %v3000 = vand.u32 %v2999, 4294901760
    %3001 = vmatpush1.msra.mxu0 %v3000
    %3002 = vmatprep.subr.mxu0 0.0
    %v3003 = vand.u32 %v2492, 4294901760
    %v3004 = vsub.f32 %v2492, %v3003
    %v3005 = vand.u32 %v3004, 4294901760
    %v3006 = vsub.f32 %v3004, %v3005
    %v3007 = vand.u32 %v3006, 4294901760
    %3008 = vmatpush1.msra.mxu0 %v3007
    %3009 = vmatprep.subr.mxu0 0.0
    %v3010 = vand.u32 %v2493, 4294901760
    %v3011 = vsub.f32 %v2493, %v3010
    %v3012 = vand.u32 %v3011, 4294901760
    %v3013 = vsub.f32 %v3011, %v3012
    %v3014 = vand.u32 %v3013, 4294901760
    %3015 = vmatpush1.msra.mxu0 %v3014
    %3016 = vmatprep.subr.mxu0 0.0
    %v3017 = vand.u32 %v2494, 4294901760
    %v3018 = vsub.f32 %v2494, %v3017
    %v3019 = vand.u32 %v3018, 4294901760
    %v3020 = vsub.f32 %v3018, %v3019
    %v3021 = vand.u32 %v3020, 4294901760
    %3022 = vmatpush1.msra.mxu0 %v3021
    %3023 = vmatprep.subr.mxu0 0.0
    %v3024 = vand.u32 %v2495, 4294901760
    %v3025 = vsub.f32 %v2495, %v3024
    %v3026 = vand.u32 %v3025, 4294901760
    %v3027 = vsub.f32 %v3025, %v3026
    %v3028 = vand.u32 %v3027, 4294901760
    %3029 = vmatpush1.msra.mxu0 %v3028
    %3030 = vmatprep.subr.mxu0 0.0
    %v3031 = vand.u32 %v2496, 4294901760
    %v3032 = vsub.f32 %v2496, %v3031
    %v3033 = vand.u32 %v3032, 4294901760
    %v3034 = vsub.f32 %v3032, %v3033
    %v3035 = vand.u32 %v3034, 4294901760
    %3036 = vmatpush1.msra.mxu0 %v3035
    %3037 = vmatprep.subr.mxu0 0.0
    %v3038 = vand.u32 %v2497, 4294901760
    %v3039 = vsub.f32 %v2497, %v3038
    %v3040 = vand.u32 %v3039, 4294901760
    %v3041 = vsub.f32 %v3039, %v3040
    %v3042 = vand.u32 %v3041, 4294901760
    %3043 = vmatpush1.msra.mxu0 %v3042
    %3044 = vmatprep.subr.mxu0 0.0
    %v3045 = vand.u32 %v2500, 4294901760
    %v3046 = vsub.f32 %v2500, %v3045
    %v3047 = vand.u32 %v3046, 4294901760
    %v3048 = vsub.f32 %v3046, %v3047
    %v3049 = vand.u32 %v3048, 4294901760
    %3050 = vmatpush1.msra.mxu0 %v3049
    %3051 = vmatprep.subr.mxu0 0.0
    %3052 = vmatpush1.msra.mxu0 0.0
    %3053 = vmatprep.subr.mxu0 0.0
    %3054 = vmatpush1.msra.mxu0 0.0
    %3055 = vmatprep.subr.mxu0 0.0
    %3056 = vmatpush1.msra.mxu0 0.0
    %3057 = vmatprep.subr.mxu0 0.0
    %3058 = vmatpush1.msra.mxu0 0.0
    %3059 = vmatprep.subr.mxu0 0.0
    %3060 = vmatpush1.msra.mxu0 0.0
    %3061 = vmatprep.subr.mxu0 0.0
    %3062 = vmatpush1.msra.mxu0 0.0
    %3063 = vmatprep.subr.mxu0 0.0
    %3064 = vmatpush1.msra.mxu0 0.0
    %3065 = vmatprep.subr.mxu0 0.0
    %3066 = vmatpush1.msra.mxu0 0.0
    %3067 = vmatprep.subr.mxu0 0.0
    %3068 = vmatpush1.msra.mxu0 0.0
    %3069 = vmatprep.subr.mxu0 0.0
    %3070 = vmatpush1.msra.mxu0 0.0
    %3071 = vmatprep.subr.mxu0 0.0
    %3072 = vmatpush1.msra.mxu0 0.0
    %3073 = vmatprep.subr.mxu0 0.0
    %3074 = vmatpush1.msra.mxu0 0.0
    %3075 = vmatprep.subr.mxu0 0.0
    %3076 = vmatpush1.msra.mxu0 0.0
    %3077 = vmatprep.subr.mxu0 0.0
    %3078 = vmatpush1.msra.mxu0 0.0
    %3079 = vmatprep.subr.mxu0 0.0
    %3080 = vmatpush1.msra.mxu0 0.0
    %3081 = vmatprep.subr.mxu0 0.0
    %3082 = vmatpush1.msra.mxu0 0.0
    %3083 = vmatprep.subr.mxu0 0.0
    %3084 = vmatpush1.msra.mxu0 0.0
    %3085 = vmatprep.subr.mxu0 0.0
    %3086 = vmatpush1.msra.mxu0 0.0
    %3087 = vmatprep.subr.mxu0 0.0
    %3088 = vmatpush1.msra.mxu0 0.0
    %3089 = vmatprep.mubr.f32.mxu0 0.0
    %v3090 = vand.u32 %v149, 4294901760
    %3091 = vmatmul.mubr.f32.gmra.mrb[0].mxu0 %v3090
    %v3092 = vpop.f32.mrb[0].mxu0
    %v3093 = vadd.f32 %v2587, %v3092
    %v3094 = vpop.f32.mrb[0].mxu0
    %3095 = vmatprep.mubr.f32.mxu0 0.0
    %v3096 = vand.u32 %v152, 4294901760
    %3097 = vmatmul.mubr.f32.gmra.mrb[0].mxu0 %v3096
    %v3098 = vpop.f32.mrb[0].mxu0
    %v3099 = vadd.f32 %v2597, %v3098
    %v3100 = vpop.f32.mrb[0].mxu0
    %3101 = vmatprep.mubr.f32.mxu0 0.0
    %v3102 = vand.u32 %v155, 4294901760
    %3103 = vmatmul.mubr.f32.gmra.mrb[0].mxu0 %v3102
    %v3104 = vpop.f32.mrb[0].mxu0
    %v3105 = vadd.f32 %v2607, %v3104
    %v3106 = vpop.f32.mrb[0].mxu0
    %3107 = vmatprep.mubr.f32.mxu0 0.0
    %v3108 = vand.u32 %v158, 4294901760
    %3109 = vmatmul.mubr.f32.gmra.mrb[0].mxu0 %v3108
    %v3110 = vpop.f32.mrb[0].mxu0
    %v3111 = vadd.f32 %v2617, %v3110
    %v3112 = vpop.f32.mrb[0].mxu0
    %3113 = vmatprep.mubr.f32.mxu0 0.0
    %v3114 = vand.u32 %v161, 4294901760
    %3115 = vmatmul.mubr.f32.gmra.mrb[0].mxu0 %v3114
    %v3116 = vpop.f32.mrb[0].mxu0
    %v3117 = vadd.f32 %v2627, %v3116
    %v3118 = vpop.f32.mrb[0].mxu0
    %3119 = vmatprep.mubr.f32.mxu0 0.0
    %v3120 = vand.u32 %v164, 4294901760
    %3121 = vmatmul.mubr.f32.gmra.mrb[0].mxu0 %v3120
    %v3122 = vpop.f32.mrb[0].mxu0
    %v3123 = vadd.f32 %v2637, %v3122
    %v3124 = vpop.f32.mrb[0].mxu0
    %3125 = vmatprep.mubr.f32.mxu0 0.0
    %v3126 = vand.u32 %v167, 4294901760
    %3127 = vmatmul.mubr.f32.gmra.mrb[0].mxu0 %v3126
    %v3128 = vpop.f32.mrb[0].mxu0
    %v3129 = vadd.f32 %v2647, %v3128
    %v3130 = vpop.f32.mrb[0].mxu0
    %3131 = vmatprep.mubr.f32.mxu0 0.0
    %v3132 = vand.u32 %v170, 4294901760
    %3133 = vmatmul.mubr.f32.gmra.mrb[0].mxu0 %v3132
    %v3134 = vpop.f32.mrb[0].mxu0
    %v3135 = vadd.f32 %v2657, %v3134
    %v3136 = vpop.f32.mrb[0].mxu0
    %3137 = vmatprep.mubr.f32.mxu0 0.0
    %v3138 = vand.u32 %v173, 4294901760
    %3139 = vmatmul.mubr.f32.gmra.mrb[0].mxu0 %v3138
    %v3140 = vpop.f32.mrb[0].mxu0
    %v3141 = vadd.f32 %v2667, %v3140
    %v3142 = vpop.f32.mrb[0].mxu0
    %3143 = vmatprep.mubr.f32.mxu0 0.0
    %v3144 = vand.u32 %v176, 4294901760
    %3145 = vmatmul.mubr.f32.gmra.mrb[0].mxu0 %v3144
    %v3146 = vpop.f32.mrb[0].mxu0
    %v3147 = vadd.f32 %v2677, %v3146
    %v3148 = vpop.f32.mrb[0].mxu0
    %3149 = vmatprep.mubr.f32.mxu0 0.0
    %v3150 = vand.u32 %v179, 4294901760
    %3151 = vmatmul.mubr.f32.gmra.mrb[0].mxu0 %v3150
    %v3152 = vpop.f32.mrb[0].mxu0
    %v3153 = vadd.f32 %v2687, %v3152
    %v3154 = vpop.f32.mrb[0].mxu0
    %3155 = vmatprep.mubr.f32.mxu0 0.0
    %v3156 = vand.u32 %v182, 4294901760
    %3157 = vmatmul.mubr.f32.gmra.mrb[0].mxu0 %v3156
    %v3158 = vpop.f32.mrb[0].mxu0
    %v3159 = vadd.f32 %v2697, %v3158
    %v3160 = vpop.f32.mrb[0].mxu0
    %3161 = vmatprep.mubr.f32.mxu0 0.0
    %v3162 = vand.u32 %v185, 4294901760
    %3163 = vmatmul.mubr.f32.gmra.mrb[0].mxu0 %v3162
    %v3164 = vpop.f32.mrb[0].mxu0
    %v3165 = vadd.f32 %v2707, %v3164
    %v3166 = vpop.f32.mrb[0].mxu0
    %3167 = vmatprep.mubr.f32.mxu0 0.0
    %v3168 = vand.u32 %v188, 4294901760
    %3169 = vmatmul.mubr.f32.gmra.mrb[0].mxu0 %v3168
    %v3170 = vpop.f32.mrb[0].mxu0
    %v3171 = vadd.f32 %v2717, %v3170
    %v3172 = vpop.f32.mrb[0].mxu0
    %3173 = vmatprep.mubr.f32.mxu0 0.0
    %v3174 = vand.u32 %v191, 4294901760
    %3175 = vmatmul.mubr.f32.gmra.mrb[0].mxu0 %v3174
    %v3176 = vpop.f32.mrb[0].mxu0
    %v3177 = vadd.f32 %v2727, %v3176
    %v3178 = vpop.f32.mrb[0].mxu0
    %3179 = vmatprep.mubr.f32.mxu0 0.0
    %v3180 = vand.u32 %v194, 4294901760
    %3181 = vmatmul.mubr.f32.gmra.mrb[0].mxu0 %v3180
    %v3182 = vpop.f32.mrb[0].mxu0
    %v3183 = vadd.f32 %v2737, %v3182
    %v3184 = vpop.f32.mrb[0].mxu0
    %3185 = vmatprep.mubr.f32.mxu0 0.0
    %v3186 = vand.u32 %v197, 4294901760
    %3187 = vmatmul.mubr.f32.gmra.mrb[0].mxu0 %v3186
    %v3188 = vpop.f32.mrb[0].mxu0
    %v3189 = vadd.f32 %v2747, %v3188
    %v3190 = vpop.f32.mrb[0].mxu0
    %3191 = vmatprep.mubr.f32.mxu0 0.0
    %v3192 = vand.u32 %v200, 4294901760
    %3193 = vmatmul.mubr.f32.gmra.mrb[0].mxu0 %v3192
    %v3194 = vpop.f32.mrb[0].mxu0
    %v3195 = vadd.f32 %v2757, %v3194
    %v3196 = vpop.f32.mrb[0].mxu0
    %3197 = vmatprep.mubr.f32.mxu0 0.0
    %v3198 = vand.u32 %v203, 4294901760
    %3199 = vmatmul.mubr.f32.gmra.mrb[0].mxu0 %v3198
    %v3200 = vpop.f32.mrb[0].mxu0
    %v3201 = vadd.f32 %v2767, %v3200
    %v3202 = vpop.f32.mrb[0].mxu0
    %3203 = vmatprep.mubr.f32.mxu0 0.0
    %v3204 = vand.u32 %v206, 4294901760
    %3205 = vmatmul.mubr.f32.gmra.mrb[0].mxu0 %v3204
    %v3206 = vpop.f32.mrb[0].mxu0
    %v3207 = vadd.f32 %v2777, %v3206
    %v3208 = vpop.f32.mrb[0].mxu0
    %3209 = vmatprep.mubr.f32.mxu0 0.0
    %v3210 = vand.u32 %v209, 4294901760
    %3211 = vmatmul.mubr.f32.gmra.mrb[0].mxu0 %v3210
    %v3212 = vpop.f32.mrb[0].mxu0
    %v3213 = vadd.f32 %v2787, %v3212
    %v3214 = vpop.f32.mrb[0].mxu0
    %3215 = vmatprep.mubr.f32.mxu0 0.0
    %v3216 = vand.u32 %v212, 4294901760
    %3217 = vmatmul.mubr.f32.gmra.mrb[0].mxu0 %v3216
    %v3218 = vpop.f32.mrb[0].mxu0
    %v3219 = vadd.f32 %v2797, %v3218
    %v3220 = vpop.f32.mrb[0].mxu0
    %3221 = vmatprep.mubr.f32.mxu0 0.0
    %v3222 = vand.u32 %v215, 4294901760
    %3223 = vmatmul.mubr.f32.gmra.mrb[0].mxu0 %v3222
    %v3224 = vpop.f32.mrb[0].mxu0
    %v3225 = vadd.f32 %v2807, %v3224
    %v3226 = vpop.f32.mrb[0].mxu0
    %3227 = vmatprep.mubr.f32.mxu0 0.0
    %v3228 = vand.u32 %v218, 4294901760
    %3229 = vmatmul.mubr.f32.gmra.mrb[0].mxu0 %v3228
    %v3230 = vpop.f32.mrb[0].mxu0
    %v3231 = vadd.f32 %v2817, %v3230
    %v3232 = vpop.f32.mrb[0].mxu0
    %3233 = vmatprep.mubr.f32.mxu0 0.0
    %v3234 = vand.u32 %v221, 4294901760
    %3235 = vmatmul.mubr.f32.gmra.mrb[0].mxu0 %v3234
    %v3236 = vpop.f32.mrb[0].mxu0
    %v3237 = vadd.f32 %v2827, %v3236
    %v3238 = vpop.f32.mrb[0].mxu0
    %3239 = vmatprep.mubr.f32.mxu0 0.0
    %v3240 = vand.u32 %v224, 4294901760
    %3241 = vmatmul.mubr.f32.gmra.mrb[0].mxu0 %v3240
    %v3242 = vpop.f32.mrb[0].mxu0
    %v3243 = vadd.f32 %v2837, %v3242
    %v3244 = vpop.f32.mrb[0].mxu0
    %3245 = vmatprep.mubr.f32.mxu0 0.0
    %v3246 = vand.u32 %v227, 4294901760
    %3247 = vmatmul.mubr.f32.gmra.mrb[0].mxu0 %v3246
    %v3248 = vpop.f32.mrb[0].mxu0
    %v3249 = vadd.f32 %v2847, %v3248
    %v3250 = vpop.f32.mrb[0].mxu0
    %3251 = vmatprep.mubr.f32.mxu0 0.0
    %v3252 = vand.u32 %v230, 4294901760
    %3253 = vmatmul.mubr.f32.gmra.mrb[0].mxu0 %v3252
    %v3254 = vpop.f32.mrb[0].mxu0
    %v3255 = vadd.f32 %v2857, %v3254
    %v3256 = vpop.f32.mrb[0].mxu0
    %3257 = vmatprep.mubr.f32.mxu0 0.0
    %v3258 = vand.u32 %v233, 4294901760
    %3259 = vmatmul.mubr.f32.gmra.mrb[0].mxu0 %v3258
    %v3260 = vpop.f32.mrb[0].mxu0
    %v3261 = vadd.f32 %v2867, %v3260
    %v3262 = vpop.f32.mrb[0].mxu0
    %3263 = vmatprep.mubr.f32.mxu0 0.0
    %v3264 = vand.u32 %v236, 4294901760
    %3265 = vmatmul.mubr.f32.gmra.mrb[0].mxu0 %v3264
    %v3266 = vpop.f32.mrb[0].mxu0
    %v3267 = vadd.f32 %v2877, %v3266
    %v3268 = vpop.f32.mrb[0].mxu0
    %3269 = vmatprep.mubr.f32.mxu0 0.0
    %v3270 = vand.u32 %v239, 4294901760
    %3271 = vmatmul.mubr.f32.gmra.mrb[0].mxu0 %v3270
    %v3272 = vpop.f32.mrb[0].mxu0
    %v3273 = vadd.f32 %v2887, %v3272
    %v3274 = vpop.f32.mrb[0].mxu0
    %3275 = vmatprep.mubr.f32.mxu0 0.0
    %v3276 = vand.u32 %v242, 4294901760
    %3277 = vmatmul.mubr.f32.gmra.mrb[0].mxu0 %v3276
    %v3278 = vpop.f32.mrb[0].mxu0
    %v3279 = vadd.f32 %v2897, %v3278
    %v3280 = vpop.f32.mrb[0].mxu0
    %3281 = vmatprep.mubr.f32.mxu0 0.0
    %v3282 = vand.u32 %v245, 4294901760
    %3283 = vmatmul.mubr.f32.gmra.mrb[0].mxu0 %v3282
    %v3284 = vpop.f32.mrb[0].mxu0
    %v3285 = vadd.f32 %v2907, %v3284
    %v3286 = vpop.f32.mrb[0].mxu0
    %3287 = vmatprep.mubr.f32.mxu0 0.0
    %v3288 = vand.u32 %v248, 4294901760
    %3289 = vmatmul.mubr.f32.gmra.mrb[0].mxu0 %v3288
    %v3290 = vpop.f32.mrb[0].mxu0
    %v3291 = vadd.f32 %v2917, %v3290
    %v3292 = vpop.f32.mrb[0].mxu0
    %3293 = vmatprep.mubr.f32.mxu0 0.0
    %v3294 = vand.u32 %v251, 4294901760
    %3295 = vmatmul.mubr.f32.gmra.mrb[0].mxu0 %v3294
    %v3296 = vpop.f32.mrb[0].mxu0
    %v3297 = vadd.f32 %v2927, %v3296
    %v3298 = vpop.f32.mrb[0].mxu0
    %3299 = vmatprep.mubr.f32.mxu0 0.0
    %v3300 = vand.u32 %v254, 4294901760
    %3301 = vmatmul.mubr.f32.gmra.mrb[0].mxu0 %v3300
    %v3302 = vpop.f32.mrb[0].mxu0
    %v3303 = vadd.f32 %v2937, %v3302
    %v3304 = vpop.f32.mrb[0].mxu0
    %3305 = vmatprep.mubr.f32.mxu0 0.0
    %v3306 = vand.u32 %v257, 4294901760
    %3307 = vmatmul.mubr.f32.gmra.mrb[0].mxu0 %v3306
    %v3308 = vpop.f32.mrb[0].mxu0
    %v3309 = vadd.f32 %v2947, %v3308
    %v3310 = vpop.f32.mrb[0].mxu0
    %3311 = vmatprep.mubr.f32.mxu0 0.0
    %v3312 = vand.u32 %v260, 4294901760
    %3313 = vmatmul.mubr.f32.gmra.mrb[0].mxu0 %v3312
    %v3314 = vpop.f32.mrb[0].mxu0
    %v3315 = vadd.f32 %v2957, %v3314
    %v3316 = vpop.f32.mrb[0].mxu0
    %3317 = vdwg.mxu0
    %3318 = vmatprep.subr.mxu0 0.0
    %v3319 = vand.u32 %v2486, 4294901760
    %v3320 = vsub.f32 %v2486, %v3319
    %3321 = vmatpush1.msra.mxu0 %v3320
    %3322 = vmatprep.subr.mxu0 0.0
    %v3323 = vand.u32 %v2487, 4294901760
    %v3324 = vsub.f32 %v2487, %v3323
    %3325 = vmatpush1.msra.mxu0 %v3324
    %3326 = vmatprep.subr.mxu0 0.0
    %v3327 = vand.u32 %v2488, 4294901760
    %v3328 = vsub.f32 %v2488, %v3327
    %3329 = vmatpush1.msra.mxu0 %v3328
    %3330 = vmatprep.subr.mxu0 0.0
    %v3331 = vand.u32 %v2489, 4294901760
    %v3332 = vsub.f32 %v2489, %v3331
    %3333 = vmatpush1.msra.mxu0 %v3332
    %3334 = vmatprep.subr.mxu0 0.0
    %v3335 = vand.u32 %v2490, 4294901760
    %v3336 = vsub.f32 %v2490, %v3335
    %3337 = vmatpush1.msra.mxu0 %v3336
    %3338 = vmatprep.subr.mxu0 0.0
    %v3339 = vand.u32 %v2491, 4294901760
    %v3340 = vsub.f32 %v2491, %v3339
    %3341 = vmatpush1.msra.mxu0 %v3340
    %3342 = vmatprep.subr.mxu0 0.0
    %v3343 = vand.u32 %v2492, 4294901760
    %v3344 = vsub.f32 %v2492, %v3343
    %3345 = vmatpush1.msra.mxu0 %v3344
    %3346 = vmatprep.subr.mxu0 0.0
    %v3347 = vand.u32 %v2493, 4294901760
    %v3348 = vsub.f32 %v2493, %v3347
    %3349 = vmatpush1.msra.mxu0 %v3348
    %3350 = vmatprep.subr.mxu0 0.0
    %v3351 = vand.u32 %v2494, 4294901760
    %v3352 = vsub.f32 %v2494, %v3351
    %3353 = vmatpush1.msra.mxu0 %v3352
    %3354 = vmatprep.subr.mxu0 0.0
    %v3355 = vand.u32 %v2495, 4294901760
    %v3356 = vsub.f32 %v2495, %v3355
    %3357 = vmatpush1.msra.mxu0 %v3356
    %3358 = vmatprep.subr.mxu0 0.0
    %v3359 = vand.u32 %v2496, 4294901760
    %v3360 = vsub.f32 %v2496, %v3359
    %3361 = vmatpush1.msra.mxu0 %v3360
    %3362 = vmatprep.subr.mxu0 0.0
    %v3363 = vand.u32 %v2497, 4294901760
    %v3364 = vsub.f32 %v2497, %v3363
    %3365 = vmatpush1.msra.mxu0 %v3364
    %3366 = vmatprep.subr.mxu0 0.0
    %v3367 = vand.u32 %v2500, 4294901760
    %v3368 = vsub.f32 %v2500, %v3367
    %3369 = vmatpush1.msra.mxu0 %v3368
    %3370 = vmatprep.subr.mxu0 0.0
    %3371 = vmatpush1.msra.mxu0 0.0
    %3372 = vmatprep.subr.mxu0 0.0
    %3373 = vmatpush1.msra.mxu0 0.0
    %3374 = vmatprep.subr.mxu0 0.0
    %3375 = vmatpush1.msra.mxu0 0.0
    %3376 = vmatprep.subr.mxu0 0.0
    %3377 = vmatpush1.msra.mxu0 0.0
    %3378 = vmatprep.subr.mxu0 0.0
    %3379 = vmatpush1.msra.mxu0 0.0
    %3380 = vmatprep.subr.mxu0 0.0
    %3381 = vmatpush1.msra.mxu0 0.0
    %3382 = vmatprep.subr.mxu0 0.0
    %3383 = vmatpush1.msra.mxu0 0.0
    %3384 = vmatprep.subr.mxu0 0.0
    %3385 = vmatpush1.msra.mxu0 0.0
    %3386 = vmatprep.subr.mxu0 0.0
    %3387 = vmatpush1.msra.mxu0 0.0
    %3388 = vmatprep.subr.mxu0 0.0
    %3389 = vmatpush1.msra.mxu0 0.0
    %3390 = vmatprep.subr.mxu0 0.0
    %3391 = vmatpush1.msra.mxu0 0.0
    %3392 = vmatprep.subr.mxu0 0.0
    %3393 = vmatpush1.msra.mxu0 0.0
    %3394 = vmatprep.subr.mxu0 0.0
    %3395 = vmatpush1.msra.mxu0 0.0
    %3396 = vmatprep.subr.mxu0 0.0
    %3397 = vmatpush1.msra.mxu0 0.0
    %3398 = vmatprep.subr.mxu0 0.0
    %3399 = vmatpush1.msra.mxu0 0.0
    %3400 = vmatprep.subr.mxu0 0.0
    %3401 = vmatpush1.msra.mxu0 0.0
    %3402 = vmatprep.subr.mxu0 0.0
    %3403 = vmatpush1.msra.mxu0 0.0
    %3404 = vmatprep.subr.mxu0 0.0
    %3405 = vmatpush1.msra.mxu0 0.0
    %3406 = vmatprep.subr.mxu0 0.0
    %3407 = vmatpush1.msra.mxu0 0.0
    %3408 = vmatprep.mubr.f32.mxu0 0.0
    %v3409 = vand.u32 %v149, 4294901760
    %v3410 = vsub.f32 %v149, %v3409
    %3411 = vmatmul.mubr.f32.gmra.mrb[0].mxu0 %v3410
    %v3412 = vpop.f32.mrb[0].mxu0
    %v3413 = vadd.f32 %v3093, %v3412
    %v3414 = vpop.f32.mrb[0].mxu0
    %3415 = vmatprep.mubr.f32.mxu0 0.0
    %v3416 = vand.u32 %v152, 4294901760
    %v3417 = vsub.f32 %v152, %v3416
    %3418 = vmatmul.mubr.f32.gmra.mrb[0].mxu0 %v3417
    %v3419 = vpop.f32.mrb[0].mxu0
    %v3420 = vadd.f32 %v3099, %v3419
    %v3421 = vpop.f32.mrb[0].mxu0
    %3422 = vmatprep.mubr.f32.mxu0 0.0
    %v3423 = vand.u32 %v155, 4294901760
    %v3424 = vsub.f32 %v155, %v3423
    %3425 = vmatmul.mubr.f32.gmra.mrb[0].mxu0 %v3424
    %v3426 = vpop.f32.mrb[0].mxu0
    %v3427 = vadd.f32 %v3105, %v3426
    %v3428 = vpop.f32.mrb[0].mxu0
    %3429 = vmatprep.mubr.f32.mxu0 0.0
    %v3430 = vand.u32 %v158, 4294901760
    %v3431 = vsub.f32 %v158, %v3430
    %3432 = vmatmul.mubr.f32.gmra.mrb[0].mxu0 %v3431
    %v3433 = vpop.f32.mrb[0].mxu0
    %v3434 = vadd.f32 %v3111, %v3433
    %v3435 = vpop.f32.mrb[0].mxu0
    %3436 = vmatprep.mubr.f32.mxu0 0.0
    %v3437 = vand.u32 %v161, 4294901760
    %v3438 = vsub.f32 %v161, %v3437
    %3439 = vmatmul.mubr.f32.gmra.mrb[0].mxu0 %v3438
    %v3440 = vpop.f32.mrb[0].mxu0
    %v3441 = vadd.f32 %v3117, %v3440
    %v3442 = vpop.f32.mrb[0].mxu0
    %3443 = vmatprep.mubr.f32.mxu0 0.0
    %v3444 = vand.u32 %v164, 4294901760
    %v3445 = vsub.f32 %v164, %v3444
    %3446 = vmatmul.mubr.f32.gmra.mrb[0].mxu0 %v3445
    %v3447 = vpop.f32.mrb[0].mxu0
    %v3448 = vadd.f32 %v3123, %v3447
    %v3449 = vpop.f32.mrb[0].mxu0
    %3450 = vmatprep.mubr.f32.mxu0 0.0
    %v3451 = vand.u32 %v167, 4294901760
    %v3452 = vsub.f32 %v167, %v3451
    %3453 = vmatmul.mubr.f32.gmra.mrb[0].mxu0 %v3452
    %v3454 = vpop.f32.mrb[0].mxu0
    %v3455 = vadd.f32 %v3129, %v3454
    %v3456 = vpop.f32.mrb[0].mxu0
    %3457 = vmatprep.mubr.f32.mxu0 0.0
    %v3458 = vand.u32 %v170, 4294901760
    %v3459 = vsub.f32 %v170, %v3458
    %3460 = vmatmul.mubr.f32.gmra.mrb[0].mxu0 %v3459
    %v3461 = vpop.f32.mrb[0].mxu0
    %v3462 = vadd.f32 %v3135, %v3461
    %v3463 = vpop.f32.mrb[0].mxu0
    %3464 = vmatprep.mubr.f32.mxu0 0.0
    %v3465 = vand.u32 %v173, 4294901760
    %v3466 = vsub.f32 %v173, %v3465
    %3467 = vmatmul.mubr.f32.gmra.mrb[0].mxu0 %v3466
    %v3468 = vpop.f32.mrb[0].mxu0
    %v3469 = vadd.f32 %v3141, %v3468
    %v3470 = vpop.f32.mrb[0].mxu0
    %3471 = vmatprep.mubr.f32.mxu0 0.0
    %v3472 = vand.u32 %v176, 4294901760
    %v3473 = vsub.f32 %v176, %v3472
    %3474 = vmatmul.mubr.f32.gmra.mrb[0].mxu0 %v3473
    %v3475 = vpop.f32.mrb[0].mxu0
    %v3476 = vadd.f32 %v3147, %v3475
    %v3477 = vpop.f32.mrb[0].mxu0
    %3478 = vmatprep.mubr.f32.mxu0 0.0
    %v3479 = vand.u32 %v179, 4294901760
    %v3480 = vsub.f32 %v179, %v3479
    %3481 = vmatmul.mubr.f32.gmra.mrb[0].mxu0 %v3480
    %v3482 = vpop.f32.mrb[0].mxu0
    %v3483 = vadd.f32 %v3153, %v3482
    %v3484 = vpop.f32.mrb[0].mxu0
    %3485 = vmatprep.mubr.f32.mxu0 0.0
    %v3486 = vand.u32 %v182, 4294901760
    %v3487 = vsub.f32 %v182, %v3486
    %3488 = vmatmul.mubr.f32.gmra.mrb[0].mxu0 %v3487
    %v3489 = vpop.f32.mrb[0].mxu0
    %v3490 = vadd.f32 %v3159, %v3489
    %v3491 = vpop.f32.mrb[0].mxu0
    %3492 = vmatprep.mubr.f32.mxu0 0.0
    %v3493 = vand.u32 %v185, 4294901760
    %v3494 = vsub.f32 %v185, %v3493
    %3495 = vmatmul.mubr.f32.gmra.mrb[0].mxu0 %v3494
    %v3496 = vpop.f32.mrb[0].mxu0
    %v3497 = vadd.f32 %v3165, %v3496
    %v3498 = vpop.f32.mrb[0].mxu0
    %3499 = vmatprep.mubr.f32.mxu0 0.0
    %v3500 = vand.u32 %v188, 4294901760
    %v3501 = vsub.f32 %v188, %v3500
    %3502 = vmatmul.mubr.f32.gmra.mrb[0].mxu0 %v3501
    %v3503 = vpop.f32.mrb[0].mxu0
    %v3504 = vadd.f32 %v3171, %v3503
    %v3505 = vpop.f32.mrb[0].mxu0
    %3506 = vmatprep.mubr.f32.mxu0 0.0
    %v3507 = vand.u32 %v191, 4294901760
    %v3508 = vsub.f32 %v191, %v3507
    %3509 = vmatmul.mubr.f32.gmra.mrb[0].mxu0 %v3508
    %v3510 = vpop.f32.mrb[0].mxu0
    %v3511 = vadd.f32 %v3177, %v3510
    %v3512 = vpop.f32.mrb[0].mxu0
    %3513 = vmatprep.mubr.f32.mxu0 0.0
    %v3514 = vand.u32 %v194, 4294901760
    %v3515 = vsub.f32 %v194, %v3514
    %3516 = vmatmul.mubr.f32.gmra.mrb[0].mxu0 %v3515
    %v3517 = vpop.f32.mrb[0].mxu0
    %v3518 = vadd.f32 %v3183, %v3517
    %v3519 = vpop.f32.mrb[0].mxu0
    %3520 = vmatprep.mubr.f32.mxu0 0.0
    %v3521 = vand.u32 %v197, 4294901760
    %v3522 = vsub.f32 %v197, %v3521
    %3523 = vmatmul.mubr.f32.gmra.mrb[0].mxu0 %v3522
    %v3524 = vpop.f32.mrb[0].mxu0
    %v3525 = vadd.f32 %v3189, %v3524
    %v3526 = vpop.f32.mrb[0].mxu0
    %3527 = vmatprep.mubr.f32.mxu0 0.0
    %v3528 = vand.u32 %v200, 4294901760
    %v3529 = vsub.f32 %v200, %v3528
    %3530 = vmatmul.mubr.f32.gmra.mrb[0].mxu0 %v3529
    %v3531 = vpop.f32.mrb[0].mxu0
    %v3532 = vadd.f32 %v3195, %v3531
    %v3533 = vpop.f32.mrb[0].mxu0
    %3534 = vmatprep.mubr.f32.mxu0 0.0
    %v3535 = vand.u32 %v203, 4294901760
    %v3536 = vsub.f32 %v203, %v3535
    %3537 = vmatmul.mubr.f32.gmra.mrb[0].mxu0 %v3536
    %v3538 = vpop.f32.mrb[0].mxu0
    %v3539 = vadd.f32 %v3201, %v3538
    %v3540 = vpop.f32.mrb[0].mxu0
    %3541 = vmatprep.mubr.f32.mxu0 0.0
    %v3542 = vand.u32 %v206, 4294901760
    %v3543 = vsub.f32 %v206, %v3542
    %3544 = vmatmul.mubr.f32.gmra.mrb[0].mxu0 %v3543
    %v3545 = vpop.f32.mrb[0].mxu0
    %v3546 = vadd.f32 %v3207, %v3545
    %v3547 = vpop.f32.mrb[0].mxu0
    %3548 = vmatprep.mubr.f32.mxu0 0.0
    %v3549 = vand.u32 %v209, 4294901760
    %v3550 = vsub.f32 %v209, %v3549
    %3551 = vmatmul.mubr.f32.gmra.mrb[0].mxu0 %v3550
    %v3552 = vpop.f32.mrb[0].mxu0
    %v3553 = vadd.f32 %v3213, %v3552
    %v3554 = vpop.f32.mrb[0].mxu0
    %3555 = vmatprep.mubr.f32.mxu0 0.0
    %v3556 = vand.u32 %v212, 4294901760
    %v3557 = vsub.f32 %v212, %v3556
    %3558 = vmatmul.mubr.f32.gmra.mrb[0].mxu0 %v3557
    %v3559 = vpop.f32.mrb[0].mxu0
    %v3560 = vadd.f32 %v3219, %v3559
    %v3561 = vpop.f32.mrb[0].mxu0
    %3562 = vmatprep.mubr.f32.mxu0 0.0
    %v3563 = vand.u32 %v215, 4294901760
    %v3564 = vsub.f32 %v215, %v3563
    %3565 = vmatmul.mubr.f32.gmra.mrb[0].mxu0 %v3564
    %v3566 = vpop.f32.mrb[0].mxu0
    %v3567 = vadd.f32 %v3225, %v3566
    %v3568 = vpop.f32.mrb[0].mxu0
    %3569 = vmatprep.mubr.f32.mxu0 0.0
    %v3570 = vand.u32 %v218, 4294901760
    %v3571 = vsub.f32 %v218, %v3570
    %3572 = vmatmul.mubr.f32.gmra.mrb[0].mxu0 %v3571
    %v3573 = vpop.f32.mrb[0].mxu0
    %v3574 = vadd.f32 %v3231, %v3573
    %v3575 = vpop.f32.mrb[0].mxu0
    %3576 = vmatprep.mubr.f32.mxu0 0.0
    %v3577 = vand.u32 %v221, 4294901760
    %v3578 = vsub.f32 %v221, %v3577
    %3579 = vmatmul.mubr.f32.gmra.mrb[0].mxu0 %v3578
    %v3580 = vpop.f32.mrb[0].mxu0
    %v3581 = vadd.f32 %v3237, %v3580
    %v3582 = vpop.f32.mrb[0].mxu0
    %3583 = vmatprep.mubr.f32.mxu0 0.0
    %v3584 = vand.u32 %v224, 4294901760
    %v3585 = vsub.f32 %v224, %v3584
    %3586 = vmatmul.mubr.f32.gmra.mrb[0].mxu0 %v3585
    %v3587 = vpop.f32.mrb[0].mxu0
    %v3588 = vadd.f32 %v3243, %v3587
    %v3589 = vpop.f32.mrb[0].mxu0
    %3590 = vmatprep.mubr.f32.mxu0 0.0
    %v3591 = vand.u32 %v227, 4294901760
    %v3592 = vsub.f32 %v227, %v3591
    %3593 = vmatmul.mubr.f32.gmra.mrb[0].mxu0 %v3592
    %v3594 = vpop.f32.mrb[0].mxu0
    %v3595 = vadd.f32 %v3249, %v3594
    %v3596 = vpop.f32.mrb[0].mxu0
    %3597 = vmatprep.mubr.f32.mxu0 0.0
    %v3598 = vand.u32 %v230, 4294901760
    %v3599 = vsub.f32 %v230, %v3598
    %3600 = vmatmul.mubr.f32.gmra.mrb[0].mxu0 %v3599
    %v3601 = vpop.f32.mrb[0].mxu0
    %v3602 = vadd.f32 %v3255, %v3601
    %v3603 = vpop.f32.mrb[0].mxu0
    %3604 = vmatprep.mubr.f32.mxu0 0.0
    %v3605 = vand.u32 %v233, 4294901760
    %v3606 = vsub.f32 %v233, %v3605
    %3607 = vmatmul.mubr.f32.gmra.mrb[0].mxu0 %v3606
    %v3608 = vpop.f32.mrb[0].mxu0
    %v3609 = vadd.f32 %v3261, %v3608
    %v3610 = vpop.f32.mrb[0].mxu0
    %3611 = vmatprep.mubr.f32.mxu0 0.0
    %v3612 = vand.u32 %v236, 4294901760
    %v3613 = vsub.f32 %v236, %v3612
    %3614 = vmatmul.mubr.f32.gmra.mrb[0].mxu0 %v3613
    %v3615 = vpop.f32.mrb[0].mxu0
    %v3616 = vadd.f32 %v3267, %v3615
    %v3617 = vpop.f32.mrb[0].mxu0
    %3618 = vmatprep.mubr.f32.mxu0 0.0
    %v3619 = vand.u32 %v239, 4294901760
    %v3620 = vsub.f32 %v239, %v3619
    %3621 = vmatmul.mubr.f32.gmra.mrb[0].mxu0 %v3620
    %v3622 = vpop.f32.mrb[0].mxu0
    %v3623 = vadd.f32 %v3273, %v3622
    %v3624 = vpop.f32.mrb[0].mxu0
    %3625 = vmatprep.mubr.f32.mxu0 0.0
    %v3626 = vand.u32 %v242, 4294901760
    %v3627 = vsub.f32 %v242, %v3626
    %3628 = vmatmul.mubr.f32.gmra.mrb[0].mxu0 %v3627
    %v3629 = vpop.f32.mrb[0].mxu0
    %v3630 = vadd.f32 %v3279, %v3629
    %v3631 = vpop.f32.mrb[0].mxu0
    %3632 = vmatprep.mubr.f32.mxu0 0.0
    %v3633 = vand.u32 %v245, 4294901760
    %v3634 = vsub.f32 %v245, %v3633
    %3635 = vmatmul.mubr.f32.gmra.mrb[0].mxu0 %v3634
    %v3636 = vpop.f32.mrb[0].mxu0
    %v3637 = vadd.f32 %v3285, %v3636
    %v3638 = vpop.f32.mrb[0].mxu0
    %3639 = vmatprep.mubr.f32.mxu0 0.0
    %v3640 = vand.u32 %v248, 4294901760
    %v3641 = vsub.f32 %v248, %v3640
    %3642 = vmatmul.mubr.f32.gmra.mrb[0].mxu0 %v3641
    %v3643 = vpop.f32.mrb[0].mxu0
    %v3644 = vadd.f32 %v3291, %v3643
    %v3645 = vpop.f32.mrb[0].mxu0
    %3646 = vmatprep.mubr.f32.mxu0 0.0
    %v3647 = vand.u32 %v251, 4294901760
    %v3648 = vsub.f32 %v251, %v3647
    %3649 = vmatmul.mubr.f32.gmra.mrb[0].mxu0 %v3648
    %v3650 = vpop.f32.mrb[0].mxu0
    %v3651 = vadd.f32 %v3297, %v3650
    %v3652 = vpop.f32.mrb[0].mxu0
    %3653 = vmatprep.mubr.f32.mxu0 0.0
    %v3654 = vand.u32 %v254, 4294901760
    %v3655 = vsub.f32 %v254, %v3654
    %3656 = vmatmul.mubr.f32.gmra.mrb[0].mxu0 %v3655
    %v3657 = vpop.f32.mrb[0].mxu0
    %v3658 = vadd.f32 %v3303, %v3657
    %v3659 = vpop.f32.mrb[0].mxu0
    %3660 = vmatprep.mubr.f32.mxu0 0.0
    %v3661 = vand.u32 %v257, 4294901760
    %v3662 = vsub.f32 %v257, %v3661
    %3663 = vmatmul.mubr.f32.gmra.mrb[0].mxu0 %v3662
    %v3664 = vpop.f32.mrb[0].mxu0
    %v3665 = vadd.f32 %v3309, %v3664
    %v3666 = vpop.f32.mrb[0].mxu0
    %3667 = vmatprep.mubr.f32.mxu0 0.0
    %v3668 = vand.u32 %v260, 4294901760
    %v3669 = vsub.f32 %v260, %v3668
    %3670 = vmatmul.mubr.f32.gmra.mrb[0].mxu0 %v3669
    %v3671 = vpop.f32.mrb[0].mxu0
    %v3672 = vadd.f32 %v3315, %v3671
    %v3673 = vpop.f32.mrb[0].mxu0
    %3674 = vdwg.mxu0
    %3675 = vmatprep.subr.mxu0 0.0
    %v3676 = vand.u32 %v2486, 4294901760
    %3677 = vmatpush1.msra.mxu0 %v3676
    %3678 = vmatprep.subr.mxu0 0.0
    %v3679 = vand.u32 %v2487, 4294901760
    %3680 = vmatpush1.msra.mxu0 %v3679
    %3681 = vmatprep.subr.mxu0 0.0
    %v3682 = vand.u32 %v2488, 4294901760
    %3683 = vmatpush1.msra.mxu0 %v3682
    %3684 = vmatprep.subr.mxu0 0.0
    %v3685 = vand.u32 %v2489, 4294901760
    %3686 = vmatpush1.msra.mxu0 %v3685
    %3687 = vmatprep.subr.mxu0 0.0
    %v3688 = vand.u32 %v2490, 4294901760
    %3689 = vmatpush1.msra.mxu0 %v3688
    %3690 = vmatprep.subr.mxu0 0.0
    %v3691 = vand.u32 %v2491, 4294901760
    %3692 = vmatpush1.msra.mxu0 %v3691
    %3693 = vmatprep.subr.mxu0 0.0
    %v3694 = vand.u32 %v2492, 4294901760
    %3695 = vmatpush1.msra.mxu0 %v3694
    %3696 = vmatprep.subr.mxu0 0.0
    %v3697 = vand.u32 %v2493, 4294901760
    %3698 = vmatpush1.msra.mxu0 %v3697
    %3699 = vmatprep.subr.mxu0 0.0
    %v3700 = vand.u32 %v2494, 4294901760
    %3701 = vmatpush1.msra.mxu0 %v3700
    %3702 = vmatprep.subr.mxu0 0.0
    %v3703 = vand.u32 %v2495, 4294901760
    %3704 = vmatpush1.msra.mxu0 %v3703
    %3705 = vmatprep.subr.mxu0 0.0
    %v3706 = vand.u32 %v2496, 4294901760
    %3707 = vmatpush1.msra.mxu0 %v3706
    %3708 = vmatprep.subr.mxu0 0.0
    %v3709 = vand.u32 %v2497, 4294901760
    %3710 = vmatpush1.msra.mxu0 %v3709
    %3711 = vmatprep.subr.mxu0 0.0
    %v3712 = vand.u32 %v2500, 4294901760
    %3713 = vmatpush1.msra.mxu0 %v3712
    %3714 = vmatprep.subr.mxu0 0.0
    %3715 = vmatpush1.msra.mxu0 0.0
    %3716 = vmatprep.subr.mxu0 0.0
    %3717 = vmatpush1.msra.mxu0 0.0
    %3718 = vmatprep.subr.mxu0 0.0
    %3719 = vmatpush1.msra.mxu0 0.0
    %3720 = vmatprep.subr.mxu0 0.0
    %3721 = vmatpush1.msra.mxu0 0.0
    %3722 = vmatprep.subr.mxu0 0.0
    %3723 = vmatpush1.msra.mxu0 0.0
    %3724 = vmatprep.subr.mxu0 0.0
    %3725 = vmatpush1.msra.mxu0 0.0
    %3726 = vmatprep.subr.mxu0 0.0
    %3727 = vmatpush1.msra.mxu0 0.0
    %3728 = vmatprep.subr.mxu0 0.0
    %3729 = vmatpush1.msra.mxu0 0.0
    %3730 = vmatprep.subr.mxu0 0.0
    %3731 = vmatpush1.msra.mxu0 0.0
    %3732 = vmatprep.subr.mxu0 0.0
    %3733 = vmatpush1.msra.mxu0 0.0
    %3734 = vmatprep.subr.mxu0 0.0
    %3735 = vmatpush1.msra.mxu0 0.0
    %3736 = vmatprep.subr.mxu0 0.0
    %3737 = vmatpush1.msra.mxu0 0.0
    %3738 = vmatprep.subr.mxu0 0.0
    %3739 = vmatpush1.msra.mxu0 0.0
    %3740 = vmatprep.subr.mxu0 0.0
    %3741 = vmatpush1.msra.mxu0 0.0
    %3742 = vmatprep.subr.mxu0 0.0
    %3743 = vmatpush1.msra.mxu0 0.0
    %3744 = vmatprep.subr.mxu0 0.0
    %3745 = vmatpush1.msra.mxu0 0.0
    %3746 = vmatprep.subr.mxu0 0.0
    %3747 = vmatpush1.msra.mxu0 0.0
    %3748 = vmatprep.subr.mxu0 0.0
    %3749 = vmatpush1.msra.mxu0 0.0
    %3750 = vmatprep.subr.mxu0 0.0
    %3751 = vmatpush1.msra.mxu0 0.0
    %3752 = vmatprep.mubr.f32.mxu0 0.0
    %v3753 = vand.u32 %v149, 4294901760
    %v3754 = vsub.f32 %v149, %v3753
    %v3755 = vand.u32 %v3754, 4294901760
    %3756 = vmatmul.mubr.f32.gmra.mrb[0].mxu0 %v3755
    %v3757 = vpop.f32.mrb[0].mxu0
    %v3758 = vadd.f32 %v3413, %v3757
    %v3759 = vpop.f32.mrb[0].mxu0
    %3760 = vmatprep.mubr.f32.mxu0 0.0
    %v3761 = vand.u32 %v152, 4294901760
    %v3762 = vsub.f32 %v152, %v3761
    %v3763 = vand.u32 %v3762, 4294901760
    %3764 = vmatmul.mubr.f32.gmra.mrb[0].mxu0 %v3763
    %v3765 = vpop.f32.mrb[0].mxu0
    %v3766 = vadd.f32 %v3420, %v3765
    %v3767 = vpop.f32.mrb[0].mxu0
    %3768 = vmatprep.mubr.f32.mxu0 0.0
    %v3769 = vand.u32 %v155, 4294901760
    %v3770 = vsub.f32 %v155, %v3769
    %v3771 = vand.u32 %v3770, 4294901760
    %3772 = vmatmul.mubr.f32.gmra.mrb[0].mxu0 %v3771
    %v3773 = vpop.f32.mrb[0].mxu0
    %v3774 = vadd.f32 %v3427, %v3773
    %v3775 = vpop.f32.mrb[0].mxu0
    %3776 = vmatprep.mubr.f32.mxu0 0.0
    %v3777 = vand.u32 %v158, 4294901760
    %v3778 = vsub.f32 %v158, %v3777
    %v3779 = vand.u32 %v3778, 4294901760
    %3780 = vmatmul.mubr.f32.gmra.mrb[0].mxu0 %v3779
    %v3781 = vpop.f32.mrb[0].mxu0
    %v3782 = vadd.f32 %v3434, %v3781
    %v3783 = vpop.f32.mrb[0].mxu0
    %3784 = vmatprep.mubr.f32.mxu0 0.0
    %v3785 = vand.u32 %v161, 4294901760
    %v3786 = vsub.f32 %v161, %v3785
    %v3787 = vand.u32 %v3786, 4294901760
    %3788 = vmatmul.mubr.f32.gmra.mrb[0].mxu0 %v3787
    %v3789 = vpop.f32.mrb[0].mxu0
    %v3790 = vadd.f32 %v3441, %v3789
    %v3791 = vpop.f32.mrb[0].mxu0
    %3792 = vmatprep.mubr.f32.mxu0 0.0
    %v3793 = vand.u32 %v164, 4294901760
    %v3794 = vsub.f32 %v164, %v3793
    %v3795 = vand.u32 %v3794, 4294901760
    %3796 = vmatmul.mubr.f32.gmra.mrb[0].mxu0 %v3795
    %v3797 = vpop.f32.mrb[0].mxu0
    %v3798 = vadd.f32 %v3448, %v3797
    %v3799 = vpop.f32.mrb[0].mxu0
    %3800 = vmatprep.mubr.f32.mxu0 0.0
    %v3801 = vand.u32 %v167, 4294901760
    %v3802 = vsub.f32 %v167, %v3801
    %v3803 = vand.u32 %v3802, 4294901760
    %3804 = vmatmul.mubr.f32.gmra.mrb[0].mxu0 %v3803
    %v3805 = vpop.f32.mrb[0].mxu0
    %v3806 = vadd.f32 %v3455, %v3805
    %v3807 = vpop.f32.mrb[0].mxu0
    %3808 = vmatprep.mubr.f32.mxu0 0.0
    %v3809 = vand.u32 %v170, 4294901760
    %v3810 = vsub.f32 %v170, %v3809
    %v3811 = vand.u32 %v3810, 4294901760
    %3812 = vmatmul.mubr.f32.gmra.mrb[0].mxu0 %v3811
    %v3813 = vpop.f32.mrb[0].mxu0
    %v3814 = vadd.f32 %v3462, %v3813
    %v3815 = vpop.f32.mrb[0].mxu0
    %3816 = vmatprep.mubr.f32.mxu0 0.0
    %v3817 = vand.u32 %v173, 4294901760
    %v3818 = vsub.f32 %v173, %v3817
    %v3819 = vand.u32 %v3818, 4294901760
    %3820 = vmatmul.mubr.f32.gmra.mrb[0].mxu0 %v3819
    %v3821 = vpop.f32.mrb[0].mxu0
    %v3822 = vadd.f32 %v3469, %v3821
    %v3823 = vpop.f32.mrb[0].mxu0
    %3824 = vmatprep.mubr.f32.mxu0 0.0
    %v3825 = vand.u32 %v176, 4294901760
    %v3826 = vsub.f32 %v176, %v3825
    %v3827 = vand.u32 %v3826, 4294901760
    %3828 = vmatmul.mubr.f32.gmra.mrb[0].mxu0 %v3827
    %v3829 = vpop.f32.mrb[0].mxu0
    %v3830 = vadd.f32 %v3476, %v3829
    %v3831 = vpop.f32.mrb[0].mxu0
    %3832 = vmatprep.mubr.f32.mxu0 0.0
    %v3833 = vand.u32 %v179, 4294901760
    %v3834 = vsub.f32 %v179, %v3833
    %v3835 = vand.u32 %v3834, 4294901760
    %3836 = vmatmul.mubr.f32.gmra.mrb[0].mxu0 %v3835
    %v3837 = vpop.f32.mrb[0].mxu0
    %v3838 = vadd.f32 %v3483, %v3837
    %v3839 = vpop.f32.mrb[0].mxu0
    %3840 = vmatprep.mubr.f32.mxu0 0.0
    %v3841 = vand.u32 %v182, 4294901760
    %v3842 = vsub.f32 %v182, %v3841
    %v3843 = vand.u32 %v3842, 4294901760
    %3844 = vmatmul.mubr.f32.gmra.mrb[0].mxu0 %v3843
    %v3845 = vpop.f32.mrb[0].mxu0
    %v3846 = vadd.f32 %v3490, %v3845
    %v3847 = vpop.f32.mrb[0].mxu0
    %3848 = vmatprep.mubr.f32.mxu0 0.0
    %v3849 = vand.u32 %v185, 4294901760
    %v3850 = vsub.f32 %v185, %v3849
    %v3851 = vand.u32 %v3850, 4294901760
    %3852 = vmatmul.mubr.f32.gmra.mrb[0].mxu0 %v3851
    %v3853 = vpop.f32.mrb[0].mxu0
    %v3854 = vadd.f32 %v3497, %v3853
    %v3855 = vpop.f32.mrb[0].mxu0
    %3856 = vmatprep.mubr.f32.mxu0 0.0
    %v3857 = vand.u32 %v188, 4294901760
    %v3858 = vsub.f32 %v188, %v3857
    %v3859 = vand.u32 %v3858, 4294901760
    %3860 = vmatmul.mubr.f32.gmra.mrb[0].mxu0 %v3859
    %v3861 = vpop.f32.mrb[0].mxu0
    %v3862 = vadd.f32 %v3504, %v3861
    %v3863 = vpop.f32.mrb[0].mxu0
    %3864 = vmatprep.mubr.f32.mxu0 0.0
    %v3865 = vand.u32 %v191, 4294901760
    %v3866 = vsub.f32 %v191, %v3865
    %v3867 = vand.u32 %v3866, 4294901760
    %3868 = vmatmul.mubr.f32.gmra.mrb[0].mxu0 %v3867
    %v3869 = vpop.f32.mrb[0].mxu0
    %v3870 = vadd.f32 %v3511, %v3869
    %v3871 = vpop.f32.mrb[0].mxu0
    %3872 = vmatprep.mubr.f32.mxu0 0.0
    %v3873 = vand.u32 %v194, 4294901760
    %v3874 = vsub.f32 %v194, %v3873
    %v3875 = vand.u32 %v3874, 4294901760
    %3876 = vmatmul.mubr.f32.gmra.mrb[0].mxu0 %v3875
    %v3877 = vpop.f32.mrb[0].mxu0
    %v3878 = vadd.f32 %v3518, %v3877
    %v3879 = vpop.f32.mrb[0].mxu0
    %3880 = vmatprep.mubr.f32.mxu0 0.0
    %v3881 = vand.u32 %v197, 4294901760
    %v3882 = vsub.f32 %v197, %v3881
    %v3883 = vand.u32 %v3882, 4294901760
    %3884 = vmatmul.mubr.f32.gmra.mrb[0].mxu0 %v3883
    %v3885 = vpop.f32.mrb[0].mxu0
    %v3886 = vadd.f32 %v3525, %v3885
    %v3887 = vpop.f32.mrb[0].mxu0
    %3888 = vmatprep.mubr.f32.mxu0 0.0
    %v3889 = vand.u32 %v200, 4294901760
    %v3890 = vsub.f32 %v200, %v3889
    %v3891 = vand.u32 %v3890, 4294901760
    %3892 = vmatmul.mubr.f32.gmra.mrb[0].mxu0 %v3891
    %v3893 = vpop.f32.mrb[0].mxu0
    %v3894 = vadd.f32 %v3532, %v3893
    %v3895 = vpop.f32.mrb[0].mxu0
    %3896 = vmatprep.mubr.f32.mxu0 0.0
    %v3897 = vand.u32 %v203, 4294901760
    %v3898 = vsub.f32 %v203, %v3897
    %v3899 = vand.u32 %v3898, 4294901760
    %3900 = vmatmul.mubr.f32.gmra.mrb[0].mxu0 %v3899
    %v3901 = vpop.f32.mrb[0].mxu0
    %v3902 = vadd.f32 %v3539, %v3901
    %v3903 = vpop.f32.mrb[0].mxu0
    %3904 = vmatprep.mubr.f32.mxu0 0.0
    %v3905 = vand.u32 %v206, 4294901760
    %v3906 = vsub.f32 %v206, %v3905
    %v3907 = vand.u32 %v3906, 4294901760
    %3908 = vmatmul.mubr.f32.gmra.mrb[0].mxu0 %v3907
    %v3909 = vpop.f32.mrb[0].mxu0
    %v3910 = vadd.f32 %v3546, %v3909
    %v3911 = vpop.f32.mrb[0].mxu0
    %3912 = vmatprep.mubr.f32.mxu0 0.0
    %v3913 = vand.u32 %v209, 4294901760
    %v3914 = vsub.f32 %v209, %v3913
    %v3915 = vand.u32 %v3914, 4294901760
    %3916 = vmatmul.mubr.f32.gmra.mrb[0].mxu0 %v3915
    %v3917 = vpop.f32.mrb[0].mxu0
    %v3918 = vadd.f32 %v3553, %v3917
    %v3919 = vpop.f32.mrb[0].mxu0
    %3920 = vmatprep.mubr.f32.mxu0 0.0
    %v3921 = vand.u32 %v212, 4294901760
    %v3922 = vsub.f32 %v212, %v3921
    %v3923 = vand.u32 %v3922, 4294901760
    %3924 = vmatmul.mubr.f32.gmra.mrb[0].mxu0 %v3923
    %v3925 = vpop.f32.mrb[0].mxu0
    %v3926 = vadd.f32 %v3560, %v3925
    %v3927 = vpop.f32.mrb[0].mxu0
    %3928 = vmatprep.mubr.f32.mxu0 0.0
    %v3929 = vand.u32 %v215, 4294901760
    %v3930 = vsub.f32 %v215, %v3929
    %v3931 = vand.u32 %v3930, 4294901760
    %3932 = vmatmul.mubr.f32.gmra.mrb[0].mxu0 %v3931
    %v3933 = vpop.f32.mrb[0].mxu0
    %v3934 = vadd.f32 %v3567, %v3933
    %v3935 = vpop.f32.mrb[0].mxu0
    %3936 = vmatprep.mubr.f32.mxu0 0.0
    %v3937 = vand.u32 %v218, 4294901760
    %v3938 = vsub.f32 %v218, %v3937
    %v3939 = vand.u32 %v3938, 4294901760
    %3940 = vmatmul.mubr.f32.gmra.mrb[0].mxu0 %v3939
    %v3941 = vpop.f32.mrb[0].mxu0
    %v3942 = vadd.f32 %v3574, %v3941
    %v3943 = vpop.f32.mrb[0].mxu0
    %3944 = vmatprep.mubr.f32.mxu0 0.0
    %v3945 = vand.u32 %v221, 4294901760
    %v3946 = vsub.f32 %v221, %v3945
    %v3947 = vand.u32 %v3946, 4294901760
    %3948 = vmatmul.mubr.f32.gmra.mrb[0].mxu0 %v3947
    %v3949 = vpop.f32.mrb[0].mxu0
    %v3950 = vadd.f32 %v3581, %v3949
    %v3951 = vpop.f32.mrb[0].mxu0
    %3952 = vmatprep.mubr.f32.mxu0 0.0
    %v3953 = vand.u32 %v224, 4294901760
    %v3954 = vsub.f32 %v224, %v3953
    %v3955 = vand.u32 %v3954, 4294901760
    %3956 = vmatmul.mubr.f32.gmra.mrb[0].mxu0 %v3955
    %v3957 = vpop.f32.mrb[0].mxu0
    %v3958 = vadd.f32 %v3588, %v3957
    %v3959 = vpop.f32.mrb[0].mxu0
    %3960 = vmatprep.mubr.f32.mxu0 0.0
    %v3961 = vand.u32 %v227, 4294901760
    %v3962 = vsub.f32 %v227, %v3961
    %v3963 = vand.u32 %v3962, 4294901760
    %3964 = vmatmul.mubr.f32.gmra.mrb[0].mxu0 %v3963
    %v3965 = vpop.f32.mrb[0].mxu0
    %v3966 = vadd.f32 %v3595, %v3965
    %v3967 = vpop.f32.mrb[0].mxu0
    %3968 = vmatprep.mubr.f32.mxu0 0.0
    %v3969 = vand.u32 %v230, 4294901760
    %v3970 = vsub.f32 %v230, %v3969
    %v3971 = vand.u32 %v3970, 4294901760
    %3972 = vmatmul.mubr.f32.gmra.mrb[0].mxu0 %v3971
    %v3973 = vpop.f32.mrb[0].mxu0
    %v3974 = vadd.f32 %v3602, %v3973
    %v3975 = vpop.f32.mrb[0].mxu0
    %3976 = vmatprep.mubr.f32.mxu0 0.0
    %v3977 = vand.u32 %v233, 4294901760
    %v3978 = vsub.f32 %v233, %v3977
    %v3979 = vand.u32 %v3978, 4294901760
    %3980 = vmatmul.mubr.f32.gmra.mrb[0].mxu0 %v3979
    %v3981 = vpop.f32.mrb[0].mxu0
    %v3982 = vadd.f32 %v3609, %v3981
    %v3983 = vpop.f32.mrb[0].mxu0
    %3984 = vmatprep.mubr.f32.mxu0 0.0
    %v3985 = vand.u32 %v236, 4294901760
    %v3986 = vsub.f32 %v236, %v3985
    %v3987 = vand.u32 %v3986, 4294901760
    %3988 = vmatmul.mubr.f32.gmra.mrb[0].mxu0 %v3987
    %v3989 = vpop.f32.mrb[0].mxu0
    %v3990 = vadd.f32 %v3616, %v3989
    %v3991 = vpop.f32.mrb[0].mxu0
    %3992 = vmatprep.mubr.f32.mxu0 0.0
    %v3993 = vand.u32 %v239, 4294901760
    %v3994 = vsub.f32 %v239, %v3993
    %v3995 = vand.u32 %v3994, 4294901760
    %3996 = vmatmul.mubr.f32.gmra.mrb[0].mxu0 %v3995
    %v3997 = vpop.f32.mrb[0].mxu0
    %v3998 = vadd.f32 %v3623, %v3997
    %v3999 = vpop.f32.mrb[0].mxu0
    %4000 = vmatprep.mubr.f32.mxu0 0.0
    %v4001 = vand.u32 %v242, 4294901760
    %v4002 = vsub.f32 %v242, %v4001
    %v4003 = vand.u32 %v4002, 4294901760
    %4004 = vmatmul.mubr.f32.gmra.mrb[0].mxu0 %v4003
    %v4005 = vpop.f32.mrb[0].mxu0
    %v4006 = vadd.f32 %v3630, %v4005
    %v4007 = vpop.f32.mrb[0].mxu0
    %4008 = vmatprep.mubr.f32.mxu0 0.0
    %v4009 = vand.u32 %v245, 4294901760
    %v4010 = vsub.f32 %v245, %v4009
    %v4011 = vand.u32 %v4010, 4294901760
    %4012 = vmatmul.mubr.f32.gmra.mrb[0].mxu0 %v4011
    %v4013 = vpop.f32.mrb[0].mxu0
    %v4014 = vadd.f32 %v3637, %v4013
    %v4015 = vpop.f32.mrb[0].mxu0
    %4016 = vmatprep.mubr.f32.mxu0 0.0
    %v4017 = vand.u32 %v248, 4294901760
    %v4018 = vsub.f32 %v248, %v4017
    %v4019 = vand.u32 %v4018, 4294901760
    %4020 = vmatmul.mubr.f32.gmra.mrb[0].mxu0 %v4019
    %v4021 = vpop.f32.mrb[0].mxu0
    %v4022 = vadd.f32 %v3644, %v4021
    %v4023 = vpop.f32.mrb[0].mxu0
    %4024 = vmatprep.mubr.f32.mxu0 0.0
    %v4025 = vand.u32 %v251, 4294901760
    %v4026 = vsub.f32 %v251, %v4025
    %v4027 = vand.u32 %v4026, 4294901760
    %4028 = vmatmul.mubr.f32.gmra.mrb[0].mxu0 %v4027
    %v4029 = vpop.f32.mrb[0].mxu0
    %v4030 = vadd.f32 %v3651, %v4029
    %v4031 = vpop.f32.mrb[0].mxu0
    %4032 = vmatprep.mubr.f32.mxu0 0.0
    %v4033 = vand.u32 %v254, 4294901760
    %v4034 = vsub.f32 %v254, %v4033
    %v4035 = vand.u32 %v4034, 4294901760
    %4036 = vmatmul.mubr.f32.gmra.mrb[0].mxu0 %v4035
    %v4037 = vpop.f32.mrb[0].mxu0
    %v4038 = vadd.f32 %v3658, %v4037
    %v4039 = vpop.f32.mrb[0].mxu0
    %4040 = vmatprep.mubr.f32.mxu0 0.0
    %v4041 = vand.u32 %v257, 4294901760
    %v4042 = vsub.f32 %v257, %v4041
    %v4043 = vand.u32 %v4042, 4294901760
    %4044 = vmatmul.mubr.f32.gmra.mrb[0].mxu0 %v4043
    %v4045 = vpop.f32.mrb[0].mxu0
    %v4046 = vadd.f32 %v3665, %v4045
    %v4047 = vpop.f32.mrb[0].mxu0
    %4048 = vmatprep.mubr.f32.mxu0 0.0
    %v4049 = vand.u32 %v260, 4294901760
    %v4050 = vsub.f32 %v260, %v4049
    %v4051 = vand.u32 %v4050, 4294901760
    %4052 = vmatmul.mubr.f32.gmra.mrb[0].mxu0 %v4051
    %v4053 = vpop.f32.mrb[0].mxu0
    %v4054 = vadd.f32 %v3672, %v4053
    %v4055 = vpop.f32.mrb[0].mxu0
    %4056 = vdwg.mxu0
    %4057 = vmatprep.subr.mxu0 0.0
    %v4058 = vand.u32 %v2486, 4294901760
    %v4059 = vsub.f32 %v2486, %v4058
    %v4060 = vand.u32 %v4059, 4294901760
    %4061 = vmatpush1.msra.mxu0 %v4060
    %4062 = vmatprep.subr.mxu0 0.0
    %v4063 = vand.u32 %v2487, 4294901760
    %v4064 = vsub.f32 %v2487, %v4063
    %v4065 = vand.u32 %v4064, 4294901760
    %4066 = vmatpush1.msra.mxu0 %v4065
    %4067 = vmatprep.subr.mxu0 0.0
    %v4068 = vand.u32 %v2488, 4294901760
    %v4069 = vsub.f32 %v2488, %v4068
    %v4070 = vand.u32 %v4069, 4294901760
    %4071 = vmatpush1.msra.mxu0 %v4070
    %4072 = vmatprep.subr.mxu0 0.0
    %v4073 = vand.u32 %v2489, 4294901760
    %v4074 = vsub.f32 %v2489, %v4073
    %v4075 = vand.u32 %v4074, 4294901760
    %4076 = vmatpush1.msra.mxu0 %v4075
    %4077 = vmatprep.subr.mxu0 0.0
    %v4078 = vand.u32 %v2490, 4294901760
    %v4079 = vsub.f32 %v2490, %v4078
    %v4080 = vand.u32 %v4079, 4294901760
    %4081 = vmatpush1.msra.mxu0 %v4080
    %4082 = vmatprep.subr.mxu0 0.0
    %v4083 = vand.u32 %v2491, 4294901760
    %v4084 = vsub.f32 %v2491, %v4083
    %v4085 = vand.u32 %v4084, 4294901760
    %4086 = vmatpush1.msra.mxu0 %v4085
    %4087 = vmatprep.subr.mxu0 0.0
    %v4088 = vand.u32 %v2492, 4294901760
    %v4089 = vsub.f32 %v2492, %v4088
    %v4090 = vand.u32 %v4089, 4294901760
    %4091 = vmatpush1.msra.mxu0 %v4090
    %4092 = vmatprep.subr.mxu0 0.0
    %v4093 = vand.u32 %v2493, 4294901760
    %v4094 = vsub.f32 %v2493, %v4093
    %v4095 = vand.u32 %v4094, 4294901760
    %4096 = vmatpush1.msra.mxu0 %v4095
    %4097 = vmatprep.subr.mxu0 0.0
    %v4098 = vand.u32 %v2494, 4294901760
    %v4099 = vsub.f32 %v2494, %v4098
    %v4100 = vand.u32 %v4099, 4294901760
    %4101 = vmatpush1.msra.mxu0 %v4100
    %4102 = vmatprep.subr.mxu0 0.0
    %v4103 = vand.u32 %v2495, 4294901760
    %v4104 = vsub.f32 %v2495, %v4103
    %v4105 = vand.u32 %v4104, 4294901760
    %4106 = vmatpush1.msra.mxu0 %v4105
    %4107 = vmatprep.subr.mxu0 0.0
    %v4108 = vand.u32 %v2496, 4294901760
    %v4109 = vsub.f32 %v2496, %v4108
    %v4110 = vand.u32 %v4109, 4294901760
    %4111 = vmatpush1.msra.mxu0 %v4110
    %4112 = vmatprep.subr.mxu0 0.0
    %v4113 = vand.u32 %v2497, 4294901760
    %v4114 = vsub.f32 %v2497, %v4113
    %v4115 = vand.u32 %v4114, 4294901760
    %4116 = vmatpush1.msra.mxu0 %v4115
    %4117 = vmatprep.subr.mxu0 0.0
    %v4118 = vand.u32 %v2500, 4294901760
    %v4119 = vsub.f32 %v2500, %v4118
    %v4120 = vand.u32 %v4119, 4294901760
    %4121 = vmatpush1.msra.mxu0 %v4120
    %4122 = vmatprep.subr.mxu0 0.0
    %4123 = vmatpush1.msra.mxu0 0.0
    %4124 = vmatprep.subr.mxu0 0.0
    %4125 = vmatpush1.msra.mxu0 0.0
    %4126 = vmatprep.subr.mxu0 0.0
    %4127 = vmatpush1.msra.mxu0 0.0
    %4128 = vmatprep.subr.mxu0 0.0
    %4129 = vmatpush1.msra.mxu0 0.0
    %4130 = vmatprep.subr.mxu0 0.0
    %4131 = vmatpush1.msra.mxu0 0.0
    %4132 = vmatprep.subr.mxu0 0.0
    %4133 = vmatpush1.msra.mxu0 0.0
    %4134 = vmatprep.subr.mxu0 0.0
    %4135 = vmatpush1.msra.mxu0 0.0
    %4136 = vmatprep.subr.mxu0 0.0
    %4137 = vmatpush1.msra.mxu0 0.0
    %4138 = vmatprep.subr.mxu0 0.0
    %4139 = vmatpush1.msra.mxu0 0.0
    %4140 = vmatprep.subr.mxu0 0.0
    %4141 = vmatpush1.msra.mxu0 0.0
    %4142 = vmatprep.subr.mxu0 0.0
    %4143 = vmatpush1.msra.mxu0 0.0
    %4144 = vmatprep.subr.mxu0 0.0
    %4145 = vmatpush1.msra.mxu0 0.0
    %4146 = vmatprep.subr.mxu0 0.0
    %4147 = vmatpush1.msra.mxu0 0.0
    %4148 = vmatprep.subr.mxu0 0.0
    %4149 = vmatpush1.msra.mxu0 0.0
    %4150 = vmatprep.subr.mxu0 0.0
    %4151 = vmatpush1.msra.mxu0 0.0
    %4152 = vmatprep.subr.mxu0 0.0
    %4153 = vmatpush1.msra.mxu0 0.0
    %4154 = vmatprep.subr.mxu0 0.0
    %4155 = vmatpush1.msra.mxu0 0.0
    %4156 = vmatprep.subr.mxu0 0.0
    %4157 = vmatpush1.msra.mxu0 0.0
    %4158 = vmatprep.subr.mxu0 0.0
    %4159 = vmatpush1.msra.mxu0 0.0
    %4160 = vmatprep.mubr.f32.mxu0 0.0
    %v4161 = vand.u32 %v149, 4294901760
    %4162 = vmatmul.mubr.f32.gmra.mrb[0].mxu0 %v4161
    %v4163 = vpop.f32.mrb[0].mxu0
    %v4164 = vadd.f32 %v3758, %v4163
    %v4165 = vpop.f32.mrb[0].mxu0
    %4166 = vmatprep.mubr.f32.mxu0 0.0
    %v4167 = vand.u32 %v152, 4294901760
    %4168 = vmatmul.mubr.f32.gmra.mrb[0].mxu0 %v4167
    %v4169 = vpop.f32.mrb[0].mxu0
    %v4170 = vadd.f32 %v3766, %v4169
    %v4171 = vpop.f32.mrb[0].mxu0
    %4172 = vmatprep.mubr.f32.mxu0 0.0
    %v4173 = vand.u32 %v155, 4294901760
    %4174 = vmatmul.mubr.f32.gmra.mrb[0].mxu0 %v4173
    %v4175 = vpop.f32.mrb[0].mxu0
    %v4176 = vadd.f32 %v3774, %v4175
    %v4177 = vpop.f32.mrb[0].mxu0
    %4178 = vmatprep.mubr.f32.mxu0 0.0
    %v4179 = vand.u32 %v158, 4294901760
    %4180 = vmatmul.mubr.f32.gmra.mrb[0].mxu0 %v4179
    %v4181 = vpop.f32.mrb[0].mxu0
    %v4182 = vadd.f32 %v3782, %v4181
    %v4183 = vpop.f32.mrb[0].mxu0
    %4184 = vmatprep.mubr.f32.mxu0 0.0
    %v4185 = vand.u32 %v161, 4294901760
    %4186 = vmatmul.mubr.f32.gmra.mrb[0].mxu0 %v4185
    %v4187 = vpop.f32.mrb[0].mxu0
    %v4188 = vadd.f32 %v3790, %v4187
    %v4189 = vpop.f32.mrb[0].mxu0
    %4190 = vmatprep.mubr.f32.mxu0 0.0
    %v4191 = vand.u32 %v164, 4294901760
    %4192 = vmatmul.mubr.f32.gmra.mrb[0].mxu0 %v4191
    %v4193 = vpop.f32.mrb[0].mxu0
    %v4194 = vadd.f32 %v3798, %v4193
    %v4195 = vpop.f32.mrb[0].mxu0
    %4196 = vmatprep.mubr.f32.mxu0 0.0
    %v4197 = vand.u32 %v167, 4294901760
    %4198 = vmatmul.mubr.f32.gmra.mrb[0].mxu0 %v4197
    %v4199 = vpop.f32.mrb[0].mxu0
    %v4200 = vadd.f32 %v3806, %v4199
    %v4201 = vpop.f32.mrb[0].mxu0
    %4202 = vmatprep.mubr.f32.mxu0 0.0
    %v4203 = vand.u32 %v170, 4294901760
    %4204 = vmatmul.mubr.f32.gmra.mrb[0].mxu0 %v4203
    %v4205 = vpop.f32.mrb[0].mxu0
    %v4206 = vadd.f32 %v3814, %v4205
    %v4207 = vpop.f32.mrb[0].mxu0
    %4208 = vmatprep.mubr.f32.mxu0 0.0
    %v4209 = vand.u32 %v173, 4294901760
    %4210 = vmatmul.mubr.f32.gmra.mrb[0].mxu0 %v4209
    %v4211 = vpop.f32.mrb[0].mxu0
    %v4212 = vadd.f32 %v3822, %v4211
    %v4213 = vpop.f32.mrb[0].mxu0
    %4214 = vmatprep.mubr.f32.mxu0 0.0
    %v4215 = vand.u32 %v176, 4294901760
    %4216 = vmatmul.mubr.f32.gmra.mrb[0].mxu0 %v4215
    %v4217 = vpop.f32.mrb[0].mxu0
    %v4218 = vadd.f32 %v3830, %v4217
    %v4219 = vpop.f32.mrb[0].mxu0
    %4220 = vmatprep.mubr.f32.mxu0 0.0
    %v4221 = vand.u32 %v179, 4294901760
    %4222 = vmatmul.mubr.f32.gmra.mrb[0].mxu0 %v4221
    %v4223 = vpop.f32.mrb[0].mxu0
    %v4224 = vadd.f32 %v3838, %v4223
    %v4225 = vpop.f32.mrb[0].mxu0
    %4226 = vmatprep.mubr.f32.mxu0 0.0
    %v4227 = vand.u32 %v182, 4294901760
    %4228 = vmatmul.mubr.f32.gmra.mrb[0].mxu0 %v4227
    %v4229 = vpop.f32.mrb[0].mxu0
    %v4230 = vadd.f32 %v3846, %v4229
    %v4231 = vpop.f32.mrb[0].mxu0
    %4232 = vmatprep.mubr.f32.mxu0 0.0
    %v4233 = vand.u32 %v185, 4294901760
    %4234 = vmatmul.mubr.f32.gmra.mrb[0].mxu0 %v4233
    %v4235 = vpop.f32.mrb[0].mxu0
    %v4236 = vadd.f32 %v3854, %v4235
    %v4237 = vpop.f32.mrb[0].mxu0
    %4238 = vmatprep.mubr.f32.mxu0 0.0
    %v4239 = vand.u32 %v188, 4294901760
    %4240 = vmatmul.mubr.f32.gmra.mrb[0].mxu0 %v4239
    %v4241 = vpop.f32.mrb[0].mxu0
    %v4242 = vadd.f32 %v3862, %v4241
    %v4243 = vpop.f32.mrb[0].mxu0
    %4244 = vmatprep.mubr.f32.mxu0 0.0
    %v4245 = vand.u32 %v191, 4294901760
    %4246 = vmatmul.mubr.f32.gmra.mrb[0].mxu0 %v4245
    %v4247 = vpop.f32.mrb[0].mxu0
    %v4248 = vadd.f32 %v3870, %v4247
    %v4249 = vpop.f32.mrb[0].mxu0
    %4250 = vmatprep.mubr.f32.mxu0 0.0
    %v4251 = vand.u32 %v194, 4294901760
    %4252 = vmatmul.mubr.f32.gmra.mrb[0].mxu0 %v4251
    %v4253 = vpop.f32.mrb[0].mxu0
    %v4254 = vadd.f32 %v3878, %v4253
    %v4255 = vpop.f32.mrb[0].mxu0
    %4256 = vmatprep.mubr.f32.mxu0 0.0
    %v4257 = vand.u32 %v197, 4294901760
    %4258 = vmatmul.mubr.f32.gmra.mrb[0].mxu0 %v4257
    %v4259 = vpop.f32.mrb[0].mxu0
    %v4260 = vadd.f32 %v3886, %v4259
    %v4261 = vpop.f32.mrb[0].mxu0
    %4262 = vmatprep.mubr.f32.mxu0 0.0
    %v4263 = vand.u32 %v200, 4294901760
    %4264 = vmatmul.mubr.f32.gmra.mrb[0].mxu0 %v4263
    %v4265 = vpop.f32.mrb[0].mxu0
    %v4266 = vadd.f32 %v3894, %v4265
    %v4267 = vpop.f32.mrb[0].mxu0
    %4268 = vmatprep.mubr.f32.mxu0 0.0
    %v4269 = vand.u32 %v203, 4294901760
    %4270 = vmatmul.mubr.f32.gmra.mrb[0].mxu0 %v4269
    %v4271 = vpop.f32.mrb[0].mxu0
    %v4272 = vadd.f32 %v3902, %v4271
    %v4273 = vpop.f32.mrb[0].mxu0
    %4274 = vmatprep.mubr.f32.mxu0 0.0
    %v4275 = vand.u32 %v206, 4294901760
    %4276 = vmatmul.mubr.f32.gmra.mrb[0].mxu0 %v4275
    %v4277 = vpop.f32.mrb[0].mxu0
    %v4278 = vadd.f32 %v3910, %v4277
    %v4279 = vpop.f32.mrb[0].mxu0
    %4280 = vmatprep.mubr.f32.mxu0 0.0
    %v4281 = vand.u32 %v209, 4294901760
    %4282 = vmatmul.mubr.f32.gmra.mrb[0].mxu0 %v4281
    %v4283 = vpop.f32.mrb[0].mxu0
    %v4284 = vadd.f32 %v3918, %v4283
    %v4285 = vpop.f32.mrb[0].mxu0
    %4286 = vmatprep.mubr.f32.mxu0 0.0
    %v4287 = vand.u32 %v212, 4294901760
    %4288 = vmatmul.mubr.f32.gmra.mrb[0].mxu0 %v4287
    %v4289 = vpop.f32.mrb[0].mxu0
    %v4290 = vadd.f32 %v3926, %v4289
    %v4291 = vpop.f32.mrb[0].mxu0
    %4292 = vmatprep.mubr.f32.mxu0 0.0
    %v4293 = vand.u32 %v215, 4294901760
    %4294 = vmatmul.mubr.f32.gmra.mrb[0].mxu0 %v4293
    %v4295 = vpop.f32.mrb[0].mxu0
    %v4296 = vadd.f32 %v3934, %v4295
    %v4297 = vpop.f32.mrb[0].mxu0
    %4298 = vmatprep.mubr.f32.mxu0 0.0
    %v4299 = vand.u32 %v218, 4294901760
    %4300 = vmatmul.mubr.f32.gmra.mrb[0].mxu0 %v4299
    %v4301 = vpop.f32.mrb[0].mxu0
    %v4302 = vadd.f32 %v3942, %v4301
    %v4303 = vpop.f32.mrb[0].mxu0
    %4304 = vmatprep.mubr.f32.mxu0 0.0
    %v4305 = vand.u32 %v221, 4294901760
    %4306 = vmatmul.mubr.f32.gmra.mrb[0].mxu0 %v4305
    %v4307 = vpop.f32.mrb[0].mxu0
    %v4308 = vadd.f32 %v3950, %v4307
    %v4309 = vpop.f32.mrb[0].mxu0
    %4310 = vmatprep.mubr.f32.mxu0 0.0
    %v4311 = vand.u32 %v224, 4294901760
    %4312 = vmatmul.mubr.f32.gmra.mrb[0].mxu0 %v4311
    %v4313 = vpop.f32.mrb[0].mxu0
    %v4314 = vadd.f32 %v3958, %v4313
    %v4315 = vpop.f32.mrb[0].mxu0
    %4316 = vmatprep.mubr.f32.mxu0 0.0
    %v4317 = vand.u32 %v227, 4294901760
    %4318 = vmatmul.mubr.f32.gmra.mrb[0].mxu0 %v4317
    %v4319 = vpop.f32.mrb[0].mxu0
    %v4320 = vadd.f32 %v3966, %v4319
    %v4321 = vpop.f32.mrb[0].mxu0
    %4322 = vmatprep.mubr.f32.mxu0 0.0
    %v4323 = vand.u32 %v230, 4294901760
    %4324 = vmatmul.mubr.f32.gmra.mrb[0].mxu0 %v4323
    %v4325 = vpop.f32.mrb[0].mxu0
    %v4326 = vadd.f32 %v3974, %v4325
    %v4327 = vpop.f32.mrb[0].mxu0
    %4328 = vmatprep.mubr.f32.mxu0 0.0
    %v4329 = vand.u32 %v233, 4294901760
    %4330 = vmatmul.mubr.f32.gmra.mrb[0].mxu0 %v4329
    %v4331 = vpop.f32.mrb[0].mxu0
    %v4332 = vadd.f32 %v3982, %v4331
    %v4333 = vpop.f32.mrb[0].mxu0
    %4334 = vmatprep.mubr.f32.mxu0 0.0
    %v4335 = vand.u32 %v236, 4294901760
    %4336 = vmatmul.mubr.f32.gmra.mrb[0].mxu0 %v4335
    %v4337 = vpop.f32.mrb[0].mxu0
    %v4338 = vadd.f32 %v3990, %v4337
    %v4339 = vpop.f32.mrb[0].mxu0
    %4340 = vmatprep.mubr.f32.mxu0 0.0
    %v4341 = vand.u32 %v239, 4294901760
    %4342 = vmatmul.mubr.f32.gmra.mrb[0].mxu0 %v4341
    %v4343 = vpop.f32.mrb[0].mxu0
    %v4344 = vadd.f32 %v3998, %v4343
    %v4345 = vpop.f32.mrb[0].mxu0
    %4346 = vmatprep.mubr.f32.mxu0 0.0
    %v4347 = vand.u32 %v242, 4294901760
    %4348 = vmatmul.mubr.f32.gmra.mrb[0].mxu0 %v4347
    %v4349 = vpop.f32.mrb[0].mxu0
    %v4350 = vadd.f32 %v4006, %v4349
    %v4351 = vpop.f32.mrb[0].mxu0
    %4352 = vmatprep.mubr.f32.mxu0 0.0
    %v4353 = vand.u32 %v245, 4294901760
    %4354 = vmatmul.mubr.f32.gmra.mrb[0].mxu0 %v4353
    %v4355 = vpop.f32.mrb[0].mxu0
    %v4356 = vadd.f32 %v4014, %v4355
    %v4357 = vpop.f32.mrb[0].mxu0
    %4358 = vmatprep.mubr.f32.mxu0 0.0
    %v4359 = vand.u32 %v248, 4294901760
    %4360 = vmatmul.mubr.f32.gmra.mrb[0].mxu0 %v4359
    %v4361 = vpop.f32.mrb[0].mxu0
    %v4362 = vadd.f32 %v4022, %v4361
    %v4363 = vpop.f32.mrb[0].mxu0
    %4364 = vmatprep.mubr.f32.mxu0 0.0
    %v4365 = vand.u32 %v251, 4294901760
    %4366 = vmatmul.mubr.f32.gmra.mrb[0].mxu0 %v4365
    %v4367 = vpop.f32.mrb[0].mxu0
    %v4368 = vadd.f32 %v4030, %v4367
    %v4369 = vpop.f32.mrb[0].mxu0
    %4370 = vmatprep.mubr.f32.mxu0 0.0
    %v4371 = vand.u32 %v254, 4294901760
    %4372 = vmatmul.mubr.f32.gmra.mrb[0].mxu0 %v4371
    %v4373 = vpop.f32.mrb[0].mxu0
    %v4374 = vadd.f32 %v4038, %v4373
    %v4375 = vpop.f32.mrb[0].mxu0
    %4376 = vmatprep.mubr.f32.mxu0 0.0
    %v4377 = vand.u32 %v257, 4294901760
    %4378 = vmatmul.mubr.f32.gmra.mrb[0].mxu0 %v4377
    %v4379 = vpop.f32.mrb[0].mxu0
    %v4380 = vadd.f32 %v4046, %v4379
    %v4381 = vpop.f32.mrb[0].mxu0
    %4382 = vmatprep.mubr.f32.mxu0 0.0
    %v4383 = vand.u32 %v260, 4294901760
    %4384 = vmatmul.mubr.f32.gmra.mrb[0].mxu0 %v4383
    %v4385 = vpop.f32.mrb[0].mxu0
    %v4386 = vadd.f32 %v4054, %v4385
    %v4387 = vpop.f32.mrb[0].mxu0
    %4388 = vdwg.mxu0
    %4389 = vmatprep.subr.mxu0 0.0
    %v4390 = vand.u32 %v2486, 4294901760
    %4391 = vmatpush1.msra.mxu0 %v4390
    %4392 = vmatprep.subr.mxu0 0.0
    %v4393 = vand.u32 %v2487, 4294901760
    %4394 = vmatpush1.msra.mxu0 %v4393
    %4395 = vmatprep.subr.mxu0 0.0
    %v4396 = vand.u32 %v2488, 4294901760
    %4397 = vmatpush1.msra.mxu0 %v4396
    %4398 = vmatprep.subr.mxu0 0.0
    %v4399 = vand.u32 %v2489, 4294901760
    %4400 = vmatpush1.msra.mxu0 %v4399
    %4401 = vmatprep.subr.mxu0 0.0
    %v4402 = vand.u32 %v2490, 4294901760
    %4403 = vmatpush1.msra.mxu0 %v4402
    %4404 = vmatprep.subr.mxu0 0.0
    %v4405 = vand.u32 %v2491, 4294901760
    %4406 = vmatpush1.msra.mxu0 %v4405
    %4407 = vmatprep.subr.mxu0 0.0
    %v4408 = vand.u32 %v2492, 4294901760
    %4409 = vmatpush1.msra.mxu0 %v4408
    %4410 = vmatprep.subr.mxu0 0.0
    %v4411 = vand.u32 %v2493, 4294901760
    %4412 = vmatpush1.msra.mxu0 %v4411
    %4413 = vmatprep.subr.mxu0 0.0
    %v4414 = vand.u32 %v2494, 4294901760
    %4415 = vmatpush1.msra.mxu0 %v4414
    %4416 = vmatprep.subr.mxu0 0.0
    %v4417 = vand.u32 %v2495, 4294901760
    %4418 = vmatpush1.msra.mxu0 %v4417
    %4419 = vmatprep.subr.mxu0 0.0
    %v4420 = vand.u32 %v2496, 4294901760
    %4421 = vmatpush1.msra.mxu0 %v4420
    %4422 = vmatprep.subr.mxu0 0.0
    %v4423 = vand.u32 %v2497, 4294901760
    %4424 = vmatpush1.msra.mxu0 %v4423
    %4425 = vmatprep.subr.mxu0 0.0
    %v4426 = vand.u32 %v2500, 4294901760
    %4427 = vmatpush1.msra.mxu0 %v4426
    %4428 = vmatprep.subr.mxu0 0.0
    %4429 = vmatpush1.msra.mxu0 0.0
    %4430 = vmatprep.subr.mxu0 0.0
    %4431 = vmatpush1.msra.mxu0 0.0
    %4432 = vmatprep.subr.mxu0 0.0
    %4433 = vmatpush1.msra.mxu0 0.0
    %4434 = vmatprep.subr.mxu0 0.0
    %4435 = vmatpush1.msra.mxu0 0.0
    %4436 = vmatprep.subr.mxu0 0.0
    %4437 = vmatpush1.msra.mxu0 0.0
    %4438 = vmatprep.subr.mxu0 0.0
    %4439 = vmatpush1.msra.mxu0 0.0
    %4440 = vmatprep.subr.mxu0 0.0
    %4441 = vmatpush1.msra.mxu0 0.0
    %4442 = vmatprep.subr.mxu0 0.0
    %4443 = vmatpush1.msra.mxu0 0.0
    %4444 = vmatprep.subr.mxu0 0.0
    %4445 = vmatpush1.msra.mxu0 0.0
    %4446 = vmatprep.subr.mxu0 0.0
    %4447 = vmatpush1.msra.mxu0 0.0
    %4448 = vmatprep.subr.mxu0 0.0
    %4449 = vmatpush1.msra.mxu0 0.0
    %4450 = vmatprep.subr.mxu0 0.0
    %4451 = vmatpush1.msra.mxu0 0.0
    %4452 = vmatprep.subr.mxu0 0.0
    %4453 = vmatpush1.msra.mxu0 0.0
    %4454 = vmatprep.subr.mxu0 0.0
    %4455 = vmatpush1.msra.mxu0 0.0
    %4456 = vmatprep.subr.mxu0 0.0
    %4457 = vmatpush1.msra.mxu0 0.0
    %4458 = vmatprep.subr.mxu0 0.0
    %4459 = vmatpush1.msra.mxu0 0.0
    %4460 = vmatprep.subr.mxu0 0.0
    %4461 = vmatpush1.msra.mxu0 0.0
    %4462 = vmatprep.subr.mxu0 0.0
    %4463 = vmatpush1.msra.mxu0 0.0
    %4464 = vmatprep.subr.mxu0 0.0
    %4465 = vmatpush1.msra.mxu0 0.0
    %4466 = vmatprep.mubr.f32.mxu0 0.0
    %v4467 = vand.u32 %v149, 4294901760
    %4468 = vmatmul.mubr.f32.gmra.mrb[0].mxu0 %v4467
    %v4469 = vpop.f32.mrb[0].mxu0
    %v4470 = vadd.f32 %v4164, %v4469
    %v4471 = vpop.f32.mrb[0].mxu0
    %4472 = vmatprep.mubr.f32.mxu0 0.0
    %v4473 = vand.u32 %v152, 4294901760
    %4474 = vmatmul.mubr.f32.gmra.mrb[0].mxu0 %v4473
    %v4475 = vpop.f32.mrb[0].mxu0
    %v4476 = vadd.f32 %v4170, %v4475
    %v4477 = vpop.f32.mrb[0].mxu0
    %4478 = vmatprep.mubr.f32.mxu0 0.0
    %v4479 = vand.u32 %v155, 4294901760
    %4480 = vmatmul.mubr.f32.gmra.mrb[0].mxu0 %v4479
    %v4481 = vpop.f32.mrb[0].mxu0
    %v4482 = vadd.f32 %v4176, %v4481
    %v4483 = vpop.f32.mrb[0].mxu0
    %4484 = vmatprep.mubr.f32.mxu0 0.0
    %v4485 = vand.u32 %v158, 4294901760
    %4486 = vmatmul.mubr.f32.gmra.mrb[0].mxu0 %v4485
    %v4487 = vpop.f32.mrb[0].mxu0
    %v4488 = vadd.f32 %v4182, %v4487
    %v4489 = vpop.f32.mrb[0].mxu0
    %4490 = vmatprep.mubr.f32.mxu0 0.0
    %v4491 = vand.u32 %v161, 4294901760
    %4492 = vmatmul.mubr.f32.gmra.mrb[0].mxu0 %v4491
    %v4493 = vpop.f32.mrb[0].mxu0
    %v4494 = vadd.f32 %v4188, %v4493
    %v4495 = vpop.f32.mrb[0].mxu0
    %4496 = vmatprep.mubr.f32.mxu0 0.0
    %v4497 = vand.u32 %v164, 4294901760
    %4498 = vmatmul.mubr.f32.gmra.mrb[0].mxu0 %v4497
    %v4499 = vpop.f32.mrb[0].mxu0
    %v4500 = vadd.f32 %v4194, %v4499
    %v4501 = vpop.f32.mrb[0].mxu0
    %4502 = vmatprep.mubr.f32.mxu0 0.0
    %v4503 = vand.u32 %v167, 4294901760
    %4504 = vmatmul.mubr.f32.gmra.mrb[0].mxu0 %v4503
    %v4505 = vpop.f32.mrb[0].mxu0
    %v4506 = vadd.f32 %v4200, %v4505
    %v4507 = vpop.f32.mrb[0].mxu0
    %4508 = vmatprep.mubr.f32.mxu0 0.0
    %v4509 = vand.u32 %v170, 4294901760
    %4510 = vmatmul.mubr.f32.gmra.mrb[0].mxu0 %v4509
    %v4511 = vpop.f32.mrb[0].mxu0
    %v4512 = vadd.f32 %v4206, %v4511
    %v4513 = vpop.f32.mrb[0].mxu0
    %4514 = vmatprep.mubr.f32.mxu0 0.0
    %v4515 = vand.u32 %v173, 4294901760
    %4516 = vmatmul.mubr.f32.gmra.mrb[0].mxu0 %v4515
    %v4517 = vpop.f32.mrb[0].mxu0
    %v4518 = vadd.f32 %v4212, %v4517
    %v4519 = vpop.f32.mrb[0].mxu0
    %4520 = vmatprep.mubr.f32.mxu0 0.0
    %v4521 = vand.u32 %v176, 4294901760
    %4522 = vmatmul.mubr.f32.gmra.mrb[0].mxu0 %v4521
    %v4523 = vpop.f32.mrb[0].mxu0
    %v4524 = vadd.f32 %v4218, %v4523
    %v4525 = vpop.f32.mrb[0].mxu0
    %4526 = vmatprep.mubr.f32.mxu0 0.0
    %v4527 = vand.u32 %v179, 4294901760
    %4528 = vmatmul.mubr.f32.gmra.mrb[0].mxu0 %v4527
    %v4529 = vpop.f32.mrb[0].mxu0
    %v4530 = vadd.f32 %v4224, %v4529
    %v4531 = vpop.f32.mrb[0].mxu0
    %4532 = vmatprep.mubr.f32.mxu0 0.0
    %v4533 = vand.u32 %v182, 4294901760
    %4534 = vmatmul.mubr.f32.gmra.mrb[0].mxu0 %v4533
    %v4535 = vpop.f32.mrb[0].mxu0
    %v4536 = vadd.f32 %v4230, %v4535
    %v4537 = vpop.f32.mrb[0].mxu0
    %4538 = vmatprep.mubr.f32.mxu0 0.0
    %v4539 = vand.u32 %v185, 4294901760
    %4540 = vmatmul.mubr.f32.gmra.mrb[0].mxu0 %v4539
    %v4541 = vpop.f32.mrb[0].mxu0
    %v4542 = vadd.f32 %v4236, %v4541
    %v4543 = vpop.f32.mrb[0].mxu0
    %4544 = vmatprep.mubr.f32.mxu0 0.0
    %v4545 = vand.u32 %v188, 4294901760
    %4546 = vmatmul.mubr.f32.gmra.mrb[0].mxu0 %v4545
    %v4547 = vpop.f32.mrb[0].mxu0
    %v4548 = vadd.f32 %v4242, %v4547
    %v4549 = vpop.f32.mrb[0].mxu0
    %4550 = vmatprep.mubr.f32.mxu0 0.0
    %v4551 = vand.u32 %v191, 4294901760
    %4552 = vmatmul.mubr.f32.gmra.mrb[0].mxu0 %v4551
    %v4553 = vpop.f32.mrb[0].mxu0
    %v4554 = vadd.f32 %v4248, %v4553
    %v4555 = vpop.f32.mrb[0].mxu0
    %4556 = vmatprep.mubr.f32.mxu0 0.0
    %v4557 = vand.u32 %v194, 4294901760
    %4558 = vmatmul.mubr.f32.gmra.mrb[0].mxu0 %v4557
    %v4559 = vpop.f32.mrb[0].mxu0
    %v4560 = vadd.f32 %v4254, %v4559
    %v4561 = vpop.f32.mrb[0].mxu0
    %4562 = vmatprep.mubr.f32.mxu0 0.0
    %v4563 = vand.u32 %v197, 4294901760
    %4564 = vmatmul.mubr.f32.gmra.mrb[0].mxu0 %v4563
    %v4565 = vpop.f32.mrb[0].mxu0
    %v4566 = vadd.f32 %v4260, %v4565
    %v4567 = vpop.f32.mrb[0].mxu0
    %4568 = vmatprep.mubr.f32.mxu0 0.0
    %v4569 = vand.u32 %v200, 4294901760
    %4570 = vmatmul.mubr.f32.gmra.mrb[0].mxu0 %v4569
    %v4571 = vpop.f32.mrb[0].mxu0
    %v4572 = vadd.f32 %v4266, %v4571
    %v4573 = vpop.f32.mrb[0].mxu0
    %4574 = vmatprep.mubr.f32.mxu0 0.0
    %v4575 = vand.u32 %v203, 4294901760
    %4576 = vmatmul.mubr.f32.gmra.mrb[0].mxu0 %v4575
    %v4577 = vpop.f32.mrb[0].mxu0
    %v4578 = vadd.f32 %v4272, %v4577
    %v4579 = vpop.f32.mrb[0].mxu0
    %4580 = vmatprep.mubr.f32.mxu0 0.0
    %v4581 = vand.u32 %v206, 4294901760
    %4582 = vmatmul.mubr.f32.gmra.mrb[0].mxu0 %v4581
    %v4583 = vpop.f32.mrb[0].mxu0
    %v4584 = vadd.f32 %v4278, %v4583
    %v4585 = vpop.f32.mrb[0].mxu0
    %4586 = vmatprep.mubr.f32.mxu0 0.0
    %v4587 = vand.u32 %v209, 4294901760
    %4588 = vmatmul.mubr.f32.gmra.mrb[0].mxu0 %v4587
    %v4589 = vpop.f32.mrb[0].mxu0
    %v4590 = vadd.f32 %v4284, %v4589
    %v4591 = vpop.f32.mrb[0].mxu0
    %4592 = vmatprep.mubr.f32.mxu0 0.0
    %v4593 = vand.u32 %v212, 4294901760
    %4594 = vmatmul.mubr.f32.gmra.mrb[0].mxu0 %v4593
    %v4595 = vpop.f32.mrb[0].mxu0
    %v4596 = vadd.f32 %v4290, %v4595
    %v4597 = vpop.f32.mrb[0].mxu0
    %4598 = vmatprep.mubr.f32.mxu0 0.0
    %v4599 = vand.u32 %v215, 4294901760
    %4600 = vmatmul.mubr.f32.gmra.mrb[0].mxu0 %v4599
    %v4601 = vpop.f32.mrb[0].mxu0
    %v4602 = vadd.f32 %v4296, %v4601
    %v4603 = vpop.f32.mrb[0].mxu0
    %4604 = vmatprep.mubr.f32.mxu0 0.0
    %v4605 = vand.u32 %v218, 4294901760
    %4606 = vmatmul.mubr.f32.gmra.mrb[0].mxu0 %v4605
    %v4607 = vpop.f32.mrb[0].mxu0
    %v4608 = vadd.f32 %v4302, %v4607
    %v4609 = vpop.f32.mrb[0].mxu0
    %4610 = vmatprep.mubr.f32.mxu0 0.0
    %v4611 = vand.u32 %v221, 4294901760
    %4612 = vmatmul.mubr.f32.gmra.mrb[0].mxu0 %v4611
    %v4613 = vpop.f32.mrb[0].mxu0
    %v4614 = vadd.f32 %v4308, %v4613
    %v4615 = vpop.f32.mrb[0].mxu0
    %4616 = vmatprep.mubr.f32.mxu0 0.0
    %v4617 = vand.u32 %v224, 4294901760
    %4618 = vmatmul.mubr.f32.gmra.mrb[0].mxu0 %v4617
    %v4619 = vpop.f32.mrb[0].mxu0
    %v4620 = vadd.f32 %v4314, %v4619
    %v4621 = vpop.f32.mrb[0].mxu0
    %4622 = vmatprep.mubr.f32.mxu0 0.0
    %v4623 = vand.u32 %v227, 4294901760
    %4624 = vmatmul.mubr.f32.gmra.mrb[0].mxu0 %v4623
    %v4625 = vpop.f32.mrb[0].mxu0
    %v4626 = vadd.f32 %v4320, %v4625
    %v4627 = vpop.f32.mrb[0].mxu0
    %4628 = vmatprep.mubr.f32.mxu0 0.0
    %v4629 = vand.u32 %v230, 4294901760
    %4630 = vmatmul.mubr.f32.gmra.mrb[0].mxu0 %v4629
    %v4631 = vpop.f32.mrb[0].mxu0
    %v4632 = vadd.f32 %v4326, %v4631
    %v4633 = vpop.f32.mrb[0].mxu0
    %4634 = vmatprep.mubr.f32.mxu0 0.0
    %v4635 = vand.u32 %v233, 4294901760
    %4636 = vmatmul.mubr.f32.gmra.mrb[0].mxu0 %v4635
    %v4637 = vpop.f32.mrb[0].mxu0
    %v4638 = vadd.f32 %v4332, %v4637
    %v4639 = vpop.f32.mrb[0].mxu0
    %4640 = vmatprep.mubr.f32.mxu0 0.0
    %v4641 = vand.u32 %v236, 4294901760
    %4642 = vmatmul.mubr.f32.gmra.mrb[0].mxu0 %v4641
    %v4643 = vpop.f32.mrb[0].mxu0
    %v4644 = vadd.f32 %v4338, %v4643
    %v4645 = vpop.f32.mrb[0].mxu0
    %4646 = vmatprep.mubr.f32.mxu0 0.0
    %v4647 = vand.u32 %v239, 4294901760
    %4648 = vmatmul.mubr.f32.gmra.mrb[0].mxu0 %v4647
    %v4649 = vpop.f32.mrb[0].mxu0
    %v4650 = vadd.f32 %v4344, %v4649
    %v4651 = vpop.f32.mrb[0].mxu0
    %4652 = vmatprep.mubr.f32.mxu0 0.0
    %v4653 = vand.u32 %v242, 4294901760
    %4654 = vmatmul.mubr.f32.gmra.mrb[0].mxu0 %v4653
    %v4655 = vpop.f32.mrb[0].mxu0
    %v4656 = vadd.f32 %v4350, %v4655
    %v4657 = vpop.f32.mrb[0].mxu0
    %4658 = vmatprep.mubr.f32.mxu0 0.0
    %v4659 = vand.u32 %v245, 4294901760
    %4660 = vmatmul.mubr.f32.gmra.mrb[0].mxu0 %v4659
    %v4661 = vpop.f32.mrb[0].mxu0
    %v4662 = vadd.f32 %v4356, %v4661
    %v4663 = vpop.f32.mrb[0].mxu0
    %4664 = vmatprep.mubr.f32.mxu0 0.0
    %v4665 = vand.u32 %v248, 4294901760
    %4666 = vmatmul.mubr.f32.gmra.mrb[0].mxu0 %v4665
    %v4667 = vpop.f32.mrb[0].mxu0
    %v4668 = vadd.f32 %v4362, %v4667
    %v4669 = vpop.f32.mrb[0].mxu0
    %4670 = vmatprep.mubr.f32.mxu0 0.0
    %v4671 = vand.u32 %v251, 4294901760
    %4672 = vmatmul.mubr.f32.gmra.mrb[0].mxu0 %v4671
    %v4673 = vpop.f32.mrb[0].mxu0
    %v4674 = vadd.f32 %v4368, %v4673
    %v4675 = vpop.f32.mrb[0].mxu0
    %4676 = vmatprep.mubr.f32.mxu0 0.0
    %v4677 = vand.u32 %v254, 4294901760
    %4678 = vmatmul.mubr.f32.gmra.mrb[0].mxu0 %v4677
    %v4679 = vpop.f32.mrb[0].mxu0
    %v4680 = vadd.f32 %v4374, %v4679
    %v4681 = vpop.f32.mrb[0].mxu0
    %4682 = vmatprep.mubr.f32.mxu0 0.0
    %v4683 = vand.u32 %v257, 4294901760
    %4684 = vmatmul.mubr.f32.gmra.mrb[0].mxu0 %v4683
    %v4685 = vpop.f32.mrb[0].mxu0
    %v4686 = vadd.f32 %v4380, %v4685
    %v4687 = vpop.f32.mrb[0].mxu0
    %4688 = vmatprep.mubr.f32.mxu0 0.0
    %v4689 = vand.u32 %v260, 4294901760
    %4690 = vmatmul.mubr.f32.gmra.mrb[0].mxu0 %v4689
    %v4691 = vpop.f32.mrb[0].mxu0
    %v4692 = vadd.f32 %v4386, %v4691
    %v4693 = vpop.f32.mrb[0].mxu0
    %4694 = vdwg.mxu0
    %s4695 = sld [smem:[#allocation6]]
    %v4696 = vstv %s4695
    %s4697 = sld [smem:[#allocation6 + $0x1]]
    %v4698 = vstv %s4697
    %s4699 = sld [smem:[#allocation6 + $0x2]]
    %v4700 = vstv %s4699
    %s4701 = sld [smem:[#allocation6 + $0x3]]
    %v4702 = vstv %s4701
    %s4703 = sld [smem:[#allocation5]]
    %v4704 = vstv %s4703
    %v4705 = vmul.f32 %v4704, %v2234
    %v4706 = vmul.f32 %v4704, %v2240
    %v4707 = vmul.f32 %v4704, %v2246
    %v4708 = vmul.f32 %v4704, %v2252
    %v4709 = vmul.f32 %v4704, %v2258
    %v4710 = vadd.f32 %v4696, %v4705
    %v4711 = vadd.f32 %v4696, %v4706
    %v4712 = vadd.f32 %v4696, %v4707
    %v4713 = vadd.f32 %v4696, %v4708
    %v4714 = vadd.f32 %v4696, %v4709
    %s4715 = sld [smem:[#allocation5 + $0x40]]
    %v4716 = vstv %s4715
    %v4717 = vmul.f32 %v4716, %v2234
    %v4718 = vmul.f32 %v4716, %v2240
    %v4719 = vmul.f32 %v4716, %v2246
    %v4720 = vmul.f32 %v4716, %v2252
    %v4721 = vmul.f32 %v4716, %v2258
    %v4722 = vadd.f32 %v4698, %v4717
    %v4723 = vadd.f32 %v4698, %v4718
    %v4724 = vadd.f32 %v4698, %v4719
    %v4725 = vadd.f32 %v4698, %v4720
    %v4726 = vadd.f32 %v4698, %v4721
    %s4727 = sld [smem:[#allocation5 + $0x80]]
    %v4728 = vstv %s4727
    %v4729 = vmul.f32 %v4728, %v2234
    %v4730 = vmul.f32 %v4728, %v2240
    %v4731 = vmul.f32 %v4728, %v2246
    %v4732 = vmul.f32 %v4728, %v2252
    %v4733 = vmul.f32 %v4728, %v2258
    %v4734 = vadd.f32 %v4700, %v4729
    %v4735 = vadd.f32 %v4700, %v4730
    %v4736 = vadd.f32 %v4700, %v4731
    %v4737 = vadd.f32 %v4700, %v4732
    %v4738 = vadd.f32 %v4700, %v4733
    %s4739 = sld [smem:[#allocation5 + $0xc0]]
    %v4740 = vstv %s4739
    %v4741 = vmul.f32 %v4740, %v2234
    %v4742 = vmul.f32 %v4740, %v2240
    %v4743 = vmul.f32 %v4740, %v2246
    %v4744 = vmul.f32 %v4740, %v2252
    %v4745 = vmul.f32 %v4740, %v2258
    %v4746 = vadd.f32 %v4702, %v4741
    %v4747 = vadd.f32 %v4702, %v4742
    %v4748 = vadd.f32 %v4702, %v4743
    %v4749 = vadd.f32 %v4702, %v4744
    %v4750 = vadd.f32 %v4702, %v4745
    %s4751 = sld [smem:[#allocation5 + $0x1]]
    %v4752 = vstv %s4751
    %v4753 = vmul.f32 %v4752, %v4470
    %v4754 = vmul.f32 %v4752, %v4476
    %v4755 = vmul.f32 %v4752, %v4482
    %v4756 = vmul.f32 %v4752, %v4488
    %v4757 = vmul.f32 %v4752, %v4494
    %v4758 = vadd.f32 %v4710, %v4753
    %v4759 = vadd.f32 %v4711, %v4754
    %v4760 = vadd.f32 %v4712, %v4755
    %v4761 = vadd.f32 %v4713, %v4756
    %v4762 = vadd.f32 %v4714, %v4757
    %s4763 = sld [smem:[#allocation5 + $0x41]]
    %v4764 = vstv %s4763
    %v4765 = vmul.f32 %v4764, %v4470
    %v4766 = vmul.f32 %v4764, %v4476
    %v4767 = vmul.f32 %v4764, %v4482
    %v4768 = vmul.f32 %v4764, %v4488
    %v4769 = vmul.f32 %v4764, %v4494
    %v4770 = vadd.f32 %v4722, %v4765
    %v4771 = vadd.f32 %v4723, %v4766
    %v4772 = vadd.f32 %v4724, %v4767
    %v4773 = vadd.f32 %v4725, %v4768
    %v4774 = vadd.f32 %v4726, %v4769
    %s4775 = sld [smem:[#allocation5 + $0x81]]
    %v4776 = vstv %s4775
    %v4777 = vmul.f32 %v4776, %v4470
    %v4778 = vmul.f32 %v4776, %v4476
    %v4779 = vmul.f32 %v4776, %v4482
    %v4780 = vmul.f32 %v4776, %v4488
    %v4781 = vmul.f32 %v4776, %v4494
    %v4782 = vadd.f32 %v4734, %v4777
    %v4783 = vadd.f32 %v4735, %v4778
    %v4784 = vadd.f32 %v4736, %v4779
    %v4785 = vadd.f32 %v4737, %v4780
    %v4786 = vadd.f32 %v4738, %v4781
    %s4787 = sld [smem:[#allocation5 + $0xc1]]
    %v4788 = vstv %s4787
    %v4789 = vmul.f32 %v4788, %v4470
    %v4790 = vmul.f32 %v4788, %v4476
    %v4791 = vmul.f32 %v4788, %v4482
    %v4792 = vmul.f32 %v4788, %v4488
    %v4793 = vmul.f32 %v4788, %v4494
    %v4794 = vadd.f32 %v4746, %v4789
    %v4795 = vadd.f32 %v4747, %v4790
    %v4796 = vadd.f32 %v4748, %v4791
    %v4797 = vadd.f32 %v4749, %v4792
    %v4798 = vadd.f32 %v4750, %v4793
    %s4799 = sld [smem:[#allocation5 + $0x2]]
    %v4800 = vstv %s4799
    %v4801 = vmul.f32 %v4800, %v2234
    %v4802 = vmul.f32 %v4800, %v2240
    %v4803 = vmul.f32 %v4800, %v2246
    %v4804 = vmul.f32 %v4800, %v2252
    %v4805 = vmul.f32 %v4800, %v2258
    %vm4811 = vcmask 1046528
    %v4812 = vrot.slane %v4801, 1
    %v4813 = vrot.slane %v4802, 1
    %v4814 = vsel %vm4811, %v4812, %v4813
    %v4815 = vrot.slane %v4803, 1
    %v4816 = vsel %vm4811, %v4813, %v4815
    %v4817 = vrot.slane %v4804, 1
    %v4818 = vsel %vm4811, %v4815, %v4817
    %v4819 = vrot.slane %v4805, 1
    %v4820 = vsel %vm4811, %v4817, %v4819
    %v4826 = vadd.f32 %v4758, %v4814
    %v4827 = vadd.f32 %v4759, %v4816
    %v4828 = vadd.f32 %v4760, %v4818
    %v4829 = vadd.f32 %v4761, %v4820
    %v4830 = vadd.f32 %v4762, %v4819
    %s4831 = sld [smem:[#allocation5 + $0x42]]
    %v4832 = vstv %s4831
    %v4833 = vmul.f32 %v4832, %v2234
    %v4834 = vmul.f32 %v4832, %v2240
    %v4835 = vmul.f32 %v4832, %v2246
    %v4836 = vmul.f32 %v4832, %v2252
    %v4837 = vmul.f32 %v4832, %v2258
    %v4843 = vrot.slane %v4833, 1
    %v4844 = vrot.slane %v4834, 1
    %v4845 = vsel %vm4811, %v4843, %v4844
    %v4846 = vrot.slane %v4835, 1
    %v4847 = vsel %vm4811, %v4844, %v4846
    %v4848 = vrot.slane %v4836, 1
    %v4849 = vsel %vm4811, %v4846, %v4848
    %v4850 = vrot.slane %v4837, 1
    %v4851 = vsel %vm4811, %v4848, %v4850
    %v4857 = vadd.f32 %v4770, %v4845
    %v4858 = vadd.f32 %v4771, %v4847
    %v4859 = vadd.f32 %v4772, %v4849
    %v4860 = vadd.f32 %v4773, %v4851
    %v4861 = vadd.f32 %v4774, %v4850
    %s4862 = sld [smem:[#allocation5 + $0x82]]
    %v4863 = vstv %s4862
    %v4864 = vmul.f32 %v4863, %v2234
    %v4865 = vmul.f32 %v4863, %v2240
    %v4866 = vmul.f32 %v4863, %v2246
    %v4867 = vmul.f32 %v4863, %v2252
    %v4868 = vmul.f32 %v4863, %v2258
    %v4874 = vrot.slane %v4864, 1
    %v4875 = vrot.slane %v4865, 1
    %v4876 = vsel %vm4811, %v4874, %v4875
    %v4877 = vrot.slane %v4866, 1
    %v4878 = vsel %vm4811, %v4875, %v4877
    %v4879 = vrot.slane %v4867, 1
    %v4880 = vsel %vm4811, %v4877, %v4879
    %v4881 = vrot.slane %v4868, 1
    %v4882 = vsel %vm4811, %v4879, %v4881
    %v4888 = vadd.f32 %v4782, %v4876
    %v4889 = vadd.f32 %v4783, %v4878
    %v4890 = vadd.f32 %v4784, %v4880
    %v4891 = vadd.f32 %v4785, %v4882
    %v4892 = vadd.f32 %v4786, %v4881
    %s4893 = sld [smem:[#allocation5 + $0xc2]]
    %v4894 = vstv %s4893
    %v4895 = vmul.f32 %v4894, %v2234
    %v4896 = vmul.f32 %v4894, %v2240
    %v4897 = vmul.f32 %v4894, %v2246
    %v4898 = vmul.f32 %v4894, %v2252
    %v4899 = vmul.f32 %v4894, %v2258
    %v4905 = vrot.slane %v4895, 1
    %v4906 = vrot.slane %v4896, 1
    %v4907 = vsel %vm4811, %v4905, %v4906
    %v4908 = vrot.slane %v4897, 1
    %v4909 = vsel %vm4811, %v4906, %v4908
    %v4910 = vrot.slane %v4898, 1
    %v4911 = vsel %vm4811, %v4908, %v4910
    %v4912 = vrot.slane %v4899, 1
    %v4913 = vsel %vm4811, %v4910, %v4912
    %v4919 = vadd.f32 %v4794, %v4907
    %v4920 = vadd.f32 %v4795, %v4909
    %v4921 = vadd.f32 %v4796, %v4911
    %v4922 = vadd.f32 %v4797, %v4913
    %v4923 = vadd.f32 %v4798, %v4912
    %s4924 = sld [smem:[#allocation5 + $0x3]]
    %v4925 = vstv %s4924
    %v4926 = vmul.f32 %v4925, %v4470
    %v4927 = vmul.f32 %v4925, %v4476
    %v4928 = vmul.f32 %v4925, %v4482
    %v4929 = vmul.f32 %v4925, %v4488
    %v4930 = vmul.f32 %v4925, %v4494
    %v4936 = vrot.slane %v4926, 1
    %v4937 = vrot.slane %v4927, 1
    %v4938 = vsel %vm4811, %v4936, %v4937
    %v4939 = vrot.slane %v4928, 1
    %v4940 = vsel %vm4811, %v4937, %v4939
    %v4941 = vrot.slane %v4929, 1
    %v4942 = vsel %vm4811, %v4939, %v4941
    %v4943 = vrot.slane %v4930, 1
    %v4944 = vsel %vm4811, %v4941, %v4943
    %v4950 = vadd.f32 %v4826, %v4938
    %v4951 = vadd.f32 %v4827, %v4940
    %v4952 = vadd.f32 %v4828, %v4942
    %v4953 = vadd.f32 %v4829, %v4944
    %v4954 = vadd.f32 %v4830, %v4943
    %s4955 = sld [smem:[#allocation5 + $0x43]]
    %v4956 = vstv %s4955
    %v4957 = vmul.f32 %v4956, %v4470
    %v4958 = vmul.f32 %v4956, %v4476
    %v4959 = vmul.f32 %v4956, %v4482
    %v4960 = vmul.f32 %v4956, %v4488
    %v4961 = vmul.f32 %v4956, %v4494
    %v4967 = vrot.slane %v4957, 1
    %v4968 = vrot.slane %v4958, 1
    %v4969 = vsel %vm4811, %v4967, %v4968
    %v4970 = vrot.slane %v4959, 1
    %v4971 = vsel %vm4811, %v4968, %v4970
    %v4972 = vrot.slane %v4960, 1
    %v4973 = vsel %vm4811, %v4970, %v4972
    %v4974 = vrot.slane %v4961, 1
    %v4975 = vsel %vm4811, %v4972, %v4974
    %v4981 = vadd.f32 %v4857, %v4969
    %v4982 = vadd.f32 %v4858, %v4971
    %v4983 = vadd.f32 %v4859, %v4973
    %v4984 = vadd.f32 %v4860, %v4975
    %v4985 = vadd.f32 %v4861, %v4974
    %s4986 = sld [smem:[#allocation5 + $0x83]]
    %v4987 = vstv %s4986
    %v4988 = vmul.f32 %v4987, %v4470
    %v4989 = vmul.f32 %v4987, %v4476
    %v4990 = vmul.f32 %v4987, %v4482
    %v4991 = vmul.f32 %v4987, %v4488
    %v4992 = vmul.f32 %v4987, %v4494
    %v4998 = vrot.slane %v4988, 1
    %v4999 = vrot.slane %v4989, 1
    %v5000 = vsel %vm4811, %v4998, %v4999
    %v5001 = vrot.slane %v4990, 1
    %v5002 = vsel %vm4811, %v4999, %v5001
    %v5003 = vrot.slane %v4991, 1
    %v5004 = vsel %vm4811, %v5001, %v5003
    %v5005 = vrot.slane %v4992, 1
    %v5006 = vsel %vm4811, %v5003, %v5005
    %v5012 = vadd.f32 %v4888, %v5000
    %v5013 = vadd.f32 %v4889, %v5002
    %v5014 = vadd.f32 %v4890, %v5004
    %v5015 = vadd.f32 %v4891, %v5006
    %v5016 = vadd.f32 %v4892, %v5005
    %s5017 = sld [smem:[#allocation5 + $0xc3]]
    %v5018 = vstv %s5017
    %v5019 = vmul.f32 %v5018, %v4470
    %v5020 = vmul.f32 %v5018, %v4476
    %v5021 = vmul.f32 %v5018, %v4482
    %v5022 = vmul.f32 %v5018, %v4488
    %v5023 = vmul.f32 %v5018, %v4494
    %v5029 = vrot.slane %v5019, 1
    %v5030 = vrot.slane %v5020, 1
    %v5031 = vsel %vm4811, %v5029, %v5030
    %v5032 = vrot.slane %v5021, 1
    %v5033 = vsel %vm4811, %v5030, %v5032
    %v5034 = vrot.slane %v5022, 1
    %v5035 = vsel %vm4811, %v5032, %v5034
    %v5036 = vrot.slane %v5023, 1
    %v5037 = vsel %vm4811, %v5034, %v5036
    %v5043 = vadd.f32 %v4919, %v5031
    %v5044 = vadd.f32 %v4920, %v5033
    %v5045 = vadd.f32 %v4921, %v5035
    %v5046 = vadd.f32 %v4922, %v5037
    %v5047 = vadd.f32 %v4923, %v5036
    %s5048 = sld [smem:[#allocation5 + $0x4]]
    %v5049 = vstv %s5048
    %v5050 = vmul.f32 %v5049, %v2234
    %v5051 = vmul.f32 %v5049, %v2240
    %v5052 = vmul.f32 %v5049, %v2246
    %v5053 = vmul.f32 %v5049, %v2252
    %v5054 = vmul.f32 %v5049, %v2258
    %vm5060 = vcmask 1045504
    %v5061 = vrot.slane %v5050, 2
    %v5062 = vrot.slane %v5051, 2
    %v5063 = vsel %vm5060, %v5061, %v5062
    %v5064 = vrot.slane %v5052, 2
    %v5065 = vsel %vm5060, %v5062, %v5064
    %v5066 = vrot.slane %v5053, 2
    %v5067 = vsel %vm5060, %v5064, %v5066
    %v5068 = vrot.slane %v5054, 2
    %v5069 = vsel %vm5060, %v5066, %v5068
    %v5075 = vadd.f32 %v4950, %v5063
    %v5076 = vadd.f32 %v4951, %v5065
    %v5077 = vadd.f32 %v4952, %v5067
    %v5078 = vadd.f32 %v4953, %v5069
    %v5079 = vadd.f32 %v4954, %v5068
    %s5080 = sld [smem:[#allocation5 + $0x44]]
    %v5081 = vstv %s5080
    %v5082 = vmul.f32 %v5081, %v2234
    %v5083 = vmul.f32 %v5081, %v2240
    %v5084 = vmul.f32 %v5081, %v2246
    %v5085 = vmul.f32 %v5081, %v2252
    %v5086 = vmul.f32 %v5081, %v2258
    %v5092 = vrot.slane %v5082, 2
    %v5093 = vrot.slane %v5083, 2
    %v5094 = vsel %vm5060, %v5092, %v5093
    %v5095 = vrot.slane %v5084, 2
    %v5096 = vsel %vm5060, %v5093, %v5095
    %v5097 = vrot.slane %v5085, 2
    %v5098 = vsel %vm5060, %v5095, %v5097
    %v5099 = vrot.slane %v5086, 2
    %v5100 = vsel %vm5060, %v5097, %v5099
    %v5106 = vadd.f32 %v4981, %v5094
    %v5107 = vadd.f32 %v4982, %v5096
    %v5108 = vadd.f32 %v4983, %v5098
    %v5109 = vadd.f32 %v4984, %v5100
    %v5110 = vadd.f32 %v4985, %v5099
    %s5111 = sld [smem:[#allocation5 + $0x84]]
    %v5112 = vstv %s5111
    %v5113 = vmul.f32 %v5112, %v2234
    %v5114 = vmul.f32 %v5112, %v2240
    %v5115 = vmul.f32 %v5112, %v2246
    %v5116 = vmul.f32 %v5112, %v2252
    %v5117 = vmul.f32 %v5112, %v2258
    %v5123 = vrot.slane %v5113, 2
    %v5124 = vrot.slane %v5114, 2
    %v5125 = vsel %vm5060, %v5123, %v5124
    %v5126 = vrot.slane %v5115, 2
    %v5127 = vsel %vm5060, %v5124, %v5126
    %v5128 = vrot.slane %v5116, 2
    %v5129 = vsel %vm5060, %v5126, %v5128
    %v5130 = vrot.slane %v5117, 2
    %v5131 = vsel %vm5060, %v5128, %v5130
    %v5137 = vadd.f32 %v5012, %v5125
    %v5138 = vadd.f32 %v5013, %v5127
    %v5139 = vadd.f32 %v5014, %v5129
    %v5140 = vadd.f32 %v5015, %v5131
    %v5141 = vadd.f32 %v5016, %v5130
    %s5142 = sld [smem:[#allocation5 + $0xc4]]
    %v5143 = vstv %s5142
    %v5144 = vmul.f32 %v5143, %v2234
    %v5145 = vmul.f32 %v5143, %v2240
    %v5146 = vmul.f32 %v5143, %v2246
    %v5147 = vmul.f32 %v5143, %v2252
    %v5148 = vmul.f32 %v5143, %v2258
    %v5154 = vrot.slane %v5144, 2
    %v5155 = vrot.slane %v5145, 2
    %v5156 = vsel %vm5060, %v5154, %v5155
    %v5157 = vrot.slane %v5146, 2
    %v5158 = vsel %vm5060, %v5155, %v5157
    %v5159 = vrot.slane %v5147, 2
    %v5160 = vsel %vm5060, %v5157, %v5159
    %v5161 = vrot.slane %v5148, 2
    %v5162 = vsel %vm5060, %v5159, %v5161
    %v5168 = vadd.f32 %v5043, %v5156
    %v5169 = vadd.f32 %v5044, %v5158
    %v5170 = vadd.f32 %v5045, %v5160
    %v5171 = vadd.f32 %v5046, %v5162
    %v5172 = vadd.f32 %v5047, %v5161
    %s5173 = sld [smem:[#allocation5 + $0x5]]
    %v5174 = vstv %s5173
    %v5175 = vmul.f32 %v5174, %v4470
    %v5176 = vmul.f32 %v5174, %v4476
    %v5177 = vmul.f32 %v5174, %v4482
    %v5178 = vmul.f32 %v5174, %v4488
    %v5179 = vmul.f32 %v5174, %v4494
    %v5185 = vrot.slane %v5175, 2
    %v5186 = vrot.slane %v5176, 2
    %v5187 = vsel %vm5060, %v5185, %v5186
    %v5188 = vrot.slane %v5177, 2
    %v5189 = vsel %vm5060, %v5186, %v5188
    %v5190 = vrot.slane %v5178, 2
    %v5191 = vsel %vm5060, %v5188, %v5190
    %v5192 = vrot.slane %v5179, 2
    %v5193 = vsel %vm5060, %v5190, %v5192
    %v5199 = vadd.f32 %v5075, %v5187
    %v5200 = vadd.f32 %v5076, %v5189
    %v5201 = vadd.f32 %v5077, %v5191
    %v5202 = vadd.f32 %v5078, %v5193
    %v5203 = vadd.f32 %v5079, %v5192
    %s5204 = sld [smem:[#allocation5 + $0x45]]
    %v5205 = vstv %s5204
    %v5206 = vmul.f32 %v5205, %v4470
    %v5207 = vmul.f32 %v5205, %v4476
    %v5208 = vmul.f32 %v5205, %v4482
    %v5209 = vmul.f32 %v5205, %v4488
    %v5210 = vmul.f32 %v5205, %v4494
    %v5216 = vrot.slane %v5206, 2
    %v5217 = vrot.slane %v5207, 2
    %v5218 = vsel %vm5060, %v5216, %v5217
    %v5219 = vrot.slane %v5208, 2
    %v5220 = vsel %vm5060, %v5217, %v5219
    %v5221 = vrot.slane %v5209, 2
    %v5222 = vsel %vm5060, %v5219, %v5221
    %v5223 = vrot.slane %v5210, 2
    %v5224 = vsel %vm5060, %v5221, %v5223
    %v5230 = vadd.f32 %v5106, %v5218
    %v5231 = vadd.f32 %v5107, %v5220
    %v5232 = vadd.f32 %v5108, %v5222
    %v5233 = vadd.f32 %v5109, %v5224
    %v5234 = vadd.f32 %v5110, %v5223
    %s5235 = sld [smem:[#allocation5 + $0x85]]
    %v5236 = vstv %s5235
    %v5237 = vmul.f32 %v5236, %v4470
    %v5238 = vmul.f32 %v5236, %v4476
    %v5239 = vmul.f32 %v5236, %v4482
    %v5240 = vmul.f32 %v5236, %v4488
    %v5241 = vmul.f32 %v5236, %v4494
    %v5247 = vrot.slane %v5237, 2
    %v5248 = vrot.slane %v5238, 2
    %v5249 = vsel %vm5060, %v5247, %v5248
    %v5250 = vrot.slane %v5239, 2
    %v5251 = vsel %vm5060, %v5248, %v5250
    %v5252 = vrot.slane %v5240, 2
    %v5253 = vsel %vm5060, %v5250, %v5252
    %v5254 = vrot.slane %v5241, 2
    %v5255 = vsel %vm5060, %v5252, %v5254
    %v5261 = vadd.f32 %v5137, %v5249
    %v5262 = vadd.f32 %v5138, %v5251
    %v5263 = vadd.f32 %v5139, %v5253
    %v5264 = vadd.f32 %v5140, %v5255
    %v5265 = vadd.f32 %v5141, %v5254
    %s5266 = sld [smem:[#allocation5 + $0xc5]]
    %v5267 = vstv %s5266
    %v5268 = vmul.f32 %v5267, %v4470
    %v5269 = vmul.f32 %v5267, %v4476
    %v5270 = vmul.f32 %v5267, %v4482
    %v5271 = vmul.f32 %v5267, %v4488
    %v5272 = vmul.f32 %v5267, %v4494
    %v5278 = vrot.slane %v5268, 2
    %v5279 = vrot.slane %v5269, 2
    %v5280 = vsel %vm5060, %v5278, %v5279
    %v5281 = vrot.slane %v5270, 2
    %v5282 = vsel %vm5060, %v5279, %v5281
    %v5283 = vrot.slane %v5271, 2
    %v5284 = vsel %vm5060, %v5281, %v5283
    %v5285 = vrot.slane %v5272, 2
    %v5286 = vsel %vm5060, %v5283, %v5285
    %v5292 = vadd.f32 %v5168, %v5280
    %v5293 = vadd.f32 %v5169, %v5282
    %v5294 = vadd.f32 %v5170, %v5284
    %v5295 = vadd.f32 %v5171, %v5286
    %v5296 = vadd.f32 %v5172, %v5285
    %s5297 = sld [smem:[#allocation5 + $0x6]]
    %v5298 = vstv %s5297
    %v5299 = vmul.f32 %v5298, %v2234
    %v5300 = vmul.f32 %v5298, %v2240
    %v5301 = vmul.f32 %v5298, %v2246
    %v5302 = vmul.f32 %v5298, %v2252
    %v5303 = vmul.f32 %v5298, %v2258
    %vm5309 = vcmask 1044480
    %v5310 = vrot.slane %v5299, 3
    %v5311 = vrot.slane %v5300, 3
    %v5312 = vsel %vm5309, %v5310, %v5311
    %v5313 = vrot.slane %v5301, 3
    %v5314 = vsel %vm5309, %v5311, %v5313
    %v5315 = vrot.slane %v5302, 3
    %v5316 = vsel %vm5309, %v5313, %v5315
    %v5317 = vrot.slane %v5303, 3
    %v5318 = vsel %vm5309, %v5315, %v5317
    %v5324 = vadd.f32 %v5199, %v5312
    %v5325 = vadd.f32 %v5200, %v5314
    %v5326 = vadd.f32 %v5201, %v5316
    %v5327 = vadd.f32 %v5202, %v5318
    %v5328 = vadd.f32 %v5203, %v5317
    %s5329 = sld [smem:[#allocation5 + $0x46]]
    %v5330 = vstv %s5329
    %v5331 = vmul.f32 %v5330, %v2234
    %v5332 = vmul.f32 %v5330, %v2240
    %v5333 = vmul.f32 %v5330, %v2246
    %v5334 = vmul.f32 %v5330, %v2252
    %v5335 = vmul.f32 %v5330, %v2258
    %v5341 = vrot.slane %v5331, 3
    %v5342 = vrot.slane %v5332, 3
    %v5343 = vsel %vm5309, %v5341, %v5342
    %v5344 = vrot.slane %v5333, 3
    %v5345 = vsel %vm5309, %v5342, %v5344
    %v5346 = vrot.slane %v5334, 3
    %v5347 = vsel %vm5309, %v5344, %v5346
    %v5348 = vrot.slane %v5335, 3
    %v5349 = vsel %vm5309, %v5346, %v5348
    %v5355 = vadd.f32 %v5230, %v5343
    %v5356 = vadd.f32 %v5231, %v5345
    %v5357 = vadd.f32 %v5232, %v5347
    %v5358 = vadd.f32 %v5233, %v5349
    %v5359 = vadd.f32 %v5234, %v5348
    %s5360 = sld [smem:[#allocation5 + $0x86]]
    %v5361 = vstv %s5360
    %v5362 = vmul.f32 %v5361, %v2234
    %v5363 = vmul.f32 %v5361, %v2240
    %v5364 = vmul.f32 %v5361, %v2246
    %v5365 = vmul.f32 %v5361, %v2252
    %v5366 = vmul.f32 %v5361, %v2258
    %v5372 = vrot.slane %v5362, 3
    %v5373 = vrot.slane %v5363, 3
    %v5374 = vsel %vm5309, %v5372, %v5373
    %v5375 = vrot.slane %v5364, 3
    %v5376 = vsel %vm5309, %v5373, %v5375
    %v5377 = vrot.slane %v5365, 3
    %v5378 = vsel %vm5309, %v5375, %v5377
    %v5379 = vrot.slane %v5366, 3
    %v5380 = vsel %vm5309, %v5377, %v5379
    %v5386 = vadd.f32 %v5261, %v5374
    %v5387 = vadd.f32 %v5262, %v5376
    %v5388 = vadd.f32 %v5263, %v5378
    %v5389 = vadd.f32 %v5264, %v5380
    %v5390 = vadd.f32 %v5265, %v5379
    %s5391 = sld [smem:[#allocation5 + $0xc6]]
    %v5392 = vstv %s5391
    %v5393 = vmul.f32 %v5392, %v2234
    %v5394 = vmul.f32 %v5392, %v2240
    %v5395 = vmul.f32 %v5392, %v2246
    %v5396 = vmul.f32 %v5392, %v2252
    %v5397 = vmul.f32 %v5392, %v2258
    %v5403 = vrot.slane %v5393, 3
    %v5404 = vrot.slane %v5394, 3
    %v5405 = vsel %vm5309, %v5403, %v5404
    %v5406 = vrot.slane %v5395, 3
    %v5407 = vsel %vm5309, %v5404, %v5406
    %v5408 = vrot.slane %v5396, 3
    %v5409 = vsel %vm5309, %v5406, %v5408
    %v5410 = vrot.slane %v5397, 3
    %v5411 = vsel %vm5309, %v5408, %v5410
    %v5417 = vadd.f32 %v5292, %v5405
    %v5418 = vadd.f32 %v5293, %v5407
    %v5419 = vadd.f32 %v5294, %v5409
    %v5420 = vadd.f32 %v5295, %v5411
    %v5421 = vadd.f32 %v5296, %v5410
    %s5422 = sld [smem:[#allocation5 + $0x7]]
    %v5423 = vstv %s5422
    %v5424 = vmul.f32 %v5423, %v4470
    %v5425 = vmul.f32 %v5423, %v4476
    %v5426 = vmul.f32 %v5423, %v4482
    %v5427 = vmul.f32 %v5423, %v4488
    %v5428 = vmul.f32 %v5423, %v4494
    %v5434 = vrot.slane %v5424, 3
    %v5435 = vrot.slane %v5425, 3
    %v5436 = vsel %vm5309, %v5434, %v5435
    %v5437 = vrot.slane %v5426, 3
    %v5438 = vsel %vm5309, %v5435, %v5437
    %v5439 = vrot.slane %v5427, 3
    %v5440 = vsel %vm5309, %v5437, %v5439
    %v5441 = vrot.slane %v5428, 3
    %v5442 = vsel %vm5309, %v5439, %v5441
    %v5448 = vadd.f32 %v5324, %v5436
    %v5449 = vadd.f32 %v5325, %v5438
    %v5450 = vadd.f32 %v5326, %v5440
    %v5451 = vadd.f32 %v5327, %v5442
    %v5452 = vadd.f32 %v5328, %v5441
    %s5453 = sld [smem:[#allocation5 + $0x47]]
    %v5454 = vstv %s5453
    %v5455 = vmul.f32 %v5454, %v4470
    %v5456 = vmul.f32 %v5454, %v4476
    %v5457 = vmul.f32 %v5454, %v4482
    %v5458 = vmul.f32 %v5454, %v4488
    %v5459 = vmul.f32 %v5454, %v4494
    %v5465 = vrot.slane %v5455, 3
    %v5466 = vrot.slane %v5456, 3
    %v5467 = vsel %vm5309, %v5465, %v5466
    %v5468 = vrot.slane %v5457, 3
    %v5469 = vsel %vm5309, %v5466, %v5468
    %v5470 = vrot.slane %v5458, 3
    %v5471 = vsel %vm5309, %v5468, %v5470
    %v5472 = vrot.slane %v5459, 3
    %v5473 = vsel %vm5309, %v5470, %v5472
    %v5479 = vadd.f32 %v5355, %v5467
    %v5480 = vadd.f32 %v5356, %v5469
    %v5481 = vadd.f32 %v5357, %v5471
    %v5482 = vadd.f32 %v5358, %v5473
    %v5483 = vadd.f32 %v5359, %v5472
    %s5484 = sld [smem:[#allocation5 + $0x87]]
    %v5485 = vstv %s5484
    %v5486 = vmul.f32 %v5485, %v4470
    %v5487 = vmul.f32 %v5485, %v4476
    %v5488 = vmul.f32 %v5485, %v4482
    %v5489 = vmul.f32 %v5485, %v4488
    %v5490 = vmul.f32 %v5485, %v4494
    %v5496 = vrot.slane %v5486, 3
    %v5497 = vrot.slane %v5487, 3
    %v5498 = vsel %vm5309, %v5496, %v5497
    %v5499 = vrot.slane %v5488, 3
    %v5500 = vsel %vm5309, %v5497, %v5499
    %v5501 = vrot.slane %v5489, 3
    %v5502 = vsel %vm5309, %v5499, %v5501
    %v5503 = vrot.slane %v5490, 3
    %v5504 = vsel %vm5309, %v5501, %v5503
    %v5510 = vadd.f32 %v5386, %v5498
    %v5511 = vadd.f32 %v5387, %v5500
    %v5512 = vadd.f32 %v5388, %v5502
    %v5513 = vadd.f32 %v5389, %v5504
    %v5514 = vadd.f32 %v5390, %v5503
    %s5515 = sld [smem:[#allocation5 + $0xc7]]
    %v5516 = vstv %s5515
    %v5517 = vmul.f32 %v5516, %v4470
    %v5518 = vmul.f32 %v5516, %v4476
    %v5519 = vmul.f32 %v5516, %v4482
    %v5520 = vmul.f32 %v5516, %v4488
    %v5521 = vmul.f32 %v5516, %v4494
    %v5527 = vrot.slane %v5517, 3
    %v5528 = vrot.slane %v5518, 3
    %v5529 = vsel %vm5309, %v5527, %v5528
    %v5530 = vrot.slane %v5519, 3
    %v5531 = vsel %vm5309, %v5528, %v5530
    %v5532 = vrot.slane %v5520, 3
    %v5533 = vsel %vm5309, %v5530, %v5532
    %v5534 = vrot.slane %v5521, 3
    %v5535 = vsel %vm5309, %v5532, %v5534
    %v5541 = vadd.f32 %v5417, %v5529
    %v5542 = vadd.f32 %v5418, %v5531
    %v5543 = vadd.f32 %v5419, %v5533
    %v5544 = vadd.f32 %v5420, %v5535
    %v5545 = vadd.f32 %v5421, %v5534
    %s5546 = sld [smem:[#allocation5 + $0x8]]
    %v5547 = vstv %s5546
    %v5548 = vmul.f32 %v5547, %v2258
    %v5549 = vmul.f32 %v5547, %v2264
    %v5550 = vmul.f32 %v5547, %v2270
    %v5551 = vmul.f32 %v5547, %v2276
    %v5552 = vmul.f32 %v5547, %v2282
    %v5553 = vmul.f32 %v5547, %v2288
    %v5560 = vrot.slane %v5548, 6
    %v5561 = vrot.slane %v5549, 6
    %v5562 = vsel %vm262, %v5560, %v5561
    %v5563 = vrot.slane %v5550, 6
    %v5564 = vsel %vm262, %v5561, %v5563
    %v5565 = vrot.slane %v5551, 6
    %v5566 = vsel %vm262, %v5563, %v5565
    %v5567 = vrot.slane %v5552, 6
    %v5568 = vsel %vm262, %v5565, %v5567
    %v5569 = vrot.slane %v5553, 6
    %v5570 = vsel %vm262, %v5567, %v5569
    %v5576 = vadd.f32 %v5448, %v5562
    %v5577 = vadd.f32 %v5449, %v5564
    %v5578 = vadd.f32 %v5450, %v5566
    %v5579 = vadd.f32 %v5451, %v5568
    %v5580 = vadd.f32 %v5452, %v5570
    %s5581 = sld [smem:[#allocation5 + $0x48]]
    %v5582 = vstv %s5581
    %v5583 = vmul.f32 %v5582, %v2258
    %v5584 = vmul.f32 %v5582, %v2264
    %v5585 = vmul.f32 %v5582, %v2270
    %v5586 = vmul.f32 %v5582, %v2276
    %v5587 = vmul.f32 %v5582, %v2282
    %v5588 = vmul.f32 %v5582, %v2288
    %v5595 = vrot.slane %v5583, 6
    %v5596 = vrot.slane %v5584, 6
    %v5597 = vsel %vm262, %v5595, %v5596
    %v5598 = vrot.slane %v5585, 6
    %v5599 = vsel %vm262, %v5596, %v5598
    %v5600 = vrot.slane %v5586, 6
    %v5601 = vsel %vm262, %v5598, %v5600
    %v5602 = vrot.slane %v5587, 6
    %v5603 = vsel %vm262, %v5600, %v5602
    %v5604 = vrot.slane %v5588, 6
    %v5605 = vsel %vm262, %v5602, %v5604
    %v5611 = vadd.f32 %v5479, %v5597
    %v5612 = vadd.f32 %v5480, %v5599
    %v5613 = vadd.f32 %v5481, %v5601
    %v5614 = vadd.f32 %v5482, %v5603
    %v5615 = vadd.f32 %v5483, %v5605
    %s5616 = sld [smem:[#allocation5 + $0x88]]
    %v5617 = vstv %s5616
    %v5618 = vmul.f32 %v5617, %v2258
    %v5619 = vmul.f32 %v5617, %v2264
    %v5620 = vmul.f32 %v5617, %v2270
    %v5621 = vmul.f32 %v5617, %v2276
    %v5622 = vmul.f32 %v5617, %v2282
    %v5623 = vmul.f32 %v5617, %v2288
    %v5630 = vrot.slane %v5618, 6
    %v5631 = vrot.slane %v5619, 6
    %v5632 = vsel %vm262, %v5630, %v5631
    %v5633 = vrot.slane %v5620, 6
    %v5634 = vsel %vm262, %v5631, %v5633
    %v5635 = vrot.slane %v5621, 6
    %v5636 = vsel %vm262, %v5633, %v5635
    %v5637 = vrot.slane %v5622, 6
    %v5638 = vsel %vm262, %v5635, %v5637
    %v5639 = vrot.slane %v5623, 6
    %v5640 = vsel %vm262, %v5637, %v5639
    %v5646 = vadd.f32 %v5510, %v5632
    %v5647 = vadd.f32 %v5511, %v5634
    %v5648 = vadd.f32 %v5512, %v5636
    %v5649 = vadd.f32 %v5513, %v5638
    %v5650 = vadd.f32 %v5514, %v5640
    %s5651 = sld [smem:[#allocation5 + $0xc8]]
    %v5652 = vstv %s5651
    %v5653 = vmul.f32 %v5652, %v2258
    %v5654 = vmul.f32 %v5652, %v2264
    %v5655 = vmul.f32 %v5652, %v2270
    %v5656 = vmul.f32 %v5652, %v2276
    %v5657 = vmul.f32 %v5652, %v2282
    %v5658 = vmul.f32 %v5652, %v2288
    %v5665 = vrot.slane %v5653, 6
    %v5666 = vrot.slane %v5654, 6
    %v5667 = vsel %vm262, %v5665, %v5666
    %v5668 = vrot.slane %v5655, 6
    %v5669 = vsel %vm262, %v5666, %v5668
    %v5670 = vrot.slane %v5656, 6
    %v5671 = vsel %vm262, %v5668, %v5670
    %v5672 = vrot.slane %v5657, 6
    %v5673 = vsel %vm262, %v5670, %v5672
    %v5674 = vrot.slane %v5658, 6
    %v5675 = vsel %vm262, %v5672, %v5674
    %v5681 = vadd.f32 %v5541, %v5667
    %v5682 = vadd.f32 %v5542, %v5669
    %v5683 = vadd.f32 %v5543, %v5671
    %v5684 = vadd.f32 %v5544, %v5673
    %v5685 = vadd.f32 %v5545, %v5675
    %s5686 = sld [smem:[#allocation5 + $0x9]]
    %v5687 = vstv %s5686
    %v5688 = vmul.f32 %v5687, %v4494
    %v5689 = vmul.f32 %v5687, %v4500
    %v5690 = vmul.f32 %v5687, %v4506
    %v5691 = vmul.f32 %v5687, %v4512
    %v5692 = vmul.f32 %v5687, %v4518
    %v5693 = vmul.f32 %v5687, %v4524
    %v5700 = vrot.slane %v5688, 6
    %v5701 = vrot.slane %v5689, 6
    %v5702 = vsel %vm262, %v5700, %v5701
    %v5703 = vrot.slane %v5690, 6
    %v5704 = vsel %vm262, %v5701, %v5703
    %v5705 = vrot.slane %v5691, 6
    %v5706 = vsel %vm262, %v5703, %v5705
    %v5707 = vrot.slane %v5692, 6
    %v5708 = vsel %vm262, %v5705, %v5707
    %v5709 = vrot.slane %v5693, 6
    %v5710 = vsel %vm262, %v5707, %v5709
    %v5716 = vadd.f32 %v5576, %v5702
    %v5717 = vadd.f32 %v5577, %v5704
    %v5718 = vadd.f32 %v5578, %v5706
    %v5719 = vadd.f32 %v5579, %v5708
    %v5720 = vadd.f32 %v5580, %v5710
    %s5721 = sld [smem:[#allocation5 + $0x49]]
    %v5722 = vstv %s5721
    %v5723 = vmul.f32 %v5722, %v4494
    %v5724 = vmul.f32 %v5722, %v4500
    %v5725 = vmul.f32 %v5722, %v4506
    %v5726 = vmul.f32 %v5722, %v4512
    %v5727 = vmul.f32 %v5722, %v4518
    %v5728 = vmul.f32 %v5722, %v4524
    %v5735 = vrot.slane %v5723, 6
    %v5736 = vrot.slane %v5724, 6
    %v5737 = vsel %vm262, %v5735, %v5736
    %v5738 = vrot.slane %v5725, 6
    %v5739 = vsel %vm262, %v5736, %v5738
    %v5740 = vrot.slane %v5726, 6
    %v5741 = vsel %vm262, %v5738, %v5740
    %v5742 = vrot.slane %v5727, 6
    %v5743 = vsel %vm262, %v5740, %v5742
    %v5744 = vrot.slane %v5728, 6
    %v5745 = vsel %vm262, %v5742, %v5744
    %v5751 = vadd.f32 %v5611, %v5737
    %v5752 = vadd.f32 %v5612, %v5739
    %v5753 = vadd.f32 %v5613, %v5741
    %v5754 = vadd.f32 %v5614, %v5743
    %v5755 = vadd.f32 %v5615, %v5745
    %s5756 = sld [smem:[#allocation5 + $0x89]]
    %v5757 = vstv %s5756
    %v5758 = vmul.f32 %v5757, %v4494
    %v5759 = vmul.f32 %v5757, %v4500
    %v5760 = vmul.f32 %v5757, %v4506
    %v5761 = vmul.f32 %v5757, %v4512
    %v5762 = vmul.f32 %v5757, %v4518
    %v5763 = vmul.f32 %v5757, %v4524
    %v5770 = vrot.slane %v5758, 6
    %v5771 = vrot.slane %v5759, 6
    %v5772 = vsel %vm262, %v5770, %v5771
    %v5773 = vrot.slane %v5760, 6
    %v5774 = vsel %vm262, %v5771, %v5773
    %v5775 = vrot.slane %v5761, 6
    %v5776 = vsel %vm262, %v5773, %v5775
    %v5777 = vrot.slane %v5762, 6
    %v5778 = vsel %vm262, %v5775, %v5777
    %v5779 = vrot.slane %v5763, 6
    %v5780 = vsel %vm262, %v5777, %v5779
    %v5786 = vadd.f32 %v5646, %v5772
    %v5787 = vadd.f32 %v5647, %v5774
    %v5788 = vadd.f32 %v5648, %v5776
    %v5789 = vadd.f32 %v5649, %v5778
    %v5790 = vadd.f32 %v5650, %v5780
    %s5791 = sld [smem:[#allocation5 + $0xc9]]
    %v5792 = vstv %s5791
    %v5793 = vmul.f32 %v5792, %v4494
    %v5794 = vmul.f32 %v5792, %v4500
    %v5795 = vmul.f32 %v5792, %v4506
    %v5796 = vmul.f32 %v5792, %v4512
    %v5797 = vmul.f32 %v5792, %v4518
    %v5798 = vmul.f32 %v5792, %v4524
    %v5805 = vrot.slane %v5793, 6
    %v5806 = vrot.slane %v5794, 6
    %v5807 = vsel %vm262, %v5805, %v5806
    %v5808 = vrot.slane %v5795, 6
    %v5809 = vsel %vm262, %v5806, %v5808
    %v5810 = vrot.slane %v5796, 6
    %v5811 = vsel %vm262, %v5808, %v5810
    %v5812 = vrot.slane %v5797, 6
    %v5813 = vsel %vm262, %v5810, %v5812
    %v5814 = vrot.slane %v5798, 6
    %v5815 = vsel %vm262, %v5812, %v5814
    %v5821 = vadd.f32 %v5681, %v5807
    %v5822 = vadd.f32 %v5682, %v5809
    %v5823 = vadd.f32 %v5683, %v5811
    %v5824 = vadd.f32 %v5684, %v5813
    %v5825 = vadd.f32 %v5685, %v5815
    %s5826 = sld [smem:[#allocation5 + $0xa]]
    %v5827 = vstv %s5826
    %v5828 = vmul.f32 %v5827, %v2258
    %v5829 = vmul.f32 %v5827, %v2264
    %v5830 = vmul.f32 %v5827, %v2270
    %v5831 = vmul.f32 %v5827, %v2276
    %v5832 = vmul.f32 %v5827, %v2282
    %v5833 = vmul.f32 %v5827, %v2288
    %vm5840 = vcmask 1040384
    %v5841 = vrot.slane %v5828, 7
    %v5842 = vrot.slane %v5829, 7
    %v5843 = vsel %vm5840, %v5841, %v5842
    %v5844 = vrot.slane %v5830, 7
    %v5845 = vsel %vm5840, %v5842, %v5844
    %v5846 = vrot.slane %v5831, 7
    %v5847 = vsel %vm5840, %v5844, %v5846
    %v5848 = vrot.slane %v5832, 7
    %v5849 = vsel %vm5840, %v5846, %v5848
    %v5850 = vrot.slane %v5833, 7
    %v5851 = vsel %vm5840, %v5848, %v5850
    %v5857 = vadd.f32 %v5716, %v5843
    %v5858 = vadd.f32 %v5717, %v5845
    %v5859 = vadd.f32 %v5718, %v5847
    %v5860 = vadd.f32 %v5719, %v5849
    %v5861 = vadd.f32 %v5720, %v5851
    %s5862 = sld [smem:[#allocation5 + $0x4a]]
    %v5863 = vstv %s5862
    %v5864 = vmul.f32 %v5863, %v2258
    %v5865 = vmul.f32 %v5863, %v2264
    %v5866 = vmul.f32 %v5863, %v2270
    %v5867 = vmul.f32 %v5863, %v2276
    %v5868 = vmul.f32 %v5863, %v2282
    %v5869 = vmul.f32 %v5863, %v2288
    %v5876 = vrot.slane %v5864, 7
    %v5877 = vrot.slane %v5865, 7
    %v5878 = vsel %vm5840, %v5876, %v5877
    %v5879 = vrot.slane %v5866, 7
    %v5880 = vsel %vm5840, %v5877, %v5879
    %v5881 = vrot.slane %v5867, 7
    %v5882 = vsel %vm5840, %v5879, %v5881
    %v5883 = vrot.slane %v5868, 7
    %v5884 = vsel %vm5840, %v5881, %v5883
    %v5885 = vrot.slane %v5869, 7
    %v5886 = vsel %vm5840, %v5883, %v5885
    %v5892 = vadd.f32 %v5751, %v5878
    %v5893 = vadd.f32 %v5752, %v5880
    %v5894 = vadd.f32 %v5753, %v5882
    %v5895 = vadd.f32 %v5754, %v5884
    %v5896 = vadd.f32 %v5755, %v5886
    %s5897 = sld [smem:[#allocation5 + $0x8a]]
    %v5898 = vstv %s5897
    %v5899 = vmul.f32 %v5898, %v2258
    %v5900 = vmul.f32 %v5898, %v2264
    %v5901 = vmul.f32 %v5898, %v2270
    %v5902 = vmul.f32 %v5898, %v2276
    %v5903 = vmul.f32 %v5898, %v2282
    %v5904 = vmul.f32 %v5898, %v2288
    %v5911 = vrot.slane %v5899, 7
    %v5912 = vrot.slane %v5900, 7
    %v5913 = vsel %vm5840, %v5911, %v5912
    %v5914 = vrot.slane %v5901, 7
    %v5915 = vsel %vm5840, %v5912, %v5914
    %v5916 = vrot.slane %v5902, 7
    %v5917 = vsel %vm5840, %v5914, %v5916
    %v5918 = vrot.slane %v5903, 7
    %v5919 = vsel %vm5840, %v5916, %v5918
    %v5920 = vrot.slane %v5904, 7
    %v5921 = vsel %vm5840, %v5918, %v5920
    %v5927 = vadd.f32 %v5786, %v5913
    %v5928 = vadd.f32 %v5787, %v5915
    %v5929 = vadd.f32 %v5788, %v5917
    %v5930 = vadd.f32 %v5789, %v5919
    %v5931 = vadd.f32 %v5790, %v5921
    %s5932 = sld [smem:[#allocation5 + $0xca]]
    %v5933 = vstv %s5932
    %v5934 = vmul.f32 %v5933, %v2258
    %v5935 = vmul.f32 %v5933, %v2264
    %v5936 = vmul.f32 %v5933, %v2270
    %v5937 = vmul.f32 %v5933, %v2276
    %v5938 = vmul.f32 %v5933, %v2282
    %v5939 = vmul.f32 %v5933, %v2288
    %v5946 = vrot.slane %v5934, 7
    %v5947 = vrot.slane %v5935, 7
    %v5948 = vsel %vm5840, %v5946, %v5947
    %v5949 = vrot.slane %v5936, 7
    %v5950 = vsel %vm5840, %v5947, %v5949
    %v5951 = vrot.slane %v5937, 7
    %v5952 = vsel %vm5840, %v5949, %v5951
    %v5953 = vrot.slane %v5938, 7
    %v5954 = vsel %vm5840, %v5951, %v5953
    %v5955 = vrot.slane %v5939, 7
    %v5956 = vsel %vm5840, %v5953, %v5955
    %v5962 = vadd.f32 %v5821, %v5948
    %v5963 = vadd.f32 %v5822, %v5950
    %v5964 = vadd.f32 %v5823, %v5952
    %v5965 = vadd.f32 %v5824, %v5954
    %v5966 = vadd.f32 %v5825, %v5956
    %s5967 = sld [smem:[#allocation5 + $0xb]]
    %v5968 = vstv %s5967
    %v5969 = vmul.f32 %v5968, %v4494
    %v5970 = vmul.f32 %v5968, %v4500
    %v5971 = vmul.f32 %v5968, %v4506
    %v5972 = vmul.f32 %v5968, %v4512
    %v5973 = vmul.f32 %v5968, %v4518
    %v5974 = vmul.f32 %v5968, %v4524
    %v5981 = vrot.slane %v5969, 7
    %v5982 = vrot.slane %v5970, 7
    %v5983 = vsel %vm5840, %v5981, %v5982
    %v5984 = vrot.slane %v5971, 7
    %v5985 = vsel %vm5840, %v5982, %v5984
    %v5986 = vrot.slane %v5972, 7
    %v5987 = vsel %vm5840, %v5984, %v5986
    %v5988 = vrot.slane %v5973, 7
    %v5989 = vsel %vm5840, %v5986, %v5988
    %v5990 = vrot.slane %v5974, 7
    %v5991 = vsel %vm5840, %v5988, %v5990
    %v5997 = vadd.f32 %v5857, %v5983
    %v5998 = vadd.f32 %v5858, %v5985
    %v5999 = vadd.f32 %v5859, %v5987
    %v6000 = vadd.f32 %v5860, %v5989
    %v6001 = vadd.f32 %v5861, %v5991
    %s6002 = sld [smem:[#allocation5 + $0x4b]]
    %v6003 = vstv %s6002
    %v6004 = vmul.f32 %v6003, %v4494
    %v6005 = vmul.f32 %v6003, %v4500
    %v6006 = vmul.f32 %v6003, %v4506
    %v6007 = vmul.f32 %v6003, %v4512
    %v6008 = vmul.f32 %v6003, %v4518
    %v6009 = vmul.f32 %v6003, %v4524
    %v6016 = vrot.slane %v6004, 7
    %v6017 = vrot.slane %v6005, 7
    %v6018 = vsel %vm5840, %v6016, %v6017
    %v6019 = vrot.slane %v6006, 7
    %v6020 = vsel %vm5840, %v6017, %v6019
    %v6021 = vrot.slane %v6007, 7
    %v6022 = vsel %vm5840, %v6019, %v6021
    %v6023 = vrot.slane %v6008, 7
    %v6024 = vsel %vm5840, %v6021, %v6023
    %v6025 = vrot.slane %v6009, 7
    %v6026 = vsel %vm5840, %v6023, %v6025
    %v6032 = vadd.f32 %v5892, %v6018
    %v6033 = vadd.f32 %v5893, %v6020
    %v6034 = vadd.f32 %v5894, %v6022
    %v6035 = vadd.f32 %v5895, %v6024
    %v6036 = vadd.f32 %v5896, %v6026
    %s6037 = sld [smem:[#allocation5 + $0x8b]]
    %v6038 = vstv %s6037
    %v6039 = vmul.f32 %v6038, %v4494
    %v6040 = vmul.f32 %v6038, %v4500
    %v6041 = vmul.f32 %v6038, %v4506
    %v6042 = vmul.f32 %v6038, %v4512
    %v6043 = vmul.f32 %v6038, %v4518
    %v6044 = vmul.f32 %v6038, %v4524
    %v6051 = vrot.slane %v6039, 7
    %v6052 = vrot.slane %v6040, 7
    %v6053 = vsel %vm5840, %v6051, %v6052
    %v6054 = vrot.slane %v6041, 7
    %v6055 = vsel %vm5840, %v6052, %v6054
    %v6056 = vrot.slane %v6042, 7
    %v6057 = vsel %vm5840, %v6054, %v6056
    %v6058 = vrot.slane %v6043, 7
    %v6059 = vsel %vm5840, %v6056, %v6058
    %v6060 = vrot.slane %v6044, 7
    %v6061 = vsel %vm5840, %v6058, %v6060
    %v6067 = vadd.f32 %v5927, %v6053
    %v6068 = vadd.f32 %v5928, %v6055
    %v6069 = vadd.f32 %v5929, %v6057
    %v6070 = vadd.f32 %v5930, %v6059
    %v6071 = vadd.f32 %v5931, %v6061
    %s6072 = sld [smem:[#allocation5 + $0xcb]]
    %v6073 = vstv %s6072
    %v6074 = vmul.f32 %v6073, %v4494
    %v6075 = vmul.f32 %v6073, %v4500
    %v6076 = vmul.f32 %v6073, %v4506
    %v6077 = vmul.f32 %v6073, %v4512
    %v6078 = vmul.f32 %v6073, %v4518
    %v6079 = vmul.f32 %v6073, %v4524
    %v6086 = vrot.slane %v6074, 7
    %v6087 = vrot.slane %v6075, 7
    %v6088 = vsel %vm5840, %v6086, %v6087
    %v6089 = vrot.slane %v6076, 7
    %v6090 = vsel %vm5840, %v6087, %v6089
    %v6091 = vrot.slane %v6077, 7
    %v6092 = vsel %vm5840, %v6089, %v6091
    %v6093 = vrot.slane %v6078, 7
    %v6094 = vsel %vm5840, %v6091, %v6093
    %v6095 = vrot.slane %v6079, 7
    %v6096 = vsel %vm5840, %v6093, %v6095
    %v6102 = vadd.f32 %v5962, %v6088
    %v6103 = vadd.f32 %v5963, %v6090
    %v6104 = vadd.f32 %v5964, %v6092
    %v6105 = vadd.f32 %v5965, %v6094
    %v6106 = vadd.f32 %v5966, %v6096
    %s6107 = sld [smem:[#allocation5 + $0xc]]
    %v6108 = vstv %s6107
    %v6109 = vmul.f32 %v6108, %v2264
    %v6110 = vmul.f32 %v6108, %v2270
    %v6111 = vmul.f32 %v6108, %v2276
    %v6112 = vmul.f32 %v6108, %v2282
    %v6113 = vmul.f32 %v6108, %v2288
    %v6114 = vadd.f32 %v5997, %v6109
    %v6115 = vadd.f32 %v5998, %v6110
    %v6116 = vadd.f32 %v5999, %v6111
    %v6117 = vadd.f32 %v6000, %v6112
    %v6118 = vadd.f32 %v6001, %v6113
    %s6119 = sld [smem:[#allocation5 + $0x4c]]
    %v6120 = vstv %s6119
    %v6121 = vmul.f32 %v6120, %v2264
    %v6122 = vmul.f32 %v6120, %v2270
    %v6123 = vmul.f32 %v6120, %v2276
    %v6124 = vmul.f32 %v6120, %v2282
    %v6125 = vmul.f32 %v6120, %v2288
    %v6126 = vadd.f32 %v6032, %v6121
    %v6127 = vadd.f32 %v6033, %v6122
    %v6128 = vadd.f32 %v6034, %v6123
    %v6129 = vadd.f32 %v6035, %v6124
    %v6130 = vadd.f32 %v6036, %v6125
    %s6131 = sld [smem:[#allocation5 + $0x8c]]
    %v6132 = vstv %s6131
    %v6133 = vmul.f32 %v6132, %v2264
    %v6134 = vmul.f32 %v6132, %v2270
    %v6135 = vmul.f32 %v6132, %v2276
    %v6136 = vmul.f32 %v6132, %v2282
    %v6137 = vmul.f32 %v6132, %v2288
    %v6138 = vadd.f32 %v6067, %v6133
    %v6139 = vadd.f32 %v6068, %v6134
    %v6140 = vadd.f32 %v6069, %v6135
    %v6141 = vadd.f32 %v6070, %v6136
    %v6142 = vadd.f32 %v6071, %v6137
    %s6143 = sld [smem:[#allocation5 + $0xcc]]
    %v6144 = vstv %s6143
    %v6145 = vmul.f32 %v6144, %v2264
    %v6146 = vmul.f32 %v6144, %v2270
    %v6147 = vmul.f32 %v6144, %v2276
    %v6148 = vmul.f32 %v6144, %v2282
    %v6149 = vmul.f32 %v6144, %v2288
    %v6150 = vadd.f32 %v6102, %v6145
    %v6151 = vadd.f32 %v6103, %v6146
    %v6152 = vadd.f32 %v6104, %v6147
    %v6153 = vadd.f32 %v6105, %v6148
    %v6154 = vadd.f32 %v6106, %v6149
    %s6155 = sld [smem:[#allocation5 + $0xd]]
    %v6156 = vstv %s6155
    %v6157 = vmul.f32 %v6156, %v4500
    %v6158 = vmul.f32 %v6156, %v4506
    %v6159 = vmul.f32 %v6156, %v4512
    %v6160 = vmul.f32 %v6156, %v4518
    %v6161 = vmul.f32 %v6156, %v4524
    %v6162 = vadd.f32 %v6114, %v6157
    %v6163 = vadd.f32 %v6115, %v6158
    %v6164 = vadd.f32 %v6116, %v6159
    %v6165 = vadd.f32 %v6117, %v6160
    %v6166 = vadd.f32 %v6118, %v6161
    %s6167 = sld [smem:[#allocation5 + $0x4d]]
    %v6168 = vstv %s6167
    %v6169 = vmul.f32 %v6168, %v4500
    %v6170 = vmul.f32 %v6168, %v4506
    %v6171 = vmul.f32 %v6168, %v4512
    %v6172 = vmul.f32 %v6168, %v4518
    %v6173 = vmul.f32 %v6168, %v4524
    %v6174 = vadd.f32 %v6126, %v6169
    %v6175 = vadd.f32 %v6127, %v6170
    %v6176 = vadd.f32 %v6128, %v6171
    %v6177 = vadd.f32 %v6129, %v6172
    %v6178 = vadd.f32 %v6130, %v6173
    %s6179 = sld [smem:[#allocation5 + $0x8d]]
    %v6180 = vstv %s6179
    %v6181 = vmul.f32 %v6180, %v4500
    %v6182 = vmul.f32 %v6180, %v4506
    %v6183 = vmul.f32 %v6180, %v4512
    %v6184 = vmul.f32 %v6180, %v4518
    %v6185 = vmul.f32 %v6180, %v4524
    %v6186 = vadd.f32 %v6138, %v6181
    %v6187 = vadd.f32 %v6139, %v6182
    %v6188 = vadd.f32 %v6140, %v6183
    %v6189 = vadd.f32 %v6141, %v6184
    %v6190 = vadd.f32 %v6142, %v6185
    %s6191 = sld [smem:[#allocation5 + $0xcd]]
    %v6192 = vstv %s6191
    %v6193 = vmul.f32 %v6192, %v4500
    %v6194 = vmul.f32 %v6192, %v4506
    %v6195 = vmul.f32 %v6192, %v4512
    %v6196 = vmul.f32 %v6192, %v4518
    %v6197 = vmul.f32 %v6192, %v4524
    %v6198 = vadd.f32 %v6150, %v6193
    %v6199 = vadd.f32 %v6151, %v6194
    %v6200 = vadd.f32 %v6152, %v6195
    %v6201 = vadd.f32 %v6153, %v6196
    %v6202 = vadd.f32 %v6154, %v6197
    %s6203 = sld [smem:[#allocation5 + $0xe]]
    %v6204 = vstv %s6203
    %v6205 = vmul.f32 %v6204, %v2264
    %v6206 = vmul.f32 %v6204, %v2270
    %v6207 = vmul.f32 %v6204, %v2276
    %v6208 = vmul.f32 %v6204, %v2282
    %v6209 = vmul.f32 %v6204, %v2288
    %v6215 = vrot.slane %v6205, 1
    %v6216 = vrot.slane %v6206, 1
    %v6217 = vsel %vm4811, %v6215, %v6216
    %v6218 = vrot.slane %v6207, 1
    %v6219 = vsel %vm4811, %v6216, %v6218
    %v6220 = vrot.slane %v6208, 1
    %v6221 = vsel %vm4811, %v6218, %v6220
    %v6222 = vrot.slane %v6209, 1
    %v6223 = vsel %vm4811, %v6220, %v6222
    %v6229 = vadd.f32 %v6162, %v6217
    %v6230 = vadd.f32 %v6163, %v6219
    %v6231 = vadd.f32 %v6164, %v6221
    %v6232 = vadd.f32 %v6165, %v6223
    %v6233 = vadd.f32 %v6166, %v6222
    %s6234 = sld [smem:[#allocation5 + $0x4e]]
    %v6235 = vstv %s6234
    %v6236 = vmul.f32 %v6235, %v2264
    %v6237 = vmul.f32 %v6235, %v2270
    %v6238 = vmul.f32 %v6235, %v2276
    %v6239 = vmul.f32 %v6235, %v2282
    %v6240 = vmul.f32 %v6235, %v2288
    %v6246 = vrot.slane %v6236, 1
    %v6247 = vrot.slane %v6237, 1
    %v6248 = vsel %vm4811, %v6246, %v6247
    %v6249 = vrot.slane %v6238, 1
    %v6250 = vsel %vm4811, %v6247, %v6249
    %v6251 = vrot.slane %v6239, 1
    %v6252 = vsel %vm4811, %v6249, %v6251
    %v6253 = vrot.slane %v6240, 1
    %v6254 = vsel %vm4811, %v6251, %v6253
    %v6260 = vadd.f32 %v6174, %v6248
    %v6261 = vadd.f32 %v6175, %v6250
    %v6262 = vadd.f32 %v6176, %v6252
    %v6263 = vadd.f32 %v6177, %v6254
    %v6264 = vadd.f32 %v6178, %v6253
    %s6265 = sld [smem:[#allocation5 + $0x8e]]
    %v6266 = vstv %s6265
    %v6267 = vmul.f32 %v6266, %v2264
    %v6268 = vmul.f32 %v6266, %v2270
    %v6269 = vmul.f32 %v6266, %v2276
    %v6270 = vmul.f32 %v6266, %v2282
    %v6271 = vmul.f32 %v6266, %v2288
    %v6277 = vrot.slane %v6267, 1
    %v6278 = vrot.slane %v6268, 1
    %v6279 = vsel %vm4811, %v6277, %v6278
    %v6280 = vrot.slane %v6269, 1
    %v6281 = vsel %vm4811, %v6278, %v6280
    %v6282 = vrot.slane %v6270, 1
    %v6283 = vsel %vm4811, %v6280, %v6282
    %v6284 = vrot.slane %v6271, 1
    %v6285 = vsel %vm4811, %v6282, %v6284
    %v6291 = vadd.f32 %v6186, %v6279
    %v6292 = vadd.f32 %v6187, %v6281
    %v6293 = vadd.f32 %v6188, %v6283
    %v6294 = vadd.f32 %v6189, %v6285
    %v6295 = vadd.f32 %v6190, %v6284
    %s6296 = sld [smem:[#allocation5 + $0xce]]
    %v6297 = vstv %s6296
    %v6298 = vmul.f32 %v6297, %v2264
    %v6299 = vmul.f32 %v6297, %v2270
    %v6300 = vmul.f32 %v6297, %v2276
    %v6301 = vmul.f32 %v6297, %v2282
    %v6302 = vmul.f32 %v6297, %v2288
    %v6308 = vrot.slane %v6298, 1
    %v6309 = vrot.slane %v6299, 1
    %v6310 = vsel %vm4811, %v6308, %v6309
    %v6311 = vrot.slane %v6300, 1
    %v6312 = vsel %vm4811, %v6309, %v6311
    %v6313 = vrot.slane %v6301, 1
    %v6314 = vsel %vm4811, %v6311, %v6313
    %v6315 = vrot.slane %v6302, 1
    %v6316 = vsel %vm4811, %v6313, %v6315
    %v6322 = vadd.f32 %v6198, %v6310
    %v6323 = vadd.f32 %v6199, %v6312
    %v6324 = vadd.f32 %v6200, %v6314
    %v6325 = vadd.f32 %v6201, %v6316
    %v6326 = vadd.f32 %v6202, %v6315
    %s6327 = sld [smem:[#allocation5 + $0xf]]
    %v6328 = vstv %s6327
    %v6329 = vmul.f32 %v6328, %v4500
    %v6330 = vmul.f32 %v6328, %v4506
    %v6331 = vmul.f32 %v6328, %v4512
    %v6332 = vmul.f32 %v6328, %v4518
    %v6333 = vmul.f32 %v6328, %v4524
    %v6339 = vrot.slane %v6329, 1
    %v6340 = vrot.slane %v6330, 1
    %v6341 = vsel %vm4811, %v6339, %v6340
    %v6342 = vrot.slane %v6331, 1
    %v6343 = vsel %vm4811, %v6340, %v6342
    %v6344 = vrot.slane %v6332, 1
    %v6345 = vsel %vm4811, %v6342, %v6344
    %v6346 = vrot.slane %v6333, 1
    %v6347 = vsel %vm4811, %v6344, %v6346
    %v6353 = vadd.f32 %v6229, %v6341
    %v6354 = vadd.f32 %v6230, %v6343
    %v6355 = vadd.f32 %v6231, %v6345
    %v6356 = vadd.f32 %v6232, %v6347
    %v6357 = vadd.f32 %v6233, %v6346
    %s6358 = sld [smem:[#allocation5 + $0x4f]]
    %v6359 = vstv %s6358
    %v6360 = vmul.f32 %v6359, %v4500
    %v6361 = vmul.f32 %v6359, %v4506
    %v6362 = vmul.f32 %v6359, %v4512
    %v6363 = vmul.f32 %v6359, %v4518
    %v6364 = vmul.f32 %v6359, %v4524
    %v6370 = vrot.slane %v6360, 1
    %v6371 = vrot.slane %v6361, 1
    %v6372 = vsel %vm4811, %v6370, %v6371
    %v6373 = vrot.slane %v6362, 1
    %v6374 = vsel %vm4811, %v6371, %v6373
    %v6375 = vrot.slane %v6363, 1
    %v6376 = vsel %vm4811, %v6373, %v6375
    %v6377 = vrot.slane %v6364, 1
    %v6378 = vsel %vm4811, %v6375, %v6377
    %v6384 = vadd.f32 %v6260, %v6372
    %v6385 = vadd.f32 %v6261, %v6374
    %v6386 = vadd.f32 %v6262, %v6376
    %v6387 = vadd.f32 %v6263, %v6378
    %v6388 = vadd.f32 %v6264, %v6377
    %s6389 = sld [smem:[#allocation5 + $0x8f]]
    %v6390 = vstv %s6389
    %v6391 = vmul.f32 %v6390, %v4500
    %v6392 = vmul.f32 %v6390, %v4506
    %v6393 = vmul.f32 %v6390, %v4512
    %v6394 = vmul.f32 %v6390, %v4518
    %v6395 = vmul.f32 %v6390, %v4524
    %v6401 = vrot.slane %v6391, 1
    %v6402 = vrot.slane %v6392, 1
    %v6403 = vsel %vm4811, %v6401, %v6402
    %v6404 = vrot.slane %v6393, 1
    %v6405 = vsel %vm4811, %v6402, %v6404
    %v6406 = vrot.slane %v6394, 1
    %v6407 = vsel %vm4811, %v6404, %v6406
    %v6408 = vrot.slane %v6395, 1
    %v6409 = vsel %vm4811, %v6406, %v6408
    %v6415 = vadd.f32 %v6291, %v6403
    %v6416 = vadd.f32 %v6292, %v6405
    %v6417 = vadd.f32 %v6293, %v6407
    %v6418 = vadd.f32 %v6294, %v6409
    %v6419 = vadd.f32 %v6295, %v6408
    %s6420 = sld [smem:[#allocation5 + $0xcf]]
    %v6421 = vstv %s6420
    %v6422 = vmul.f32 %v6421, %v4500
    %v6423 = vmul.f32 %v6421, %v4506
    %v6424 = vmul.f32 %v6421, %v4512
    %v6425 = vmul.f32 %v6421, %v4518
    %v6426 = vmul.f32 %v6421, %v4524
    %v6432 = vrot.slane %v6422, 1
    %v6433 = vrot.slane %v6423, 1
    %v6434 = vsel %vm4811, %v6432, %v6433
    %v6435 = vrot.slane %v6424, 1
    %v6436 = vsel %vm4811, %v6433, %v6435
    %v6437 = vrot.slane %v6425, 1
    %v6438 = vsel %vm4811, %v6435, %v6437
    %v6439 = vrot.slane %v6426, 1
    %v6440 = vsel %vm4811, %v6437, %v6439
    %v6446 = vadd.f32 %v6322, %v6434
    %v6447 = vadd.f32 %v6323, %v6436
    %v6448 = vadd.f32 %v6324, %v6438
    %v6449 = vadd.f32 %v6325, %v6440
    %v6450 = vadd.f32 %v6326, %v6439
    %s6451 = sld [smem:[#allocation5 + $0x10]]
    %v6452 = vstv %s6451
    %v6453 = vmul.f32 %v6452, %v2288
    %v6454 = vmul.f32 %v6452, %v2294
    %v6455 = vmul.f32 %v6452, %v2300
    %v6456 = vmul.f32 %v6452, %v2306
    %v6457 = vmul.f32 %v6452, %v2312
    %vm6463 = vcmask 1043456
    %v6464 = vrot.slane %v6453, 4
    %v6465 = vrot.slane %v6454, 4
    %v6466 = vsel %vm6463, %v6464, %v6465
    %v6467 = vrot.slane %v6455, 4
    %v6468 = vsel %vm6463, %v6465, %v6467
    %v6469 = vrot.slane %v6456, 4
    %v6470 = vsel %vm6463, %v6467, %v6469
    %v6471 = vrot.slane %v6457, 4
    %v6472 = vsel %vm6463, %v6469, %v6471
    %v6478 = vadd.f32 %v6353, %v6466
    %v6479 = vadd.f32 %v6354, %v6468
    %v6480 = vadd.f32 %v6355, %v6470
    %v6481 = vadd.f32 %v6356, %v6472
    %v6482 = vadd.f32 %v6357, %v6471
    %s6483 = sld [smem:[#allocation5 + $0x50]]
    %v6484 = vstv %s6483
    %v6485 = vmul.f32 %v6484, %v2288
    %v6486 = vmul.f32 %v6484, %v2294
    %v6487 = vmul.f32 %v6484, %v2300
    %v6488 = vmul.f32 %v6484, %v2306
    %v6489 = vmul.f32 %v6484, %v2312
    %v6495 = vrot.slane %v6485, 4
    %v6496 = vrot.slane %v6486, 4
    %v6497 = vsel %vm6463, %v6495, %v6496
    %v6498 = vrot.slane %v6487, 4
    %v6499 = vsel %vm6463, %v6496, %v6498
    %v6500 = vrot.slane %v6488, 4
    %v6501 = vsel %vm6463, %v6498, %v6500
    %v6502 = vrot.slane %v6489, 4
    %v6503 = vsel %vm6463, %v6500, %v6502
    %v6509 = vadd.f32 %v6384, %v6497
    %v6510 = vadd.f32 %v6385, %v6499
    %v6511 = vadd.f32 %v6386, %v6501
    %v6512 = vadd.f32 %v6387, %v6503
    %v6513 = vadd.f32 %v6388, %v6502
    %s6514 = sld [smem:[#allocation5 + $0x90]]
    %v6515 = vstv %s6514
    %v6516 = vmul.f32 %v6515, %v2288
    %v6517 = vmul.f32 %v6515, %v2294
    %v6518 = vmul.f32 %v6515, %v2300
    %v6519 = vmul.f32 %v6515, %v2306
    %v6520 = vmul.f32 %v6515, %v2312
    %v6526 = vrot.slane %v6516, 4
    %v6527 = vrot.slane %v6517, 4
    %v6528 = vsel %vm6463, %v6526, %v6527
    %v6529 = vrot.slane %v6518, 4
    %v6530 = vsel %vm6463, %v6527, %v6529
    %v6531 = vrot.slane %v6519, 4
    %v6532 = vsel %vm6463, %v6529, %v6531
    %v6533 = vrot.slane %v6520, 4
    %v6534 = vsel %vm6463, %v6531, %v6533
    %v6540 = vadd.f32 %v6415, %v6528
    %v6541 = vadd.f32 %v6416, %v6530
    %v6542 = vadd.f32 %v6417, %v6532
    %v6543 = vadd.f32 %v6418, %v6534
    %v6544 = vadd.f32 %v6419, %v6533
    %s6545 = sld [smem:[#allocation5 + $0xd0]]
    %v6546 = vstv %s6545
    %v6547 = vmul.f32 %v6546, %v2288
    %v6548 = vmul.f32 %v6546, %v2294
    %v6549 = vmul.f32 %v6546, %v2300
    %v6550 = vmul.f32 %v6546, %v2306
    %v6551 = vmul.f32 %v6546, %v2312
    %v6557 = vrot.slane %v6547, 4
    %v6558 = vrot.slane %v6548, 4
    %v6559 = vsel %vm6463, %v6557, %v6558
    %v6560 = vrot.slane %v6549, 4
    %v6561 = vsel %vm6463, %v6558, %v6560
    %v6562 = vrot.slane %v6550, 4
    %v6563 = vsel %vm6463, %v6560, %v6562
    %v6564 = vrot.slane %v6551, 4
    %v6565 = vsel %vm6463, %v6562, %v6564
    %v6571 = vadd.f32 %v6446, %v6559
    %v6572 = vadd.f32 %v6447, %v6561
    %v6573 = vadd.f32 %v6448, %v6563
    %v6574 = vadd.f32 %v6449, %v6565
    %v6575 = vadd.f32 %v6450, %v6564
    %s6576 = sld [smem:[#allocation5 + $0x11]]
    %v6577 = vstv %s6576
    %v6578 = vmul.f32 %v6577, %v4524
    %v6579 = vmul.f32 %v6577, %v4530
    %v6580 = vmul.f32 %v6577, %v4536
    %v6581 = vmul.f32 %v6577, %v4542
    %v6582 = vmul.f32 %v6577, %v4548
    %v6588 = vrot.slane %v6578, 4
    %v6589 = vrot.slane %v6579, 4
    %v6590 = vsel %vm6463, %v6588, %v6589
    %v6591 = vrot.slane %v6580, 4
    %v6592 = vsel %vm6463, %v6589, %v6591
    %v6593 = vrot.slane %v6581, 4
    %v6594 = vsel %vm6463, %v6591, %v6593
    %v6595 = vrot.slane %v6582, 4
    %v6596 = vsel %vm6463, %v6593, %v6595
    %v6602 = vadd.f32 %v6478, %v6590
    %v6603 = vadd.f32 %v6479, %v6592
    %v6604 = vadd.f32 %v6480, %v6594
    %v6605 = vadd.f32 %v6481, %v6596
    %v6606 = vadd.f32 %v6482, %v6595
    %s6607 = sld [smem:[#allocation5 + $0x51]]
    %v6608 = vstv %s6607
    %v6609 = vmul.f32 %v6608, %v4524
    %v6610 = vmul.f32 %v6608, %v4530
    %v6611 = vmul.f32 %v6608, %v4536
    %v6612 = vmul.f32 %v6608, %v4542
    %v6613 = vmul.f32 %v6608, %v4548
    %v6619 = vrot.slane %v6609, 4
    %v6620 = vrot.slane %v6610, 4
    %v6621 = vsel %vm6463, %v6619, %v6620
    %v6622 = vrot.slane %v6611, 4
    %v6623 = vsel %vm6463, %v6620, %v6622
    %v6624 = vrot.slane %v6612, 4
    %v6625 = vsel %vm6463, %v6622, %v6624
    %v6626 = vrot.slane %v6613, 4
    %v6627 = vsel %vm6463, %v6624, %v6626
    %v6633 = vadd.f32 %v6509, %v6621
    %v6634 = vadd.f32 %v6510, %v6623
    %v6635 = vadd.f32 %v6511, %v6625
    %v6636 = vadd.f32 %v6512, %v6627
    %v6637 = vadd.f32 %v6513, %v6626
    %s6638 = sld [smem:[#allocation5 + $0x91]]
    %v6639 = vstv %s6638
    %v6640 = vmul.f32 %v6639, %v4524
    %v6641 = vmul.f32 %v6639, %v4530
    %v6642 = vmul.f32 %v6639, %v4536
    %v6643 = vmul.f32 %v6639, %v4542
    %v6644 = vmul.f32 %v6639, %v4548
    %v6650 = vrot.slane %v6640, 4
    %v6651 = vrot.slane %v6641, 4
    %v6652 = vsel %vm6463, %v6650, %v6651
    %v6653 = vrot.slane %v6642, 4
    %v6654 = vsel %vm6463, %v6651, %v6653
    %v6655 = vrot.slane %v6643, 4
    %v6656 = vsel %vm6463, %v6653, %v6655
    %v6657 = vrot.slane %v6644, 4
    %v6658 = vsel %vm6463, %v6655, %v6657
    %v6664 = vadd.f32 %v6540, %v6652
    %v6665 = vadd.f32 %v6541, %v6654
    %v6666 = vadd.f32 %v6542, %v6656
    %v6667 = vadd.f32 %v6543, %v6658
    %v6668 = vadd.f32 %v6544, %v6657
    %s6669 = sld [smem:[#allocation5 + $0xd1]]
    %v6670 = vstv %s6669
    %v6671 = vmul.f32 %v6670, %v4524
    %v6672 = vmul.f32 %v6670, %v4530
    %v6673 = vmul.f32 %v6670, %v4536
    %v6674 = vmul.f32 %v6670, %v4542
    %v6675 = vmul.f32 %v6670, %v4548
    %v6681 = vrot.slane %v6671, 4
    %v6682 = vrot.slane %v6672, 4
    %v6683 = vsel %vm6463, %v6681, %v6682
    %v6684 = vrot.slane %v6673, 4
    %v6685 = vsel %vm6463, %v6682, %v6684
    %v6686 = vrot.slane %v6674, 4
    %v6687 = vsel %vm6463, %v6684, %v6686
    %v6688 = vrot.slane %v6675, 4
    %v6689 = vsel %vm6463, %v6686, %v6688
    %v6695 = vadd.f32 %v6571, %v6683
    %v6696 = vadd.f32 %v6572, %v6685
    %v6697 = vadd.f32 %v6573, %v6687
    %v6698 = vadd.f32 %v6574, %v6689
    %v6699 = vadd.f32 %v6575, %v6688
    %s6700 = sld [smem:[#allocation5 + $0x12]]
    %v6701 = vstv %s6700
    %v6702 = vmul.f32 %v6701, %v2288
    %v6703 = vmul.f32 %v6701, %v2294
    %v6704 = vmul.f32 %v6701, %v2300
    %v6705 = vmul.f32 %v6701, %v2306
    %v6706 = vmul.f32 %v6701, %v2312
    %vm6712 = vcmask 1042432
    %v6713 = vrot.slane %v6702, 5
    %v6714 = vrot.slane %v6703, 5
    %v6715 = vsel %vm6712, %v6713, %v6714
    %v6716 = vrot.slane %v6704, 5
    %v6717 = vsel %vm6712, %v6714, %v6716
    %v6718 = vrot.slane %v6705, 5
    %v6719 = vsel %vm6712, %v6716, %v6718
    %v6720 = vrot.slane %v6706, 5
    %v6721 = vsel %vm6712, %v6718, %v6720
    %v6727 = vadd.f32 %v6602, %v6715
    %v6728 = vadd.f32 %v6603, %v6717
    %v6729 = vadd.f32 %v6604, %v6719
    %v6730 = vadd.f32 %v6605, %v6721
    %v6731 = vadd.f32 %v6606, %v6720
    %s6732 = sld [smem:[#allocation5 + $0x52]]
    %v6733 = vstv %s6732
    %v6734 = vmul.f32 %v6733, %v2288
    %v6735 = vmul.f32 %v6733, %v2294
    %v6736 = vmul.f32 %v6733, %v2300
    %v6737 = vmul.f32 %v6733, %v2306
    %v6738 = vmul.f32 %v6733, %v2312
    %v6744 = vrot.slane %v6734, 5
    %v6745 = vrot.slane %v6735, 5
    %v6746 = vsel %vm6712, %v6744, %v6745
    %v6747 = vrot.slane %v6736, 5
    %v6748 = vsel %vm6712, %v6745, %v6747
    %v6749 = vrot.slane %v6737, 5
    %v6750 = vsel %vm6712, %v6747, %v6749
    %v6751 = vrot.slane %v6738, 5
    %v6752 = vsel %vm6712, %v6749, %v6751
    %v6758 = vadd.f32 %v6633, %v6746
    %v6759 = vadd.f32 %v6634, %v6748
    %v6760 = vadd.f32 %v6635, %v6750
    %v6761 = vadd.f32 %v6636, %v6752
    %v6762 = vadd.f32 %v6637, %v6751
    %s6763 = sld [smem:[#allocation5 + $0x92]]
    %v6764 = vstv %s6763
    %v6765 = vmul.f32 %v6764, %v2288
    %v6766 = vmul.f32 %v6764, %v2294
    %v6767 = vmul.f32 %v6764, %v2300
    %v6768 = vmul.f32 %v6764, %v2306
    %v6769 = vmul.f32 %v6764, %v2312
    %v6775 = vrot.slane %v6765, 5
    %v6776 = vrot.slane %v6766, 5
    %v6777 = vsel %vm6712, %v6775, %v6776
    %v6778 = vrot.slane %v6767, 5
    %v6779 = vsel %vm6712, %v6776, %v6778
    %v6780 = vrot.slane %v6768, 5
    %v6781 = vsel %vm6712, %v6778, %v6780
    %v6782 = vrot.slane %v6769, 5
    %v6783 = vsel %vm6712, %v6780, %v6782
    %v6789 = vadd.f32 %v6664, %v6777
    %v6790 = vadd.f32 %v6665, %v6779
    %v6791 = vadd.f32 %v6666, %v6781
    %v6792 = vadd.f32 %v6667, %v6783
    %v6793 = vadd.f32 %v6668, %v6782
    %s6794 = sld [smem:[#allocation5 + $0xd2]]
    %v6795 = vstv %s6794
    %v6796 = vmul.f32 %v6795, %v2288
    %v6797 = vmul.f32 %v6795, %v2294
    %v6798 = vmul.f32 %v6795, %v2300
    %v6799 = vmul.f32 %v6795, %v2306
    %v6800 = vmul.f32 %v6795, %v2312
    %v6806 = vrot.slane %v6796, 5
    %v6807 = vrot.slane %v6797, 5
    %v6808 = vsel %vm6712, %v6806, %v6807
    %v6809 = vrot.slane %v6798, 5
    %v6810 = vsel %vm6712, %v6807, %v6809
    %v6811 = vrot.slane %v6799, 5
    %v6812 = vsel %vm6712, %v6809, %v6811
    %v6813 = vrot.slane %v6800, 5
    %v6814 = vsel %vm6712, %v6811, %v6813
    %v6820 = vadd.f32 %v6695, %v6808
    %v6821 = vadd.f32 %v6696, %v6810
    %v6822 = vadd.f32 %v6697, %v6812
    %v6823 = vadd.f32 %v6698, %v6814
    %v6824 = vadd.f32 %v6699, %v6813
    %s6825 = sld [smem:[#allocation5 + $0x13]]
    %v6826 = vstv %s6825
    %v6827 = vmul.f32 %v6826, %v4524
    %v6828 = vmul.f32 %v6826, %v4530
    %v6829 = vmul.f32 %v6826, %v4536
    %v6830 = vmul.f32 %v6826, %v4542
    %v6831 = vmul.f32 %v6826, %v4548
    %v6837 = vrot.slane %v6827, 5
    %v6838 = vrot.slane %v6828, 5
    %v6839 = vsel %vm6712, %v6837, %v6838
    %v6840 = vrot.slane %v6829, 5
    %v6841 = vsel %vm6712, %v6838, %v6840
    %v6842 = vrot.slane %v6830, 5
    %v6843 = vsel %vm6712, %v6840, %v6842
    %v6844 = vrot.slane %v6831, 5
    %v6845 = vsel %vm6712, %v6842, %v6844
    %v6851 = vadd.f32 %v6727, %v6839
    %v6852 = vadd.f32 %v6728, %v6841
    %v6853 = vadd.f32 %v6729, %v6843
    %v6854 = vadd.f32 %v6730, %v6845
    %v6855 = vadd.f32 %v6731, %v6844
    %s6856 = sld [smem:[#allocation5 + $0x53]]
    %v6857 = vstv %s6856
    %v6858 = vmul.f32 %v6857, %v4524
    %v6859 = vmul.f32 %v6857, %v4530
    %v6860 = vmul.f32 %v6857, %v4536
    %v6861 = vmul.f32 %v6857, %v4542
    %v6862 = vmul.f32 %v6857, %v4548
    %v6868 = vrot.slane %v6858, 5
    %v6869 = vrot.slane %v6859, 5
    %v6870 = vsel %vm6712, %v6868, %v6869
    %v6871 = vrot.slane %v6860, 5
    %v6872 = vsel %vm6712, %v6869, %v6871
    %v6873 = vrot.slane %v6861, 5
    %v6874 = vsel %vm6712, %v6871, %v6873
    %v6875 = vrot.slane %v6862, 5
    %v6876 = vsel %vm6712, %v6873, %v6875
    %v6882 = vadd.f32 %v6758, %v6870
    %v6883 = vadd.f32 %v6759, %v6872
    %v6884 = vadd.f32 %v6760, %v6874
    %v6885 = vadd.f32 %v6761, %v6876
    %v6886 = vadd.f32 %v6762, %v6875
    %s6887 = sld [smem:[#allocation5 + $0x93]]
    %v6888 = vstv %s6887
    %v6889 = vmul.f32 %v6888, %v4524
    %v6890 = vmul.f32 %v6888, %v4530
    %v6891 = vmul.f32 %v6888, %v4536
    %v6892 = vmul.f32 %v6888, %v4542
    %v6893 = vmul.f32 %v6888, %v4548
    %v6899 = vrot.slane %v6889, 5
    %v6900 = vrot.slane %v6890, 5
    %v6901 = vsel %vm6712, %v6899, %v6900
    %v6902 = vrot.slane %v6891, 5
    %v6903 = vsel %vm6712, %v6900, %v6902
    %v6904 = vrot.slane %v6892, 5
    %v6905 = vsel %vm6712, %v6902, %v6904
    %v6906 = vrot.slane %v6893, 5
    %v6907 = vsel %vm6712, %v6904, %v6906
    %v6913 = vadd.f32 %v6789, %v6901
    %v6914 = vadd.f32 %v6790, %v6903
    %v6915 = vadd.f32 %v6791, %v6905
    %v6916 = vadd.f32 %v6792, %v6907
    %v6917 = vadd.f32 %v6793, %v6906
    %s6918 = sld [smem:[#allocation5 + $0xd3]]
    %v6919 = vstv %s6918
    %v6920 = vmul.f32 %v6919, %v4524
    %v6921 = vmul.f32 %v6919, %v4530
    %v6922 = vmul.f32 %v6919, %v4536
    %v6923 = vmul.f32 %v6919, %v4542
    %v6924 = vmul.f32 %v6919, %v4548
    %v6930 = vrot.slane %v6920, 5
    %v6931 = vrot.slane %v6921, 5
    %v6932 = vsel %vm6712, %v6930, %v6931
    %v6933 = vrot.slane %v6922, 5
    %v6934 = vsel %vm6712, %v6931, %v6933
    %v6935 = vrot.slane %v6923, 5
    %v6936 = vsel %vm6712, %v6933, %v6935
    %v6937 = vrot.slane %v6924, 5
    %v6938 = vsel %vm6712, %v6935, %v6937
    %v6944 = vadd.f32 %v6820, %v6932
    %v6945 = vadd.f32 %v6821, %v6934
    %v6946 = vadd.f32 %v6822, %v6936
    %v6947 = vadd.f32 %v6823, %v6938
    %v6948 = vadd.f32 %v6824, %v6937
    %s6949 = sld [smem:[#allocation5 + $0x14]]
    %v6950 = vstv %s6949
    %v6951 = vmul.f32 %v6950, %v2288
    %v6952 = vmul.f32 %v6950, %v2294
    %v6953 = vmul.f32 %v6950, %v2300
    %v6954 = vmul.f32 %v6950, %v2306
    %v6955 = vmul.f32 %v6950, %v2312
    %v6956 = vmul.f32 %v6950, %v2318
    %v6963 = vrot.slane %v6951, 6
    %v6964 = vrot.slane %v6952, 6
    %v6965 = vsel %vm262, %v6963, %v6964
    %v6966 = vrot.slane %v6953, 6
    %v6967 = vsel %vm262, %v6964, %v6966
    %v6968 = vrot.slane %v6954, 6
    %v6969 = vsel %vm262, %v6966, %v6968
    %v6970 = vrot.slane %v6955, 6
    %v6971 = vsel %vm262, %v6968, %v6970
    %v6972 = vrot.slane %v6956, 6
    %v6973 = vsel %vm262, %v6970, %v6972
    %v6979 = vadd.f32 %v6851, %v6965
    %v6980 = vadd.f32 %v6852, %v6967
    %v6981 = vadd.f32 %v6853, %v6969
    %v6982 = vadd.f32 %v6854, %v6971
    %v6983 = vadd.f32 %v6855, %v6973
    %s6984 = sld [smem:[#allocation5 + $0x54]]
    %v6985 = vstv %s6984
    %v6986 = vmul.f32 %v6985, %v2288
    %v6987 = vmul.f32 %v6985, %v2294
    %v6988 = vmul.f32 %v6985, %v2300
    %v6989 = vmul.f32 %v6985, %v2306
    %v6990 = vmul.f32 %v6985, %v2312
    %v6991 = vmul.f32 %v6985, %v2318
    %v6998 = vrot.slane %v6986, 6
    %v6999 = vrot.slane %v6987, 6
    %v7000 = vsel %vm262, %v6998, %v6999
    %v7001 = vrot.slane %v6988, 6
    %v7002 = vsel %vm262, %v6999, %v7001
    %v7003 = vrot.slane %v6989, 6
    %v7004 = vsel %vm262, %v7001, %v7003
    %v7005 = vrot.slane %v6990, 6
    %v7006 = vsel %vm262, %v7003, %v7005
    %v7007 = vrot.slane %v6991, 6
    %v7008 = vsel %vm262, %v7005, %v7007
    %v7014 = vadd.f32 %v6882, %v7000
    %v7015 = vadd.f32 %v6883, %v7002
    %v7016 = vadd.f32 %v6884, %v7004
    %v7017 = vadd.f32 %v6885, %v7006
    %v7018 = vadd.f32 %v6886, %v7008
    %s7019 = sld [smem:[#allocation5 + $0x94]]
    %v7020 = vstv %s7019
    %v7021 = vmul.f32 %v7020, %v2288
    %v7022 = vmul.f32 %v7020, %v2294
    %v7023 = vmul.f32 %v7020, %v2300
    %v7024 = vmul.f32 %v7020, %v2306
    %v7025 = vmul.f32 %v7020, %v2312
    %v7026 = vmul.f32 %v7020, %v2318
    %v7033 = vrot.slane %v7021, 6
    %v7034 = vrot.slane %v7022, 6
    %v7035 = vsel %vm262, %v7033, %v7034
    %v7036 = vrot.slane %v7023, 6
    %v7037 = vsel %vm262, %v7034, %v7036
    %v7038 = vrot.slane %v7024, 6
    %v7039 = vsel %vm262, %v7036, %v7038
    %v7040 = vrot.slane %v7025, 6
    %v7041 = vsel %vm262, %v7038, %v7040
    %v7042 = vrot.slane %v7026, 6
    %v7043 = vsel %vm262, %v7040, %v7042
    %v7049 = vadd.f32 %v6913, %v7035
    %v7050 = vadd.f32 %v6914, %v7037
    %v7051 = vadd.f32 %v6915, %v7039
    %v7052 = vadd.f32 %v6916, %v7041
    %v7053 = vadd.f32 %v6917, %v7043
    %s7054 = sld [smem:[#allocation5 + $0xd4]]
    %v7055 = vstv %s7054
    %v7056 = vmul.f32 %v7055, %v2288
    %v7057 = vmul.f32 %v7055, %v2294
    %v7058 = vmul.f32 %v7055, %v2300
    %v7059 = vmul.f32 %v7055, %v2306
    %v7060 = vmul.f32 %v7055, %v2312
    %v7061 = vmul.f32 %v7055, %v2318
    %v7068 = vrot.slane %v7056, 6
    %v7069 = vrot.slane %v7057, 6
    %v7070 = vsel %vm262, %v7068, %v7069
    %v7071 = vrot.slane %v7058, 6
    %v7072 = vsel %vm262, %v7069, %v7071
    %v7073 = vrot.slane %v7059, 6
    %v7074 = vsel %vm262, %v7071, %v7073
    %v7075 = vrot.slane %v7060, 6
    %v7076 = vsel %vm262, %v7073, %v7075
    %v7077 = vrot.slane %v7061, 6
    %v7078 = vsel %vm262, %v7075, %v7077
    %v7084 = vadd.f32 %v6944, %v7070
    %v7085 = vadd.f32 %v6945, %v7072
    %v7086 = vadd.f32 %v6946, %v7074
    %v7087 = vadd.f32 %v6947, %v7076
    %v7088 = vadd.f32 %v6948, %v7078
    %s7089 = sld [smem:[#allocation5 + $0x15]]
    %v7090 = vstv %s7089
    %v7091 = vmul.f32 %v7090, %v4524
    %v7092 = vmul.f32 %v7090, %v4530
    %v7093 = vmul.f32 %v7090, %v4536
    %v7094 = vmul.f32 %v7090, %v4542
    %v7095 = vmul.f32 %v7090, %v4548
    %v7096 = vmul.f32 %v7090, %v4554
    %v7103 = vrot.slane %v7091, 6
    %v7104 = vrot.slane %v7092, 6
    %v7105 = vsel %vm262, %v7103, %v7104
    %v7106 = vrot.slane %v7093, 6
    %v7107 = vsel %vm262, %v7104, %v7106
    %v7108 = vrot.slane %v7094, 6
    %v7109 = vsel %vm262, %v7106, %v7108
    %v7110 = vrot.slane %v7095, 6
    %v7111 = vsel %vm262, %v7108, %v7110
    %v7112 = vrot.slane %v7096, 6
    %v7113 = vsel %vm262, %v7110, %v7112
    %v7119 = vadd.f32 %v6979, %v7105
    %v7120 = vadd.f32 %v6980, %v7107
    %v7121 = vadd.f32 %v6981, %v7109
    %v7122 = vadd.f32 %v6982, %v7111
    %v7123 = vadd.f32 %v6983, %v7113
    %s7124 = sld [smem:[#allocation5 + $0x55]]
    %v7125 = vstv %s7124
    %v7126 = vmul.f32 %v7125, %v4524
    %v7127 = vmul.f32 %v7125, %v4530
    %v7128 = vmul.f32 %v7125, %v4536
    %v7129 = vmul.f32 %v7125, %v4542
    %v7130 = vmul.f32 %v7125, %v4548
    %v7131 = vmul.f32 %v7125, %v4554
    %v7138 = vrot.slane %v7126, 6
    %v7139 = vrot.slane %v7127, 6
    %v7140 = vsel %vm262, %v7138, %v7139
    %v7141 = vrot.slane %v7128, 6
    %v7142 = vsel %vm262, %v7139, %v7141
    %v7143 = vrot.slane %v7129, 6
    %v7144 = vsel %vm262, %v7141, %v7143
    %v7145 = vrot.slane %v7130, 6
    %v7146 = vsel %vm262, %v7143, %v7145
    %v7147 = vrot.slane %v7131, 6
    %v7148 = vsel %vm262, %v7145, %v7147
    %v7154 = vadd.f32 %v7014, %v7140
    %v7155 = vadd.f32 %v7015, %v7142
    %v7156 = vadd.f32 %v7016, %v7144
    %v7157 = vadd.f32 %v7017, %v7146
    %v7158 = vadd.f32 %v7018, %v7148
    %s7159 = sld [smem:[#allocation5 + $0x95]]
    %v7160 = vstv %s7159
    %v7161 = vmul.f32 %v7160, %v4524
    %v7162 = vmul.f32 %v7160, %v4530
    %v7163 = vmul.f32 %v7160, %v4536
    %v7164 = vmul.f32 %v7160, %v4542
    %v7165 = vmul.f32 %v7160, %v4548
    %v7166 = vmul.f32 %v7160, %v4554
    %v7173 = vrot.slane %v7161, 6
    %v7174 = vrot.slane %v7162, 6
    %v7175 = vsel %vm262, %v7173, %v7174
    %v7176 = vrot.slane %v7163, 6
    %v7177 = vsel %vm262, %v7174, %v7176
    %v7178 = vrot.slane %v7164, 6
    %v7179 = vsel %vm262, %v7176, %v7178
    %v7180 = vrot.slane %v7165, 6
    %v7181 = vsel %vm262, %v7178, %v7180
    %v7182 = vrot.slane %v7166, 6
    %v7183 = vsel %vm262, %v7180, %v7182
    %v7189 = vadd.f32 %v7049, %v7175
    %v7190 = vadd.f32 %v7050, %v7177
    %v7191 = vadd.f32 %v7051, %v7179
    %v7192 = vadd.f32 %v7052, %v7181
    %v7193 = vadd.f32 %v7053, %v7183
    %s7194 = sld [smem:[#allocation5 + $0xd5]]
    %v7195 = vstv %s7194
    %v7196 = vmul.f32 %v7195, %v4524
    %v7197 = vmul.f32 %v7195, %v4530
    %v7198 = vmul.f32 %v7195, %v4536
    %v7199 = vmul.f32 %v7195, %v4542
    %v7200 = vmul.f32 %v7195, %v4548
    %v7201 = vmul.f32 %v7195, %v4554
    %v7208 = vrot.slane %v7196, 6
    %v7209 = vrot.slane %v7197, 6
    %v7210 = vsel %vm262, %v7208, %v7209
    %v7211 = vrot.slane %v7198, 6
    %v7212 = vsel %vm262, %v7209, %v7211
    %v7213 = vrot.slane %v7199, 6
    %v7214 = vsel %vm262, %v7211, %v7213
    %v7215 = vrot.slane %v7200, 6
    %v7216 = vsel %vm262, %v7213, %v7215
    %v7217 = vrot.slane %v7201, 6
    %v7218 = vsel %vm262, %v7215, %v7217
    %v7224 = vadd.f32 %v7084, %v7210
    %v7225 = vadd.f32 %v7085, %v7212
    %v7226 = vadd.f32 %v7086, %v7214
    %v7227 = vadd.f32 %v7087, %v7216
    %v7228 = vadd.f32 %v7088, %v7218
    %s7229 = sld [smem:[#allocation5 + $0x16]]
    %v7230 = vstv %s7229
    %v7231 = vmul.f32 %v7230, %v2288
    %v7232 = vmul.f32 %v7230, %v2294
    %v7233 = vmul.f32 %v7230, %v2300
    %v7234 = vmul.f32 %v7230, %v2306
    %v7235 = vmul.f32 %v7230, %v2312
    %v7236 = vmul.f32 %v7230, %v2318
    %v7243 = vrot.slane %v7231, 7
    %v7244 = vrot.slane %v7232, 7
    %v7245 = vsel %vm5840, %v7243, %v7244
    %v7246 = vrot.slane %v7233, 7
    %v7247 = vsel %vm5840, %v7244, %v7246
    %v7248 = vrot.slane %v7234, 7
    %v7249 = vsel %vm5840, %v7246, %v7248
    %v7250 = vrot.slane %v7235, 7
    %v7251 = vsel %vm5840, %v7248, %v7250
    %v7252 = vrot.slane %v7236, 7
    %v7253 = vsel %vm5840, %v7250, %v7252
    %v7259 = vadd.f32 %v7119, %v7245
    %v7260 = vadd.f32 %v7120, %v7247
    %v7261 = vadd.f32 %v7121, %v7249
    %v7262 = vadd.f32 %v7122, %v7251
    %v7263 = vadd.f32 %v7123, %v7253
    %s7264 = sld [smem:[#allocation5 + $0x56]]
    %v7265 = vstv %s7264
    %v7266 = vmul.f32 %v7265, %v2288
    %v7267 = vmul.f32 %v7265, %v2294
    %v7268 = vmul.f32 %v7265, %v2300
    %v7269 = vmul.f32 %v7265, %v2306
    %v7270 = vmul.f32 %v7265, %v2312
    %v7271 = vmul.f32 %v7265, %v2318
    %v7278 = vrot.slane %v7266, 7
    %v7279 = vrot.slane %v7267, 7
    %v7280 = vsel %vm5840, %v7278, %v7279
    %v7281 = vrot.slane %v7268, 7
    %v7282 = vsel %vm5840, %v7279, %v7281
    %v7283 = vrot.slane %v7269, 7
    %v7284 = vsel %vm5840, %v7281, %v7283
    %v7285 = vrot.slane %v7270, 7
    %v7286 = vsel %vm5840, %v7283, %v7285
    %v7287 = vrot.slane %v7271, 7
    %v7288 = vsel %vm5840, %v7285, %v7287
    %v7294 = vadd.f32 %v7154, %v7280
    %v7295 = vadd.f32 %v7155, %v7282
    %v7296 = vadd.f32 %v7156, %v7284
    %v7297 = vadd.f32 %v7157, %v7286
    %v7298 = vadd.f32 %v7158, %v7288
    %s7299 = sld [smem:[#allocation5 + $0x96]]
    %v7300 = vstv %s7299
    %v7301 = vmul.f32 %v7300, %v2288
    %v7302 = vmul.f32 %v7300, %v2294
    %v7303 = vmul.f32 %v7300, %v2300
    %v7304 = vmul.f32 %v7300, %v2306
    %v7305 = vmul.f32 %v7300, %v2312
    %v7306 = vmul.f32 %v7300, %v2318
    %v7313 = vrot.slane %v7301, 7
    %v7314 = vrot.slane %v7302, 7
    %v7315 = vsel %vm5840, %v7313, %v7314
    %v7316 = vrot.slane %v7303, 7
    %v7317 = vsel %vm5840, %v7314, %v7316
    %v7318 = vrot.slane %v7304, 7
    %v7319 = vsel %vm5840, %v7316, %v7318
    %v7320 = vrot.slane %v7305, 7
    %v7321 = vsel %vm5840, %v7318, %v7320
    %v7322 = vrot.slane %v7306, 7
    %v7323 = vsel %vm5840, %v7320, %v7322
    %v7329 = vadd.f32 %v7189, %v7315
    %v7330 = vadd.f32 %v7190, %v7317
    %v7331 = vadd.f32 %v7191, %v7319
    %v7332 = vadd.f32 %v7192, %v7321
    %v7333 = vadd.f32 %v7193, %v7323
    %s7334 = sld [smem:[#allocation5 + $0xd6]]
    %v7335 = vstv %s7334
    %v7336 = vmul.f32 %v7335, %v2288
    %v7337 = vmul.f32 %v7335, %v2294
    %v7338 = vmul.f32 %v7335, %v2300
    %v7339 = vmul.f32 %v7335, %v2306
    %v7340 = vmul.f32 %v7335, %v2312
    %v7341 = vmul.f32 %v7335, %v2318
    %v7348 = vrot.slane %v7336, 7
    %v7349 = vrot.slane %v7337, 7
    %v7350 = vsel %vm5840, %v7348, %v7349
    %v7351 = vrot.slane %v7338, 7
    %v7352 = vsel %vm5840, %v7349, %v7351
    %v7353 = vrot.slane %v7339, 7
    %v7354 = vsel %vm5840, %v7351, %v7353
    %v7355 = vrot.slane %v7340, 7
    %v7356 = vsel %vm5840, %v7353, %v7355
    %v7357 = vrot.slane %v7341, 7
    %v7358 = vsel %vm5840, %v7355, %v7357
    %v7364 = vadd.f32 %v7224, %v7350
    %v7365 = vadd.f32 %v7225, %v7352
    %v7366 = vadd.f32 %v7226, %v7354
    %v7367 = vadd.f32 %v7227, %v7356
    %v7368 = vadd.f32 %v7228, %v7358
    %s7369 = sld [smem:[#allocation5 + $0x17]]
    %v7370 = vstv %s7369
    %v7371 = vmul.f32 %v7370, %v4524
    %v7372 = vmul.f32 %v7370, %v4530
    %v7373 = vmul.f32 %v7370, %v4536
    %v7374 = vmul.f32 %v7370, %v4542
    %v7375 = vmul.f32 %v7370, %v4548
    %v7376 = vmul.f32 %v7370, %v4554
    %v7383 = vrot.slane %v7371, 7
    %v7384 = vrot.slane %v7372, 7
    %v7385 = vsel %vm5840, %v7383, %v7384
    %v7386 = vrot.slane %v7373, 7
    %v7387 = vsel %vm5840, %v7384, %v7386
    %v7388 = vrot.slane %v7374, 7
    %v7389 = vsel %vm5840, %v7386, %v7388
    %v7390 = vrot.slane %v7375, 7
    %v7391 = vsel %vm5840, %v7388, %v7390
    %v7392 = vrot.slane %v7376, 7
    %v7393 = vsel %vm5840, %v7390, %v7392
    %v7399 = vadd.f32 %v7259, %v7385
    %v7400 = vadd.f32 %v7260, %v7387
    %v7401 = vadd.f32 %v7261, %v7389
    %v7402 = vadd.f32 %v7262, %v7391
    %v7403 = vadd.f32 %v7263, %v7393
    %s7404 = sld [smem:[#allocation5 + $0x57]]
    %v7405 = vstv %s7404
    %v7406 = vmul.f32 %v7405, %v4524
    %v7407 = vmul.f32 %v7405, %v4530
    %v7408 = vmul.f32 %v7405, %v4536
    %v7409 = vmul.f32 %v7405, %v4542
    %v7410 = vmul.f32 %v7405, %v4548
    %v7411 = vmul.f32 %v7405, %v4554
    %v7418 = vrot.slane %v7406, 7
    %v7419 = vrot.slane %v7407, 7
    %v7420 = vsel %vm5840, %v7418, %v7419
    %v7421 = vrot.slane %v7408, 7
    %v7422 = vsel %vm5840, %v7419, %v7421
    %v7423 = vrot.slane %v7409, 7
    %v7424 = vsel %vm5840, %v7421, %v7423
    %v7425 = vrot.slane %v7410, 7
    %v7426 = vsel %vm5840, %v7423, %v7425
    %v7427 = vrot.slane %v7411, 7
    %v7428 = vsel %vm5840, %v7425, %v7427
    %v7434 = vadd.f32 %v7294, %v7420
    %v7435 = vadd.f32 %v7295, %v7422
    %v7436 = vadd.f32 %v7296, %v7424
    %v7437 = vadd.f32 %v7297, %v7426
    %v7438 = vadd.f32 %v7298, %v7428
    %s7439 = sld [smem:[#allocation5 + $0x97]]
    %v7440 = vstv %s7439
    %v7441 = vmul.f32 %v7440, %v4524
    %v7442 = vmul.f32 %v7440, %v4530
    %v7443 = vmul.f32 %v7440, %v4536
    %v7444 = vmul.f32 %v7440, %v4542
    %v7445 = vmul.f32 %v7440, %v4548
    %v7446 = vmul.f32 %v7440, %v4554
    %v7453 = vrot.slane %v7441, 7
    %v7454 = vrot.slane %v7442, 7
    %v7455 = vsel %vm5840, %v7453, %v7454
    %v7456 = vrot.slane %v7443, 7
    %v7457 = vsel %vm5840, %v7454, %v7456
    %v7458 = vrot.slane %v7444, 7
    %v7459 = vsel %vm5840, %v7456, %v7458
    %v7460 = vrot.slane %v7445, 7
    %v7461 = vsel %vm5840, %v7458, %v7460
    %v7462 = vrot.slane %v7446, 7
    %v7463 = vsel %vm5840, %v7460, %v7462
    %v7469 = vadd.f32 %v7329, %v7455
    %v7470 = vadd.f32 %v7330, %v7457
    %v7471 = vadd.f32 %v7331, %v7459
    %v7472 = vadd.f32 %v7332, %v7461
    %v7473 = vadd.f32 %v7333, %v7463
    %s7474 = sld [smem:[#allocation5 + $0xd7]]
    %v7475 = vstv %s7474
    %v7476 = vmul.f32 %v7475, %v4524
    %v7477 = vmul.f32 %v7475, %v4530
    %v7478 = vmul.f32 %v7475, %v4536
    %v7479 = vmul.f32 %v7475, %v4542
    %v7480 = vmul.f32 %v7475, %v4548
    %v7481 = vmul.f32 %v7475, %v4554
    %v7488 = vrot.slane %v7476, 7
    %v7489 = vrot.slane %v7477, 7
    %v7490 = vsel %vm5840, %v7488, %v7489
    %v7491 = vrot.slane %v7478, 7
    %v7492 = vsel %vm5840, %v7489, %v7491
    %v7493 = vrot.slane %v7479, 7
    %v7494 = vsel %vm5840, %v7491, %v7493
    %v7495 = vrot.slane %v7480, 7
    %v7496 = vsel %vm5840, %v7493, %v7495
    %v7497 = vrot.slane %v7481, 7
    %v7498 = vsel %vm5840, %v7495, %v7497
    %v7504 = vadd.f32 %v7364, %v7490
    %v7505 = vadd.f32 %v7365, %v7492
    %v7506 = vadd.f32 %v7366, %v7494
    %v7507 = vadd.f32 %v7367, %v7496
    %v7508 = vadd.f32 %v7368, %v7498
    %s7509 = sld [smem:[#allocation5 + $0x18]]
    %v7510 = vstv %s7509
    %v7511 = vmul.f32 %v7510, %v2318
    %v7512 = vmul.f32 %v7510, %v2324
    %v7513 = vmul.f32 %v7510, %v2330
    %v7514 = vmul.f32 %v7510, %v2336
    %v7515 = vmul.f32 %v7510, %v2342
    %v7521 = vrot.slane %v7511, 2
    %v7522 = vrot.slane %v7512, 2
    %v7523 = vsel %vm5060, %v7521, %v7522
    %v7524 = vrot.slane %v7513, 2
    %v7525 = vsel %vm5060, %v7522, %v7524
    %v7526 = vrot.slane %v7514, 2
    %v7527 = vsel %vm5060, %v7524, %v7526
    %v7528 = vrot.slane %v7515, 2
    %v7529 = vsel %vm5060, %v7526, %v7528
    %v7535 = vadd.f32 %v7399, %v7523
    %v7536 = vadd.f32 %v7400, %v7525
    %v7537 = vadd.f32 %v7401, %v7527
    %v7538 = vadd.f32 %v7402, %v7529
    %v7539 = vadd.f32 %v7403, %v7528
    %s7540 = sld [smem:[#allocation5 + $0x58]]
    %v7541 = vstv %s7540
    %v7542 = vmul.f32 %v7541, %v2318
    %v7543 = vmul.f32 %v7541, %v2324
    %v7544 = vmul.f32 %v7541, %v2330
    %v7545 = vmul.f32 %v7541, %v2336
    %v7546 = vmul.f32 %v7541, %v2342
    %v7552 = vrot.slane %v7542, 2
    %v7553 = vrot.slane %v7543, 2
    %v7554 = vsel %vm5060, %v7552, %v7553
    %v7555 = vrot.slane %v7544, 2
    %v7556 = vsel %vm5060, %v7553, %v7555
    %v7557 = vrot.slane %v7545, 2
    %v7558 = vsel %vm5060, %v7555, %v7557
    %v7559 = vrot.slane %v7546, 2
    %v7560 = vsel %vm5060, %v7557, %v7559
    %v7566 = vadd.f32 %v7434, %v7554
    %v7567 = vadd.f32 %v7435, %v7556
    %v7568 = vadd.f32 %v7436, %v7558
    %v7569 = vadd.f32 %v7437, %v7560
    %v7570 = vadd.f32 %v7438, %v7559
    %s7571 = sld [smem:[#allocation5 + $0x98]]
    %v7572 = vstv %s7571
    %v7573 = vmul.f32 %v7572, %v2318
    %v7574 = vmul.f32 %v7572, %v2324
    %v7575 = vmul.f32 %v7572, %v2330
    %v7576 = vmul.f32 %v7572, %v2336
    %v7577 = vmul.f32 %v7572, %v2342
    %v7583 = vrot.slane %v7573, 2
    %v7584 = vrot.slane %v7574, 2
    %v7585 = vsel %vm5060, %v7583, %v7584
    %v7586 = vrot.slane %v7575, 2
    %v7587 = vsel %vm5060, %v7584, %v7586
    %v7588 = vrot.slane %v7576, 2
    %v7589 = vsel %vm5060, %v7586, %v7588
    %v7590 = vrot.slane %v7577, 2
    %v7591 = vsel %vm5060, %v7588, %v7590
    %v7597 = vadd.f32 %v7469, %v7585
    %v7598 = vadd.f32 %v7470, %v7587
    %v7599 = vadd.f32 %v7471, %v7589
    %v7600 = vadd.f32 %v7472, %v7591
    %v7601 = vadd.f32 %v7473, %v7590
    %s7602 = sld [smem:[#allocation5 + $0xd8]]
    %v7603 = vstv %s7602
    %v7604 = vmul.f32 %v7603, %v2318
    %v7605 = vmul.f32 %v7603, %v2324
    %v7606 = vmul.f32 %v7603, %v2330
    %v7607 = vmul.f32 %v7603, %v2336
    %v7608 = vmul.f32 %v7603, %v2342
    %v7614 = vrot.slane %v7604, 2
    %v7615 = vrot.slane %v7605, 2
    %v7616 = vsel %vm5060, %v7614, %v7615
    %v7617 = vrot.slane %v7606, 2
    %v7618 = vsel %vm5060, %v7615, %v7617
    %v7619 = vrot.slane %v7607, 2
    %v7620 = vsel %vm5060, %v7617, %v7619
    %v7621 = vrot.slane %v7608, 2
    %v7622 = vsel %vm5060, %v7619, %v7621
    %v7628 = vadd.f32 %v7504, %v7616
    %v7629 = vadd.f32 %v7505, %v7618
    %v7630 = vadd.f32 %v7506, %v7620
    %v7631 = vadd.f32 %v7507, %v7622
    %v7632 = vadd.f32 %v7508, %v7621
    %s7633 = sld [smem:[#allocation5 + $0x19]]
    %v7634 = vstv %s7633
    %v7635 = vmul.f32 %v7634, %v4554
    %v7636 = vmul.f32 %v7634, %v4560
    %v7637 = vmul.f32 %v7634, %v4566
    %v7638 = vmul.f32 %v7634, %v4572
    %v7639 = vmul.f32 %v7634, %v4578
    %v7645 = vrot.slane %v7635, 2
    %v7646 = vrot.slane %v7636, 2
    %v7647 = vsel %vm5060, %v7645, %v7646
    %v7648 = vrot.slane %v7637, 2
    %v7649 = vsel %vm5060, %v7646, %v7648
    %v7650 = vrot.slane %v7638, 2
    %v7651 = vsel %vm5060, %v7648, %v7650
    %v7652 = vrot.slane %v7639, 2
    %v7653 = vsel %vm5060, %v7650, %v7652
    %v7659 = vadd.f32 %v7535, %v7647
    %v7660 = vadd.f32 %v7536, %v7649
    %v7661 = vadd.f32 %v7537, %v7651
    %v7662 = vadd.f32 %v7538, %v7653
    %v7663 = vadd.f32 %v7539, %v7652
    %s7664 = sld [smem:[#allocation5 + $0x59]]
    %v7665 = vstv %s7664
    %v7666 = vmul.f32 %v7665, %v4554
    %v7667 = vmul.f32 %v7665, %v4560
    %v7668 = vmul.f32 %v7665, %v4566
    %v7669 = vmul.f32 %v7665, %v4572
    %v7670 = vmul.f32 %v7665, %v4578
    %v7676 = vrot.slane %v7666, 2
    %v7677 = vrot.slane %v7667, 2
    %v7678 = vsel %vm5060, %v7676, %v7677
    %v7679 = vrot.slane %v7668, 2
    %v7680 = vsel %vm5060, %v7677, %v7679
    %v7681 = vrot.slane %v7669, 2
    %v7682 = vsel %vm5060, %v7679, %v7681
    %v7683 = vrot.slane %v7670, 2
    %v7684 = vsel %vm5060, %v7681, %v7683
    %v7690 = vadd.f32 %v7566, %v7678
    %v7691 = vadd.f32 %v7567, %v7680
    %v7692 = vadd.f32 %v7568, %v7682
    %v7693 = vadd.f32 %v7569, %v7684
    %v7694 = vadd.f32 %v7570, %v7683
    %s7695 = sld [smem:[#allocation5 + $0x99]]
    %v7696 = vstv %s7695
    %v7697 = vmul.f32 %v7696, %v4554
    %v7698 = vmul.f32 %v7696, %v4560
    %v7699 = vmul.f32 %v7696, %v4566
    %v7700 = vmul.f32 %v7696, %v4572
    %v7701 = vmul.f32 %v7696, %v4578
    %v7707 = vrot.slane %v7697, 2
    %v7708 = vrot.slane %v7698, 2
    %v7709 = vsel %vm5060, %v7707, %v7708
    %v7710 = vrot.slane %v7699, 2
    %v7711 = vsel %vm5060, %v7708, %v7710
    %v7712 = vrot.slane %v7700, 2
    %v7713 = vsel %vm5060, %v7710, %v7712
    %v7714 = vrot.slane %v7701, 2
    %v7715 = vsel %vm5060, %v7712, %v7714
    %v7721 = vadd.f32 %v7597, %v7709
    %v7722 = vadd.f32 %v7598, %v7711
    %v7723 = vadd.f32 %v7599, %v7713
    %v7724 = vadd.f32 %v7600, %v7715
    %v7725 = vadd.f32 %v7601, %v7714
    %s7726 = sld [smem:[#allocation5 + $0xd9]]
    %v7727 = vstv %s7726
    %v7728 = vmul.f32 %v7727, %v4554
    %v7729 = vmul.f32 %v7727, %v4560
    %v7730 = vmul.f32 %v7727, %v4566
    %v7731 = vmul.f32 %v7727, %v4572
    %v7732 = vmul.f32 %v7727, %v4578
    %v7738 = vrot.slane %v7728, 2
    %v7739 = vrot.slane %v7729, 2
    %v7740 = vsel %vm5060, %v7738, %v7739
    %v7741 = vrot.slane %v7730, 2
    %v7742 = vsel %vm5060, %v7739, %v7741
    %v7743 = vrot.slane %v7731, 2
    %v7744 = vsel %vm5060, %v7741, %v7743
    %v7745 = vrot.slane %v7732, 2
    %v7746 = vsel %vm5060, %v7743, %v7745
    %v7752 = vadd.f32 %v7628, %v7740
    %v7753 = vadd.f32 %v7629, %v7742
    %v7754 = vadd.f32 %v7630, %v7744
    %v7755 = vadd.f32 %v7631, %v7746
    %v7756 = vadd.f32 %v7632, %v7745
    %s7757 = sld [smem:[#allocation5 + $0x1a]]
    %v7758 = vstv %s7757
    %v7759 = vmul.f32 %v7758, %v2318
    %v7760 = vmul.f32 %v7758, %v2324
    %v7761 = vmul.f32 %v7758, %v2330
    %v7762 = vmul.f32 %v7758, %v2336
    %v7763 = vmul.f32 %v7758, %v2342
    %v7769 = vrot.slane %v7759, 3
    %v7770 = vrot.slane %v7760, 3
    %v7771 = vsel %vm5309, %v7769, %v7770
    %v7772 = vrot.slane %v7761, 3
    %v7773 = vsel %vm5309, %v7770, %v7772
    %v7774 = vrot.slane %v7762, 3
    %v7775 = vsel %vm5309, %v7772, %v7774
    %v7776 = vrot.slane %v7763, 3
    %v7777 = vsel %vm5309, %v7774, %v7776
    %v7783 = vadd.f32 %v7659, %v7771
    %v7784 = vadd.f32 %v7660, %v7773
    %v7785 = vadd.f32 %v7661, %v7775
    %v7786 = vadd.f32 %v7662, %v7777
    %v7787 = vadd.f32 %v7663, %v7776
    %s7788 = sld [smem:[#allocation5 + $0x5a]]
    %v7789 = vstv %s7788
    %v7790 = vmul.f32 %v7789, %v2318
    %v7791 = vmul.f32 %v7789, %v2324
    %v7792 = vmul.f32 %v7789, %v2330
    %v7793 = vmul.f32 %v7789, %v2336
    %v7794 = vmul.f32 %v7789, %v2342
    %v7800 = vrot.slane %v7790, 3
    %v7801 = vrot.slane %v7791, 3
    %v7802 = vsel %vm5309, %v7800, %v7801
    %v7803 = vrot.slane %v7792, 3
    %v7804 = vsel %vm5309, %v7801, %v7803
    %v7805 = vrot.slane %v7793, 3
    %v7806 = vsel %vm5309, %v7803, %v7805
    %v7807 = vrot.slane %v7794, 3
    %v7808 = vsel %vm5309, %v7805, %v7807
    %v7814 = vadd.f32 %v7690, %v7802
    %v7815 = vadd.f32 %v7691, %v7804
    %v7816 = vadd.f32 %v7692, %v7806
    %v7817 = vadd.f32 %v7693, %v7808
    %v7818 = vadd.f32 %v7694, %v7807
    %s7819 = sld [smem:[#allocation5 + $0x9a]]
    %v7820 = vstv %s7819
    %v7821 = vmul.f32 %v7820, %v2318
    %v7822 = vmul.f32 %v7820, %v2324
    %v7823 = vmul.f32 %v7820, %v2330
    %v7824 = vmul.f32 %v7820, %v2336
    %v7825 = vmul.f32 %v7820, %v2342
    %v7831 = vrot.slane %v7821, 3
    %v7832 = vrot.slane %v7822, 3
    %v7833 = vsel %vm5309, %v7831, %v7832
    %v7834 = vrot.slane %v7823, 3
    %v7835 = vsel %vm5309, %v7832, %v7834
    %v7836 = vrot.slane %v7824, 3
    %v7837 = vsel %vm5309, %v7834, %v7836
    %v7838 = vrot.slane %v7825, 3
    %v7839 = vsel %vm5309, %v7836, %v7838
    %v7845 = vadd.f32 %v7721, %v7833
    %v7846 = vadd.f32 %v7722, %v7835
    %v7847 = vadd.f32 %v7723, %v7837
    %v7848 = vadd.f32 %v7724, %v7839
    %v7849 = vadd.f32 %v7725, %v7838
    %s7850 = sld [smem:[#allocation5 + $0xda]]
    %v7851 = vstv %s7850
    %v7852 = vmul.f32 %v7851, %v2318
    %v7853 = vmul.f32 %v7851, %v2324
    %v7854 = vmul.f32 %v7851, %v2330
    %v7855 = vmul.f32 %v7851, %v2336
    %v7856 = vmul.f32 %v7851, %v2342
    %v7862 = vrot.slane %v7852, 3
    %v7863 = vrot.slane %v7853, 3
    %v7864 = vsel %vm5309, %v7862, %v7863
    %v7865 = vrot.slane %v7854, 3
    %v7866 = vsel %vm5309, %v7863, %v7865
    %v7867 = vrot.slane %v7855, 3
    %v7868 = vsel %vm5309, %v7865, %v7867
    %v7869 = vrot.slane %v7856, 3
    %v7870 = vsel %vm5309, %v7867, %v7869
    %v7876 = vadd.f32 %v7752, %v7864
    %v7877 = vadd.f32 %v7753, %v7866
    %v7878 = vadd.f32 %v7754, %v7868
    %v7879 = vadd.f32 %v7755, %v7870
    %v7880 = vadd.f32 %v7756, %v7869
    %s7881 = sld [smem:[#allocation5 + $0x1b]]
    %v7882 = vstv %s7881
    %v7883 = vmul.f32 %v7882, %v4554
    %v7884 = vmul.f32 %v7882, %v4560
    %v7885 = vmul.f32 %v7882, %v4566
    %v7886 = vmul.f32 %v7882, %v4572
    %v7887 = vmul.f32 %v7882, %v4578
    %v7893 = vrot.slane %v7883, 3
    %v7894 = vrot.slane %v7884, 3
    %v7895 = vsel %vm5309, %v7893, %v7894
    %v7896 = vrot.slane %v7885, 3
    %v7897 = vsel %vm5309, %v7894, %v7896
    %v7898 = vrot.slane %v7886, 3
    %v7899 = vsel %vm5309, %v7896, %v7898
    %v7900 = vrot.slane %v7887, 3
    %v7901 = vsel %vm5309, %v7898, %v7900
    %v7907 = vadd.f32 %v7783, %v7895
    %v7908 = vadd.f32 %v7784, %v7897
    %v7909 = vadd.f32 %v7785, %v7899
    %v7910 = vadd.f32 %v7786, %v7901
    %v7911 = vadd.f32 %v7787, %v7900
    %s7912 = sld [smem:[#allocation5 + $0x5b]]
    %v7913 = vstv %s7912
    %v7914 = vmul.f32 %v7913, %v4554
    %v7915 = vmul.f32 %v7913, %v4560
    %v7916 = vmul.f32 %v7913, %v4566
    %v7917 = vmul.f32 %v7913, %v4572
    %v7918 = vmul.f32 %v7913, %v4578
    %v7924 = vrot.slane %v7914, 3
    %v7925 = vrot.slane %v7915, 3
    %v7926 = vsel %vm5309, %v7924, %v7925
    %v7927 = vrot.slane %v7916, 3
    %v7928 = vsel %vm5309, %v7925, %v7927
    %v7929 = vrot.slane %v7917, 3
    %v7930 = vsel %vm5309, %v7927, %v7929
    %v7931 = vrot.slane %v7918, 3
    %v7932 = vsel %vm5309, %v7929, %v7931
    %v7938 = vadd.f32 %v7814, %v7926
    %v7939 = vadd.f32 %v7815, %v7928
    %v7940 = vadd.f32 %v7816, %v7930
    %v7941 = vadd.f32 %v7817, %v7932
    %v7942 = vadd.f32 %v7818, %v7931
    %s7943 = sld [smem:[#allocation5 + $0x9b]]
    %v7944 = vstv %s7943
    %v7945 = vmul.f32 %v7944, %v4554
    %v7946 = vmul.f32 %v7944, %v4560
    %v7947 = vmul.f32 %v7944, %v4566
    %v7948 = vmul.f32 %v7944, %v4572
    %v7949 = vmul.f32 %v7944, %v4578
    %v7955 = vrot.slane %v7945, 3
    %v7956 = vrot.slane %v7946, 3
    %v7957 = vsel %vm5309, %v7955, %v7956
    %v7958 = vrot.slane %v7947, 3
    %v7959 = vsel %vm5309, %v7956, %v7958
    %v7960 = vrot.slane %v7948, 3
    %v7961 = vsel %vm5309, %v7958, %v7960
    %v7962 = vrot.slane %v7949, 3
    %v7963 = vsel %vm5309, %v7960, %v7962
    %v7969 = vadd.f32 %v7845, %v7957
    %v7970 = vadd.f32 %v7846, %v7959
    %v7971 = vadd.f32 %v7847, %v7961
    %v7972 = vadd.f32 %v7848, %v7963
    %v7973 = vadd.f32 %v7849, %v7962
    %s7974 = sld [smem:[#allocation5 + $0xdb]]
    %v7975 = vstv %s7974
    %v7976 = vmul.f32 %v7975, %v4554
    %v7977 = vmul.f32 %v7975, %v4560
    %v7978 = vmul.f32 %v7975, %v4566
    %v7979 = vmul.f32 %v7975, %v4572
    %v7980 = vmul.f32 %v7975, %v4578
    %v7986 = vrot.slane %v7976, 3
    %v7987 = vrot.slane %v7977, 3
    %v7988 = vsel %vm5309, %v7986, %v7987
    %v7989 = vrot.slane %v7978, 3
    %v7990 = vsel %vm5309, %v7987, %v7989
    %v7991 = vrot.slane %v7979, 3
    %v7992 = vsel %vm5309, %v7989, %v7991
    %v7993 = vrot.slane %v7980, 3
    %v7994 = vsel %vm5309, %v7991, %v7993
    %v8000 = vadd.f32 %v7876, %v7988
    %v8001 = vadd.f32 %v7877, %v7990
    %v8002 = vadd.f32 %v7878, %v7992
    %v8003 = vadd.f32 %v7879, %v7994
    %v8004 = vadd.f32 %v7880, %v7993
    %s8005 = sld [smem:[#allocation5 + $0x1c]]
    %v8006 = vstv %s8005
    %v8007 = vmul.f32 %v8006, %v2318
    %v8008 = vmul.f32 %v8006, %v2324
    %v8009 = vmul.f32 %v8006, %v2330
    %v8010 = vmul.f32 %v8006, %v2336
    %v8011 = vmul.f32 %v8006, %v2342
    %v8017 = vrot.slane %v8007, 4
    %v8018 = vrot.slane %v8008, 4
    %v8019 = vsel %vm6463, %v8017, %v8018
    %v8020 = vrot.slane %v8009, 4
    %v8021 = vsel %vm6463, %v8018, %v8020
    %v8022 = vrot.slane %v8010, 4
    %v8023 = vsel %vm6463, %v8020, %v8022
    %v8024 = vrot.slane %v8011, 4
    %v8025 = vsel %vm6463, %v8022, %v8024
    %v8031 = vadd.f32 %v7907, %v8019
    %v8032 = vadd.f32 %v7908, %v8021
    %v8033 = vadd.f32 %v7909, %v8023
    %v8034 = vadd.f32 %v7910, %v8025
    %v8035 = vadd.f32 %v7911, %v8024
    %s8036 = sld [smem:[#allocation5 + $0x5c]]
    %v8037 = vstv %s8036
    %v8038 = vmul.f32 %v8037, %v2318
    %v8039 = vmul.f32 %v8037, %v2324
    %v8040 = vmul.f32 %v8037, %v2330
    %v8041 = vmul.f32 %v8037, %v2336
    %v8042 = vmul.f32 %v8037, %v2342
    %v8048 = vrot.slane %v8038, 4
    %v8049 = vrot.slane %v8039, 4
    %v8050 = vsel %vm6463, %v8048, %v8049
    %v8051 = vrot.slane %v8040, 4
    %v8052 = vsel %vm6463, %v8049, %v8051
    %v8053 = vrot.slane %v8041, 4
    %v8054 = vsel %vm6463, %v8051, %v8053
    %v8055 = vrot.slane %v8042, 4
    %v8056 = vsel %vm6463, %v8053, %v8055
    %v8062 = vadd.f32 %v7938, %v8050
    %v8063 = vadd.f32 %v7939, %v8052
    %v8064 = vadd.f32 %v7940, %v8054
    %v8065 = vadd.f32 %v7941, %v8056
    %v8066 = vadd.f32 %v7942, %v8055
    %s8067 = sld [smem:[#allocation5 + $0x9c]]
    %v8068 = vstv %s8067
    %v8069 = vmul.f32 %v8068, %v2318
    %v8070 = vmul.f32 %v8068, %v2324
    %v8071 = vmul.f32 %v8068, %v2330
    %v8072 = vmul.f32 %v8068, %v2336
    %v8073 = vmul.f32 %v8068, %v2342
    %v8079 = vrot.slane %v8069, 4
    %v8080 = vrot.slane %v8070, 4
    %v8081 = vsel %vm6463, %v8079, %v8080
    %v8082 = vrot.slane %v8071, 4
    %v8083 = vsel %vm6463, %v8080, %v8082
    %v8084 = vrot.slane %v8072, 4
    %v8085 = vsel %vm6463, %v8082, %v8084
    %v8086 = vrot.slane %v8073, 4
    %v8087 = vsel %vm6463, %v8084, %v8086
    %v8093 = vadd.f32 %v7969, %v8081
    %v8094 = vadd.f32 %v7970, %v8083
    %v8095 = vadd.f32 %v7971, %v8085
    %v8096 = vadd.f32 %v7972, %v8087
    %v8097 = vadd.f32 %v7973, %v8086
    %s8098 = sld [smem:[#allocation5 + $0xdc]]
    %v8099 = vstv %s8098
    %v8100 = vmul.f32 %v8099, %v2318
    %v8101 = vmul.f32 %v8099, %v2324
    %v8102 = vmul.f32 %v8099, %v2330
    %v8103 = vmul.f32 %v8099, %v2336
    %v8104 = vmul.f32 %v8099, %v2342
    %v8110 = vrot.slane %v8100, 4
    %v8111 = vrot.slane %v8101, 4
    %v8112 = vsel %vm6463, %v8110, %v8111
    %v8113 = vrot.slane %v8102, 4
    %v8114 = vsel %vm6463, %v8111, %v8113
    %v8115 = vrot.slane %v8103, 4
    %v8116 = vsel %vm6463, %v8113, %v8115
    %v8117 = vrot.slane %v8104, 4
    %v8118 = vsel %vm6463, %v8115, %v8117
    %v8124 = vadd.f32 %v8000, %v8112
    %v8125 = vadd.f32 %v8001, %v8114
    %v8126 = vadd.f32 %v8002, %v8116
    %v8127 = vadd.f32 %v8003, %v8118
    %v8128 = vadd.f32 %v8004, %v8117
    %s8129 = sld [smem:[#allocation5 + $0x1d]]
    %v8130 = vstv %s8129
    %v8131 = vmul.f32 %v8130, %v4554
    %v8132 = vmul.f32 %v8130, %v4560
    %v8133 = vmul.f32 %v8130, %v4566
    %v8134 = vmul.f32 %v8130, %v4572
    %v8135 = vmul.f32 %v8130, %v4578
    %v8141 = vrot.slane %v8131, 4
    %v8142 = vrot.slane %v8132, 4
    %v8143 = vsel %vm6463, %v8141, %v8142
    %v8144 = vrot.slane %v8133, 4
    %v8145 = vsel %vm6463, %v8142, %v8144
    %v8146 = vrot.slane %v8134, 4
    %v8147 = vsel %vm6463, %v8144, %v8146
    %v8148 = vrot.slane %v8135, 4
    %v8149 = vsel %vm6463, %v8146, %v8148
    %v8155 = vadd.f32 %v8031, %v8143
    %v8156 = vadd.f32 %v8032, %v8145
    %v8157 = vadd.f32 %v8033, %v8147
    %v8158 = vadd.f32 %v8034, %v8149
    %v8159 = vadd.f32 %v8035, %v8148
    %s8160 = sld [smem:[#allocation5 + $0x5d]]
    %v8161 = vstv %s8160
    %v8162 = vmul.f32 %v8161, %v4554
    %v8163 = vmul.f32 %v8161, %v4560
    %v8164 = vmul.f32 %v8161, %v4566
    %v8165 = vmul.f32 %v8161, %v4572
    %v8166 = vmul.f32 %v8161, %v4578
    %v8172 = vrot.slane %v8162, 4
    %v8173 = vrot.slane %v8163, 4
    %v8174 = vsel %vm6463, %v8172, %v8173
    %v8175 = vrot.slane %v8164, 4
    %v8176 = vsel %vm6463, %v8173, %v8175
    %v8177 = vrot.slane %v8165, 4
    %v8178 = vsel %vm6463, %v8175, %v8177
    %v8179 = vrot.slane %v8166, 4
    %v8180 = vsel %vm6463, %v8177, %v8179
    %v8186 = vadd.f32 %v8062, %v8174
    %v8187 = vadd.f32 %v8063, %v8176
    %v8188 = vadd.f32 %v8064, %v8178
    %v8189 = vadd.f32 %v8065, %v8180
    %v8190 = vadd.f32 %v8066, %v8179
    %s8191 = sld [smem:[#allocation5 + $0x9d]]
    %v8192 = vstv %s8191
    %v8193 = vmul.f32 %v8192, %v4554
    %v8194 = vmul.f32 %v8192, %v4560
    %v8195 = vmul.f32 %v8192, %v4566
    %v8196 = vmul.f32 %v8192, %v4572
    %v8197 = vmul.f32 %v8192, %v4578
    %v8203 = vrot.slane %v8193, 4
    %v8204 = vrot.slane %v8194, 4
    %v8205 = vsel %vm6463, %v8203, %v8204
    %v8206 = vrot.slane %v8195, 4
    %v8207 = vsel %vm6463, %v8204, %v8206
    %v8208 = vrot.slane %v8196, 4
    %v8209 = vsel %vm6463, %v8206, %v8208
    %v8210 = vrot.slane %v8197, 4
    %v8211 = vsel %vm6463, %v8208, %v8210
    %v8217 = vadd.f32 %v8093, %v8205
    %v8218 = vadd.f32 %v8094, %v8207
    %v8219 = vadd.f32 %v8095, %v8209
    %v8220 = vadd.f32 %v8096, %v8211
    %v8221 = vadd.f32 %v8097, %v8210
    %s8222 = sld [smem:[#allocation5 + $0xdd]]
    %v8223 = vstv %s8222
    %v8224 = vmul.f32 %v8223, %v4554
    %v8225 = vmul.f32 %v8223, %v4560
    %v8226 = vmul.f32 %v8223, %v4566
    %v8227 = vmul.f32 %v8223, %v4572
    %v8228 = vmul.f32 %v8223, %v4578
    %v8234 = vrot.slane %v8224, 4
    %v8235 = vrot.slane %v8225, 4
    %v8236 = vsel %vm6463, %v8234, %v8235
    %v8237 = vrot.slane %v8226, 4
    %v8238 = vsel %vm6463, %v8235, %v8237
    %v8239 = vrot.slane %v8227, 4
    %v8240 = vsel %vm6463, %v8237, %v8239
    %v8241 = vrot.slane %v8228, 4
    %v8242 = vsel %vm6463, %v8239, %v8241
    %v8248 = vadd.f32 %v8124, %v8236
    %v8249 = vadd.f32 %v8125, %v8238
    %v8250 = vadd.f32 %v8126, %v8240
    %v8251 = vadd.f32 %v8127, %v8242
    %v8252 = vadd.f32 %v8128, %v8241
    %s8253 = sld [smem:[#allocation5 + $0x1e]]
    %v8254 = vstv %s8253
    %v8255 = vmul.f32 %v8254, %v2318
    %v8256 = vmul.f32 %v8254, %v2324
    %v8257 = vmul.f32 %v8254, %v2330
    %v8258 = vmul.f32 %v8254, %v2336
    %v8259 = vmul.f32 %v8254, %v2342
    %v8265 = vrot.slane %v8255, 5
    %v8266 = vrot.slane %v8256, 5
    %v8267 = vsel %vm6712, %v8265, %v8266
    %v8268 = vrot.slane %v8257, 5
    %v8269 = vsel %vm6712, %v8266, %v8268
    %v8270 = vrot.slane %v8258, 5
    %v8271 = vsel %vm6712, %v8268, %v8270
    %v8272 = vrot.slane %v8259, 5
    %v8273 = vsel %vm6712, %v8270, %v8272
    %v8279 = vadd.f32 %v8155, %v8267
    %v8280 = vadd.f32 %v8156, %v8269
    %v8281 = vadd.f32 %v8157, %v8271
    %v8282 = vadd.f32 %v8158, %v8273
    %v8283 = vadd.f32 %v8159, %v8272
    %s8284 = sld [smem:[#allocation5 + $0x5e]]
    %v8285 = vstv %s8284
    %v8286 = vmul.f32 %v8285, %v2318
    %v8287 = vmul.f32 %v8285, %v2324
    %v8288 = vmul.f32 %v8285, %v2330
    %v8289 = vmul.f32 %v8285, %v2336
    %v8290 = vmul.f32 %v8285, %v2342
    %v8296 = vrot.slane %v8286, 5
    %v8297 = vrot.slane %v8287, 5
    %v8298 = vsel %vm6712, %v8296, %v8297
    %v8299 = vrot.slane %v8288, 5
    %v8300 = vsel %vm6712, %v8297, %v8299
    %v8301 = vrot.slane %v8289, 5
    %v8302 = vsel %vm6712, %v8299, %v8301
    %v8303 = vrot.slane %v8290, 5
    %v8304 = vsel %vm6712, %v8301, %v8303
    %v8310 = vadd.f32 %v8186, %v8298
    %v8311 = vadd.f32 %v8187, %v8300
    %v8312 = vadd.f32 %v8188, %v8302
    %v8313 = vadd.f32 %v8189, %v8304
    %v8314 = vadd.f32 %v8190, %v8303
    %s8315 = sld [smem:[#allocation5 + $0x9e]]
    %v8316 = vstv %s8315
    %v8317 = vmul.f32 %v8316, %v2318
    %v8318 = vmul.f32 %v8316, %v2324
    %v8319 = vmul.f32 %v8316, %v2330
    %v8320 = vmul.f32 %v8316, %v2336
    %v8321 = vmul.f32 %v8316, %v2342
    %v8327 = vrot.slane %v8317, 5
    %v8328 = vrot.slane %v8318, 5
    %v8329 = vsel %vm6712, %v8327, %v8328
    %v8330 = vrot.slane %v8319, 5
    %v8331 = vsel %vm6712, %v8328, %v8330
    %v8332 = vrot.slane %v8320, 5
    %v8333 = vsel %vm6712, %v8330, %v8332
    %v8334 = vrot.slane %v8321, 5
    %v8335 = vsel %vm6712, %v8332, %v8334
    %v8341 = vadd.f32 %v8217, %v8329
    %v8342 = vadd.f32 %v8218, %v8331
    %v8343 = vadd.f32 %v8219, %v8333
    %v8344 = vadd.f32 %v8220, %v8335
    %v8345 = vadd.f32 %v8221, %v8334
    %s8346 = sld [smem:[#allocation5 + $0xde]]
    %v8347 = vstv %s8346
    %v8348 = vmul.f32 %v8347, %v2318
    %v8349 = vmul.f32 %v8347, %v2324
    %v8350 = vmul.f32 %v8347, %v2330
    %v8351 = vmul.f32 %v8347, %v2336
    %v8352 = vmul.f32 %v8347, %v2342
    %v8358 = vrot.slane %v8348, 5
    %v8359 = vrot.slane %v8349, 5
    %v8360 = vsel %vm6712, %v8358, %v8359
    %v8361 = vrot.slane %v8350, 5
    %v8362 = vsel %vm6712, %v8359, %v8361
    %v8363 = vrot.slane %v8351, 5
    %v8364 = vsel %vm6712, %v8361, %v8363
    %v8365 = vrot.slane %v8352, 5
    %v8366 = vsel %vm6712, %v8363, %v8365
    %v8372 = vadd.f32 %v8248, %v8360
    %v8373 = vadd.f32 %v8249, %v8362
    %v8374 = vadd.f32 %v8250, %v8364
    %v8375 = vadd.f32 %v8251, %v8366
    %v8376 = vadd.f32 %v8252, %v8365
    %s8377 = sld [smem:[#allocation5 + $0x1f]]
    %v8378 = vstv %s8377
    %v8379 = vmul.f32 %v8378, %v4554
    %v8380 = vmul.f32 %v8378, %v4560
    %v8381 = vmul.f32 %v8378, %v4566
    %v8382 = vmul.f32 %v8378, %v4572
    %v8383 = vmul.f32 %v8378, %v4578
    %v8389 = vrot.slane %v8379, 5
    %v8390 = vrot.slane %v8380, 5
    %v8391 = vsel %vm6712, %v8389, %v8390
    %v8392 = vrot.slane %v8381, 5
    %v8393 = vsel %vm6712, %v8390, %v8392
    %v8394 = vrot.slane %v8382, 5
    %v8395 = vsel %vm6712, %v8392, %v8394
    %v8396 = vrot.slane %v8383, 5
    %v8397 = vsel %vm6712, %v8394, %v8396
    %v8403 = vadd.f32 %v8279, %v8391
    %v8404 = vadd.f32 %v8280, %v8393
    %v8405 = vadd.f32 %v8281, %v8395
    %v8406 = vadd.f32 %v8282, %v8397
    %v8407 = vadd.f32 %v8283, %v8396
    %s8408 = sld [smem:[#allocation5 + $0x5f]]
    %v8409 = vstv %s8408
    %v8410 = vmul.f32 %v8409, %v4554
    %v8411 = vmul.f32 %v8409, %v4560
    %v8412 = vmul.f32 %v8409, %v4566
    %v8413 = vmul.f32 %v8409, %v4572
    %v8414 = vmul.f32 %v8409, %v4578
    %v8420 = vrot.slane %v8410, 5
    %v8421 = vrot.slane %v8411, 5
    %v8422 = vsel %vm6712, %v8420, %v8421
    %v8423 = vrot.slane %v8412, 5
    %v8424 = vsel %vm6712, %v8421, %v8423
    %v8425 = vrot.slane %v8413, 5
    %v8426 = vsel %vm6712, %v8423, %v8425
    %v8427 = vrot.slane %v8414, 5
    %v8428 = vsel %vm6712, %v8425, %v8427
    %v8434 = vadd.f32 %v8310, %v8422
    %v8435 = vadd.f32 %v8311, %v8424
    %v8436 = vadd.f32 %v8312, %v8426
    %v8437 = vadd.f32 %v8313, %v8428
    %v8438 = vadd.f32 %v8314, %v8427
    %s8439 = sld [smem:[#allocation5 + $0x9f]]
    %v8440 = vstv %s8439
    %v8441 = vmul.f32 %v8440, %v4554
    %v8442 = vmul.f32 %v8440, %v4560
    %v8443 = vmul.f32 %v8440, %v4566
    %v8444 = vmul.f32 %v8440, %v4572
    %v8445 = vmul.f32 %v8440, %v4578
    %v8451 = vrot.slane %v8441, 5
    %v8452 = vrot.slane %v8442, 5
    %v8453 = vsel %vm6712, %v8451, %v8452
    %v8454 = vrot.slane %v8443, 5
    %v8455 = vsel %vm6712, %v8452, %v8454
    %v8456 = vrot.slane %v8444, 5
    %v8457 = vsel %vm6712, %v8454, %v8456
    %v8458 = vrot.slane %v8445, 5
    %v8459 = vsel %vm6712, %v8456, %v8458
    %v8465 = vadd.f32 %v8341, %v8453
    %v8466 = vadd.f32 %v8342, %v8455
    %v8467 = vadd.f32 %v8343, %v8457
    %v8468 = vadd.f32 %v8344, %v8459
    %v8469 = vadd.f32 %v8345, %v8458
    %s8470 = sld [smem:[#allocation5 + $0xdf]]
    %v8471 = vstv %s8470
    %v8472 = vmul.f32 %v8471, %v4554
    %v8473 = vmul.f32 %v8471, %v4560
    %v8474 = vmul.f32 %v8471, %v4566
    %v8475 = vmul.f32 %v8471, %v4572
    %v8476 = vmul.f32 %v8471, %v4578
    %v8482 = vrot.slane %v8472, 5
    %v8483 = vrot.slane %v8473, 5
    %v8484 = vsel %vm6712, %v8482, %v8483
    %v8485 = vrot.slane %v8474, 5
    %v8486 = vsel %vm6712, %v8483, %v8485
    %v8487 = vrot.slane %v8475, 5
    %v8488 = vsel %vm6712, %v8485, %v8487
    %v8489 = vrot.slane %v8476, 5
    %v8490 = vsel %vm6712, %v8487, %v8489
    %v8496 = vadd.f32 %v8372, %v8484
    %v8497 = vadd.f32 %v8373, %v8486
    %v8498 = vadd.f32 %v8374, %v8488
    %v8499 = vadd.f32 %v8375, %v8490
    %v8500 = vadd.f32 %v8376, %v8489
    %s8501 = sld [smem:[#allocation5 + $0x20]]
    %v8502 = vstv %s8501
    %v8503 = vmul.f32 %v8502, %v2348
    %v8504 = vmul.f32 %v8502, %v2354
    %v8505 = vmul.f32 %v8502, %v2360
    %v8506 = vmul.f32 %v8502, %v2366
    %v8507 = vmul.f32 %v8502, %v2372
    %v8508 = vadd.f32 %v8403, %v8503
    %v8509 = vadd.f32 %v8404, %v8504
    %v8510 = vadd.f32 %v8405, %v8505
    %v8511 = vadd.f32 %v8406, %v8506
    %v8512 = vadd.f32 %v8407, %v8507
    %s8513 = sld [smem:[#allocation5 + $0x60]]
    %v8514 = vstv %s8513
    %v8515 = vmul.f32 %v8514, %v2348
    %v8516 = vmul.f32 %v8514, %v2354
    %v8517 = vmul.f32 %v8514, %v2360
    %v8518 = vmul.f32 %v8514, %v2366
    %v8519 = vmul.f32 %v8514, %v2372
    %v8520 = vadd.f32 %v8434, %v8515
    %v8521 = vadd.f32 %v8435, %v8516
    %v8522 = vadd.f32 %v8436, %v8517
    %v8523 = vadd.f32 %v8437, %v8518
    %v8524 = vadd.f32 %v8438, %v8519
    %s8525 = sld [smem:[#allocation5 + $0xa0]]
    %v8526 = vstv %s8525
    %v8527 = vmul.f32 %v8526, %v2348
    %v8528 = vmul.f32 %v8526, %v2354
    %v8529 = vmul.f32 %v8526, %v2360
    %v8530 = vmul.f32 %v8526, %v2366
    %v8531 = vmul.f32 %v8526, %v2372
    %v8532 = vadd.f32 %v8465, %v8527
    %v8533 = vadd.f32 %v8466, %v8528
    %v8534 = vadd.f32 %v8467, %v8529
    %v8535 = vadd.f32 %v8468, %v8530
    %v8536 = vadd.f32 %v8469, %v8531
    %s8537 = sld [smem:[#allocation5 + $0xe0]]
    %v8538 = vstv %s8537
    %v8539 = vmul.f32 %v8538, %v2348
    %v8540 = vmul.f32 %v8538, %v2354
    %v8541 = vmul.f32 %v8538, %v2360
    %v8542 = vmul.f32 %v8538, %v2366
    %v8543 = vmul.f32 %v8538, %v2372
    %v8544 = vadd.f32 %v8496, %v8539
    %v8545 = vadd.f32 %v8497, %v8540
    %v8546 = vadd.f32 %v8498, %v8541
    %v8547 = vadd.f32 %v8499, %v8542
    %v8548 = vadd.f32 %v8500, %v8543
    %s8549 = sld [smem:[#allocation5 + $0x21]]
    %v8550 = vstv %s8549
    %v8551 = vmul.f32 %v8550, %v4584
    %v8552 = vmul.f32 %v8550, %v4590
    %v8553 = vmul.f32 %v8550, %v4596
    %v8554 = vmul.f32 %v8550, %v4602
    %v8555 = vmul.f32 %v8550, %v4608
    %v8556 = vadd.f32 %v8508, %v8551
    %v8557 = vadd.f32 %v8509, %v8552
    %v8558 = vadd.f32 %v8510, %v8553
    %v8559 = vadd.f32 %v8511, %v8554
    %v8560 = vadd.f32 %v8512, %v8555
    %s8561 = sld [smem:[#allocation5 + $0x61]]
    %v8562 = vstv %s8561
    %v8563 = vmul.f32 %v8562, %v4584
    %v8564 = vmul.f32 %v8562, %v4590
    %v8565 = vmul.f32 %v8562, %v4596
    %v8566 = vmul.f32 %v8562, %v4602
    %v8567 = vmul.f32 %v8562, %v4608
    %v8568 = vadd.f32 %v8520, %v8563
    %v8569 = vadd.f32 %v8521, %v8564
    %v8570 = vadd.f32 %v8522, %v8565
    %v8571 = vadd.f32 %v8523, %v8566
    %v8572 = vadd.f32 %v8524, %v8567
    %s8573 = sld [smem:[#allocation5 + $0xa1]]
    %v8574 = vstv %s8573
    %v8575 = vmul.f32 %v8574, %v4584
    %v8576 = vmul.f32 %v8574, %v4590
    %v8577 = vmul.f32 %v8574, %v4596
    %v8578 = vmul.f32 %v8574, %v4602
    %v8579 = vmul.f32 %v8574, %v4608
    %v8580 = vadd.f32 %v8532, %v8575
    %v8581 = vadd.f32 %v8533, %v8576
    %v8582 = vadd.f32 %v8534, %v8577
    %v8583 = vadd.f32 %v8535, %v8578
    %v8584 = vadd.f32 %v8536, %v8579
    %s8585 = sld [smem:[#allocation5 + $0xe1]]
    %v8586 = vstv %s8585
    %v8587 = vmul.f32 %v8586, %v4584
    %v8588 = vmul.f32 %v8586, %v4590
    %v8589 = vmul.f32 %v8586, %v4596
    %v8590 = vmul.f32 %v8586, %v4602
    %v8591 = vmul.f32 %v8586, %v4608
    %v8592 = vadd.f32 %v8544, %v8587
    %v8593 = vadd.f32 %v8545, %v8588
    %v8594 = vadd.f32 %v8546, %v8589
    %v8595 = vadd.f32 %v8547, %v8590
    %v8596 = vadd.f32 %v8548, %v8591
    %s8597 = sld [smem:[#allocation5 + $0x22]]
    %v8598 = vstv %s8597
    %v8599 = vmul.f32 %v8598, %v2348
    %v8600 = vmul.f32 %v8598, %v2354
    %v8601 = vmul.f32 %v8598, %v2360
    %v8602 = vmul.f32 %v8598, %v2366
    %v8603 = vmul.f32 %v8598, %v2372
    %v8609 = vrot.slane %v8599, 1
    %v8610 = vrot.slane %v8600, 1
    %v8611 = vsel %vm4811, %v8609, %v8610
    %v8612 = vrot.slane %v8601, 1
    %v8613 = vsel %vm4811, %v8610, %v8612
    %v8614 = vrot.slane %v8602, 1
    %v8615 = vsel %vm4811, %v8612, %v8614
    %v8616 = vrot.slane %v8603, 1
    %v8617 = vsel %vm4811, %v8614, %v8616
    %v8623 = vadd.f32 %v8556, %v8611
    %v8624 = vadd.f32 %v8557, %v8613
    %v8625 = vadd.f32 %v8558, %v8615
    %v8626 = vadd.f32 %v8559, %v8617
    %v8627 = vadd.f32 %v8560, %v8616
    %s8628 = sld [smem:[#allocation5 + $0x62]]
    %v8629 = vstv %s8628
    %v8630 = vmul.f32 %v8629, %v2348
    %v8631 = vmul.f32 %v8629, %v2354
    %v8632 = vmul.f32 %v8629, %v2360
    %v8633 = vmul.f32 %v8629, %v2366
    %v8634 = vmul.f32 %v8629, %v2372
    %v8640 = vrot.slane %v8630, 1
    %v8641 = vrot.slane %v8631, 1
    %v8642 = vsel %vm4811, %v8640, %v8641
    %v8643 = vrot.slane %v8632, 1
    %v8644 = vsel %vm4811, %v8641, %v8643
    %v8645 = vrot.slane %v8633, 1
    %v8646 = vsel %vm4811, %v8643, %v8645
    %v8647 = vrot.slane %v8634, 1
    %v8648 = vsel %vm4811, %v8645, %v8647
    %v8654 = vadd.f32 %v8568, %v8642
    %v8655 = vadd.f32 %v8569, %v8644
    %v8656 = vadd.f32 %v8570, %v8646
    %v8657 = vadd.f32 %v8571, %v8648
    %v8658 = vadd.f32 %v8572, %v8647
    %s8659 = sld [smem:[#allocation5 + $0xa2]]
    %v8660 = vstv %s8659
    %v8661 = vmul.f32 %v8660, %v2348
    %v8662 = vmul.f32 %v8660, %v2354
    %v8663 = vmul.f32 %v8660, %v2360
    %v8664 = vmul.f32 %v8660, %v2366
    %v8665 = vmul.f32 %v8660, %v2372
    %v8671 = vrot.slane %v8661, 1
    %v8672 = vrot.slane %v8662, 1
    %v8673 = vsel %vm4811, %v8671, %v8672
    %v8674 = vrot.slane %v8663, 1
    %v8675 = vsel %vm4811, %v8672, %v8674
    %v8676 = vrot.slane %v8664, 1
    %v8677 = vsel %vm4811, %v8674, %v8676
    %v8678 = vrot.slane %v8665, 1
    %v8679 = vsel %vm4811, %v8676, %v8678
    %v8685 = vadd.f32 %v8580, %v8673
    %v8686 = vadd.f32 %v8581, %v8675
    %v8687 = vadd.f32 %v8582, %v8677
    %v8688 = vadd.f32 %v8583, %v8679
    %v8689 = vadd.f32 %v8584, %v8678
    %s8690 = sld [smem:[#allocation5 + $0xe2]]
    %v8691 = vstv %s8690
    %v8692 = vmul.f32 %v8691, %v2348
    %v8693 = vmul.f32 %v8691, %v2354
    %v8694 = vmul.f32 %v8691, %v2360
    %v8695 = vmul.f32 %v8691, %v2366
    %v8696 = vmul.f32 %v8691, %v2372
    %v8702 = vrot.slane %v8692, 1
    %v8703 = vrot.slane %v8693, 1
    %v8704 = vsel %vm4811, %v8702, %v8703
    %v8705 = vrot.slane %v8694, 1
    %v8706 = vsel %vm4811, %v8703, %v8705
    %v8707 = vrot.slane %v8695, 1
    %v8708 = vsel %vm4811, %v8705, %v8707
    %v8709 = vrot.slane %v8696, 1
    %v8710 = vsel %vm4811, %v8707, %v8709
    %v8716 = vadd.f32 %v8592, %v8704
    %v8717 = vadd.f32 %v8593, %v8706
    %v8718 = vadd.f32 %v8594, %v8708
    %v8719 = vadd.f32 %v8595, %v8710
    %v8720 = vadd.f32 %v8596, %v8709
    %s8721 = sld [smem:[#allocation5 + $0x23]]
    %v8722 = vstv %s8721
    %v8723 = vmul.f32 %v8722, %v4584
    %v8724 = vmul.f32 %v8722, %v4590
    %v8725 = vmul.f32 %v8722, %v4596
    %v8726 = vmul.f32 %v8722, %v4602
    %v8727 = vmul.f32 %v8722, %v4608
    %v8733 = vrot.slane %v8723, 1
    %v8734 = vrot.slane %v8724, 1
    %v8735 = vsel %vm4811, %v8733, %v8734
    %v8736 = vrot.slane %v8725, 1
    %v8737 = vsel %vm4811, %v8734, %v8736
    %v8738 = vrot.slane %v8726, 1
    %v8739 = vsel %vm4811, %v8736, %v8738
    %v8740 = vrot.slane %v8727, 1
    %v8741 = vsel %vm4811, %v8738, %v8740
    %v8747 = vadd.f32 %v8623, %v8735
    %v8748 = vadd.f32 %v8624, %v8737
    %v8749 = vadd.f32 %v8625, %v8739
    %v8750 = vadd.f32 %v8626, %v8741
    %v8751 = vadd.f32 %v8627, %v8740
    %s8752 = sld [smem:[#allocation5 + $0x63]]
    %v8753 = vstv %s8752
    %v8754 = vmul.f32 %v8753, %v4584
    %v8755 = vmul.f32 %v8753, %v4590
    %v8756 = vmul.f32 %v8753, %v4596
    %v8757 = vmul.f32 %v8753, %v4602
    %v8758 = vmul.f32 %v8753, %v4608
    %v8764 = vrot.slane %v8754, 1
    %v8765 = vrot.slane %v8755, 1
    %v8766 = vsel %vm4811, %v8764, %v8765
    %v8767 = vrot.slane %v8756, 1
    %v8768 = vsel %vm4811, %v8765, %v8767
    %v8769 = vrot.slane %v8757, 1
    %v8770 = vsel %vm4811, %v8767, %v8769
    %v8771 = vrot.slane %v8758, 1
    %v8772 = vsel %vm4811, %v8769, %v8771
    %v8778 = vadd.f32 %v8654, %v8766
    %v8779 = vadd.f32 %v8655, %v8768
    %v8780 = vadd.f32 %v8656, %v8770
    %v8781 = vadd.f32 %v8657, %v8772
    %v8782 = vadd.f32 %v8658, %v8771
    %s8783 = sld [smem:[#allocation5 + $0xa3]]
    %v8784 = vstv %s8783
    %v8785 = vmul.f32 %v8784, %v4584
    %v8786 = vmul.f32 %v8784, %v4590
    %v8787 = vmul.f32 %v8784, %v4596
    %v8788 = vmul.f32 %v8784, %v4602
    %v8789 = vmul.f32 %v8784, %v4608
    %v8795 = vrot.slane %v8785, 1
    %v8796 = vrot.slane %v8786, 1
    %v8797 = vsel %vm4811, %v8795, %v8796
    %v8798 = vrot.slane %v8787, 1
    %v8799 = vsel %vm4811, %v8796, %v8798
    %v8800 = vrot.slane %v8788, 1
    %v8801 = vsel %vm4811, %v8798, %v8800
    %v8802 = vrot.slane %v8789, 1
    %v8803 = vsel %vm4811, %v8800, %v8802
    %v8809 = vadd.f32 %v8685, %v8797
    %v8810 = vadd.f32 %v8686, %v8799
    %v8811 = vadd.f32 %v8687, %v8801
    %v8812 = vadd.f32 %v8688, %v8803
    %v8813 = vadd.f32 %v8689, %v8802
    %s8814 = sld [smem:[#allocation5 + $0xe3]]
    %v8815 = vstv %s8814
    %v8816 = vmul.f32 %v8815, %v4584
    %v8817 = vmul.f32 %v8815, %v4590
    %v8818 = vmul.f32 %v8815, %v4596
    %v8819 = vmul.f32 %v8815, %v4602
    %v8820 = vmul.f32 %v8815, %v4608
    %v8826 = vrot.slane %v8816, 1
    %v8827 = vrot.slane %v8817, 1
    %v8828 = vsel %vm4811, %v8826, %v8827
    %v8829 = vrot.slane %v8818, 1
    %v8830 = vsel %vm4811, %v8827, %v8829
    %v8831 = vrot.slane %v8819, 1
    %v8832 = vsel %vm4811, %v8829, %v8831
    %v8833 = vrot.slane %v8820, 1
    %v8834 = vsel %vm4811, %v8831, %v8833
    %v8840 = vadd.f32 %v8716, %v8828
    %v8841 = vadd.f32 %v8717, %v8830
    %v8842 = vadd.f32 %v8718, %v8832
    %v8843 = vadd.f32 %v8719, %v8834
    %v8844 = vadd.f32 %v8720, %v8833
    %s8845 = sld [smem:[#allocation5 + $0x24]]
    %v8846 = vstv %s8845
    %v8847 = vmul.f32 %v8846, %v2348
    %v8848 = vmul.f32 %v8846, %v2354
    %v8849 = vmul.f32 %v8846, %v2360
    %v8850 = vmul.f32 %v8846, %v2366
    %v8851 = vmul.f32 %v8846, %v2372
    %v8857 = vrot.slane %v8847, 2
    %v8858 = vrot.slane %v8848, 2
    %v8859 = vsel %vm5060, %v8857, %v8858
    %v8860 = vrot.slane %v8849, 2
    %v8861 = vsel %vm5060, %v8858, %v8860
    %v8862 = vrot.slane %v8850, 2
    %v8863 = vsel %vm5060, %v8860, %v8862
    %v8864 = vrot.slane %v8851, 2
    %v8865 = vsel %vm5060, %v8862, %v8864
    %v8871 = vadd.f32 %v8747, %v8859
    %v8872 = vadd.f32 %v8748, %v8861
    %v8873 = vadd.f32 %v8749, %v8863
    %v8874 = vadd.f32 %v8750, %v8865
    %v8875 = vadd.f32 %v8751, %v8864
    %s8876 = sld [smem:[#allocation5 + $0x64]]
    %v8877 = vstv %s8876
    %v8878 = vmul.f32 %v8877, %v2348
    %v8879 = vmul.f32 %v8877, %v2354
    %v8880 = vmul.f32 %v8877, %v2360
    %v8881 = vmul.f32 %v8877, %v2366
    %v8882 = vmul.f32 %v8877, %v2372
    %v8888 = vrot.slane %v8878, 2
    %v8889 = vrot.slane %v8879, 2
    %v8890 = vsel %vm5060, %v8888, %v8889
    %v8891 = vrot.slane %v8880, 2
    %v8892 = vsel %vm5060, %v8889, %v8891
    %v8893 = vrot.slane %v8881, 2
    %v8894 = vsel %vm5060, %v8891, %v8893
    %v8895 = vrot.slane %v8882, 2
    %v8896 = vsel %vm5060, %v8893, %v8895
    %v8902 = vadd.f32 %v8778, %v8890
    %v8903 = vadd.f32 %v8779, %v8892
    %v8904 = vadd.f32 %v8780, %v8894
    %v8905 = vadd.f32 %v8781, %v8896
    %v8906 = vadd.f32 %v8782, %v8895
    %s8907 = sld [smem:[#allocation5 + $0xa4]]
    %v8908 = vstv %s8907
    %v8909 = vmul.f32 %v8908, %v2348
    %v8910 = vmul.f32 %v8908, %v2354
    %v8911 = vmul.f32 %v8908, %v2360
    %v8912 = vmul.f32 %v8908, %v2366
    %v8913 = vmul.f32 %v8908, %v2372
    %v8919 = vrot.slane %v8909, 2
    %v8920 = vrot.slane %v8910, 2
    %v8921 = vsel %vm5060, %v8919, %v8920
    %v8922 = vrot.slane %v8911, 2
    %v8923 = vsel %vm5060, %v8920, %v8922
    %v8924 = vrot.slane %v8912, 2
    %v8925 = vsel %vm5060, %v8922, %v8924
    %v8926 = vrot.slane %v8913, 2
    %v8927 = vsel %vm5060, %v8924, %v8926
    %v8933 = vadd.f32 %v8809, %v8921
    %v8934 = vadd.f32 %v8810, %v8923
    %v8935 = vadd.f32 %v8811, %v8925
    %v8936 = vadd.f32 %v8812, %v8927
    %v8937 = vadd.f32 %v8813, %v8926
    %s8938 = sld [smem:[#allocation5 + $0xe4]]
    %v8939 = vstv %s8938
    %v8940 = vmul.f32 %v8939, %v2348
    %v8941 = vmul.f32 %v8939, %v2354
    %v8942 = vmul.f32 %v8939, %v2360
    %v8943 = vmul.f32 %v8939, %v2366
    %v8944 = vmul.f32 %v8939, %v2372
    %v8950 = vrot.slane %v8940, 2
    %v8951 = vrot.slane %v8941, 2
    %v8952 = vsel %vm5060, %v8950, %v8951
    %v8953 = vrot.slane %v8942, 2
    %v8954 = vsel %vm5060, %v8951, %v8953
    %v8955 = vrot.slane %v8943, 2
    %v8956 = vsel %vm5060, %v8953, %v8955
    %v8957 = vrot.slane %v8944, 2
    %v8958 = vsel %vm5060, %v8955, %v8957
    %v8964 = vadd.f32 %v8840, %v8952
    %v8965 = vadd.f32 %v8841, %v8954
    %v8966 = vadd.f32 %v8842, %v8956
    %v8967 = vadd.f32 %v8843, %v8958
    %v8968 = vadd.f32 %v8844, %v8957
    %s8969 = sld [smem:[#allocation5 + $0x25]]
    %v8970 = vstv %s8969
    %v8971 = vmul.f32 %v8970, %v4584
    %v8972 = vmul.f32 %v8970, %v4590
    %v8973 = vmul.f32 %v8970, %v4596
    %v8974 = vmul.f32 %v8970, %v4602
    %v8975 = vmul.f32 %v8970, %v4608
    %v8981 = vrot.slane %v8971, 2
    %v8982 = vrot.slane %v8972, 2
    %v8983 = vsel %vm5060, %v8981, %v8982
    %v8984 = vrot.slane %v8973, 2
    %v8985 = vsel %vm5060, %v8982, %v8984
    %v8986 = vrot.slane %v8974, 2
    %v8987 = vsel %vm5060, %v8984, %v8986
    %v8988 = vrot.slane %v8975, 2
    %v8989 = vsel %vm5060, %v8986, %v8988
    %v8995 = vadd.f32 %v8871, %v8983
    %v8996 = vadd.f32 %v8872, %v8985
    %v8997 = vadd.f32 %v8873, %v8987
    %v8998 = vadd.f32 %v8874, %v8989
    %v8999 = vadd.f32 %v8875, %v8988
    %s9000 = sld [smem:[#allocation5 + $0x65]]
    %v9001 = vstv %s9000
    %v9002 = vmul.f32 %v9001, %v4584
    %v9003 = vmul.f32 %v9001, %v4590
    %v9004 = vmul.f32 %v9001, %v4596
    %v9005 = vmul.f32 %v9001, %v4602
    %v9006 = vmul.f32 %v9001, %v4608
    %v9012 = vrot.slane %v9002, 2
    %v9013 = vrot.slane %v9003, 2
    %v9014 = vsel %vm5060, %v9012, %v9013
    %v9015 = vrot.slane %v9004, 2
    %v9016 = vsel %vm5060, %v9013, %v9015
    %v9017 = vrot.slane %v9005, 2
    %v9018 = vsel %vm5060, %v9015, %v9017
    %v9019 = vrot.slane %v9006, 2
    %v9020 = vsel %vm5060, %v9017, %v9019
    %v9026 = vadd.f32 %v8902, %v9014
    %v9027 = vadd.f32 %v8903, %v9016
    %v9028 = vadd.f32 %v8904, %v9018
    %v9029 = vadd.f32 %v8905, %v9020
    %v9030 = vadd.f32 %v8906, %v9019
    %s9031 = sld [smem:[#allocation5 + $0xa5]]
    %v9032 = vstv %s9031
    %v9033 = vmul.f32 %v9032, %v4584
    %v9034 = vmul.f32 %v9032, %v4590
    %v9035 = vmul.f32 %v9032, %v4596
    %v9036 = vmul.f32 %v9032, %v4602
    %v9037 = vmul.f32 %v9032, %v4608
    %v9043 = vrot.slane %v9033, 2
    %v9044 = vrot.slane %v9034, 2
    %v9045 = vsel %vm5060, %v9043, %v9044
    %v9046 = vrot.slane %v9035, 2
    %v9047 = vsel %vm5060, %v9044, %v9046
    %v9048 = vrot.slane %v9036, 2
    %v9049 = vsel %vm5060, %v9046, %v9048
    %v9050 = vrot.slane %v9037, 2
    %v9051 = vsel %vm5060, %v9048, %v9050
    %v9057 = vadd.f32 %v8933, %v9045
    %v9058 = vadd.f32 %v8934, %v9047
    %v9059 = vadd.f32 %v8935, %v9049
    %v9060 = vadd.f32 %v8936, %v9051
    %v9061 = vadd.f32 %v8937, %v9050
    %s9062 = sld [smem:[#allocation5 + $0xe5]]
    %v9063 = vstv %s9062
    %v9064 = vmul.f32 %v9063, %v4584
    %v9065 = vmul.f32 %v9063, %v4590
    %v9066 = vmul.f32 %v9063, %v4596
    %v9067 = vmul.f32 %v9063, %v4602
    %v9068 = vmul.f32 %v9063, %v4608
    %v9074 = vrot.slane %v9064, 2
    %v9075 = vrot.slane %v9065, 2
    %v9076 = vsel %vm5060, %v9074, %v9075
    %v9077 = vrot.slane %v9066, 2
    %v9078 = vsel %vm5060, %v9075, %v9077
    %v9079 = vrot.slane %v9067, 2
    %v9080 = vsel %vm5060, %v9077, %v9079
    %v9081 = vrot.slane %v9068, 2
    %v9082 = vsel %vm5060, %v9079, %v9081
    %v9088 = vadd.f32 %v8964, %v9076
    %v9089 = vadd.f32 %v8965, %v9078
    %v9090 = vadd.f32 %v8966, %v9080
    %v9091 = vadd.f32 %v8967, %v9082
    %v9092 = vadd.f32 %v8968, %v9081
    %s9093 = sld [smem:[#allocation5 + $0x26]]
    %v9094 = vstv %s9093
    %v9095 = vmul.f32 %v9094, %v2348
    %v9096 = vmul.f32 %v9094, %v2354
    %v9097 = vmul.f32 %v9094, %v2360
    %v9098 = vmul.f32 %v9094, %v2366
    %v9099 = vmul.f32 %v9094, %v2372
    %v9105 = vrot.slane %v9095, 3
    %v9106 = vrot.slane %v9096, 3
    %v9107 = vsel %vm5309, %v9105, %v9106
    %v9108 = vrot.slane %v9097, 3
    %v9109 = vsel %vm5309, %v9106, %v9108
    %v9110 = vrot.slane %v9098, 3
    %v9111 = vsel %vm5309, %v9108, %v9110
    %v9112 = vrot.slane %v9099, 3
    %v9113 = vsel %vm5309, %v9110, %v9112
    %v9119 = vadd.f32 %v8995, %v9107
    %v9120 = vadd.f32 %v8996, %v9109
    %v9121 = vadd.f32 %v8997, %v9111
    %v9122 = vadd.f32 %v8998, %v9113
    %v9123 = vadd.f32 %v8999, %v9112
    %s9124 = sld [smem:[#allocation5 + $0x66]]
    %v9125 = vstv %s9124
    %v9126 = vmul.f32 %v9125, %v2348
    %v9127 = vmul.f32 %v9125, %v2354
    %v9128 = vmul.f32 %v9125, %v2360
    %v9129 = vmul.f32 %v9125, %v2366
    %v9130 = vmul.f32 %v9125, %v2372
    %v9136 = vrot.slane %v9126, 3
    %v9137 = vrot.slane %v9127, 3
    %v9138 = vsel %vm5309, %v9136, %v9137
    %v9139 = vrot.slane %v9128, 3
    %v9140 = vsel %vm5309, %v9137, %v9139
    %v9141 = vrot.slane %v9129, 3
    %v9142 = vsel %vm5309, %v9139, %v9141
    %v9143 = vrot.slane %v9130, 3
    %v9144 = vsel %vm5309, %v9141, %v9143
    %v9150 = vadd.f32 %v9026, %v9138
    %v9151 = vadd.f32 %v9027, %v9140
    %v9152 = vadd.f32 %v9028, %v9142
    %v9153 = vadd.f32 %v9029, %v9144
    %v9154 = vadd.f32 %v9030, %v9143
    %s9155 = sld [smem:[#allocation5 + $0xa6]]
    %v9156 = vstv %s9155
    %v9157 = vmul.f32 %v9156, %v2348
    %v9158 = vmul.f32 %v9156, %v2354
    %v9159 = vmul.f32 %v9156, %v2360
    %v9160 = vmul.f32 %v9156, %v2366
    %v9161 = vmul.f32 %v9156, %v2372
    %v9167 = vrot.slane %v9157, 3
    %v9168 = vrot.slane %v9158, 3
    %v9169 = vsel %vm5309, %v9167, %v9168
    %v9170 = vrot.slane %v9159, 3
    %v9171 = vsel %vm5309, %v9168, %v9170
    %v9172 = vrot.slane %v9160, 3
    %v9173 = vsel %vm5309, %v9170, %v9172
    %v9174 = vrot.slane %v9161, 3
    %v9175 = vsel %vm5309, %v9172, %v9174
    %v9181 = vadd.f32 %v9057, %v9169
    %v9182 = vadd.f32 %v9058, %v9171
    %v9183 = vadd.f32 %v9059, %v9173
    %v9184 = vadd.f32 %v9060, %v9175
    %v9185 = vadd.f32 %v9061, %v9174
    %s9186 = sld [smem:[#allocation5 + $0xe6]]
    %v9187 = vstv %s9186
    %v9188 = vmul.f32 %v9187, %v2348
    %v9189 = vmul.f32 %v9187, %v2354
    %v9190 = vmul.f32 %v9187, %v2360
    %v9191 = vmul.f32 %v9187, %v2366
    %v9192 = vmul.f32 %v9187, %v2372
    %v9198 = vrot.slane %v9188, 3
    %v9199 = vrot.slane %v9189, 3
    %v9200 = vsel %vm5309, %v9198, %v9199
    %v9201 = vrot.slane %v9190, 3
    %v9202 = vsel %vm5309, %v9199, %v9201
    %v9203 = vrot.slane %v9191, 3
    %v9204 = vsel %vm5309, %v9201, %v9203
    %v9205 = vrot.slane %v9192, 3
    %v9206 = vsel %vm5309, %v9203, %v9205
    %v9212 = vadd.f32 %v9088, %v9200
    %v9213 = vadd.f32 %v9089, %v9202
    %v9214 = vadd.f32 %v9090, %v9204
    %v9215 = vadd.f32 %v9091, %v9206
    %v9216 = vadd.f32 %v9092, %v9205
    %s9217 = sld [smem:[#allocation5 + $0x27]]
    %v9218 = vstv %s9217
    %v9219 = vmul.f32 %v9218, %v4584
    %v9220 = vmul.f32 %v9218, %v4590
    %v9221 = vmul.f32 %v9218, %v4596
    %v9222 = vmul.f32 %v9218, %v4602
    %v9223 = vmul.f32 %v9218, %v4608
    %v9229 = vrot.slane %v9219, 3
    %v9230 = vrot.slane %v9220, 3
    %v9231 = vsel %vm5309, %v9229, %v9230
    %v9232 = vrot.slane %v9221, 3
    %v9233 = vsel %vm5309, %v9230, %v9232
    %v9234 = vrot.slane %v9222, 3
    %v9235 = vsel %vm5309, %v9232, %v9234
    %v9236 = vrot.slane %v9223, 3
    %v9237 = vsel %vm5309, %v9234, %v9236
    %v9243 = vadd.f32 %v9119, %v9231
    %v9244 = vadd.f32 %v9120, %v9233
    %v9245 = vadd.f32 %v9121, %v9235
    %v9246 = vadd.f32 %v9122, %v9237
    %v9247 = vadd.f32 %v9123, %v9236
    %s9248 = sld [smem:[#allocation5 + $0x67]]
    %v9249 = vstv %s9248
    %v9250 = vmul.f32 %v9249, %v4584
    %v9251 = vmul.f32 %v9249, %v4590
    %v9252 = vmul.f32 %v9249, %v4596
    %v9253 = vmul.f32 %v9249, %v4602
    %v9254 = vmul.f32 %v9249, %v4608
    %v9260 = vrot.slane %v9250, 3
    %v9261 = vrot.slane %v9251, 3
    %v9262 = vsel %vm5309, %v9260, %v9261
    %v9263 = vrot.slane %v9252, 3
    %v9264 = vsel %vm5309, %v9261, %v9263
    %v9265 = vrot.slane %v9253, 3
    %v9266 = vsel %vm5309, %v9263, %v9265
    %v9267 = vrot.slane %v9254, 3
    %v9268 = vsel %vm5309, %v9265, %v9267
    %v9274 = vadd.f32 %v9150, %v9262
    %v9275 = vadd.f32 %v9151, %v9264
    %v9276 = vadd.f32 %v9152, %v9266
    %v9277 = vadd.f32 %v9153, %v9268
    %v9278 = vadd.f32 %v9154, %v9267
    %s9279 = sld [smem:[#allocation5 + $0xa7]]
    %v9280 = vstv %s9279
    %v9281 = vmul.f32 %v9280, %v4584
    %v9282 = vmul.f32 %v9280, %v4590
    %v9283 = vmul.f32 %v9280, %v4596
    %v9284 = vmul.f32 %v9280, %v4602
    %v9285 = vmul.f32 %v9280, %v4608
    %v9291 = vrot.slane %v9281, 3
    %v9292 = vrot.slane %v9282, 3
    %v9293 = vsel %vm5309, %v9291, %v9292
    %v9294 = vrot.slane %v9283, 3
    %v9295 = vsel %vm5309, %v9292, %v9294
    %v9296 = vrot.slane %v9284, 3
    %v9297 = vsel %vm5309, %v9294, %v9296
    %v9298 = vrot.slane %v9285, 3
    %v9299 = vsel %vm5309, %v9296, %v9298
    %v9305 = vadd.f32 %v9181, %v9293
    %v9306 = vadd.f32 %v9182, %v9295
    %v9307 = vadd.f32 %v9183, %v9297
    %v9308 = vadd.f32 %v9184, %v9299
    %v9309 = vadd.f32 %v9185, %v9298
    %s9310 = sld [smem:[#allocation5 + $0xe7]]
    %v9311 = vstv %s9310
    %v9312 = vmul.f32 %v9311, %v4584
    %v9313 = vmul.f32 %v9311, %v4590
    %v9314 = vmul.f32 %v9311, %v4596
    %v9315 = vmul.f32 %v9311, %v4602
    %v9316 = vmul.f32 %v9311, %v4608
    %v9322 = vrot.slane %v9312, 3
    %v9323 = vrot.slane %v9313, 3
    %v9324 = vsel %vm5309, %v9322, %v9323
    %v9325 = vrot.slane %v9314, 3
    %v9326 = vsel %vm5309, %v9323, %v9325
    %v9327 = vrot.slane %v9315, 3
    %v9328 = vsel %vm5309, %v9325, %v9327
    %v9329 = vrot.slane %v9316, 3
    %v9330 = vsel %vm5309, %v9327, %v9329
    %v9336 = vadd.f32 %v9212, %v9324
    %v9337 = vadd.f32 %v9213, %v9326
    %v9338 = vadd.f32 %v9214, %v9328
    %v9339 = vadd.f32 %v9215, %v9330
    %v9340 = vadd.f32 %v9216, %v9329
    %s9341 = sld [smem:[#allocation5 + $0x28]]
    %v9342 = vstv %s9341
    %v9343 = vmul.f32 %v9342, %v2372
    %v9344 = vmul.f32 %v9342, %v2378
    %v9345 = vmul.f32 %v9342, %v2384
    %v9346 = vmul.f32 %v9342, %v2390
    %v9347 = vmul.f32 %v9342, %v2396
    %v9348 = vmul.f32 %v9342, %v2402
    %v9355 = vrot.slane %v9343, 6
    %v9356 = vrot.slane %v9344, 6
    %v9357 = vsel %vm262, %v9355, %v9356
    %v9358 = vrot.slane %v9345, 6
    %v9359 = vsel %vm262, %v9356, %v9358
    %v9360 = vrot.slane %v9346, 6
    %v9361 = vsel %vm262, %v9358, %v9360
    %v9362 = vrot.slane %v9347, 6
    %v9363 = vsel %vm262, %v9360, %v9362
    %v9364 = vrot.slane %v9348, 6
    %v9365 = vsel %vm262, %v9362, %v9364
    %v9371 = vadd.f32 %v9243, %v9357
    %v9372 = vadd.f32 %v9244, %v9359
    %v9373 = vadd.f32 %v9245, %v9361
    %v9374 = vadd.f32 %v9246, %v9363
    %v9375 = vadd.f32 %v9247, %v9365
    %s9376 = sld [smem:[#allocation5 + $0x68]]
    %v9377 = vstv %s9376
    %v9378 = vmul.f32 %v9377, %v2372
    %v9379 = vmul.f32 %v9377, %v2378
    %v9380 = vmul.f32 %v9377, %v2384
    %v9381 = vmul.f32 %v9377, %v2390
    %v9382 = vmul.f32 %v9377, %v2396
    %v9383 = vmul.f32 %v9377, %v2402
    %v9390 = vrot.slane %v9378, 6
    %v9391 = vrot.slane %v9379, 6
    %v9392 = vsel %vm262, %v9390, %v9391
    %v9393 = vrot.slane %v9380, 6
    %v9394 = vsel %vm262, %v9391, %v9393
    %v9395 = vrot.slane %v9381, 6
    %v9396 = vsel %vm262, %v9393, %v9395
    %v9397 = vrot.slane %v9382, 6
    %v9398 = vsel %vm262, %v9395, %v9397
    %v9399 = vrot.slane %v9383, 6
    %v9400 = vsel %vm262, %v9397, %v9399
    %v9406 = vadd.f32 %v9274, %v9392
    %v9407 = vadd.f32 %v9275, %v9394
    %v9408 = vadd.f32 %v9276, %v9396
    %v9409 = vadd.f32 %v9277, %v9398
    %v9410 = vadd.f32 %v9278, %v9400
    %s9411 = sld [smem:[#allocation5 + $0xa8]]
    %v9412 = vstv %s9411
    %v9413 = vmul.f32 %v9412, %v2372
    %v9414 = vmul.f32 %v9412, %v2378
    %v9415 = vmul.f32 %v9412, %v2384
    %v9416 = vmul.f32 %v9412, %v2390
    %v9417 = vmul.f32 %v9412, %v2396
    %v9418 = vmul.f32 %v9412, %v2402
    %v9425 = vrot.slane %v9413, 6
    %v9426 = vrot.slane %v9414, 6
    %v9427 = vsel %vm262, %v9425, %v9426
    %v9428 = vrot.slane %v9415, 6
    %v9429 = vsel %vm262, %v9426, %v9428
    %v9430 = vrot.slane %v9416, 6
    %v9431 = vsel %vm262, %v9428, %v9430
    %v9432 = vrot.slane %v9417, 6
    %v9433 = vsel %vm262, %v9430, %v9432
    %v9434 = vrot.slane %v9418, 6
    %v9435 = vsel %vm262, %v9432, %v9434
    %v9441 = vadd.f32 %v9305, %v9427
    %v9442 = vadd.f32 %v9306, %v9429
    %v9443 = vadd.f32 %v9307, %v9431
    %v9444 = vadd.f32 %v9308, %v9433
    %v9445 = vadd.f32 %v9309, %v9435
    %s9446 = sld [smem:[#allocation5 + $0xe8]]
    %v9447 = vstv %s9446
    %v9448 = vmul.f32 %v9447, %v2372
    %v9449 = vmul.f32 %v9447, %v2378
    %v9450 = vmul.f32 %v9447, %v2384
    %v9451 = vmul.f32 %v9447, %v2390
    %v9452 = vmul.f32 %v9447, %v2396
    %v9453 = vmul.f32 %v9447, %v2402
    %v9460 = vrot.slane %v9448, 6
    %v9461 = vrot.slane %v9449, 6
    %v9462 = vsel %vm262, %v9460, %v9461
    %v9463 = vrot.slane %v9450, 6
    %v9464 = vsel %vm262, %v9461, %v9463
    %v9465 = vrot.slane %v9451, 6
    %v9466 = vsel %vm262, %v9463, %v9465
    %v9467 = vrot.slane %v9452, 6
    %v9468 = vsel %vm262, %v9465, %v9467
    %v9469 = vrot.slane %v9453, 6
    %v9470 = vsel %vm262, %v9467, %v9469
    %v9476 = vadd.f32 %v9336, %v9462
    %v9477 = vadd.f32 %v9337, %v9464
    %v9478 = vadd.f32 %v9338, %v9466
    %v9479 = vadd.f32 %v9339, %v9468
    %v9480 = vadd.f32 %v9340, %v9470
    %s9481 = sld [smem:[#allocation5 + $0x29]]
    %v9482 = vstv %s9481
    %v9483 = vmul.f32 %v9482, %v4608
    %v9484 = vmul.f32 %v9482, %v4614
    %v9485 = vmul.f32 %v9482, %v4620
    %v9486 = vmul.f32 %v9482, %v4626
    %v9487 = vmul.f32 %v9482, %v4632
    %v9488 = vmul.f32 %v9482, %v4638
    %v9495 = vrot.slane %v9483, 6
    %v9496 = vrot.slane %v9484, 6
    %v9497 = vsel %vm262, %v9495, %v9496
    %v9498 = vrot.slane %v9485, 6
    %v9499 = vsel %vm262, %v9496, %v9498
    %v9500 = vrot.slane %v9486, 6
    %v9501 = vsel %vm262, %v9498, %v9500
    %v9502 = vrot.slane %v9487, 6
    %v9503 = vsel %vm262, %v9500, %v9502
    %v9504 = vrot.slane %v9488, 6
    %v9505 = vsel %vm262, %v9502, %v9504
    %v9511 = vadd.f32 %v9371, %v9497
    %v9512 = vadd.f32 %v9372, %v9499
    %v9513 = vadd.f32 %v9373, %v9501
    %v9514 = vadd.f32 %v9374, %v9503
    %v9515 = vadd.f32 %v9375, %v9505
    %s9516 = sld [smem:[#allocation5 + $0x69]]
    %v9517 = vstv %s9516
    %v9518 = vmul.f32 %v9517, %v4608
    %v9519 = vmul.f32 %v9517, %v4614
    %v9520 = vmul.f32 %v9517, %v4620
    %v9521 = vmul.f32 %v9517, %v4626
    %v9522 = vmul.f32 %v9517, %v4632
    %v9523 = vmul.f32 %v9517, %v4638
    %v9530 = vrot.slane %v9518, 6
    %v9531 = vrot.slane %v9519, 6
    %v9532 = vsel %vm262, %v9530, %v9531
    %v9533 = vrot.slane %v9520, 6
    %v9534 = vsel %vm262, %v9531, %v9533
    %v9535 = vrot.slane %v9521, 6
    %v9536 = vsel %vm262, %v9533, %v9535
    %v9537 = vrot.slane %v9522, 6
    %v9538 = vsel %vm262, %v9535, %v9537
    %v9539 = vrot.slane %v9523, 6
    %v9540 = vsel %vm262, %v9537, %v9539
    %v9546 = vadd.f32 %v9406, %v9532
    %v9547 = vadd.f32 %v9407, %v9534
    %v9548 = vadd.f32 %v9408, %v9536
    %v9549 = vadd.f32 %v9409, %v9538
    %v9550 = vadd.f32 %v9410, %v9540
    %s9551 = sld [smem:[#allocation5 + $0xa9]]
    %v9552 = vstv %s9551
    %v9553 = vmul.f32 %v9552, %v4608
    %v9554 = vmul.f32 %v9552, %v4614
    %v9555 = vmul.f32 %v9552, %v4620
    %v9556 = vmul.f32 %v9552, %v4626
    %v9557 = vmul.f32 %v9552, %v4632
    %v9558 = vmul.f32 %v9552, %v4638
    %v9565 = vrot.slane %v9553, 6
    %v9566 = vrot.slane %v9554, 6
    %v9567 = vsel %vm262, %v9565, %v9566
    %v9568 = vrot.slane %v9555, 6
    %v9569 = vsel %vm262, %v9566, %v9568
    %v9570 = vrot.slane %v9556, 6
    %v9571 = vsel %vm262, %v9568, %v9570
    %v9572 = vrot.slane %v9557, 6
    %v9573 = vsel %vm262, %v9570, %v9572
    %v9574 = vrot.slane %v9558, 6
    %v9575 = vsel %vm262, %v9572, %v9574
    %v9581 = vadd.f32 %v9441, %v9567
    %v9582 = vadd.f32 %v9442, %v9569
    %v9583 = vadd.f32 %v9443, %v9571
    %v9584 = vadd.f32 %v9444, %v9573
    %v9585 = vadd.f32 %v9445, %v9575
    %s9586 = sld [smem:[#allocation5 + $0xe9]]
    %v9587 = vstv %s9586
    %v9588 = vmul.f32 %v9587, %v4608
    %v9589 = vmul.f32 %v9587, %v4614
    %v9590 = vmul.f32 %v9587, %v4620
    %v9591 = vmul.f32 %v9587, %v4626
    %v9592 = vmul.f32 %v9587, %v4632
    %v9593 = vmul.f32 %v9587, %v4638
    %v9600 = vrot.slane %v9588, 6
    %v9601 = vrot.slane %v9589, 6
    %v9602 = vsel %vm262, %v9600, %v9601
    %v9603 = vrot.slane %v9590, 6
    %v9604 = vsel %vm262, %v9601, %v9603
    %v9605 = vrot.slane %v9591, 6
    %v9606 = vsel %vm262, %v9603, %v9605
    %v9607 = vrot.slane %v9592, 6
    %v9608 = vsel %vm262, %v9605, %v9607
    %v9609 = vrot.slane %v9593, 6
    %v9610 = vsel %vm262, %v9607, %v9609
    %v9616 = vadd.f32 %v9476, %v9602
    %v9617 = vadd.f32 %v9477, %v9604
    %v9618 = vadd.f32 %v9478, %v9606
    %v9619 = vadd.f32 %v9479, %v9608
    %v9620 = vadd.f32 %v9480, %v9610
    %s9621 = sld [smem:[#allocation5 + $0x2a]]
    %v9622 = vstv %s9621
    %v9623 = vmul.f32 %v9622, %v2372
    %v9624 = vmul.f32 %v9622, %v2378
    %v9625 = vmul.f32 %v9622, %v2384
    %v9626 = vmul.f32 %v9622, %v2390
    %v9627 = vmul.f32 %v9622, %v2396
    %v9628 = vmul.f32 %v9622, %v2402
    %v9635 = vrot.slane %v9623, 7
    %v9636 = vrot.slane %v9624, 7
    %v9637 = vsel %vm5840, %v9635, %v9636
    %v9638 = vrot.slane %v9625, 7
    %v9639 = vsel %vm5840, %v9636, %v9638
    %v9640 = vrot.slane %v9626, 7
    %v9641 = vsel %vm5840, %v9638, %v9640
    %v9642 = vrot.slane %v9627, 7
    %v9643 = vsel %vm5840, %v9640, %v9642
    %v9644 = vrot.slane %v9628, 7
    %v9645 = vsel %vm5840, %v9642, %v9644
    %v9651 = vadd.f32 %v9511, %v9637
    %v9652 = vadd.f32 %v9512, %v9639
    %v9653 = vadd.f32 %v9513, %v9641
    %v9654 = vadd.f32 %v9514, %v9643
    %v9655 = vadd.f32 %v9515, %v9645
    %s9656 = sld [smem:[#allocation5 + $0x6a]]
    %v9657 = vstv %s9656
    %v9658 = vmul.f32 %v9657, %v2372
    %v9659 = vmul.f32 %v9657, %v2378
    %v9660 = vmul.f32 %v9657, %v2384
    %v9661 = vmul.f32 %v9657, %v2390
    %v9662 = vmul.f32 %v9657, %v2396
    %v9663 = vmul.f32 %v9657, %v2402
    %v9670 = vrot.slane %v9658, 7
    %v9671 = vrot.slane %v9659, 7
    %v9672 = vsel %vm5840, %v9670, %v9671
    %v9673 = vrot.slane %v9660, 7
    %v9674 = vsel %vm5840, %v9671, %v9673
    %v9675 = vrot.slane %v9661, 7
    %v9676 = vsel %vm5840, %v9673, %v9675
    %v9677 = vrot.slane %v9662, 7
    %v9678 = vsel %vm5840, %v9675, %v9677
    %v9679 = vrot.slane %v9663, 7
    %v9680 = vsel %vm5840, %v9677, %v9679
    %v9686 = vadd.f32 %v9546, %v9672
    %v9687 = vadd.f32 %v9547, %v9674
    %v9688 = vadd.f32 %v9548, %v9676
    %v9689 = vadd.f32 %v9549, %v9678
    %v9690 = vadd.f32 %v9550, %v9680
    %s9691 = sld [smem:[#allocation5 + $0xaa]]
    %v9692 = vstv %s9691
    %v9693 = vmul.f32 %v9692, %v2372
    %v9694 = vmul.f32 %v9692, %v2378
    %v9695 = vmul.f32 %v9692, %v2384
    %v9696 = vmul.f32 %v9692, %v2390
    %v9697 = vmul.f32 %v9692, %v2396
    %v9698 = vmul.f32 %v9692, %v2402
    %v9705 = vrot.slane %v9693, 7
    %v9706 = vrot.slane %v9694, 7
    %v9707 = vsel %vm5840, %v9705, %v9706
    %v9708 = vrot.slane %v9695, 7
    %v9709 = vsel %vm5840, %v9706, %v9708
    %v9710 = vrot.slane %v9696, 7
    %v9711 = vsel %vm5840, %v9708, %v9710
    %v9712 = vrot.slane %v9697, 7
    %v9713 = vsel %vm5840, %v9710, %v9712
    %v9714 = vrot.slane %v9698, 7
    %v9715 = vsel %vm5840, %v9712, %v9714
    %v9721 = vadd.f32 %v9581, %v9707
    %v9722 = vadd.f32 %v9582, %v9709
    %v9723 = vadd.f32 %v9583, %v9711
    %v9724 = vadd.f32 %v9584, %v9713
    %v9725 = vadd.f32 %v9585, %v9715
    %s9726 = sld [smem:[#allocation5 + $0xea]]
    %v9727 = vstv %s9726
    %v9728 = vmul.f32 %v9727, %v2372
    %v9729 = vmul.f32 %v9727, %v2378
    %v9730 = vmul.f32 %v9727, %v2384
    %v9731 = vmul.f32 %v9727, %v2390
    %v9732 = vmul.f32 %v9727, %v2396
    %v9733 = vmul.f32 %v9727, %v2402
    %v9740 = vrot.slane %v9728, 7
    %v9741 = vrot.slane %v9729, 7
    %v9742 = vsel %vm5840, %v9740, %v9741
    %v9743 = vrot.slane %v9730, 7
    %v9744 = vsel %vm5840, %v9741, %v9743
    %v9745 = vrot.slane %v9731, 7
    %v9746 = vsel %vm5840, %v9743, %v9745
    %v9747 = vrot.slane %v9732, 7
    %v9748 = vsel %vm5840, %v9745, %v9747
    %v9749 = vrot.slane %v9733, 7
    %v9750 = vsel %vm5840, %v9747, %v9749
    %v9756 = vadd.f32 %v9616, %v9742
    %v9757 = vadd.f32 %v9617, %v9744
    %v9758 = vadd.f32 %v9618, %v9746
    %v9759 = vadd.f32 %v9619, %v9748
    %v9760 = vadd.f32 %v9620, %v9750
    %s9761 = sld [smem:[#allocation5 + $0x2b]]
    %v9762 = vstv %s9761
    %v9763 = vmul.f32 %v9762, %v4608
    %v9764 = vmul.f32 %v9762, %v4614
    %v9765 = vmul.f32 %v9762, %v4620
    %v9766 = vmul.f32 %v9762, %v4626
    %v9767 = vmul.f32 %v9762, %v4632
    %v9768 = vmul.f32 %v9762, %v4638
    %v9775 = vrot.slane %v9763, 7
    %v9776 = vrot.slane %v9764, 7
    %v9777 = vsel %vm5840, %v9775, %v9776
    %v9778 = vrot.slane %v9765, 7
    %v9779 = vsel %vm5840, %v9776, %v9778
    %v9780 = vrot.slane %v9766, 7
    %v9781 = vsel %vm5840, %v9778, %v9780
    %v9782 = vrot.slane %v9767, 7
    %v9783 = vsel %vm5840, %v9780, %v9782
    %v9784 = vrot.slane %v9768, 7
    %v9785 = vsel %vm5840, %v9782, %v9784
    %v9791 = vadd.f32 %v9651, %v9777
    %v9792 = vadd.f32 %v9652, %v9779
    %v9793 = vadd.f32 %v9653, %v9781
    %v9794 = vadd.f32 %v9654, %v9783
    %v9795 = vadd.f32 %v9655, %v9785
    %s9796 = sld [smem:[#allocation5 + $0x6b]]
    %v9797 = vstv %s9796
    %v9798 = vmul.f32 %v9797, %v4608
    %v9799 = vmul.f32 %v9797, %v4614
    %v9800 = vmul.f32 %v9797, %v4620
    %v9801 = vmul.f32 %v9797, %v4626
    %v9802 = vmul.f32 %v9797, %v4632
    %v9803 = vmul.f32 %v9797, %v4638
    %v9810 = vrot.slane %v9798, 7
    %v9811 = vrot.slane %v9799, 7
    %v9812 = vsel %vm5840, %v9810, %v9811
    %v9813 = vrot.slane %v9800, 7
    %v9814 = vsel %vm5840, %v9811, %v9813
    %v9815 = vrot.slane %v9801, 7
    %v9816 = vsel %vm5840, %v9813, %v9815
    %v9817 = vrot.slane %v9802, 7
    %v9818 = vsel %vm5840, %v9815, %v9817
    %v9819 = vrot.slane %v9803, 7
    %v9820 = vsel %vm5840, %v9817, %v9819
    %v9826 = vadd.f32 %v9686, %v9812
    %v9827 = vadd.f32 %v9687, %v9814
    %v9828 = vadd.f32 %v9688, %v9816
    %v9829 = vadd.f32 %v9689, %v9818
    %v9830 = vadd.f32 %v9690, %v9820
    %s9831 = sld [smem:[#allocation5 + $0xab]]
    %v9832 = vstv %s9831
    %v9833 = vmul.f32 %v9832, %v4608
    %v9834 = vmul.f32 %v9832, %v4614
    %v9835 = vmul.f32 %v9832, %v4620
    %v9836 = vmul.f32 %v9832, %v4626
    %v9837 = vmul.f32 %v9832, %v4632
    %v9838 = vmul.f32 %v9832, %v4638
    %v9845 = vrot.slane %v9833, 7
    %v9846 = vrot.slane %v9834, 7
    %v9847 = vsel %vm5840, %v9845, %v9846
    %v9848 = vrot.slane %v9835, 7
    %v9849 = vsel %vm5840, %v9846, %v9848
    %v9850 = vrot.slane %v9836, 7
    %v9851 = vsel %vm5840, %v9848, %v9850
    %v9852 = vrot.slane %v9837, 7
    %v9853 = vsel %vm5840, %v9850, %v9852
    %v9854 = vrot.slane %v9838, 7
    %v9855 = vsel %vm5840, %v9852, %v9854
    %v9861 = vadd.f32 %v9721, %v9847
    %v9862 = vadd.f32 %v9722, %v9849
    %v9863 = vadd.f32 %v9723, %v9851
    %v9864 = vadd.f32 %v9724, %v9853
    %v9865 = vadd.f32 %v9725, %v9855
    %s9866 = sld [smem:[#allocation5 + $0xeb]]
    %v9867 = vstv %s9866
    %v9868 = vmul.f32 %v9867, %v4608
    %v9869 = vmul.f32 %v9867, %v4614
    %v9870 = vmul.f32 %v9867, %v4620
    %v9871 = vmul.f32 %v9867, %v4626
    %v9872 = vmul.f32 %v9867, %v4632
    %v9873 = vmul.f32 %v9867, %v4638
    %v9880 = vrot.slane %v9868, 7
    %v9881 = vrot.slane %v9869, 7
    %v9882 = vsel %vm5840, %v9880, %v9881
    %v9883 = vrot.slane %v9870, 7
    %v9884 = vsel %vm5840, %v9881, %v9883
    %v9885 = vrot.slane %v9871, 7
    %v9886 = vsel %vm5840, %v9883, %v9885
    %v9887 = vrot.slane %v9872, 7
    %v9888 = vsel %vm5840, %v9885, %v9887
    %v9889 = vrot.slane %v9873, 7
    %v9890 = vsel %vm5840, %v9887, %v9889
    %v9896 = vadd.f32 %v9756, %v9882
    %v9897 = vadd.f32 %v9757, %v9884
    %v9898 = vadd.f32 %v9758, %v9886
    %v9899 = vadd.f32 %v9759, %v9888
    %v9900 = vadd.f32 %v9760, %v9890
    %s9901 = sld [smem:[#allocation5 + $0x2c]]
    %v9902 = vstv %s9901
    %v9903 = vmul.f32 %v9902, %v2378
    %v9904 = vmul.f32 %v9902, %v2384
    %v9905 = vmul.f32 %v9902, %v2390
    %v9906 = vmul.f32 %v9902, %v2396
    %v9907 = vmul.f32 %v9902, %v2402
    %v9908 = vadd.f32 %v9791, %v9903
    %v9909 = vadd.f32 %v9792, %v9904
    %v9910 = vadd.f32 %v9793, %v9905
    %v9911 = vadd.f32 %v9794, %v9906
    %v9912 = vadd.f32 %v9795, %v9907
    %s9913 = sld [smem:[#allocation5 + $0x6c]]
    %v9914 = vstv %s9913
    %v9915 = vmul.f32 %v9914, %v2378
    %v9916 = vmul.f32 %v9914, %v2384
    %v9917 = vmul.f32 %v9914, %v2390
    %v9918 = vmul.f32 %v9914, %v2396
    %v9919 = vmul.f32 %v9914, %v2402
    %v9920 = vadd.f32 %v9826, %v9915
    %v9921 = vadd.f32 %v9827, %v9916
    %v9922 = vadd.f32 %v9828, %v9917
    %v9923 = vadd.f32 %v9829, %v9918
    %v9924 = vadd.f32 %v9830, %v9919
    %s9925 = sld [smem:[#allocation5 + $0xac]]
    %v9926 = vstv %s9925
    %v9927 = vmul.f32 %v9926, %v2378
    %v9928 = vmul.f32 %v9926, %v2384
    %v9929 = vmul.f32 %v9926, %v2390
    %v9930 = vmul.f32 %v9926, %v2396
    %v9931 = vmul.f32 %v9926, %v2402
    %v9932 = vadd.f32 %v9861, %v9927
    %v9933 = vadd.f32 %v9862, %v9928
    %v9934 = vadd.f32 %v9863, %v9929
    %v9935 = vadd.f32 %v9864, %v9930
    %v9936 = vadd.f32 %v9865, %v9931
    %s9937 = sld [smem:[#allocation5 + $0xec]]
    %v9938 = vstv %s9937
    %v9939 = vmul.f32 %v9938, %v2378
    %v9940 = vmul.f32 %v9938, %v2384
    %v9941 = vmul.f32 %v9938, %v2390
    %v9942 = vmul.f32 %v9938, %v2396
    %v9943 = vmul.f32 %v9938, %v2402
    %v9944 = vadd.f32 %v9896, %v9939
    %v9945 = vadd.f32 %v9897, %v9940
    %v9946 = vadd.f32 %v9898, %v9941
    %v9947 = vadd.f32 %v9899, %v9942
    %v9948 = vadd.f32 %v9900, %v9943
    %s9949 = sld [smem:[#allocation5 + $0x2d]]
    %v9950 = vstv %s9949
    %v9951 = vmul.f32 %v9950, %v4614
    %v9952 = vmul.f32 %v9950, %v4620
    %v9953 = vmul.f32 %v9950, %v4626
    %v9954 = vmul.f32 %v9950, %v4632
    %v9955 = vmul.f32 %v9950, %v4638
    %v9956 = vadd.f32 %v9908, %v9951
    %v9957 = vadd.f32 %v9909, %v9952
    %v9958 = vadd.f32 %v9910, %v9953
    %v9959 = vadd.f32 %v9911, %v9954
    %v9960 = vadd.f32 %v9912, %v9955
    %s9961 = sld [smem:[#allocation5 + $0x6d]]
    %v9962 = vstv %s9961
    %v9963 = vmul.f32 %v9962, %v4614
    %v9964 = vmul.f32 %v9962, %v4620
    %v9965 = vmul.f32 %v9962, %v4626
    %v9966 = vmul.f32 %v9962, %v4632
    %v9967 = vmul.f32 %v9962, %v4638
    %v9968 = vadd.f32 %v9920, %v9963
    %v9969 = vadd.f32 %v9921, %v9964
    %v9970 = vadd.f32 %v9922, %v9965
    %v9971 = vadd.f32 %v9923, %v9966
    %v9972 = vadd.f32 %v9924, %v9967
    %s9973 = sld [smem:[#allocation5 + $0xad]]
    %v9974 = vstv %s9973
    %v9975 = vmul.f32 %v9974, %v4614
    %v9976 = vmul.f32 %v9974, %v4620
    %v9977 = vmul.f32 %v9974, %v4626
    %v9978 = vmul.f32 %v9974, %v4632
    %v9979 = vmul.f32 %v9974, %v4638
    %v9980 = vadd.f32 %v9932, %v9975
    %v9981 = vadd.f32 %v9933, %v9976
    %v9982 = vadd.f32 %v9934, %v9977
    %v9983 = vadd.f32 %v9935, %v9978
    %v9984 = vadd.f32 %v9936, %v9979
    %s9985 = sld [smem:[#allocation5 + $0xed]]
    %v9986 = vstv %s9985
    %v9987 = vmul.f32 %v9986, %v4614
    %v9988 = vmul.f32 %v9986, %v4620
    %v9989 = vmul.f32 %v9986, %v4626
    %v9990 = vmul.f32 %v9986, %v4632
    %v9991 = vmul.f32 %v9986, %v4638
    %v9992 = vadd.f32 %v9944, %v9987
    %v9993 = vadd.f32 %v9945, %v9988
    %v9994 = vadd.f32 %v9946, %v9989
    %v9995 = vadd.f32 %v9947, %v9990
    %v9996 = vadd.f32 %v9948, %v9991
    %s9997 = sld [smem:[#allocation5 + $0x2e]]
    %v9998 = vstv %s9997
    %v9999 = vmul.f32 %v9998, %v2378
    %v10000 = vmul.f32 %v9998, %v2384
    %v10001 = vmul.f32 %v9998, %v2390
    %v10002 = vmul.f32 %v9998, %v2396
    %v10003 = vmul.f32 %v9998, %v2402
    %v10009 = vrot.slane %v9999, 1
    %v10010 = vrot.slane %v10000, 1
    %v10011 = vsel %vm4811, %v10009, %v10010
    %v10012 = vrot.slane %v10001, 1
    %v10013 = vsel %vm4811, %v10010, %v10012
    %v10014 = vrot.slane %v10002, 1
    %v10015 = vsel %vm4811, %v10012, %v10014
    %v10016 = vrot.slane %v10003, 1
    %v10017 = vsel %vm4811, %v10014, %v10016
    %v10023 = vadd.f32 %v9956, %v10011
    %v10024 = vadd.f32 %v9957, %v10013
    %v10025 = vadd.f32 %v9958, %v10015
    %v10026 = vadd.f32 %v9959, %v10017
    %v10027 = vadd.f32 %v9960, %v10016
    %s10028 = sld [smem:[#allocation5 + $0x6e]]
    %v10029 = vstv %s10028
    %v10030 = vmul.f32 %v10029, %v2378
    %v10031 = vmul.f32 %v10029, %v2384
    %v10032 = vmul.f32 %v10029, %v2390
    %v10033 = vmul.f32 %v10029, %v2396
    %v10034 = vmul.f32 %v10029, %v2402
    %v10040 = vrot.slane %v10030, 1
    %v10041 = vrot.slane %v10031, 1
    %v10042 = vsel %vm4811, %v10040, %v10041
    %v10043 = vrot.slane %v10032, 1
    %v10044 = vsel %vm4811, %v10041, %v10043
    %v10045 = vrot.slane %v10033, 1
    %v10046 = vsel %vm4811, %v10043, %v10045
    %v10047 = vrot.slane %v10034, 1
    %v10048 = vsel %vm4811, %v10045, %v10047
    %v10054 = vadd.f32 %v9968, %v10042
    %v10055 = vadd.f32 %v9969, %v10044
    %v10056 = vadd.f32 %v9970, %v10046
    %v10057 = vadd.f32 %v9971, %v10048
    %v10058 = vadd.f32 %v9972, %v10047
    %s10059 = sld [smem:[#allocation5 + $0xae]]
    %v10060 = vstv %s10059
    %v10061 = vmul.f32 %v10060, %v2378
    %v10062 = vmul.f32 %v10060, %v2384
    %v10063 = vmul.f32 %v10060, %v2390
    %v10064 = vmul.f32 %v10060, %v2396
    %v10065 = vmul.f32 %v10060, %v2402
    %v10071 = vrot.slane %v10061, 1
    %v10072 = vrot.slane %v10062, 1
    %v10073 = vsel %vm4811, %v10071, %v10072
    %v10074 = vrot.slane %v10063, 1
    %v10075 = vsel %vm4811, %v10072, %v10074
    %v10076 = vrot.slane %v10064, 1
    %v10077 = vsel %vm4811, %v10074, %v10076
    %v10078 = vrot.slane %v10065, 1
    %v10079 = vsel %vm4811, %v10076, %v10078
    %v10085 = vadd.f32 %v9980, %v10073
    %v10086 = vadd.f32 %v9981, %v10075
    %v10087 = vadd.f32 %v9982, %v10077
    %v10088 = vadd.f32 %v9983, %v10079
    %v10089 = vadd.f32 %v9984, %v10078
    %s10090 = sld [smem:[#allocation5 + $0xee]]
    %v10091 = vstv %s10090
    %v10092 = vmul.f32 %v10091, %v2378
    %v10093 = vmul.f32 %v10091, %v2384
    %v10094 = vmul.f32 %v10091, %v2390
    %v10095 = vmul.f32 %v10091, %v2396
    %v10096 = vmul.f32 %v10091, %v2402
    %v10102 = vrot.slane %v10092, 1
    %v10103 = vrot.slane %v10093, 1
    %v10104 = vsel %vm4811, %v10102, %v10103
    %v10105 = vrot.slane %v10094, 1
    %v10106 = vsel %vm4811, %v10103, %v10105
    %v10107 = vrot.slane %v10095, 1
    %v10108 = vsel %vm4811, %v10105, %v10107
    %v10109 = vrot.slane %v10096, 1
    %v10110 = vsel %vm4811, %v10107, %v10109
    %v10116 = vadd.f32 %v9992, %v10104
    %v10117 = vadd.f32 %v9993, %v10106
    %v10118 = vadd.f32 %v9994, %v10108
    %v10119 = vadd.f32 %v9995, %v10110
    %v10120 = vadd.f32 %v9996, %v10109
    %s10121 = sld [smem:[#allocation5 + $0x2f]]
    %v10122 = vstv %s10121
    %v10123 = vmul.f32 %v10122, %v4614
    %v10124 = vmul.f32 %v10122, %v4620
    %v10125 = vmul.f32 %v10122, %v4626
    %v10126 = vmul.f32 %v10122, %v4632
    %v10127 = vmul.f32 %v10122, %v4638
    %v10133 = vrot.slane %v10123, 1
    %v10134 = vrot.slane %v10124, 1
    %v10135 = vsel %vm4811, %v10133, %v10134
    %v10136 = vrot.slane %v10125, 1
    %v10137 = vsel %vm4811, %v10134, %v10136
    %v10138 = vrot.slane %v10126, 1
    %v10139 = vsel %vm4811, %v10136, %v10138
    %v10140 = vrot.slane %v10127, 1
    %v10141 = vsel %vm4811, %v10138, %v10140
    %v10147 = vadd.f32 %v10023, %v10135
    %v10148 = vadd.f32 %v10024, %v10137
    %v10149 = vadd.f32 %v10025, %v10139
    %v10150 = vadd.f32 %v10026, %v10141
    %v10151 = vadd.f32 %v10027, %v10140
    %s10152 = sld [smem:[#allocation5 + $0x6f]]
    %v10153 = vstv %s10152
    %v10154 = vmul.f32 %v10153, %v4614
    %v10155 = vmul.f32 %v10153, %v4620
    %v10156 = vmul.f32 %v10153, %v4626
    %v10157 = vmul.f32 %v10153, %v4632
    %v10158 = vmul.f32 %v10153, %v4638
    %v10164 = vrot.slane %v10154, 1
    %v10165 = vrot.slane %v10155, 1
    %v10166 = vsel %vm4811, %v10164, %v10165
    %v10167 = vrot.slane %v10156, 1
    %v10168 = vsel %vm4811, %v10165, %v10167
    %v10169 = vrot.slane %v10157, 1
    %v10170 = vsel %vm4811, %v10167, %v10169
    %v10171 = vrot.slane %v10158, 1
    %v10172 = vsel %vm4811, %v10169, %v10171
    %v10178 = vadd.f32 %v10054, %v10166
    %v10179 = vadd.f32 %v10055, %v10168
    %v10180 = vadd.f32 %v10056, %v10170
    %v10181 = vadd.f32 %v10057, %v10172
    %v10182 = vadd.f32 %v10058, %v10171
    %s10183 = sld [smem:[#allocation5 + $0xaf]]
    %v10184 = vstv %s10183
    %v10185 = vmul.f32 %v10184, %v4614
    %v10186 = vmul.f32 %v10184, %v4620
    %v10187 = vmul.f32 %v10184, %v4626
    %v10188 = vmul.f32 %v10184, %v4632
    %v10189 = vmul.f32 %v10184, %v4638
    %v10195 = vrot.slane %v10185, 1
    %v10196 = vrot.slane %v10186, 1
    %v10197 = vsel %vm4811, %v10195, %v10196
    %v10198 = vrot.slane %v10187, 1
    %v10199 = vsel %vm4811, %v10196, %v10198
    %v10200 = vrot.slane %v10188, 1
    %v10201 = vsel %vm4811, %v10198, %v10200
    %v10202 = vrot.slane %v10189, 1
    %v10203 = vsel %vm4811, %v10200, %v10202
    %v10209 = vadd.f32 %v10085, %v10197
    %v10210 = vadd.f32 %v10086, %v10199
    %v10211 = vadd.f32 %v10087, %v10201
    %v10212 = vadd.f32 %v10088, %v10203
    %v10213 = vadd.f32 %v10089, %v10202
    %s10214 = sld [smem:[#allocation5 + $0xef]]
    %v10215 = vstv %s10214
    %v10216 = vmul.f32 %v10215, %v4614
    %v10217 = vmul.f32 %v10215, %v4620
    %v10218 = vmul.f32 %v10215, %v4626
    %v10219 = vmul.f32 %v10215, %v4632
    %v10220 = vmul.f32 %v10215, %v4638
    %v10226 = vrot.slane %v10216, 1
    %v10227 = vrot.slane %v10217, 1
    %v10228 = vsel %vm4811, %v10226, %v10227
    %v10229 = vrot.slane %v10218, 1
    %v10230 = vsel %vm4811, %v10227, %v10229
    %v10231 = vrot.slane %v10219, 1
    %v10232 = vsel %vm4811, %v10229, %v10231
    %v10233 = vrot.slane %v10220, 1
    %v10234 = vsel %vm4811, %v10231, %v10233
    %v10240 = vadd.f32 %v10116, %v10228
    %v10241 = vadd.f32 %v10117, %v10230
    %v10242 = vadd.f32 %v10118, %v10232
    %v10243 = vadd.f32 %v10119, %v10234
    %v10244 = vadd.f32 %v10120, %v10233
    %s10245 = sld [smem:[#allocation5 + $0x30]]
    %v10246 = vstv %s10245
    %v10247 = vmul.f32 %v10246, %v2402
    %v10248 = vmul.f32 %v10246, %v2408
    %v10249 = vmul.f32 %v10246, %v2414
    %v10250 = vmul.f32 %v10246, %v2420
    %v10251 = vmul.f32 %v10246, %v2426
    %v10257 = vrot.slane %v10247, 4
    %v10258 = vrot.slane %v10248, 4
    %v10259 = vsel %vm6463, %v10257, %v10258
    %v10260 = vrot.slane %v10249, 4
    %v10261 = vsel %vm6463, %v10258, %v10260
    %v10262 = vrot.slane %v10250, 4
    %v10263 = vsel %vm6463, %v10260, %v10262
    %v10264 = vrot.slane %v10251, 4
    %v10265 = vsel %vm6463, %v10262, %v10264
    %v10271 = vadd.f32 %v10147, %v10259
    %v10272 = vadd.f32 %v10148, %v10261
    %v10273 = vadd.f32 %v10149, %v10263
    %v10274 = vadd.f32 %v10150, %v10265
    %v10275 = vadd.f32 %v10151, %v10264
    %s10276 = sld [smem:[#allocation5 + $0x70]]
    %v10277 = vstv %s10276
    %v10278 = vmul.f32 %v10277, %v2402
    %v10279 = vmul.f32 %v10277, %v2408
    %v10280 = vmul.f32 %v10277, %v2414
    %v10281 = vmul.f32 %v10277, %v2420
    %v10282 = vmul.f32 %v10277, %v2426
    %v10288 = vrot.slane %v10278, 4
    %v10289 = vrot.slane %v10279, 4
    %v10290 = vsel %vm6463, %v10288, %v10289
    %v10291 = vrot.slane %v10280, 4
    %v10292 = vsel %vm6463, %v10289, %v10291
    %v10293 = vrot.slane %v10281, 4
    %v10294 = vsel %vm6463, %v10291, %v10293
    %v10295 = vrot.slane %v10282, 4
    %v10296 = vsel %vm6463, %v10293, %v10295
    %v10302 = vadd.f32 %v10178, %v10290
    %v10303 = vadd.f32 %v10179, %v10292
    %v10304 = vadd.f32 %v10180, %v10294
    %v10305 = vadd.f32 %v10181, %v10296
    %v10306 = vadd.f32 %v10182, %v10295
    %s10307 = sld [smem:[#allocation5 + $0xb0]]
    %v10308 = vstv %s10307
    %v10309 = vmul.f32 %v10308, %v2402
    %v10310 = vmul.f32 %v10308, %v2408
    %v10311 = vmul.f32 %v10308, %v2414
    %v10312 = vmul.f32 %v10308, %v2420
    %v10313 = vmul.f32 %v10308, %v2426
    %v10319 = vrot.slane %v10309, 4
    %v10320 = vrot.slane %v10310, 4
    %v10321 = vsel %vm6463, %v10319, %v10320
    %v10322 = vrot.slane %v10311, 4
    %v10323 = vsel %vm6463, %v10320, %v10322
    %v10324 = vrot.slane %v10312, 4
    %v10325 = vsel %vm6463, %v10322, %v10324
    %v10326 = vrot.slane %v10313, 4
    %v10327 = vsel %vm6463, %v10324, %v10326
    %v10333 = vadd.f32 %v10209, %v10321
    %v10334 = vadd.f32 %v10210, %v10323
    %v10335 = vadd.f32 %v10211, %v10325
    %v10336 = vadd.f32 %v10212, %v10327
    %v10337 = vadd.f32 %v10213, %v10326
    %s10338 = sld [smem:[#allocation5 + $0xf0]]
    %v10339 = vstv %s10338
    %v10340 = vmul.f32 %v10339, %v2402
    %v10341 = vmul.f32 %v10339, %v2408
    %v10342 = vmul.f32 %v10339, %v2414
    %v10343 = vmul.f32 %v10339, %v2420
    %v10344 = vmul.f32 %v10339, %v2426
    %v10350 = vrot.slane %v10340, 4
    %v10351 = vrot.slane %v10341, 4
    %v10352 = vsel %vm6463, %v10350, %v10351
    %v10353 = vrot.slane %v10342, 4
    %v10354 = vsel %vm6463, %v10351, %v10353
    %v10355 = vrot.slane %v10343, 4
    %v10356 = vsel %vm6463, %v10353, %v10355
    %v10357 = vrot.slane %v10344, 4
    %v10358 = vsel %vm6463, %v10355, %v10357
    %v10364 = vadd.f32 %v10240, %v10352
    %v10365 = vadd.f32 %v10241, %v10354
    %v10366 = vadd.f32 %v10242, %v10356
    %v10367 = vadd.f32 %v10243, %v10358
    %v10368 = vadd.f32 %v10244, %v10357
    %s10369 = sld [smem:[#allocation5 + $0x31]]
    %v10370 = vstv %s10369
    %v10371 = vmul.f32 %v10370, %v4638
    %v10372 = vmul.f32 %v10370, %v4644
    %v10373 = vmul.f32 %v10370, %v4650
    %v10374 = vmul.f32 %v10370, %v4656
    %v10375 = vmul.f32 %v10370, %v4662
    %v10381 = vrot.slane %v10371, 4
    %v10382 = vrot.slane %v10372, 4
    %v10383 = vsel %vm6463, %v10381, %v10382
    %v10384 = vrot.slane %v10373, 4
    %v10385 = vsel %vm6463, %v10382, %v10384
    %v10386 = vrot.slane %v10374, 4
    %v10387 = vsel %vm6463, %v10384, %v10386
    %v10388 = vrot.slane %v10375, 4
    %v10389 = vsel %vm6463, %v10386, %v10388
    %v10395 = vadd.f32 %v10271, %v10383
    %v10396 = vadd.f32 %v10272, %v10385
    %v10397 = vadd.f32 %v10273, %v10387
    %v10398 = vadd.f32 %v10274, %v10389
    %v10399 = vadd.f32 %v10275, %v10388
    %s10400 = sld [smem:[#allocation5 + $0x71]]
    %v10401 = vstv %s10400
    %v10402 = vmul.f32 %v10401, %v4638
    %v10403 = vmul.f32 %v10401, %v4644
    %v10404 = vmul.f32 %v10401, %v4650
    %v10405 = vmul.f32 %v10401, %v4656
    %v10406 = vmul.f32 %v10401, %v4662
    %v10412 = vrot.slane %v10402, 4
    %v10413 = vrot.slane %v10403, 4
    %v10414 = vsel %vm6463, %v10412, %v10413
    %v10415 = vrot.slane %v10404, 4
    %v10416 = vsel %vm6463, %v10413, %v10415
    %v10417 = vrot.slane %v10405, 4
    %v10418 = vsel %vm6463, %v10415, %v10417
    %v10419 = vrot.slane %v10406, 4
    %v10420 = vsel %vm6463, %v10417, %v10419
    %v10426 = vadd.f32 %v10302, %v10414
    %v10427 = vadd.f32 %v10303, %v10416
    %v10428 = vadd.f32 %v10304, %v10418
    %v10429 = vadd.f32 %v10305, %v10420
    %v10430 = vadd.f32 %v10306, %v10419
    %s10431 = sld [smem:[#allocation5 + $0xb1]]
    %v10432 = vstv %s10431
    %v10433 = vmul.f32 %v10432, %v4638
    %v10434 = vmul.f32 %v10432, %v4644
    %v10435 = vmul.f32 %v10432, %v4650
    %v10436 = vmul.f32 %v10432, %v4656
    %v10437 = vmul.f32 %v10432, %v4662
    %v10443 = vrot.slane %v10433, 4
    %v10444 = vrot.slane %v10434, 4
    %v10445 = vsel %vm6463, %v10443, %v10444
    %v10446 = vrot.slane %v10435, 4
    %v10447 = vsel %vm6463, %v10444, %v10446
    %v10448 = vrot.slane %v10436, 4
    %v10449 = vsel %vm6463, %v10446, %v10448
    %v10450 = vrot.slane %v10437, 4
    %v10451 = vsel %vm6463, %v10448, %v10450
    %v10457 = vadd.f32 %v10333, %v10445
    %v10458 = vadd.f32 %v10334, %v10447
    %v10459 = vadd.f32 %v10335, %v10449
    %v10460 = vadd.f32 %v10336, %v10451
    %v10461 = vadd.f32 %v10337, %v10450
    %s10462 = sld [smem:[#allocation5 + $0xf1]]
    %v10463 = vstv %s10462
    %v10464 = vmul.f32 %v10463, %v4638
    %v10465 = vmul.f32 %v10463, %v4644
    %v10466 = vmul.f32 %v10463, %v4650
    %v10467 = vmul.f32 %v10463, %v4656
    %v10468 = vmul.f32 %v10463, %v4662
    %v10474 = vrot.slane %v10464, 4
    %v10475 = vrot.slane %v10465, 4
    %v10476 = vsel %vm6463, %v10474, %v10475
    %v10477 = vrot.slane %v10466, 4
    %v10478 = vsel %vm6463, %v10475, %v10477
    %v10479 = vrot.slane %v10467, 4
    %v10480 = vsel %vm6463, %v10477, %v10479
    %v10481 = vrot.slane %v10468, 4
    %v10482 = vsel %vm6463, %v10479, %v10481
    %v10488 = vadd.f32 %v10364, %v10476
    %v10489 = vadd.f32 %v10365, %v10478
    %v10490 = vadd.f32 %v10366, %v10480
    %v10491 = vadd.f32 %v10367, %v10482
    %v10492 = vadd.f32 %v10368, %v10481
    %s10493 = sld [smem:[#allocation5 + $0x32]]
    %v10494 = vstv %s10493
    %v10495 = vmul.f32 %v10494, %v2402
    %v10496 = vmul.f32 %v10494, %v2408
    %v10497 = vmul.f32 %v10494, %v2414
    %v10498 = vmul.f32 %v10494, %v2420
    %v10499 = vmul.f32 %v10494, %v2426
    %v10505 = vrot.slane %v10495, 5
    %v10506 = vrot.slane %v10496, 5
    %v10507 = vsel %vm6712, %v10505, %v10506
    %v10508 = vrot.slane %v10497, 5
    %v10509 = vsel %vm6712, %v10506, %v10508
    %v10510 = vrot.slane %v10498, 5
    %v10511 = vsel %vm6712, %v10508, %v10510
    %v10512 = vrot.slane %v10499, 5
    %v10513 = vsel %vm6712, %v10510, %v10512
    %v10519 = vadd.f32 %v10395, %v10507
    %v10520 = vadd.f32 %v10396, %v10509
    %v10521 = vadd.f32 %v10397, %v10511
    %v10522 = vadd.f32 %v10398, %v10513
    %v10523 = vadd.f32 %v10399, %v10512
    %s10524 = sld [smem:[#allocation5 + $0x72]]
    %v10525 = vstv %s10524
    %v10526 = vmul.f32 %v10525, %v2402
    %v10527 = vmul.f32 %v10525, %v2408
    %v10528 = vmul.f32 %v10525, %v2414
    %v10529 = vmul.f32 %v10525, %v2420
    %v10530 = vmul.f32 %v10525, %v2426
    %v10536 = vrot.slane %v10526, 5
    %v10537 = vrot.slane %v10527, 5
    %v10538 = vsel %vm6712, %v10536, %v10537
    %v10539 = vrot.slane %v10528, 5
    %v10540 = vsel %vm6712, %v10537, %v10539
    %v10541 = vrot.slane %v10529, 5
    %v10542 = vsel %vm6712, %v10539, %v10541
    %v10543 = vrot.slane %v10530, 5
    %v10544 = vsel %vm6712, %v10541, %v10543
    %v10550 = vadd.f32 %v10426, %v10538
    %v10551 = vadd.f32 %v10427, %v10540
    %v10552 = vadd.f32 %v10428, %v10542
    %v10553 = vadd.f32 %v10429, %v10544
    %v10554 = vadd.f32 %v10430, %v10543
    %s10555 = sld [smem:[#allocation5 + $0xb2]]
    %v10556 = vstv %s10555
    %v10557 = vmul.f32 %v10556, %v2402
    %v10558 = vmul.f32 %v10556, %v2408
    %v10559 = vmul.f32 %v10556, %v2414
    %v10560 = vmul.f32 %v10556, %v2420
    %v10561 = vmul.f32 %v10556, %v2426
    %v10567 = vrot.slane %v10557, 5
    %v10568 = vrot.slane %v10558, 5
    %v10569 = vsel %vm6712, %v10567, %v10568
    %v10570 = vrot.slane %v10559, 5
    %v10571 = vsel %vm6712, %v10568, %v10570
    %v10572 = vrot.slane %v10560, 5
    %v10573 = vsel %vm6712, %v10570, %v10572
    %v10574 = vrot.slane %v10561, 5
    %v10575 = vsel %vm6712, %v10572, %v10574
    %v10581 = vadd.f32 %v10457, %v10569
    %v10582 = vadd.f32 %v10458, %v10571
    %v10583 = vadd.f32 %v10459, %v10573
    %v10584 = vadd.f32 %v10460, %v10575
    %v10585 = vadd.f32 %v10461, %v10574
    %s10586 = sld [smem:[#allocation5 + $0xf2]]
    %v10587 = vstv %s10586
    %v10588 = vmul.f32 %v10587, %v2402
    %v10589 = vmul.f32 %v10587, %v2408
    %v10590 = vmul.f32 %v10587, %v2414
    %v10591 = vmul.f32 %v10587, %v2420
    %v10592 = vmul.f32 %v10587, %v2426
    %v10598 = vrot.slane %v10588, 5
    %v10599 = vrot.slane %v10589, 5
    %v10600 = vsel %vm6712, %v10598, %v10599
    %v10601 = vrot.slane %v10590, 5
    %v10602 = vsel %vm6712, %v10599, %v10601
    %v10603 = vrot.slane %v10591, 5
    %v10604 = vsel %vm6712, %v10601, %v10603
    %v10605 = vrot.slane %v10592, 5
    %v10606 = vsel %vm6712, %v10603, %v10605
    %v10612 = vadd.f32 %v10488, %v10600
    %v10613 = vadd.f32 %v10489, %v10602
    %v10614 = vadd.f32 %v10490, %v10604
    %v10615 = vadd.f32 %v10491, %v10606
    %v10616 = vadd.f32 %v10492, %v10605
    %s10617 = sld [smem:[#allocation5 + $0x33]]
    %v10618 = vstv %s10617
    %v10619 = vmul.f32 %v10618, %v4638
    %v10620 = vmul.f32 %v10618, %v4644
    %v10621 = vmul.f32 %v10618, %v4650
    %v10622 = vmul.f32 %v10618, %v4656
    %v10623 = vmul.f32 %v10618, %v4662
    %v10629 = vrot.slane %v10619, 5
    %v10630 = vrot.slane %v10620, 5
    %v10631 = vsel %vm6712, %v10629, %v10630
    %v10632 = vrot.slane %v10621, 5
    %v10633 = vsel %vm6712, %v10630, %v10632
    %v10634 = vrot.slane %v10622, 5
    %v10635 = vsel %vm6712, %v10632, %v10634
    %v10636 = vrot.slane %v10623, 5
    %v10637 = vsel %vm6712, %v10634, %v10636
    %v10643 = vadd.f32 %v10519, %v10631
    %v10644 = vadd.f32 %v10520, %v10633
    %v10645 = vadd.f32 %v10521, %v10635
    %v10646 = vadd.f32 %v10522, %v10637
    %v10647 = vadd.f32 %v10523, %v10636
    %s10648 = sld [smem:[#allocation5 + $0x73]]
    %v10649 = vstv %s10648
    %v10650 = vmul.f32 %v10649, %v4638
    %v10651 = vmul.f32 %v10649, %v4644
    %v10652 = vmul.f32 %v10649, %v4650
    %v10653 = vmul.f32 %v10649, %v4656
    %v10654 = vmul.f32 %v10649, %v4662
    %v10660 = vrot.slane %v10650, 5
    %v10661 = vrot.slane %v10651, 5
    %v10662 = vsel %vm6712, %v10660, %v10661
    %v10663 = vrot.slane %v10652, 5
    %v10664 = vsel %vm6712, %v10661, %v10663
    %v10665 = vrot.slane %v10653, 5
    %v10666 = vsel %vm6712, %v10663, %v10665
    %v10667 = vrot.slane %v10654, 5
    %v10668 = vsel %vm6712, %v10665, %v10667
    %v10674 = vadd.f32 %v10550, %v10662
    %v10675 = vadd.f32 %v10551, %v10664
    %v10676 = vadd.f32 %v10552, %v10666
    %v10677 = vadd.f32 %v10553, %v10668
    %v10678 = vadd.f32 %v10554, %v10667
    %s10679 = sld [smem:[#allocation5 + $0xb3]]
    %v10680 = vstv %s10679
    %v10681 = vmul.f32 %v10680, %v4638
    %v10682 = vmul.f32 %v10680, %v4644
    %v10683 = vmul.f32 %v10680, %v4650
    %v10684 = vmul.f32 %v10680, %v4656
    %v10685 = vmul.f32 %v10680, %v4662
    %v10691 = vrot.slane %v10681, 5
    %v10692 = vrot.slane %v10682, 5
    %v10693 = vsel %vm6712, %v10691, %v10692
    %v10694 = vrot.slane %v10683, 5
    %v10695 = vsel %vm6712, %v10692, %v10694
    %v10696 = vrot.slane %v10684, 5
    %v10697 = vsel %vm6712, %v10694, %v10696
    %v10698 = vrot.slane %v10685, 5
    %v10699 = vsel %vm6712, %v10696, %v10698
    %v10705 = vadd.f32 %v10581, %v10693
    %v10706 = vadd.f32 %v10582, %v10695
    %v10707 = vadd.f32 %v10583, %v10697
    %v10708 = vadd.f32 %v10584, %v10699
    %v10709 = vadd.f32 %v10585, %v10698
    %s10710 = sld [smem:[#allocation5 + $0xf3]]
    %v10711 = vstv %s10710
    %v10712 = vmul.f32 %v10711, %v4638
    %v10713 = vmul.f32 %v10711, %v4644
    %v10714 = vmul.f32 %v10711, %v4650
    %v10715 = vmul.f32 %v10711, %v4656
    %v10716 = vmul.f32 %v10711, %v4662
    %v10722 = vrot.slane %v10712, 5
    %v10723 = vrot.slane %v10713, 5
    %v10724 = vsel %vm6712, %v10722, %v10723
    %v10725 = vrot.slane %v10714, 5
    %v10726 = vsel %vm6712, %v10723, %v10725
    %v10727 = vrot.slane %v10715, 5
    %v10728 = vsel %vm6712, %v10725, %v10727
    %v10729 = vrot.slane %v10716, 5
    %v10730 = vsel %vm6712, %v10727, %v10729
    %v10736 = vadd.f32 %v10612, %v10724
    %v10737 = vadd.f32 %v10613, %v10726
    %v10738 = vadd.f32 %v10614, %v10728
    %v10739 = vadd.f32 %v10615, %v10730
    %v10740 = vadd.f32 %v10616, %v10729
    %s10741 = sld [smem:[#allocation5 + $0x34]]
    %v10742 = vstv %s10741
    %v10743 = vmul.f32 %v10742, %v2402
    %v10744 = vmul.f32 %v10742, %v2408
    %v10745 = vmul.f32 %v10742, %v2414
    %v10746 = vmul.f32 %v10742, %v2420
    %v10747 = vmul.f32 %v10742, %v2426
    %v10748 = vmul.f32 %v10742, %v2432
    %v10755 = vrot.slane %v10743, 6
    %v10756 = vrot.slane %v10744, 6
    %v10757 = vsel %vm262, %v10755, %v10756
    %v10758 = vrot.slane %v10745, 6
    %v10759 = vsel %vm262, %v10756, %v10758
    %v10760 = vrot.slane %v10746, 6
    %v10761 = vsel %vm262, %v10758, %v10760
    %v10762 = vrot.slane %v10747, 6
    %v10763 = vsel %vm262, %v10760, %v10762
    %v10764 = vrot.slane %v10748, 6
    %v10765 = vsel %vm262, %v10762, %v10764
    %v10771 = vadd.f32 %v10643, %v10757
    %v10772 = vadd.f32 %v10644, %v10759
    %v10773 = vadd.f32 %v10645, %v10761
    %v10774 = vadd.f32 %v10646, %v10763
    %v10775 = vadd.f32 %v10647, %v10765
    %s10776 = sld [smem:[#allocation5 + $0x74]]
    %v10777 = vstv %s10776
    %v10778 = vmul.f32 %v10777, %v2402
    %v10779 = vmul.f32 %v10777, %v2408
    %v10780 = vmul.f32 %v10777, %v2414
    %v10781 = vmul.f32 %v10777, %v2420
    %v10782 = vmul.f32 %v10777, %v2426
    %v10783 = vmul.f32 %v10777, %v2432
    %v10790 = vrot.slane %v10778, 6
    %v10791 = vrot.slane %v10779, 6
    %v10792 = vsel %vm262, %v10790, %v10791
    %v10793 = vrot.slane %v10780, 6
    %v10794 = vsel %vm262, %v10791, %v10793
    %v10795 = vrot.slane %v10781, 6
    %v10796 = vsel %vm262, %v10793, %v10795
    %v10797 = vrot.slane %v10782, 6
    %v10798 = vsel %vm262, %v10795, %v10797
    %v10799 = vrot.slane %v10783, 6
    %v10800 = vsel %vm262, %v10797, %v10799
    %v10806 = vadd.f32 %v10674, %v10792
    %v10807 = vadd.f32 %v10675, %v10794
    %v10808 = vadd.f32 %v10676, %v10796
    %v10809 = vadd.f32 %v10677, %v10798
    %v10810 = vadd.f32 %v10678, %v10800
    %s10811 = sld [smem:[#allocation5 + $0xb4]]
    %v10812 = vstv %s10811
    %v10813 = vmul.f32 %v10812, %v2402
    %v10814 = vmul.f32 %v10812, %v2408
    %v10815 = vmul.f32 %v10812, %v2414
    %v10816 = vmul.f32 %v10812, %v2420
    %v10817 = vmul.f32 %v10812, %v2426
    %v10818 = vmul.f32 %v10812, %v2432
    %v10825 = vrot.slane %v10813, 6
    %v10826 = vrot.slane %v10814, 6
    %v10827 = vsel %vm262, %v10825, %v10826
    %v10828 = vrot.slane %v10815, 6
    %v10829 = vsel %vm262, %v10826, %v10828
    %v10830 = vrot.slane %v10816, 6
    %v10831 = vsel %vm262, %v10828, %v10830
    %v10832 = vrot.slane %v10817, 6
    %v10833 = vsel %vm262, %v10830, %v10832
    %v10834 = vrot.slane %v10818, 6
    %v10835 = vsel %vm262, %v10832, %v10834
    %v10841 = vadd.f32 %v10705, %v10827
    %v10842 = vadd.f32 %v10706, %v10829
    %v10843 = vadd.f32 %v10707, %v10831
    %v10844 = vadd.f32 %v10708, %v10833
    %v10845 = vadd.f32 %v10709, %v10835
    %s10846 = sld [smem:[#allocation5 + $0xf4]]
    %v10847 = vstv %s10846
    %v10848 = vmul.f32 %v10847, %v2402
    %v10849 = vmul.f32 %v10847, %v2408
    %v10850 = vmul.f32 %v10847, %v2414
    %v10851 = vmul.f32 %v10847, %v2420
    %v10852 = vmul.f32 %v10847, %v2426
    %v10853 = vmul.f32 %v10847, %v2432
    %v10860 = vrot.slane %v10848, 6
    %v10861 = vrot.slane %v10849, 6
    %v10862 = vsel %vm262, %v10860, %v10861
    %v10863 = vrot.slane %v10850, 6
    %v10864 = vsel %vm262, %v10861, %v10863
    %v10865 = vrot.slane %v10851, 6
    %v10866 = vsel %vm262, %v10863, %v10865
    %v10867 = vrot.slane %v10852, 6
    %v10868 = vsel %vm262, %v10865, %v10867
    %v10869 = vrot.slane %v10853, 6
    %v10870 = vsel %vm262, %v10867, %v10869
    %v10876 = vadd.f32 %v10736, %v10862
    %v10877 = vadd.f32 %v10737, %v10864
    %v10878 = vadd.f32 %v10738, %v10866
    %v10879 = vadd.f32 %v10739, %v10868
    %v10880 = vadd.f32 %v10740, %v10870
    %s10881 = sld [smem:[#allocation5 + $0x35]]
    %v10882 = vstv %s10881
    %v10883 = vmul.f32 %v10882, %v4638
    %v10884 = vmul.f32 %v10882, %v4644
    %v10885 = vmul.f32 %v10882, %v4650
    %v10886 = vmul.f32 %v10882, %v4656
    %v10887 = vmul.f32 %v10882, %v4662
    %v10888 = vmul.f32 %v10882, %v4668
    %v10895 = vrot.slane %v10883, 6
    %v10896 = vrot.slane %v10884, 6
    %v10897 = vsel %vm262, %v10895, %v10896
    %v10898 = vrot.slane %v10885, 6
    %v10899 = vsel %vm262, %v10896, %v10898
    %v10900 = vrot.slane %v10886, 6
    %v10901 = vsel %vm262, %v10898, %v10900
    %v10902 = vrot.slane %v10887, 6
    %v10903 = vsel %vm262, %v10900, %v10902
    %v10904 = vrot.slane %v10888, 6
    %v10905 = vsel %vm262, %v10902, %v10904
    %v10911 = vadd.f32 %v10771, %v10897
    %v10912 = vadd.f32 %v10772, %v10899
    %v10913 = vadd.f32 %v10773, %v10901
    %v10914 = vadd.f32 %v10774, %v10903
    %v10915 = vadd.f32 %v10775, %v10905
    %s10916 = sld [smem:[#allocation5 + $0x75]]
    %v10917 = vstv %s10916
    %v10918 = vmul.f32 %v10917, %v4638
    %v10919 = vmul.f32 %v10917, %v4644
    %v10920 = vmul.f32 %v10917, %v4650
    %v10921 = vmul.f32 %v10917, %v4656
    %v10922 = vmul.f32 %v10917, %v4662
    %v10923 = vmul.f32 %v10917, %v4668
    %v10930 = vrot.slane %v10918, 6
    %v10931 = vrot.slane %v10919, 6
    %v10932 = vsel %vm262, %v10930, %v10931
    %v10933 = vrot.slane %v10920, 6
    %v10934 = vsel %vm262, %v10931, %v10933
    %v10935 = vrot.slane %v10921, 6
    %v10936 = vsel %vm262, %v10933, %v10935
    %v10937 = vrot.slane %v10922, 6
    %v10938 = vsel %vm262, %v10935, %v10937
    %v10939 = vrot.slane %v10923, 6
    %v10940 = vsel %vm262, %v10937, %v10939
    %v10946 = vadd.f32 %v10806, %v10932
    %v10947 = vadd.f32 %v10807, %v10934
    %v10948 = vadd.f32 %v10808, %v10936
    %v10949 = vadd.f32 %v10809, %v10938
    %v10950 = vadd.f32 %v10810, %v10940
    %s10951 = sld [smem:[#allocation5 + $0xb5]]
    %v10952 = vstv %s10951
    %v10953 = vmul.f32 %v10952, %v4638
    %v10954 = vmul.f32 %v10952, %v4644
    %v10955 = vmul.f32 %v10952, %v4650
    %v10956 = vmul.f32 %v10952, %v4656
    %v10957 = vmul.f32 %v10952, %v4662
    %v10958 = vmul.f32 %v10952, %v4668
    %v10965 = vrot.slane %v10953, 6
    %v10966 = vrot.slane %v10954, 6
    %v10967 = vsel %vm262, %v10965, %v10966
    %v10968 = vrot.slane %v10955, 6
    %v10969 = vsel %vm262, %v10966, %v10968
    %v10970 = vrot.slane %v10956, 6
    %v10971 = vsel %vm262, %v10968, %v10970
    %v10972 = vrot.slane %v10957, 6
    %v10973 = vsel %vm262, %v10970, %v10972
    %v10974 = vrot.slane %v10958, 6
    %v10975 = vsel %vm262, %v10972, %v10974
    %v10981 = vadd.f32 %v10841, %v10967
    %v10982 = vadd.f32 %v10842, %v10969
    %v10983 = vadd.f32 %v10843, %v10971
    %v10984 = vadd.f32 %v10844, %v10973
    %v10985 = vadd.f32 %v10845, %v10975
    %s10986 = sld [smem:[#allocation5 + $0xf5]]
    %v10987 = vstv %s10986
    %v10988 = vmul.f32 %v10987, %v4638
    %v10989 = vmul.f32 %v10987, %v4644
    %v10990 = vmul.f32 %v10987, %v4650
    %v10991 = vmul.f32 %v10987, %v4656
    %v10992 = vmul.f32 %v10987, %v4662
    %v10993 = vmul.f32 %v10987, %v4668
    %v11000 = vrot.slane %v10988, 6
    %v11001 = vrot.slane %v10989, 6
    %v11002 = vsel %vm262, %v11000, %v11001
    %v11003 = vrot.slane %v10990, 6
    %v11004 = vsel %vm262, %v11001, %v11003
    %v11005 = vrot.slane %v10991, 6
    %v11006 = vsel %vm262, %v11003, %v11005
    %v11007 = vrot.slane %v10992, 6
    %v11008 = vsel %vm262, %v11005, %v11007
    %v11009 = vrot.slane %v10993, 6
    %v11010 = vsel %vm262, %v11007, %v11009
    %v11016 = vadd.f32 %v10876, %v11002
    %v11017 = vadd.f32 %v10877, %v11004
    %v11018 = vadd.f32 %v10878, %v11006
    %v11019 = vadd.f32 %v10879, %v11008
    %v11020 = vadd.f32 %v10880, %v11010
    %s11021 = sld [smem:[#allocation5 + $0x36]]
    %v11022 = vstv %s11021
    %v11023 = vmul.f32 %v11022, %v2402
    %v11024 = vmul.f32 %v11022, %v2408
    %v11025 = vmul.f32 %v11022, %v2414
    %v11026 = vmul.f32 %v11022, %v2420
    %v11027 = vmul.f32 %v11022, %v2426
    %v11028 = vmul.f32 %v11022, %v2432
    %v11035 = vrot.slane %v11023, 7
    %v11036 = vrot.slane %v11024, 7
    %v11037 = vsel %vm5840, %v11035, %v11036
    %v11038 = vrot.slane %v11025, 7
    %v11039 = vsel %vm5840, %v11036, %v11038
    %v11040 = vrot.slane %v11026, 7
    %v11041 = vsel %vm5840, %v11038, %v11040
    %v11042 = vrot.slane %v11027, 7
    %v11043 = vsel %vm5840, %v11040, %v11042
    %v11044 = vrot.slane %v11028, 7
    %v11045 = vsel %vm5840, %v11042, %v11044
    %v11051 = vadd.f32 %v10911, %v11037
    %v11052 = vadd.f32 %v10912, %v11039
    %v11053 = vadd.f32 %v10913, %v11041
    %v11054 = vadd.f32 %v10914, %v11043
    %v11055 = vadd.f32 %v10915, %v11045
    %s11056 = sld [smem:[#allocation5 + $0x76]]
    %v11057 = vstv %s11056
    %v11058 = vmul.f32 %v11057, %v2402
    %v11059 = vmul.f32 %v11057, %v2408
    %v11060 = vmul.f32 %v11057, %v2414
    %v11061 = vmul.f32 %v11057, %v2420
    %v11062 = vmul.f32 %v11057, %v2426
    %v11063 = vmul.f32 %v11057, %v2432
    %v11070 = vrot.slane %v11058, 7
    %v11071 = vrot.slane %v11059, 7
    %v11072 = vsel %vm5840, %v11070, %v11071
    %v11073 = vrot.slane %v11060, 7
    %v11074 = vsel %vm5840, %v11071, %v11073
    %v11075 = vrot.slane %v11061, 7
    %v11076 = vsel %vm5840, %v11073, %v11075
    %v11077 = vrot.slane %v11062, 7
    %v11078 = vsel %vm5840, %v11075, %v11077
    %v11079 = vrot.slane %v11063, 7
    %v11080 = vsel %vm5840, %v11077, %v11079
    %v11086 = vadd.f32 %v10946, %v11072
    %v11087 = vadd.f32 %v10947, %v11074
    %v11088 = vadd.f32 %v10948, %v11076
    %v11089 = vadd.f32 %v10949, %v11078
    %v11090 = vadd.f32 %v10950, %v11080
    %s11091 = sld [smem:[#allocation5 + $0xb6]]
    %v11092 = vstv %s11091
    %v11093 = vmul.f32 %v11092, %v2402
    %v11094 = vmul.f32 %v11092, %v2408
    %v11095 = vmul.f32 %v11092, %v2414
    %v11096 = vmul.f32 %v11092, %v2420
    %v11097 = vmul.f32 %v11092, %v2426
    %v11098 = vmul.f32 %v11092, %v2432
    %v11105 = vrot.slane %v11093, 7
    %v11106 = vrot.slane %v11094, 7
    %v11107 = vsel %vm5840, %v11105, %v11106
    %v11108 = vrot.slane %v11095, 7
    %v11109 = vsel %vm5840, %v11106, %v11108
    %v11110 = vrot.slane %v11096, 7
    %v11111 = vsel %vm5840, %v11108, %v11110
    %v11112 = vrot.slane %v11097, 7
    %v11113 = vsel %vm5840, %v11110, %v11112
    %v11114 = vrot.slane %v11098, 7
    %v11115 = vsel %vm5840, %v11112, %v11114
    %v11121 = vadd.f32 %v10981, %v11107
    %v11122 = vadd.f32 %v10982, %v11109
    %v11123 = vadd.f32 %v10983, %v11111
    %v11124 = vadd.f32 %v10984, %v11113
    %v11125 = vadd.f32 %v10985, %v11115
    %s11126 = sld [smem:[#allocation5 + $0xf6]]
    %v11127 = vstv %s11126
    %v11128 = vmul.f32 %v11127, %v2402
    %v11129 = vmul.f32 %v11127, %v2408
    %v11130 = vmul.f32 %v11127, %v2414
    %v11131 = vmul.f32 %v11127, %v2420
    %v11132 = vmul.f32 %v11127, %v2426
    %v11133 = vmul.f32 %v11127, %v2432
    %v11140 = vrot.slane %v11128, 7
    %v11141 = vrot.slane %v11129, 7
    %v11142 = vsel %vm5840, %v11140, %v11141
    %v11143 = vrot.slane %v11130, 7
    %v11144 = vsel %vm5840, %v11141, %v11143
    %v11145 = vrot.slane %v11131, 7
    %v11146 = vsel %vm5840, %v11143, %v11145
    %v11147 = vrot.slane %v11132, 7
    %v11148 = vsel %vm5840, %v11145, %v11147
    %v11149 = vrot.slane %v11133, 7
    %v11150 = vsel %vm5840, %v11147, %v11149
    %v11156 = vadd.f32 %v11016, %v11142
    %v11157 = vadd.f32 %v11017, %v11144
    %v11158 = vadd.f32 %v11018, %v11146
    %v11159 = vadd.f32 %v11019, %v11148
    %v11160 = vadd.f32 %v11020, %v11150
    %s11161 = sld [smem:[#allocation5 + $0x37]]
    %v11162 = vstv %s11161
    %v11163 = vmul.f32 %v11162, %v4638
    %v11164 = vmul.f32 %v11162, %v4644
    %v11165 = vmul.f32 %v11162, %v4650
    %v11166 = vmul.f32 %v11162, %v4656
    %v11167 = vmul.f32 %v11162, %v4662
    %v11168 = vmul.f32 %v11162, %v4668
    %v11175 = vrot.slane %v11163, 7
    %v11176 = vrot.slane %v11164, 7
    %v11177 = vsel %vm5840, %v11175, %v11176
    %v11178 = vrot.slane %v11165, 7
    %v11179 = vsel %vm5840, %v11176, %v11178
    %v11180 = vrot.slane %v11166, 7
    %v11181 = vsel %vm5840, %v11178, %v11180
    %v11182 = vrot.slane %v11167, 7
    %v11183 = vsel %vm5840, %v11180, %v11182
    %v11184 = vrot.slane %v11168, 7
    %v11185 = vsel %vm5840, %v11182, %v11184
    %v11191 = vadd.f32 %v11051, %v11177
    %v11192 = vadd.f32 %v11052, %v11179
    %v11193 = vadd.f32 %v11053, %v11181
    %v11194 = vadd.f32 %v11054, %v11183
    %v11195 = vadd.f32 %v11055, %v11185
    %s11196 = sld [smem:[#allocation5 + $0x77]]
    %v11197 = vstv %s11196
    %v11198 = vmul.f32 %v11197, %v4638
    %v11199 = vmul.f32 %v11197, %v4644
    %v11200 = vmul.f32 %v11197, %v4650
    %v11201 = vmul.f32 %v11197, %v4656
    %v11202 = vmul.f32 %v11197, %v4662
    %v11203 = vmul.f32 %v11197, %v4668
    %v11210 = vrot.slane %v11198, 7
    %v11211 = vrot.slane %v11199, 7
    %v11212 = vsel %vm5840, %v11210, %v11211
    %v11213 = vrot.slane %v11200, 7
    %v11214 = vsel %vm5840, %v11211, %v11213
    %v11215 = vrot.slane %v11201, 7
    %v11216 = vsel %vm5840, %v11213, %v11215
    %v11217 = vrot.slane %v11202, 7
    %v11218 = vsel %vm5840, %v11215, %v11217
    %v11219 = vrot.slane %v11203, 7
    %v11220 = vsel %vm5840, %v11217, %v11219
    %v11226 = vadd.f32 %v11086, %v11212
    %v11227 = vadd.f32 %v11087, %v11214
    %v11228 = vadd.f32 %v11088, %v11216
    %v11229 = vadd.f32 %v11089, %v11218
    %v11230 = vadd.f32 %v11090, %v11220
    %s11231 = sld [smem:[#allocation5 + $0xb7]]
    %v11232 = vstv %s11231
    %v11233 = vmul.f32 %v11232, %v4638
    %v11234 = vmul.f32 %v11232, %v4644
    %v11235 = vmul.f32 %v11232, %v4650
    %v11236 = vmul.f32 %v11232, %v4656
    %v11237 = vmul.f32 %v11232, %v4662
    %v11238 = vmul.f32 %v11232, %v4668
    %v11245 = vrot.slane %v11233, 7
    %v11246 = vrot.slane %v11234, 7
    %v11247 = vsel %vm5840, %v11245, %v11246
    %v11248 = vrot.slane %v11235, 7
    %v11249 = vsel %vm5840, %v11246, %v11248
    %v11250 = vrot.slane %v11236, 7
    %v11251 = vsel %vm5840, %v11248, %v11250
    %v11252 = vrot.slane %v11237, 7
    %v11253 = vsel %vm5840, %v11250, %v11252
    %v11254 = vrot.slane %v11238, 7
    %v11255 = vsel %vm5840, %v11252, %v11254
    %v11261 = vadd.f32 %v11121, %v11247
    %v11262 = vadd.f32 %v11122, %v11249
    %v11263 = vadd.f32 %v11123, %v11251
    %v11264 = vadd.f32 %v11124, %v11253
    %v11265 = vadd.f32 %v11125, %v11255
    %s11266 = sld [smem:[#allocation5 + $0xf7]]
    %v11267 = vstv %s11266
    %v11268 = vmul.f32 %v11267, %v4638
    %v11269 = vmul.f32 %v11267, %v4644
    %v11270 = vmul.f32 %v11267, %v4650
    %v11271 = vmul.f32 %v11267, %v4656
    %v11272 = vmul.f32 %v11267, %v4662
    %v11273 = vmul.f32 %v11267, %v4668
    %v11280 = vrot.slane %v11268, 7
    %v11281 = vrot.slane %v11269, 7
    %v11282 = vsel %vm5840, %v11280, %v11281
    %v11283 = vrot.slane %v11270, 7
    %v11284 = vsel %vm5840, %v11281, %v11283
    %v11285 = vrot.slane %v11271, 7
    %v11286 = vsel %vm5840, %v11283, %v11285
    %v11287 = vrot.slane %v11272, 7
    %v11288 = vsel %vm5840, %v11285, %v11287
    %v11289 = vrot.slane %v11273, 7
    %v11290 = vsel %vm5840, %v11287, %v11289
    %v11296 = vadd.f32 %v11156, %v11282
    %v11297 = vadd.f32 %v11157, %v11284
    %v11298 = vadd.f32 %v11158, %v11286
    %v11299 = vadd.f32 %v11159, %v11288
    %v11300 = vadd.f32 %v11160, %v11290
    %s11301 = sld [smem:[#allocation5 + $0x38]]
    %v11302 = vstv %s11301
    %v11303 = vmul.f32 %v11302, %v2432
    %v11304 = vmul.f32 %v11302, %v2438
    %v11305 = vmul.f32 %v11302, %v2444
    %v11306 = vmul.f32 %v11302, %v2450
    %v11307 = vmul.f32 %v11302, %v2456
    %v11313 = vrot.slane %v11303, 2
    %v11314 = vrot.slane %v11304, 2
    %v11315 = vsel %vm5060, %v11313, %v11314
    %v11316 = vrot.slane %v11305, 2
    %v11317 = vsel %vm5060, %v11314, %v11316
    %v11318 = vrot.slane %v11306, 2
    %v11319 = vsel %vm5060, %v11316, %v11318
    %v11320 = vrot.slane %v11307, 2
    %v11321 = vsel %vm5060, %v11318, %v11320
    %v11327 = vadd.f32 %v11191, %v11315
    %v11328 = vadd.f32 %v11192, %v11317
    %v11329 = vadd.f32 %v11193, %v11319
    %v11330 = vadd.f32 %v11194, %v11321
    %v11331 = vadd.f32 %v11195, %v11320
    %s11332 = sld [smem:[#allocation5 + $0x78]]
    %v11333 = vstv %s11332
    %v11334 = vmul.f32 %v11333, %v2432
    %v11335 = vmul.f32 %v11333, %v2438
    %v11336 = vmul.f32 %v11333, %v2444
    %v11337 = vmul.f32 %v11333, %v2450
    %v11338 = vmul.f32 %v11333, %v2456
    %v11344 = vrot.slane %v11334, 2
    %v11345 = vrot.slane %v11335, 2
    %v11346 = vsel %vm5060, %v11344, %v11345
    %v11347 = vrot.slane %v11336, 2
    %v11348 = vsel %vm5060, %v11345, %v11347
    %v11349 = vrot.slane %v11337, 2
    %v11350 = vsel %vm5060, %v11347, %v11349
    %v11351 = vrot.slane %v11338, 2
    %v11352 = vsel %vm5060, %v11349, %v11351
    %v11358 = vadd.f32 %v11226, %v11346
    %v11359 = vadd.f32 %v11227, %v11348
    %v11360 = vadd.f32 %v11228, %v11350
    %v11361 = vadd.f32 %v11229, %v11352
    %v11362 = vadd.f32 %v11230, %v11351
    %s11363 = sld [smem:[#allocation5 + $0xb8]]
    %v11364 = vstv %s11363
    %v11365 = vmul.f32 %v11364, %v2432
    %v11366 = vmul.f32 %v11364, %v2438
    %v11367 = vmul.f32 %v11364, %v2444
    %v11368 = vmul.f32 %v11364, %v2450
    %v11369 = vmul.f32 %v11364, %v2456
    %v11375 = vrot.slane %v11365, 2
    %v11376 = vrot.slane %v11366, 2
    %v11377 = vsel %vm5060, %v11375, %v11376
    %v11378 = vrot.slane %v11367, 2
    %v11379 = vsel %vm5060, %v11376, %v11378
    %v11380 = vrot.slane %v11368, 2
    %v11381 = vsel %vm5060, %v11378, %v11380
    %v11382 = vrot.slane %v11369, 2
    %v11383 = vsel %vm5060, %v11380, %v11382
    %v11389 = vadd.f32 %v11261, %v11377
    %v11390 = vadd.f32 %v11262, %v11379
    %v11391 = vadd.f32 %v11263, %v11381
    %v11392 = vadd.f32 %v11264, %v11383
    %v11393 = vadd.f32 %v11265, %v11382
    %s11394 = sld [smem:[#allocation5 + $0xf8]]
    %v11395 = vstv %s11394
    %v11396 = vmul.f32 %v11395, %v2432
    %v11397 = vmul.f32 %v11395, %v2438
    %v11398 = vmul.f32 %v11395, %v2444
    %v11399 = vmul.f32 %v11395, %v2450
    %v11400 = vmul.f32 %v11395, %v2456
    %v11406 = vrot.slane %v11396, 2
    %v11407 = vrot.slane %v11397, 2
    %v11408 = vsel %vm5060, %v11406, %v11407
    %v11409 = vrot.slane %v11398, 2
    %v11410 = vsel %vm5060, %v11407, %v11409
    %v11411 = vrot.slane %v11399, 2
    %v11412 = vsel %vm5060, %v11409, %v11411
    %v11413 = vrot.slane %v11400, 2
    %v11414 = vsel %vm5060, %v11411, %v11413
    %v11420 = vadd.f32 %v11296, %v11408
    %v11421 = vadd.f32 %v11297, %v11410
    %v11422 = vadd.f32 %v11298, %v11412
    %v11423 = vadd.f32 %v11299, %v11414
    %v11424 = vadd.f32 %v11300, %v11413
    %s11425 = sld [smem:[#allocation5 + $0x39]]
    %v11426 = vstv %s11425
    %v11427 = vmul.f32 %v11426, %v4668
    %v11428 = vmul.f32 %v11426, %v4674
    %v11429 = vmul.f32 %v11426, %v4680
    %v11430 = vmul.f32 %v11426, %v4686
    %v11431 = vmul.f32 %v11426, %v4692
    %v11437 = vrot.slane %v11427, 2
    %v11438 = vrot.slane %v11428, 2
    %v11439 = vsel %vm5060, %v11437, %v11438
    %v11440 = vrot.slane %v11429, 2
    %v11441 = vsel %vm5060, %v11438, %v11440
    %v11442 = vrot.slane %v11430, 2
    %v11443 = vsel %vm5060, %v11440, %v11442
    %v11444 = vrot.slane %v11431, 2
    %v11445 = vsel %vm5060, %v11442, %v11444
    %v11451 = vadd.f32 %v11327, %v11439
    %v11452 = vadd.f32 %v11328, %v11441
    %v11453 = vadd.f32 %v11329, %v11443
    %v11454 = vadd.f32 %v11330, %v11445
    %v11455 = vadd.f32 %v11331, %v11444
    %s11456 = sld [smem:[#allocation5 + $0x79]]
    %v11457 = vstv %s11456
    %v11458 = vmul.f32 %v11457, %v4668
    %v11459 = vmul.f32 %v11457, %v4674
    %v11460 = vmul.f32 %v11457, %v4680
    %v11461 = vmul.f32 %v11457, %v4686
    %v11462 = vmul.f32 %v11457, %v4692
    %v11468 = vrot.slane %v11458, 2
    %v11469 = vrot.slane %v11459, 2
    %v11470 = vsel %vm5060, %v11468, %v11469
    %v11471 = vrot.slane %v11460, 2
    %v11472 = vsel %vm5060, %v11469, %v11471
    %v11473 = vrot.slane %v11461, 2
    %v11474 = vsel %vm5060, %v11471, %v11473
    %v11475 = vrot.slane %v11462, 2
    %v11476 = vsel %vm5060, %v11473, %v11475
    %v11482 = vadd.f32 %v11358, %v11470
    %v11483 = vadd.f32 %v11359, %v11472
    %v11484 = vadd.f32 %v11360, %v11474
    %v11485 = vadd.f32 %v11361, %v11476
    %v11486 = vadd.f32 %v11362, %v11475
    %s11487 = sld [smem:[#allocation5 + $0xb9]]
    %v11488 = vstv %s11487
    %v11489 = vmul.f32 %v11488, %v4668
    %v11490 = vmul.f32 %v11488, %v4674
    %v11491 = vmul.f32 %v11488, %v4680
    %v11492 = vmul.f32 %v11488, %v4686
    %v11493 = vmul.f32 %v11488, %v4692
    %v11499 = vrot.slane %v11489, 2
    %v11500 = vrot.slane %v11490, 2
    %v11501 = vsel %vm5060, %v11499, %v11500
    %v11502 = vrot.slane %v11491, 2
    %v11503 = vsel %vm5060, %v11500, %v11502
    %v11504 = vrot.slane %v11492, 2
    %v11505 = vsel %vm5060, %v11502, %v11504
    %v11506 = vrot.slane %v11493, 2
    %v11507 = vsel %vm5060, %v11504, %v11506
    %v11513 = vadd.f32 %v11389, %v11501
    %v11514 = vadd.f32 %v11390, %v11503
    %v11515 = vadd.f32 %v11391, %v11505
    %v11516 = vadd.f32 %v11392, %v11507
    %v11517 = vadd.f32 %v11393, %v11506
    %s11518 = sld [smem:[#allocation5 + $0xf9]]
    %v11519 = vstv %s11518
    %v11520 = vmul.f32 %v11519, %v4668
    %v11521 = vmul.f32 %v11519, %v4674
    %v11522 = vmul.f32 %v11519, %v4680
    %v11523 = vmul.f32 %v11519, %v4686
    %v11524 = vmul.f32 %v11519, %v4692
    %v11530 = vrot.slane %v11520, 2
    %v11531 = vrot.slane %v11521, 2
    %v11532 = vsel %vm5060, %v11530, %v11531
    %v11533 = vrot.slane %v11522, 2
    %v11534 = vsel %vm5060, %v11531, %v11533
    %v11535 = vrot.slane %v11523, 2
    %v11536 = vsel %vm5060, %v11533, %v11535
    %v11537 = vrot.slane %v11524, 2
    %v11538 = vsel %vm5060, %v11535, %v11537
    %v11544 = vadd.f32 %v11420, %v11532
    %v11545 = vadd.f32 %v11421, %v11534
    %v11546 = vadd.f32 %v11422, %v11536
    %v11547 = vadd.f32 %v11423, %v11538
    %v11548 = vadd.f32 %v11424, %v11537
    %s11549 = sld [smem:[#allocation5 + $0x3a]]
    %v11550 = vstv %s11549
    %v11551 = vmul.f32 %v11550, %v2432
    %v11552 = vmul.f32 %v11550, %v2438
    %v11553 = vmul.f32 %v11550, %v2444
    %v11554 = vmul.f32 %v11550, %v2450
    %v11555 = vmul.f32 %v11550, %v2456
    %v11561 = vrot.slane %v11551, 3
    %v11562 = vrot.slane %v11552, 3
    %v11563 = vsel %vm5309, %v11561, %v11562
    %v11564 = vrot.slane %v11553, 3
    %v11565 = vsel %vm5309, %v11562, %v11564
    %v11566 = vrot.slane %v11554, 3
    %v11567 = vsel %vm5309, %v11564, %v11566
    %v11568 = vrot.slane %v11555, 3
    %v11569 = vsel %vm5309, %v11566, %v11568
    %v11575 = vadd.f32 %v11451, %v11563
    %v11576 = vadd.f32 %v11452, %v11565
    %v11577 = vadd.f32 %v11453, %v11567
    %v11578 = vadd.f32 %v11454, %v11569
    %v11579 = vadd.f32 %v11455, %v11568
    %s11580 = sld [smem:[#allocation5 + $0x7a]]
    %v11581 = vstv %s11580
    %v11582 = vmul.f32 %v11581, %v2432
    %v11583 = vmul.f32 %v11581, %v2438
    %v11584 = vmul.f32 %v11581, %v2444
    %v11585 = vmul.f32 %v11581, %v2450
    %v11586 = vmul.f32 %v11581, %v2456
    %v11592 = vrot.slane %v11582, 3
    %v11593 = vrot.slane %v11583, 3
    %v11594 = vsel %vm5309, %v11592, %v11593
    %v11595 = vrot.slane %v11584, 3
    %v11596 = vsel %vm5309, %v11593, %v11595
    %v11597 = vrot.slane %v11585, 3
    %v11598 = vsel %vm5309, %v11595, %v11597
    %v11599 = vrot.slane %v11586, 3
    %v11600 = vsel %vm5309, %v11597, %v11599
    %v11606 = vadd.f32 %v11482, %v11594
    %v11607 = vadd.f32 %v11483, %v11596
    %v11608 = vadd.f32 %v11484, %v11598
    %v11609 = vadd.f32 %v11485, %v11600
    %v11610 = vadd.f32 %v11486, %v11599
    %s11611 = sld [smem:[#allocation5 + $0xba]]
    %v11612 = vstv %s11611
    %v11613 = vmul.f32 %v11612, %v2432
    %v11614 = vmul.f32 %v11612, %v2438
    %v11615 = vmul.f32 %v11612, %v2444
    %v11616 = vmul.f32 %v11612, %v2450
    %v11617 = vmul.f32 %v11612, %v2456
    %v11623 = vrot.slane %v11613, 3
    %v11624 = vrot.slane %v11614, 3
    %v11625 = vsel %vm5309, %v11623, %v11624
    %v11626 = vrot.slane %v11615, 3
    %v11627 = vsel %vm5309, %v11624, %v11626
    %v11628 = vrot.slane %v11616, 3
    %v11629 = vsel %vm5309, %v11626, %v11628
    %v11630 = vrot.slane %v11617, 3
    %v11631 = vsel %vm5309, %v11628, %v11630
    %v11637 = vadd.f32 %v11513, %v11625
    %v11638 = vadd.f32 %v11514, %v11627
    %v11639 = vadd.f32 %v11515, %v11629
    %v11640 = vadd.f32 %v11516, %v11631
    %v11641 = vadd.f32 %v11517, %v11630
    %s11642 = sld [smem:[#allocation5 + $0xfa]]
    %v11643 = vstv %s11642
    %v11644 = vmul.f32 %v11643, %v2432
    %v11645 = vmul.f32 %v11643, %v2438
    %v11646 = vmul.f32 %v11643, %v2444
    %v11647 = vmul.f32 %v11643, %v2450
    %v11648 = vmul.f32 %v11643, %v2456
    %v11654 = vrot.slane %v11644, 3
    %v11655 = vrot.slane %v11645, 3
    %v11656 = vsel %vm5309, %v11654, %v11655
    %v11657 = vrot.slane %v11646, 3
    %v11658 = vsel %vm5309, %v11655, %v11657
    %v11659 = vrot.slane %v11647, 3
    %v11660 = vsel %vm5309, %v11657, %v11659
    %v11661 = vrot.slane %v11648, 3
    %v11662 = vsel %vm5309, %v11659, %v11661
    %v11668 = vadd.f32 %v11544, %v11656
    %v11669 = vadd.f32 %v11545, %v11658
    %v11670 = vadd.f32 %v11546, %v11660
    %v11671 = vadd.f32 %v11547, %v11662
    %v11672 = vadd.f32 %v11548, %v11661
    %s11673 = sld [smem:[#allocation5 + $0x3b]]
    %v11674 = vstv %s11673
    %v11675 = vmul.f32 %v11674, %v4668
    %v11676 = vmul.f32 %v11674, %v4674
    %v11677 = vmul.f32 %v11674, %v4680
    %v11678 = vmul.f32 %v11674, %v4686
    %v11679 = vmul.f32 %v11674, %v4692
    %v11685 = vrot.slane %v11675, 3
    %v11686 = vrot.slane %v11676, 3
    %v11687 = vsel %vm5309, %v11685, %v11686
    %v11688 = vrot.slane %v11677, 3
    %v11689 = vsel %vm5309, %v11686, %v11688
    %v11690 = vrot.slane %v11678, 3
    %v11691 = vsel %vm5309, %v11688, %v11690
    %v11692 = vrot.slane %v11679, 3
    %v11693 = vsel %vm5309, %v11690, %v11692
    %v11699 = vadd.f32 %v11575, %v11687
    %v11700 = vadd.f32 %v11576, %v11689
    %v11701 = vadd.f32 %v11577, %v11691
    %v11702 = vadd.f32 %v11578, %v11693
    %v11703 = vadd.f32 %v11579, %v11692
    %s11704 = sld [smem:[#allocation5 + $0x7b]]
    %v11705 = vstv %s11704
    %v11706 = vmul.f32 %v11705, %v4668
    %v11707 = vmul.f32 %v11705, %v4674
    %v11708 = vmul.f32 %v11705, %v4680
    %v11709 = vmul.f32 %v11705, %v4686
    %v11710 = vmul.f32 %v11705, %v4692
    %v11716 = vrot.slane %v11706, 3
    %v11717 = vrot.slane %v11707, 3
    %v11718 = vsel %vm5309, %v11716, %v11717
    %v11719 = vrot.slane %v11708, 3
    %v11720 = vsel %vm5309, %v11717, %v11719
    %v11721 = vrot.slane %v11709, 3
    %v11722 = vsel %vm5309, %v11719, %v11721
    %v11723 = vrot.slane %v11710, 3
    %v11724 = vsel %vm5309, %v11721, %v11723
    %v11730 = vadd.f32 %v11606, %v11718
    %v11731 = vadd.f32 %v11607, %v11720
    %v11732 = vadd.f32 %v11608, %v11722
    %v11733 = vadd.f32 %v11609, %v11724
    %v11734 = vadd.f32 %v11610, %v11723
    %s11735 = sld [smem:[#allocation5 + $0xbb]]
    %v11736 = vstv %s11735
    %v11737 = vmul.f32 %v11736, %v4668
    %v11738 = vmul.f32 %v11736, %v4674
    %v11739 = vmul.f32 %v11736, %v4680
    %v11740 = vmul.f32 %v11736, %v4686
    %v11741 = vmul.f32 %v11736, %v4692
    %v11747 = vrot.slane %v11737, 3
    %v11748 = vrot.slane %v11738, 3
    %v11749 = vsel %vm5309, %v11747, %v11748
    %v11750 = vrot.slane %v11739, 3
    %v11751 = vsel %vm5309, %v11748, %v11750
    %v11752 = vrot.slane %v11740, 3
    %v11753 = vsel %vm5309, %v11750, %v11752
    %v11754 = vrot.slane %v11741, 3
    %v11755 = vsel %vm5309, %v11752, %v11754
    %v11761 = vadd.f32 %v11637, %v11749
    %v11762 = vadd.f32 %v11638, %v11751
    %v11763 = vadd.f32 %v11639, %v11753
    %v11764 = vadd.f32 %v11640, %v11755
    %v11765 = vadd.f32 %v11641, %v11754
    %s11766 = sld [smem:[#allocation5 + $0xfb]]
    %v11767 = vstv %s11766
    %v11768 = vmul.f32 %v11767, %v4668
    %v11769 = vmul.f32 %v11767, %v4674
    %v11770 = vmul.f32 %v11767, %v4680
    %v11771 = vmul.f32 %v11767, %v4686
    %v11772 = vmul.f32 %v11767, %v4692
    %v11778 = vrot.slane %v11768, 3
    %v11779 = vrot.slane %v11769, 3
    %v11780 = vsel %vm5309, %v11778, %v11779
    %v11781 = vrot.slane %v11770, 3
    %v11782 = vsel %vm5309, %v11779, %v11781
    %v11783 = vrot.slane %v11771, 3
    %v11784 = vsel %vm5309, %v11781, %v11783
    %v11785 = vrot.slane %v11772, 3
    %v11786 = vsel %vm5309, %v11783, %v11785
    %v11792 = vadd.f32 %v11668, %v11780
    %v11793 = vadd.f32 %v11669, %v11782
    %v11794 = vadd.f32 %v11670, %v11784
    %v11795 = vadd.f32 %v11671, %v11786
    %v11796 = vadd.f32 %v11672, %v11785
    %s11797 = sld [smem:[#allocation5 + $0x3c]]
    %v11798 = vstv %s11797
    %v11799 = vmul.f32 %v11798, %v2432
    %v11800 = vmul.f32 %v11798, %v2438
    %v11801 = vmul.f32 %v11798, %v2444
    %v11802 = vmul.f32 %v11798, %v2450
    %v11803 = vmul.f32 %v11798, %v2456
    %v11809 = vrot.slane %v11799, 4
    %v11810 = vrot.slane %v11800, 4
    %v11811 = vsel %vm6463, %v11809, %v11810
    %v11812 = vrot.slane %v11801, 4
    %v11813 = vsel %vm6463, %v11810, %v11812
    %v11814 = vrot.slane %v11802, 4
    %v11815 = vsel %vm6463, %v11812, %v11814
    %v11816 = vrot.slane %v11803, 4
    %v11817 = vsel %vm6463, %v11814, %v11816
    %v11823 = vadd.f32 %v11699, %v11811
    %v11824 = vadd.f32 %v11700, %v11813
    %v11825 = vadd.f32 %v11701, %v11815
    %v11826 = vadd.f32 %v11702, %v11817
    %v11827 = vadd.f32 %v11703, %v11816
    %s11828 = sld [smem:[#allocation5 + $0x7c]]
    %v11829 = vstv %s11828
    %v11830 = vmul.f32 %v11829, %v2432
    %v11831 = vmul.f32 %v11829, %v2438
    %v11832 = vmul.f32 %v11829, %v2444
    %v11833 = vmul.f32 %v11829, %v2450
    %v11834 = vmul.f32 %v11829, %v2456
    %v11840 = vrot.slane %v11830, 4
    %v11841 = vrot.slane %v11831, 4
    %v11842 = vsel %vm6463, %v11840, %v11841
    %v11843 = vrot.slane %v11832, 4
    %v11844 = vsel %vm6463, %v11841, %v11843
    %v11845 = vrot.slane %v11833, 4
    %v11846 = vsel %vm6463, %v11843, %v11845
    %v11847 = vrot.slane %v11834, 4
    %v11848 = vsel %vm6463, %v11845, %v11847
    %v11854 = vadd.f32 %v11730, %v11842
    %v11855 = vadd.f32 %v11731, %v11844
    %v11856 = vadd.f32 %v11732, %v11846
    %v11857 = vadd.f32 %v11733, %v11848
    %v11858 = vadd.f32 %v11734, %v11847
    %s11859 = sld [smem:[#allocation5 + $0xbc]]
    %v11860 = vstv %s11859
    %v11861 = vmul.f32 %v11860, %v2432
    %v11862 = vmul.f32 %v11860, %v2438
    %v11863 = vmul.f32 %v11860, %v2444
    %v11864 = vmul.f32 %v11860, %v2450
    %v11865 = vmul.f32 %v11860, %v2456
    %v11871 = vrot.slane %v11861, 4
    %v11872 = vrot.slane %v11862, 4
    %v11873 = vsel %vm6463, %v11871, %v11872
    %v11874 = vrot.slane %v11863, 4
    %v11875 = vsel %vm6463, %v11872, %v11874
    %v11876 = vrot.slane %v11864, 4
    %v11877 = vsel %vm6463, %v11874, %v11876
    %v11878 = vrot.slane %v11865, 4
    %v11879 = vsel %vm6463, %v11876, %v11878
    %v11885 = vadd.f32 %v11761, %v11873
    %v11886 = vadd.f32 %v11762, %v11875
    %v11887 = vadd.f32 %v11763, %v11877
    %v11888 = vadd.f32 %v11764, %v11879
    %v11889 = vadd.f32 %v11765, %v11878
    %s11890 = sld [smem:[#allocation5 + $0xfc]]
    %v11891 = vstv %s11890
    %v11892 = vmul.f32 %v11891, %v2432
    %v11893 = vmul.f32 %v11891, %v2438
    %v11894 = vmul.f32 %v11891, %v2444
    %v11895 = vmul.f32 %v11891, %v2450
    %v11896 = vmul.f32 %v11891, %v2456
    %v11902 = vrot.slane %v11892, 4
    %v11903 = vrot.slane %v11893, 4
    %v11904 = vsel %vm6463, %v11902, %v11903
    %v11905 = vrot.slane %v11894, 4
    %v11906 = vsel %vm6463, %v11903, %v11905
    %v11907 = vrot.slane %v11895, 4
    %v11908 = vsel %vm6463, %v11905, %v11907
    %v11909 = vrot.slane %v11896, 4
    %v11910 = vsel %vm6463, %v11907, %v11909
    %v11916 = vadd.f32 %v11792, %v11904
    %v11917 = vadd.f32 %v11793, %v11906
    %v11918 = vadd.f32 %v11794, %v11908
    %v11919 = vadd.f32 %v11795, %v11910
    %v11920 = vadd.f32 %v11796, %v11909
    %s11921 = sld [smem:[#allocation5 + $0x3d]]
    %v11922 = vstv %s11921
    %v11923 = vmul.f32 %v11922, %v4668
    %v11924 = vmul.f32 %v11922, %v4674
    %v11925 = vmul.f32 %v11922, %v4680
    %v11926 = vmul.f32 %v11922, %v4686
    %v11927 = vmul.f32 %v11922, %v4692
    %v11933 = vrot.slane %v11923, 4
    %v11934 = vrot.slane %v11924, 4
    %v11935 = vsel %vm6463, %v11933, %v11934
    %v11936 = vrot.slane %v11925, 4
    %v11937 = vsel %vm6463, %v11934, %v11936
    %v11938 = vrot.slane %v11926, 4
    %v11939 = vsel %vm6463, %v11936, %v11938
    %v11940 = vrot.slane %v11927, 4
    %v11941 = vsel %vm6463, %v11938, %v11940
    %v11947 = vadd.f32 %v11823, %v11935
    %v11948 = vadd.f32 %v11824, %v11937
    %v11949 = vadd.f32 %v11825, %v11939
    %v11950 = vadd.f32 %v11826, %v11941
    %v11951 = vadd.f32 %v11827, %v11940
    %s11952 = sld [smem:[#allocation5 + $0x7d]]
    %v11953 = vstv %s11952
    %v11954 = vmul.f32 %v11953, %v4668
    %v11955 = vmul.f32 %v11953, %v4674
    %v11956 = vmul.f32 %v11953, %v4680
    %v11957 = vmul.f32 %v11953, %v4686
    %v11958 = vmul.f32 %v11953, %v4692
    %v11964 = vrot.slane %v11954, 4
    %v11965 = vrot.slane %v11955, 4
    %v11966 = vsel %vm6463, %v11964, %v11965
    %v11967 = vrot.slane %v11956, 4
    %v11968 = vsel %vm6463, %v11965, %v11967
    %v11969 = vrot.slane %v11957, 4
    %v11970 = vsel %vm6463, %v11967, %v11969
    %v11971 = vrot.slane %v11958, 4
    %v11972 = vsel %vm6463, %v11969, %v11971
    %v11978 = vadd.f32 %v11854, %v11966
    %v11979 = vadd.f32 %v11855, %v11968
    %v11980 = vadd.f32 %v11856, %v11970
    %v11981 = vadd.f32 %v11857, %v11972
    %v11982 = vadd.f32 %v11858, %v11971
    %s11983 = sld [smem:[#allocation5 + $0xbd]]
    %v11984 = vstv %s11983
    %v11985 = vmul.f32 %v11984, %v4668
    %v11986 = vmul.f32 %v11984, %v4674
    %v11987 = vmul.f32 %v11984, %v4680
    %v11988 = vmul.f32 %v11984, %v4686
    %v11989 = vmul.f32 %v11984, %v4692
    %v11995 = vrot.slane %v11985, 4
    %v11996 = vrot.slane %v11986, 4
    %v11997 = vsel %vm6463, %v11995, %v11996
    %v11998 = vrot.slane %v11987, 4
    %v11999 = vsel %vm6463, %v11996, %v11998
    %v12000 = vrot.slane %v11988, 4
    %v12001 = vsel %vm6463, %v11998, %v12000
    %v12002 = vrot.slane %v11989, 4
    %v12003 = vsel %vm6463, %v12000, %v12002
    %v12009 = vadd.f32 %v11885, %v11997
    %v12010 = vadd.f32 %v11886, %v11999
    %v12011 = vadd.f32 %v11887, %v12001
    %v12012 = vadd.f32 %v11888, %v12003
    %v12013 = vadd.f32 %v11889, %v12002
    %s12014 = sld [smem:[#allocation5 + $0xfd]]
    %v12015 = vstv %s12014
    %v12016 = vmul.f32 %v12015, %v4668
    %v12017 = vmul.f32 %v12015, %v4674
    %v12018 = vmul.f32 %v12015, %v4680
    %v12019 = vmul.f32 %v12015, %v4686
    %v12020 = vmul.f32 %v12015, %v4692
    %v12026 = vrot.slane %v12016, 4
    %v12027 = vrot.slane %v12017, 4
    %v12028 = vsel %vm6463, %v12026, %v12027
    %v12029 = vrot.slane %v12018, 4
    %v12030 = vsel %vm6463, %v12027, %v12029
    %v12031 = vrot.slane %v12019, 4
    %v12032 = vsel %vm6463, %v12029, %v12031
    %v12033 = vrot.slane %v12020, 4
    %v12034 = vsel %vm6463, %v12031, %v12033
    %v12040 = vadd.f32 %v11916, %v12028
    %v12041 = vadd.f32 %v11917, %v12030
    %v12042 = vadd.f32 %v11918, %v12032
    %v12043 = vadd.f32 %v11919, %v12034
    %v12044 = vadd.f32 %v11920, %v12033
    %s12045 = sld [smem:[#allocation5 + $0x3e]]
    %v12046 = vstv %s12045
    %v12047 = vmul.f32 %v12046, %v2432
    %v12048 = vmul.f32 %v12046, %v2438
    %v12049 = vmul.f32 %v12046, %v2444
    %v12050 = vmul.f32 %v12046, %v2450
    %v12051 = vmul.f32 %v12046, %v2456
    %v12057 = vrot.slane %v12047, 5
    %v12058 = vrot.slane %v12048, 5
    %v12059 = vsel %vm6712, %v12057, %v12058
    %v12060 = vrot.slane %v12049, 5
    %v12061 = vsel %vm6712, %v12058, %v12060
    %v12062 = vrot.slane %v12050, 5
    %v12063 = vsel %vm6712, %v12060, %v12062
    %v12064 = vrot.slane %v12051, 5
    %v12065 = vsel %vm6712, %v12062, %v12064
    %v12071 = vadd.f32 %v11947, %v12059
    %v12072 = vadd.f32 %v11948, %v12061
    %v12073 = vadd.f32 %v11949, %v12063
    %v12074 = vadd.f32 %v11950, %v12065
    %v12075 = vadd.f32 %v11951, %v12064
    %s12076 = sld [smem:[#allocation5 + $0x7e]]
    %v12077 = vstv %s12076
    %v12078 = vmul.f32 %v12077, %v2432
    %v12079 = vmul.f32 %v12077, %v2438
    %v12080 = vmul.f32 %v12077, %v2444
    %v12081 = vmul.f32 %v12077, %v2450
    %v12082 = vmul.f32 %v12077, %v2456
    %v12088 = vrot.slane %v12078, 5
    %v12089 = vrot.slane %v12079, 5
    %v12090 = vsel %vm6712, %v12088, %v12089
    %v12091 = vrot.slane %v12080, 5
    %v12092 = vsel %vm6712, %v12089, %v12091
    %v12093 = vrot.slane %v12081, 5
    %v12094 = vsel %vm6712, %v12091, %v12093
    %v12095 = vrot.slane %v12082, 5
    %v12096 = vsel %vm6712, %v12093, %v12095
    %v12102 = vadd.f32 %v11978, %v12090
    %v12103 = vadd.f32 %v11979, %v12092
    %v12104 = vadd.f32 %v11980, %v12094
    %v12105 = vadd.f32 %v11981, %v12096
    %v12106 = vadd.f32 %v11982, %v12095
    %s12107 = sld [smem:[#allocation5 + $0xbe]]
    %v12108 = vstv %s12107
    %v12109 = vmul.f32 %v12108, %v2432
    %v12110 = vmul.f32 %v12108, %v2438
    %v12111 = vmul.f32 %v12108, %v2444
    %v12112 = vmul.f32 %v12108, %v2450
    %v12113 = vmul.f32 %v12108, %v2456
    %v12119 = vrot.slane %v12109, 5
    %v12120 = vrot.slane %v12110, 5
    %v12121 = vsel %vm6712, %v12119, %v12120
    %v12122 = vrot.slane %v12111, 5
    %v12123 = vsel %vm6712, %v12120, %v12122
    %v12124 = vrot.slane %v12112, 5
    %v12125 = vsel %vm6712, %v12122, %v12124
    %v12126 = vrot.slane %v12113, 5
    %v12127 = vsel %vm6712, %v12124, %v12126
    %v12133 = vadd.f32 %v12009, %v12121
    %v12134 = vadd.f32 %v12010, %v12123
    %v12135 = vadd.f32 %v12011, %v12125
    %v12136 = vadd.f32 %v12012, %v12127
    %v12137 = vadd.f32 %v12013, %v12126
    %s12138 = sld [smem:[#allocation5 + $0xfe]]
    %v12139 = vstv %s12138
    %v12140 = vmul.f32 %v12139, %v2432
    %v12141 = vmul.f32 %v12139, %v2438
    %v12142 = vmul.f32 %v12139, %v2444
    %v12143 = vmul.f32 %v12139, %v2450
    %v12144 = vmul.f32 %v12139, %v2456
    %v12150 = vrot.slane %v12140, 5
    %v12151 = vrot.slane %v12141, 5
    %v12152 = vsel %vm6712, %v12150, %v12151
    %v12153 = vrot.slane %v12142, 5
    %v12154 = vsel %vm6712, %v12151, %v12153
    %v12155 = vrot.slane %v12143, 5
    %v12156 = vsel %vm6712, %v12153, %v12155
    %v12157 = vrot.slane %v12144, 5
    %v12158 = vsel %vm6712, %v12155, %v12157
    %v12164 = vadd.f32 %v12040, %v12152
    %v12165 = vadd.f32 %v12041, %v12154
    %v12166 = vadd.f32 %v12042, %v12156
    %v12167 = vadd.f32 %v12043, %v12158
    %v12168 = vadd.f32 %v12044, %v12157
    %s12169 = sld [smem:[#allocation5 + $0x3f]]
    %v12170 = vstv %s12169
    %v12171 = vmul.f32 %v12170, %v4668
    %v12172 = vmul.f32 %v12170, %v4674
    %v12173 = vmul.f32 %v12170, %v4680
    %v12174 = vmul.f32 %v12170, %v4686
    %v12175 = vmul.f32 %v12170, %v4692
    %v12181 = vrot.slane %v12171, 5
    %v12182 = vrot.slane %v12172, 5
    %v12183 = vsel %vm6712, %v12181, %v12182
    %v12184 = vrot.slane %v12173, 5
    %v12185 = vsel %vm6712, %v12182, %v12184
    %v12186 = vrot.slane %v12174, 5
    %v12187 = vsel %vm6712, %v12184, %v12186
    %v12188 = vrot.slane %v12175, 5
    %v12189 = vsel %vm6712, %v12186, %v12188
    %v12195 = vadd.f32 %v12071, %v12183
    %v12196 = vadd.f32 %v12072, %v12185
    %v12197 = vadd.f32 %v12073, %v12187
    %v12198 = vadd.f32 %v12074, %v12189
    %v12199 = vadd.f32 %v12075, %v12188
    %s12200 = sld [smem:[#allocation5 + $0x7f]]
    %v12201 = vstv %s12200
    %v12202 = vmul.f32 %v12201, %v4668
    %v12203 = vmul.f32 %v12201, %v4674
    %v12204 = vmul.f32 %v12201, %v4680
    %v12205 = vmul.f32 %v12201, %v4686
    %v12206 = vmul.f32 %v12201, %v4692
    %v12212 = vrot.slane %v12202, 5
    %v12213 = vrot.slane %v12203, 5
    %v12214 = vsel %vm6712, %v12212, %v12213
    %v12215 = vrot.slane %v12204, 5
    %v12216 = vsel %vm6712, %v12213, %v12215
    %v12217 = vrot.slane %v12205, 5
    %v12218 = vsel %vm6712, %v12215, %v12217
    %v12219 = vrot.slane %v12206, 5
    %v12220 = vsel %vm6712, %v12217, %v12219
    %v12226 = vadd.f32 %v12102, %v12214
    %v12227 = vadd.f32 %v12103, %v12216
    %v12228 = vadd.f32 %v12104, %v12218
    %v12229 = vadd.f32 %v12105, %v12220
    %v12230 = vadd.f32 %v12106, %v12219
    %s12231 = sld [smem:[#allocation5 + $0xbf]]
    %v12232 = vstv %s12231
    %v12233 = vmul.f32 %v12232, %v4668
    %v12234 = vmul.f32 %v12232, %v4674
    %v12235 = vmul.f32 %v12232, %v4680
    %v12236 = vmul.f32 %v12232, %v4686
    %v12237 = vmul.f32 %v12232, %v4692
    %v12243 = vrot.slane %v12233, 5
    %v12244 = vrot.slane %v12234, 5
    %v12245 = vsel %vm6712, %v12243, %v12244
    %v12246 = vrot.slane %v12235, 5
    %v12247 = vsel %vm6712, %v12244, %v12246
    %v12248 = vrot.slane %v12236, 5
    %v12249 = vsel %vm6712, %v12246, %v12248
    %v12250 = vrot.slane %v12237, 5
    %v12251 = vsel %vm6712, %v12248, %v12250
    %v12257 = vadd.f32 %v12133, %v12245
    %v12258 = vadd.f32 %v12134, %v12247
    %v12259 = vadd.f32 %v12135, %v12249
    %v12260 = vadd.f32 %v12136, %v12251
    %v12261 = vadd.f32 %v12137, %v12250
    %s12262 = sld [smem:[#allocation5 + $0xff]]
    %v12263 = vstv %s12262
    %v12264 = vmul.f32 %v12263, %v4668
    %v12265 = vmul.f32 %v12263, %v4674
    %v12266 = vmul.f32 %v12263, %v4680
    %v12267 = vmul.f32 %v12263, %v4686
    %v12268 = vmul.f32 %v12263, %v4692
    %v12274 = vrot.slane %v12264, 5
    %v12275 = vrot.slane %v12265, 5
    %v12276 = vsel %vm6712, %v12274, %v12275
    %v12277 = vrot.slane %v12266, 5
    %v12278 = vsel %vm6712, %v12275, %v12277
    %v12279 = vrot.slane %v12267, 5
    %v12280 = vsel %vm6712, %v12277, %v12279
    %v12281 = vrot.slane %v12268, 5
    %v12282 = vsel %vm6712, %v12279, %v12281
    %v12288 = vadd.f32 %v12164, %v12276
    %v12289 = vadd.f32 %v12165, %v12278
    %v12290 = vadd.f32 %v12166, %v12280
    %v12291 = vadd.f32 %v12167, %v12282
    %v12292 = vadd.f32 %v12168, %v12281
    %v12293 = vsub.f32 0.0, %v12195
    %v12294 = vsub.f32 0.0, %v12196
    %v12295 = vsub.f32 0.0, %v12197
    %v12296 = vsub.f32 0.0, %v12198
    %v12297 = vsub.f32 0.0, %v12199
    %v12298 = vmul.f32 %v12293, 1.442695
    %v12299 = vpow.pop %v12298
    %v12300 = vmul.f32 %v12294, 1.442695
    %v12301 = vpow.pop %v12300
    %v12302 = vmul.f32 %v12295, 1.442695
    %v12303 = vpow.pop %v12302
    %v12304 = vmul.f32 %v12296, 1.442695
    %v12305 = vpow.pop %v12304
    %v12306 = vmul.f32 %v12297, 1.442695
    %v12307 = vpow.pop %v12306
    %v12308 = vadd.f32 %v12299, 1.0
    %v12309 = vadd.f32 %v12301, 1.0
    %v12310 = vadd.f32 %v12303, 1.0
    %v12311 = vadd.f32 %v12305, 1.0
    %v12312 = vadd.f32 %v12307, 1.0
    %v12313 = vrcp.pop %v12308
    %v12314 = vmul.f32 1.0, %v12313
    %v12315 = vrcp.pop %v12309
    %v12316 = vmul.f32 1.0, %v12315
    %v12317 = vrcp.pop %v12310
    %v12318 = vmul.f32 1.0, %v12317
    %v12319 = vrcp.pop %v12311
    %v12320 = vmul.f32 1.0, %v12319
    %v12321 = vrcp.pop %v12312
    %v12322 = vmul.f32 1.0, %v12321
    %vm12323 = vcmask 269312
    %12324 = vst.msk [vmem:[%s3] sm:$0xff] %vm12323, %v12314
    %12325 = vst.msk [vmem:[%s3 + $0x8] sm:$0xff] %vm12323, %v12316
    %12326 = vst.msk [vmem:[%s3 + $0x10] sm:$0xff] %vm12323, %v12318
    %12327 = vst.msk [vmem:[%s3 + $0x18] sm:$0xff] %vm12323, %v12320
    %vm12328 = vcmask 264192
    %12329 = vst.msk [vmem:[%s3 + $0x20] sm:$0x7] %vm12328, %v12322
    %v12330 = vsub.f32 0.0, %v12226
    %v12331 = vsub.f32 0.0, %v12227
    %v12332 = vsub.f32 0.0, %v12228
    %v12333 = vsub.f32 0.0, %v12229
    %v12334 = vsub.f32 0.0, %v12230
    %v12335 = vmul.f32 %v12330, 1.442695
    %v12336 = vpow.pop %v12335
    %v12337 = vmul.f32 %v12331, 1.442695
    %v12338 = vpow.pop %v12337
    %v12339 = vmul.f32 %v12332, 1.442695
    %v12340 = vpow.pop %v12339
    %v12341 = vmul.f32 %v12333, 1.442695
    %v12342 = vpow.pop %v12341
    %v12343 = vmul.f32 %v12334, 1.442695
    %v12344 = vpow.pop %v12343
    %v12345 = vadd.f32 %v12336, 1.0
    %v12346 = vadd.f32 %v12338, 1.0
    %v12347 = vadd.f32 %v12340, 1.0
    %v12348 = vadd.f32 %v12342, 1.0
    %v12349 = vadd.f32 %v12344, 1.0
    %v12350 = vrcp.pop %v12345
    %v12351 = vmul.f32 1.0, %v12350
    %v12352 = vrcp.pop %v12346
    %v12353 = vmul.f32 1.0, %v12352
    %v12354 = vrcp.pop %v12347
    %v12355 = vmul.f32 1.0, %v12354
    %v12356 = vrcp.pop %v12348
    %v12357 = vmul.f32 1.0, %v12356
    %v12358 = vrcp.pop %v12349
    %v12359 = vmul.f32 1.0, %v12358
    %s12360 = scalar_lea.vmem %s3, 40
    %12361 = vst.msk [vmem:[%s12360] sm:$0xff] %vm12323, %v12351
    %12362 = vst.msk [vmem:[%s12360 + $0x8] sm:$0xff] %vm12323, %v12353
    %12363 = vst.msk [vmem:[%s12360 + $0x10] sm:$0xff] %vm12323, %v12355
    %12364 = vst.msk [vmem:[%s12360 + $0x18] sm:$0xff] %vm12323, %v12357
    %12365 = vst.msk [vmem:[%s12360 + $0x20] sm:$0x7] %vm12328, %v12359
    %v12366 = vsub.f32 0.0, %v12257
    %v12367 = vsub.f32 0.0, %v12258
    %v12368 = vsub.f32 0.0, %v12259
    %v12369 = vsub.f32 0.0, %v12260
    %v12370 = vsub.f32 0.0, %v12261
    %v12371 = vmul.f32 %v12366, 1.442695
    %v12372 = vpow.pop %v12371
    %v12373 = vmul.f32 %v12367, 1.442695
    %v12374 = vpow.pop %v12373
    %v12375 = vmul.f32 %v12368, 1.442695
    %v12376 = vpow.pop %v12375
    %v12377 = vmul.f32 %v12369, 1.442695
    %v12378 = vpow.pop %v12377
    %v12379 = vmul.f32 %v12370, 1.442695
    %v12380 = vpow.pop %v12379
    %v12381 = vadd.f32 %v12372, 1.0
    %v12382 = vadd.f32 %v12374, 1.0
    %v12383 = vadd.f32 %v12376, 1.0
    %v12384 = vadd.f32 %v12378, 1.0
    %v12385 = vadd.f32 %v12380, 1.0
    %v12386 = vrcp.pop %v12381
    %v12387 = vmul.f32 1.0, %v12386
    %v12388 = vrcp.pop %v12382
    %v12389 = vmul.f32 1.0, %v12388
    %v12390 = vrcp.pop %v12383
    %v12391 = vmul.f32 1.0, %v12390
    %v12392 = vrcp.pop %v12384
    %v12393 = vmul.f32 1.0, %v12392
    %v12394 = vrcp.pop %v12385
    %v12395 = vmul.f32 1.0, %v12394
    %s12396 = scalar_lea.vmem %s3, 80
    %12397 = vst.msk [vmem:[%s12396] sm:$0xff] %vm12323, %v12387
    %12398 = vst.msk [vmem:[%s12396 + $0x8] sm:$0xff] %vm12323, %v12389
    %12399 = vst.msk [vmem:[%s12396 + $0x10] sm:$0xff] %vm12323, %v12391
    %12400 = vst.msk [vmem:[%s12396 + $0x18] sm:$0xff] %vm12323, %v12393
    %12401 = vst.msk [vmem:[%s12396 + $0x20] sm:$0x7] %vm12328, %v12395
    %v12402 = vsub.f32 0.0, %v12288
    %v12403 = vsub.f32 0.0, %v12289
    %v12404 = vsub.f32 0.0, %v12290
    %v12405 = vsub.f32 0.0, %v12291
    %v12406 = vsub.f32 0.0, %v12292
    %v12407 = vmul.f32 %v12402, 1.442695
    %v12408 = vpow.pop %v12407
    %v12409 = vmul.f32 %v12403, 1.442695
    %v12410 = vpow.pop %v12409
    %v12411 = vmul.f32 %v12404, 1.442695
    %v12412 = vpow.pop %v12411
    %v12413 = vmul.f32 %v12405, 1.442695
    %v12414 = vpow.pop %v12413
    %v12415 = vmul.f32 %v12406, 1.442695
    %v12416 = vpow.pop %v12415
    %v12417 = vadd.f32 %v12408, 1.0
    %v12418 = vadd.f32 %v12410, 1.0
    %v12419 = vadd.f32 %v12412, 1.0
    %v12420 = vadd.f32 %v12414, 1.0
    %v12421 = vadd.f32 %v12416, 1.0
    %v12422 = vrcp.pop %v12417
    %v12423 = vmul.f32 1.0, %v12422
    %v12424 = vrcp.pop %v12418
    %v12425 = vmul.f32 1.0, %v12424
    %v12426 = vrcp.pop %v12419
    %v12427 = vmul.f32 1.0, %v12426
    %v12428 = vrcp.pop %v12420
    %v12429 = vmul.f32 1.0, %v12428
    %v12430 = vrcp.pop %v12421
    %v12431 = vmul.f32 1.0, %v12430
    %s12432 = scalar_lea.vmem %s3, 120
    %12433 = vst.msk [vmem:[%s12432] sm:$0xff] %vm12323, %v12423
    %12434 = vst.msk [vmem:[%s12432 + $0x8] sm:$0xff] %vm12323, %v12425
    %12435 = vst.msk [vmem:[%s12432 + $0x10] sm:$0xff] %vm12323, %v12427
    %12436 = vst.msk [vmem:[%s12432 + $0x18] sm:$0xff] %vm12323, %v12429
    %12437 = vst.msk [vmem:[%s12432 + $0x20] sm:$0x7] %vm12328, %v12431
    // Predicated region
    $region26: #{tpu_custom_call.1} parent=1 // pred_check
      _
    $region27: #{tpu_custom_call.1} parent=1 // pred_check_branch
      %12439 = sbr.rel (0) target = $region29
    $region28: #{tpu_custom_call.1} parent=1 // pred_region
      _
    $region29: #{tpu_custom_call.1} parent=1 // pred_fallthru
      _
    // Predicated region
    $region30: #{tpu_custom_call.1} parent=1 // pred_check
      _
    $region31: #{tpu_custom_call.1} parent=1 // pred_check_branch
      %12441 = sbr.rel (0) target = $region33
    $region32: #{tpu_custom_call.1} parent=1 // pred_region
      _
    $region33: #{tpu_custom_call.1} parent=1 // pred_fallthru
      _
    %12442 = vsyncpa [#allocation3], 1
    %12443 = vsyncpa [#allocation4], 1
    %12444 = vsyncpa [#allocation7], 1

</llo_original>
